<compile_context>
chip_gen: v6e
topology: v6e:2x2x1
jax: 0.10.0
libtpu: 0.0.40
codegen_flags: <defaults>
</compile_context>

<pallas_src>
import numpy as np

import jax
import jax.numpy as jnp
from jax.experimental import pallas as pl
from jax.experimental.pallas import tpu as pltpu


# ----------------------------------------------------------------------------- utils
def make_coordinate_grid(h, w):
    """Same as monkey-net make_coordinate_grid: (h, w, 2), last dim = [x, y] in [-1, 1]."""
    x = np.arange(w, dtype=np.float32)
    y = np.arange(h, dtype=np.float32)
    x = 2.0 * (x / (w - 1)) - 1.0
    y = 2.0 * (y / (h - 1)) - 1.0
    xx = np.tile(x[None, :], (h, 1))
    yy = np.tile(y[:, None], (1, w))
    return np.stack([xx, yy], axis=-1).astype(np.float32)


_GCOLS = 128  # G padded to a full lane tile -> fully aligned (Tb,N)x(N,128) matmul.


def _moment_matrix_and_eps(h, w, eps=1e-7):
    """G (N, 128) with cols [1, gx, gy, gx*gx, gx*gy, gy*gy, 0...], plus the analytic
    epsilon-correction constants (eps * column sums of G, 1 - eps*N)."""
    grid = make_coordinate_grid(h, w).reshape(-1, 2)
    gx, gy = grid[:, 0].astype(np.float64), grid[:, 1].astype(np.float64)
    n = gx.shape[0]
    cols = np.stack([np.ones_like(gx), gx, gy, gx * gx, gx * gy, gy * gy], axis=-1)
    gmat = np.zeros((n, _GCOLS), dtype=np.float32)
    gmat[:, :6] = cols.astype(np.float32)
    eps_consts = (
        float(eps * np.sum(gx)),
        float(eps * np.sum(gy)),
        float(eps * np.sum(gx * gx)),
        float(eps * np.sum(gx * gy)),
        float(eps * np.sum(gy * gy)),
        float(1.0 - eps * n),
    )
    return jnp.asarray(gmat), eps_consts


def _vmem_policy():
    """Generation-aware VMEM / grid policy (v7x: 64 MiB + 2 TCs, v5e/v6e: 128 MiB)."""
    cap = 128 * 1024 * 1024
    try:
        info = pltpu.get_tpu_info()
        cap = int(getattr(info, "vmem_capacity_bytes", cap) or cap)
    except Exception:
        pass
    if cap <= 64 * 1024 * 1024:  # v7x-class: tighter budget, 2 TCs want >=4 grid steps
        return dict(vmem_limit=48 * 1024 * 1024, block_budget=16 * 1024 * 1024, min_steps=4)
    return dict(vmem_limit=64 * 1024 * 1024, block_budget=24 * 1024 * 1024, min_steps=2)


def _choose_t_block(T, B, cap_t, min_steps):
    """Largest divisor of T that is a multiple of 8 (or T itself), fits the budget,
    and (if possible) leaves >= min_steps grid steps.  Never returns a (8,128)-rule
    violating block."""
    valid = [d for d in range(1, T + 1) if T % d == 0 and (d % 8 == 0 or d == T)]
    fitting = [d for d in valid if d <= cap_t]
    if not fitting:
        fitting = [min(valid)]  # smallest legal block; may exceed the soft budget
    pref = [d for d in fitting if B * (T // d) >= min_steps]
    return max(pref) if pref else max(fitting)


# --------------------------------------------------------------------- fused kernel
def _make_kp_kernel(K, lanes, eps_consts):
    eps_sgx, eps_sgy, eps_sgxx, eps_sgxy, eps_sgyy, one_m_eps_n = eps_consts

    def kernel(w_ref, b_ref, scale_ref, g_ref, x_ref, out_ref):
        """One grid step = one (batch, time-block) slice.

        w_ref:     SMEM (C, K)      projection weights (stand-in 1x1x1 conv)
        b_ref:     SMEM (K,)        projection bias
        scale_ref: SMEM (1,)        1 / temperature
        g_ref:     VMEM (N, 128)    coordinate-moment matrix
        x_ref:     VMEM (C, Tb, N)
        out_ref:   VMEM (Tb, lanes) lane k*8..k*8+7 = [mx, my, vxx, vxy, vyx, vyy, 0, 0]
        """
        C, Tb, _ = x_ref.shape
        inv_t = scale_ref[0]
        xv = x_ref[...]                                    # (C, Tb, N)
        g = g_ref[...]                                     # (N, 128), hoisted
        col8 = jax.lax.broadcasted_iota(jnp.int32, (Tb, 8), 1)

        pieces = []
        for k in range(K):                                 # static unroll, K is small
            # ---- 1x1x1 conv: tiny C-deep contraction as VPU FMAs ----
            # (k-outer/c-inner: accumulator stays hot; x channels are re-read from
            #  VMEM which is cheaper than spilling K big accumulators per c.)
            hm = xv[0] * (w_ref[0, k] * inv_t)
            for c in range(1, C):
                hm = hm + xv[c] * (w_ref[c, k] * inv_t)
            hm = hm + b_ref[k] * inv_t                     # logits / temperature

            # ---- softmax numerator only (normalize AFTER the reduction) ----
            m = jnp.max(hm, axis=-1, keepdims=True)        # only XLU reduce left
            e = jnp.exp(hm - m)                            # (Tb, N), unnormalized

            # ---- all moments in ONE MXU matmul on the unnormalized e ----
            # fp32 contraction precision: default (bf16 passes) would break the
            # 1e-5 / 1e-4 tolerance.
            raw = jnp.dot(e, g, preferred_element_type=jnp.float32,
                          precision=jax.lax.Precision.HIGHEST)     # (Tb, 128)

            r = pl.reciprocal(raw[:, 0:1], approx=False)   # 1 / sum(e) (exact)
            mx = raw[:, 1:2] * r + eps_sgx                 # + analytic eps correction
            my = raw[:, 2:3] * r + eps_sgy
            vxx = raw[:, 3:4] * r + eps_sgxx - mx * mx * one_m_eps_n
            vxy = raw[:, 4:5] * r + eps_sgxy - mx * my * one_m_eps_n
            vyy = raw[:, 5:6] * r + eps_sgyy - my * my * one_m_eps_n

            packed = jnp.where(col8 == 0, mx,
                     jnp.where(col8 == 1, my,
                     jnp.where(col8 == 2, vxx,
                     jnp.where((col8 == 3) | (col8 == 4), vxy,
                     jnp.where(col8 == 5, vyy, 0.0)))))    # (Tb, 8)
            pieces.append(packed)

        if lanes > 8 * K:
            pieces.append(jnp.zeros((Tb, lanes - 8 * K), jnp.float32))
        # single lane-dense (unmasked) store per grid step
        out_ref[...] = jnp.concatenate(pieces, axis=-1)

    return kernel


def fused_kp_forward(x_flat, w, b, gmat, eps_consts, temperature, *, t_block=None):
    """x_flat: (B, C, T, N) -> packed keypoints (B, T, lanes)."""
    B, C, T, N = x_flat.shape
    K = w.shape[1]
    lanes = max(128, ((8 * K + 127) // 128) * 128)
    policy = _vmem_policy()

    if t_block is None:
        # per t-row: double-buffered x block + ~6 live (N,) f32 temporaries + out rows;
        # fixed: double-buffered G.
        fixed_bytes = 2 * N * _GCOLS * 4
        per_t_bytes = (2 * C + 6) * N * 4 + 2 * lanes * 4
        cap_t = max(1, (policy["block_budget"] - fixed_bytes) // per_t_bytes)
        t_block = _choose_t_block(T, B, cap_t, policy["min_steps"])

    grid = (B, T // t_block)
    scale = jnp.full((1,), 1.0 / float(temperature), dtype=jnp.float32)
    kernel = _make_kp_kernel(K, lanes, eps_consts)

    return pl.pallas_call(
        kernel,
        out_shape=jax.ShapeDtypeStruct((B, T, lanes), jnp.float32),
        grid=grid,
        in_specs=[
            pl.BlockSpec(memory_space=pltpu.MemorySpace.SMEM),                   # w (C, K)
            pl.BlockSpec(memory_space=pltpu.MemorySpace.SMEM),                   # b (K,)
            pl.BlockSpec(memory_space=pltpu.MemorySpace.SMEM),                   # 1/temperature
            pl.BlockSpec((N, _GCOLS), lambda bi, ti: (0, 0)),                    # G (grid-invariant)
            pl.BlockSpec((None, C, t_block, N), lambda bi, ti: (bi, 0, ti, 0)),  # x block
        ],
        out_specs=pl.BlockSpec((None, t_block, lanes), lambda bi, ti: (bi, ti, 0)),
        compiler_params=pltpu.CompilerParams(
            dimension_semantics=("parallel", "parallel"),
            vmem_limit_bytes=policy["vmem_limit"],
        ),
    )(w, b, scale, gmat, x_flat)


# ----------------------------------------------------------------------- the module
class KPDetectorPallas:
    def __init__(self, num_kp, num_channels, temperature, kp_variance="matrix",
                 scale_factor=1, clip_variance=None, key=None):
        self.num_kp = num_kp
        self.num_channels = num_channels
        self.temperature = float(temperature)
        self.kp_variance = kp_variance
        self.scale_factor = scale_factor
        self.clip_variance = clip_variance
        # TODO(synk): clip_variance (smallest-singular-value clipping) not implemented;
        # the default (None) path is reproduced exactly.
        key = jax.random.PRNGKey(42) if key is None else key
        self.w = 0.1 * jax.random.normal(key, (num_channels, num_kp), dtype=jnp.float32)
        self.b = jnp.zeros((num_kp,), dtype=jnp.float32)

    def __call__(self, x):
        # x: (B, C, T, H, W) float32
        B, C, T, H, W = x.shape
        if self.scale_factor != 1:
            sf = self.scale_factor
            inv = 1.0 / sf
            if sf < 1 and abs(inv - round(inv)) < 1e-9:
                # F.interpolate nearest downsample == strided slice (no gather copy).
                # TODO(synk): could be folded into the x BlockSpec index_map entirely.
                step = int(round(inv))
                x = jax.lax.slice(x, (0, 0, 0, 0, 0), (B, C, T, H, W), (1, 1, 1, step, step))
            else:
                Hn, Wn = int(H * sf), int(W * sf)
                hi = jnp.floor(jnp.arange(Hn) / sf).astype(jnp.int32)
                wi = jnp.floor(jnp.arange(Wn) / sf).astype(jnp.int32)
                x = x[:, :, :, hi][:, :, :, :, wi]
            H, W = int(x.shape[3]), int(x.shape[4])

        N = H * W
        K = self.num_kp
        # Lane-dense spatial view: H*W is the minor (lane) dim end-to-end.
        x_flat = x.reshape(B, C, T, N)
        gmat, eps_consts = _moment_matrix_and_eps(H, W)

        packed = fused_kp_forward(x_flat, self.w, self.b, gmat, eps_consts,
                                  self.temperature)
        packed = packed[..., :8 * K].reshape(B, T, K, 8)
        # lanes: [mean_x, mean_y, vxx, vxy, vyx, vyy, 0, 0] -- already (B, T, K, ...)
        out = {"mean": packed[..., 0:2]}
        if self.kp_variance == "matrix":
            out["var"] = packed[..., 2:6].reshape(B, T, K, 2, 2)
        elif self.kp_variance == "single":
            v = 0.5 * (packed[..., 2] + packed[..., 5])     # mean of the diagonal
            out["var"] = v[..., None, None]
        return out


# -------------------------------------------------------------------- pure-JAX ref
def reference(x, w, b, temperature, kp_variance="matrix"):
    B, C, T, H, W = x.shape
    K = w.shape[1]
    hm = jnp.einsum("bcthw,ck->bkthw", x, w,
                    precision=jax.lax.Precision.HIGHEST) + b.reshape(1, K, 1, 1, 1)
    flat = hm.reshape(B, K, T, H * W)
    sm = jax.nn.softmax(flat / temperature, axis=3).reshape(B, K, T, H, W)
    h = sm[..., None] + 1e-7
    grid = jnp.asarray(make_coordinate_grid(H, W))[None, None, None]   # (1,1,1,H,W,2)
    mean = (h * grid).sum(axis=(3, 4))                                 # (B,K,T,2)
    out = {"mean": jnp.transpose(mean, (0, 2, 1, 3))}
    mean_sub = grid - mean[:, :, :, None, None, :]
    var = mean_sub[..., :, None] * mean_sub[..., None, :]
    var = (var * h[..., None]).sum(axis=(3, 4))
    out["var"] = jnp.transpose(var, (0, 2, 1, 3, 4))
    return out


if __name__ == "__main__":
    B, C, T, H, W = 2, 4, 16, 16, 16
    num_kp = 8
    temperature = 0.1

    key = jax.random.PRNGKey(0)
    x = jax.random.normal(key, (B, C, T, H, W), dtype=jnp.float32)

    model = KPDetectorPallas(num_kp=num_kp, num_channels=C, temperature=temperature,
                             kp_variance="matrix", scale_factor=1, clip_variance=None,
                             key=jax.random.PRNGKey(42))

    out = model(x)
    jax.block_until_ready(out["mean"])
    jax.block_until_ready(out["var"])

    ref = reference(x, model.w, model.b, temperature)
    assert out["mean"].shape == (B, T, num_kp, 2)
    assert out["var"].shape == (B, T, num_kp, 2, 2)
    assert jnp.allclose(out["mean"], ref["mean"], atol=1e-5, rtol=1e-4)
    assert jnp.allclose(out["var"], ref["var"], atol=1e-5, rtol=1e-4)

    print("KERNEL_OK")
</pallas_src>

<mosaic_0001>
module attributes {stable_mosaic.version = 11 : i64} {
  func.func @kernel(%arg0: i32, %arg1: i32, %arg2: memref<4x8xf32, #tpu.memory_space<smem>>, %arg3: memref<8xf32, #tpu.memory_space<smem>>, %arg4: memref<1xf32, #tpu.memory_space<smem>>, %arg5: memref<256x128xf32, #tpu.memory_space<vmem>>, %arg6: memref<1x4x16x256xf32, #tpu.memory_space<vmem>>, %arg7: memref<1x16x128xf32, #tpu.memory_space<vmem>>) attributes {dimension_semantics = [#tpu.dimension_semantics<parallel>, #tpu.dimension_semantics<parallel>], iteration_bounds = array<i64: 2, 1>, scalar_prefetch = 0 : i64, scratch_operands = 0 : i64, tpu.core_type = #tpu.core_type<tc>, window_params = [{transform_indices = @transform_0, window_bounds = array<i64: 4, 8>}, {transform_indices = @transform_1, window_bounds = array<i64: 8>}, {transform_indices = @transform_2, window_bounds = array<i64: 1>}, {pipeline_mode = #tpu.pipeline_mode<synchronous>, transform_indices = @transform_3, window_bounds = array<i64: 256, 128>}, {transform_indices = @transform_4, window_bounds = array<i64: 1, 4, 16, 256>}, {transform_indices = @transform_5, window_bounds = array<i64: 1, 16, 128>}]} {
    %c0 = arith.constant 0 : index
    %0 = memref.load %arg4[%c0] : memref<1xf32, #tpu.memory_space<smem>>
    %c0_0 = arith.constant 0 : index
    %c0_1 = arith.constant 0 : index
    %c0_2 = arith.constant 0 : index
    %c0_3 = arith.constant 0 : index
    %1 = vector.load %arg6[%c0_0, %c0_1, %c0_2, %c0_3] : memref<1x4x16x256xf32, #tpu.memory_space<vmem>>, vector<1x4x16x256xf32>
    %2 = vector.shape_cast %1 : vector<1x4x16x256xf32> to vector<4x16x256xf32>
    %c0_4 = arith.constant 0 : index
    %c0_5 = arith.constant 0 : index
    %3 = vector.load %arg5[%c0_4, %c0_5] : memref<256x128xf32, #tpu.memory_space<vmem>>, vector<256x128xf32>
    %4 = tpu.iota {dimensions = array<i32: 1>} : vector<16x8xi32>
    %5 = vector.extract_strided_slice %2 {offsets = [0, 0, 0], sizes = [1, 16, 256], strides = [1, 1, 1]} : vector<4x16x256xf32> to vector<1x16x256xf32>
    %6 = vector.shape_cast %5 : vector<1x16x256xf32> to vector<16x256xf32>
    %c0_6 = arith.constant 0 : index
    %c0_7 = arith.constant 0 : index
    %7 = memref.load %arg2[%c0_6, %c0_7] : memref<4x8xf32, #tpu.memory_space<smem>>
    %8 = arith.mulf %7, %0 : f32
    %9 = vector.broadcast %8 : f32 to vector<16x256xf32>
    %10 = arith.mulf %6, %9 : vector<16x256xf32>
    %11 = vector.extract_strided_slice %2 {offsets = [1, 0, 0], sizes = [1, 16, 256], strides = [1, 1, 1]} : vector<4x16x256xf32> to vector<1x16x256xf32>
    %12 = vector.shape_cast %11 : vector<1x16x256xf32> to vector<16x256xf32>
    %c1 = arith.constant 1 : index
    %c0_8 = arith.constant 0 : index
    %13 = memref.load %arg2[%c1, %c0_8] : memref<4x8xf32, #tpu.memory_space<smem>>
    %14 = arith.mulf %13, %0 : f32
    %15 = vector.broadcast %14 : f32 to vector<16x256xf32>
    %16 = arith.mulf %12, %15 : vector<16x256xf32>
    %17 = arith.addf %10, %16 : vector<16x256xf32>
    %18 = vector.extract_strided_slice %2 {offsets = [2, 0, 0], sizes = [1, 16, 256], strides = [1, 1, 1]} : vector<4x16x256xf32> to vector<1x16x256xf32>
    %19 = vector.shape_cast %18 : vector<1x16x256xf32> to vector<16x256xf32>
    %c2 = arith.constant 2 : index
    %c0_9 = arith.constant 0 : index
    %20 = memref.load %arg2[%c2, %c0_9] : memref<4x8xf32, #tpu.memory_space<smem>>
    %21 = arith.mulf %20, %0 : f32
    %22 = vector.broadcast %21 : f32 to vector<16x256xf32>
    %23 = arith.mulf %19, %22 : vector<16x256xf32>
    %24 = arith.addf %17, %23 : vector<16x256xf32>
    %25 = vector.extract_strided_slice %2 {offsets = [3, 0, 0], sizes = [1, 16, 256], strides = [1, 1, 1]} : vector<4x16x256xf32> to vector<1x16x256xf32>
    %26 = vector.shape_cast %25 : vector<1x16x256xf32> to vector<16x256xf32>
    %c3 = arith.constant 3 : index
    %c0_10 = arith.constant 0 : index
    %27 = memref.load %arg2[%c3, %c0_10] : memref<4x8xf32, #tpu.memory_space<smem>>
    %28 = arith.mulf %27, %0 : f32
    %29 = vector.broadcast %28 : f32 to vector<16x256xf32>
    %30 = arith.mulf %26, %29 : vector<16x256xf32>
    %31 = arith.addf %24, %30 : vector<16x256xf32>
    %c0_11 = arith.constant 0 : index
    %32 = memref.load %arg3[%c0_11] : memref<8xf32, #tpu.memory_space<smem>>
    %33 = arith.mulf %32, %0 : f32
    %34 = vector.broadcast %33 : f32 to vector<16x256xf32>
    %35 = arith.addf %31, %34 : vector<16x256xf32>
    %cst = arith.constant dense<0xFF800000> : vector<16xf32>
    %36 = vector.multi_reduction <maximumf>, %35, %cst [1] : vector<16x256xf32> to vector<16xf32>
    %37 = vector.shape_cast %36 : vector<16xf32> to vector<16x1xf32>
    %38 = vector.broadcast %37 : vector<16x1xf32> to vector<16x256xf32>
    %39 = arith.subf %35, %38 : vector<16x256xf32>
    %40 = math.exp %39 : vector<16x256xf32>
    %cst_12 = arith.constant dense<0.000000e+00> : vector<16x128xf32>
    %41 = tpu.matmul %40, %3, %cst_12 {dimension_numbers = #tpu.dot_dimension_numbers<[1], [0], [0], [1], [0, 0, 1, 1], [], []>, precision = #tpu.contract_precision<fp32>} : vector<16x256xf32>, vector<256x128xf32>, vector<16x128xf32> -> vector<16x128xf32>
    %42 = vector.extract_strided_slice %41 {offsets = [0, 0], sizes = [16, 1], strides = [1, 1]} : vector<16x128xf32> to vector<16x1xf32>
    %43 = tpu.reciprocal %42 : vector<16x1xf32> -> vector<16x1xf32>
    %44 = vector.extract_strided_slice %41 {offsets = [0, 1], sizes = [16, 1], strides = [1, 1]} : vector<16x128xf32> to vector<16x1xf32>
    %45 = arith.mulf %44, %43 : vector<16x1xf32>
    %cst_13 = arith.constant 3.81469731E-13 : f32
    %46 = vector.broadcast %cst_13 : f32 to vector<16x1xf32>
    %47 = arith.addf %45, %46 : vector<16x1xf32>
    %48 = vector.extract_strided_slice %41 {offsets = [0, 2], sizes = [16, 1], strides = [1, 1]} : vector<16x128xf32> to vector<16x1xf32>
    %49 = arith.mulf %48, %43 : vector<16x1xf32>
    %cst_14 = arith.constant 3.81469731E-13 : f32
    %50 = vector.broadcast %cst_14 : f32 to vector<16x1xf32>
    %51 = arith.addf %49, %50 : vector<16x1xf32>
    %52 = vector.extract_strided_slice %41 {offsets = [0, 3], sizes = [16, 1], strides = [1, 1]} : vector<16x128xf32> to vector<16x1xf32>
    %53 = arith.mulf %52, %43 : vector<16x1xf32>
    %cst_15 = arith.constant 9.671111E-6 : f32
    %54 = vector.broadcast %cst_15 : f32 to vector<16x1xf32>
    %55 = arith.addf %53, %54 : vector<16x1xf32>
    %56 = arith.mulf %47, %47 : vector<16x1xf32>
    %cst_16 = arith.constant 0.999974429 : f32
    %57 = vector.broadcast %cst_16 : f32 to vector<16x1xf32>
    %58 = arith.mulf %56, %57 : vector<16x1xf32>
    %59 = arith.subf %55, %58 : vector<16x1xf32>
    %60 = vector.extract_strided_slice %41 {offsets = [0, 4], sizes = [16, 1], strides = [1, 1]} : vector<16x128xf32> to vector<16x1xf32>
    %61 = arith.mulf %60, %43 : vector<16x1xf32>
    %cst_17 = arith.constant 5.68434195E-21 : f32
    %62 = vector.broadcast %cst_17 : f32 to vector<16x1xf32>
    %63 = arith.addf %61, %62 : vector<16x1xf32>
    %64 = arith.mulf %47, %51 : vector<16x1xf32>
    %cst_18 = arith.constant 0.999974429 : f32
    %65 = vector.broadcast %cst_18 : f32 to vector<16x1xf32>
    %66 = arith.mulf %64, %65 : vector<16x1xf32>
    %67 = arith.subf %63, %66 : vector<16x1xf32>
    %68 = vector.extract_strided_slice %41 {offsets = [0, 5], sizes = [16, 1], strides = [1, 1]} : vector<16x128xf32> to vector<16x1xf32>
    %69 = arith.mulf %68, %43 : vector<16x1xf32>
    %cst_19 = arith.constant 9.671111E-6 : f32
    %70 = vector.broadcast %cst_19 : f32 to vector<16x1xf32>
    %71 = arith.addf %69, %70 : vector<16x1xf32>
    %72 = arith.mulf %51, %51 : vector<16x1xf32>
    %cst_20 = arith.constant 0.999974429 : f32
    %73 = vector.broadcast %cst_20 : f32 to vector<16x1xf32>
    %74 = arith.mulf %72, %73 : vector<16x1xf32>
    %75 = arith.subf %71, %74 : vector<16x1xf32>
    %c0_i32 = arith.constant 0 : i32
    %76 = vector.broadcast %c0_i32 : i32 to vector<16x8xi32>
    %77 = arith.cmpi eq, %4, %76 : vector<16x8xi32>
    %c1_i32 = arith.constant 1 : i32
    %78 = vector.broadcast %c1_i32 : i32 to vector<16x8xi32>
    %79 = arith.cmpi eq, %4, %78 : vector<16x8xi32>
    %c2_i32 = arith.constant 2 : i32
    %80 = vector.broadcast %c2_i32 : i32 to vector<16x8xi32>
    %81 = arith.cmpi eq, %4, %80 : vector<16x8xi32>
    %c3_i32 = arith.constant 3 : i32
    %82 = vector.broadcast %c3_i32 : i32 to vector<16x8xi32>
    %83 = arith.cmpi eq, %4, %82 : vector<16x8xi32>
    %c4_i32 = arith.constant 4 : i32
    %84 = vector.broadcast %c4_i32 : i32 to vector<16x8xi32>
    %85 = arith.cmpi eq, %4, %84 : vector<16x8xi32>
    %86 = arith.ori %83, %85 : vector<16x8xi1>
    %c5_i32 = arith.constant 5 : i32
    %87 = vector.broadcast %c5_i32 : i32 to vector<16x8xi32>
    %88 = arith.cmpi eq, %4, %87 : vector<16x8xi32>
    %cst_21 = arith.constant 0.000000e+00 : f32
    %89 = vector.shape_cast %75 : vector<16x1xf32> to vector<16x1xf32>
    %90 = vector.broadcast %89 : vector<16x1xf32> to vector<16x8xf32>
    %91 = vector.broadcast %cst_21 : f32 to vector<16x8xf32>
    %92 = arith.select %88, %90, %91 : vector<16x8xi1>, vector<16x8xf32>
    %93 = vector.shape_cast %67 : vector<16x1xf32> to vector<16x1xf32>
    %94 = vector.broadcast %93 : vector<16x1xf32> to vector<16x8xf32>
    %95 = arith.select %86, %94, %92 : vector<16x8xi1>, vector<16x8xf32>
    %96 = vector.shape_cast %59 : vector<16x1xf32> to vector<16x1xf32>
    %97 = vector.broadcast %96 : vector<16x1xf32> to vector<16x8xf32>
    %98 = arith.select %81, %97, %95 : vector<16x8xi1>, vector<16x8xf32>
    %99 = vector.shape_cast %51 : vector<16x1xf32> to vector<16x1xf32>
    %100 = vector.broadcast %99 : vector<16x1xf32> to vector<16x8xf32>
    %101 = arith.select %79, %100, %98 : vector<16x8xi1>, vector<16x8xf32>
    %102 = vector.shape_cast %47 : vector<16x1xf32> to vector<16x1xf32>
    %103 = vector.broadcast %102 : vector<16x1xf32> to vector<16x8xf32>
    %104 = arith.select %77, %103, %101 : vector<16x8xi1>, vector<16x8xf32>
    %105 = vector.extract_strided_slice %2 {offsets = [0, 0, 0], sizes = [1, 16, 256], strides = [1, 1, 1]} : vector<4x16x256xf32> to vector<1x16x256xf32>
    %106 = vector.shape_cast %105 : vector<1x16x256xf32> to vector<16x256xf32>
    %c0_22 = arith.constant 0 : index
    %c1_23 = arith.constant 1 : index
    %107 = memref.load %arg2[%c0_22, %c1_23] : memref<4x8xf32, #tpu.memory_space<smem>>
    %108 = arith.mulf %107, %0 : f32
    %109 = vector.broadcast %108 : f32 to vector<16x256xf32>
    %110 = arith.mulf %106, %109 : vector<16x256xf32>
    %111 = vector.extract_strided_slice %2 {offsets = [1, 0, 0], sizes = [1, 16, 256], strides = [1, 1, 1]} : vector<4x16x256xf32> to vector<1x16x256xf32>
    %112 = vector.shape_cast %111 : vector<1x16x256xf32> to vector<16x256xf32>
    %c1_24 = arith.constant 1 : index
    %c1_25 = arith.constant 1 : index
    %113 = memref.load %arg2[%c1_24, %c1_25] : memref<4x8xf32, #tpu.memory_space<smem>>
    %114 = arith.mulf %113, %0 : f32
    %115 = vector.broadcast %114 : f32 to vector<16x256xf32>
    %116 = arith.mulf %112, %115 : vector<16x256xf32>
    %117 = arith.addf %110, %116 : vector<16x256xf32>
    %118 = vector.extract_strided_slice %2 {offsets = [2, 0, 0], sizes = [1, 16, 256], strides = [1, 1, 1]} : vector<4x16x256xf32> to vector<1x16x256xf32>
    %119 = vector.shape_cast %118 : vector<1x16x256xf32> to vector<16x256xf32>
    %c2_26 = arith.constant 2 : index
    %c1_27 = arith.constant 1 : index
    %120 = memref.load %arg2[%c2_26, %c1_27] : memref<4x8xf32, #tpu.memory_space<smem>>
    %121 = arith.mulf %120, %0 : f32
    %122 = vector.broadcast %121 : f32 to vector<16x256xf32>
    %123 = arith.mulf %119, %122 : vector<16x256xf32>
    %124 = arith.addf %117, %123 : vector<16x256xf32>
    %125 = vector.extract_strided_slice %2 {offsets = [3, 0, 0], sizes = [1, 16, 256], strides = [1, 1, 1]} : vector<4x16x256xf32> to vector<1x16x256xf32>
    %126 = vector.shape_cast %125 : vector<1x16x256xf32> to vector<16x256xf32>
    %c3_28 = arith.constant 3 : index
    %c1_29 = arith.constant 1 : index
    %127 = memref.load %arg2[%c3_28, %c1_29] : memref<4x8xf32, #tpu.memory_space<smem>>
    %128 = arith.mulf %127, %0 : f32
    %129 = vector.broadcast %128 : f32 to vector<16x256xf32>
    %130 = arith.mulf %126, %129 : vector<16x256xf32>
    %131 = arith.addf %124, %130 : vector<16x256xf32>
    %c1_30 = arith.constant 1 : index
    %132 = memref.load %arg3[%c1_30] : memref<8xf32, #tpu.memory_space<smem>>
    %133 = arith.mulf %132, %0 : f32
    %134 = vector.broadcast %133 : f32 to vector<16x256xf32>
    %135 = arith.addf %131, %134 : vector<16x256xf32>
    %cst_31 = arith.constant dense<0xFF800000> : vector<16xf32>
    %136 = vector.multi_reduction <maximumf>, %135, %cst_31 [1] : vector<16x256xf32> to vector<16xf32>
    %137 = vector.shape_cast %136 : vector<16xf32> to vector<16x1xf32>
    %138 = vector.broadcast %137 : vector<16x1xf32> to vector<16x256xf32>
    %139 = arith.subf %135, %138 : vector<16x256xf32>
    %140 = math.exp %139 : vector<16x256xf32>
    %cst_32 = arith.constant dense<0.000000e+00> : vector<16x128xf32>
    %141 = tpu.matmul %140, %3, %cst_32 {dimension_numbers = #tpu.dot_dimension_numbers<[1], [0], [0], [1], [0, 0, 1, 1], [], []>, precision = #tpu.contract_precision<fp32>} : vector<16x256xf32>, vector<256x128xf32>, vector<16x128xf32> -> vector<16x128xf32>
    %142 = vector.extract_strided_slice %141 {offsets = [0, 0], sizes = [16, 1], strides = [1, 1]} : vector<16x128xf32> to vector<16x1xf32>
    %143 = tpu.reciprocal %142 : vector<16x1xf32> -> vector<16x1xf32>
    %144 = vector.extract_strided_slice %141 {offsets = [0, 1], sizes = [16, 1], strides = [1, 1]} : vector<16x128xf32> to vector<16x1xf32>
    %145 = arith.mulf %144, %143 : vector<16x1xf32>
    %cst_33 = arith.constant 3.81469731E-13 : f32
    %146 = vector.broadcast %cst_33 : f32 to vector<16x1xf32>
    %147 = arith.addf %145, %146 : vector<16x1xf32>
    %148 = vector.extract_strided_slice %141 {offsets = [0, 2], sizes = [16, 1], strides = [1, 1]} : vector<16x128xf32> to vector<16x1xf32>
    %149 = arith.mulf %148, %143 : vector<16x1xf32>
    %cst_34 = arith.constant 3.81469731E-13 : f32
    %150 = vector.broadcast %cst_34 : f32 to vector<16x1xf32>
    %151 = arith.addf %149, %150 : vector<16x1xf32>
    %152 = vector.extract_strided_slice %141 {offsets = [0, 3], sizes = [16, 1], strides = [1, 1]} : vector<16x128xf32> to vector<16x1xf32>
    %153 = arith.mulf %152, %143 : vector<16x1xf32>
    %cst_35 = arith.constant 9.671111E-6 : f32
    %154 = vector.broadcast %cst_35 : f32 to vector<16x1xf32>
    %155 = arith.addf %153, %154 : vector<16x1xf32>
    %156 = arith.mulf %147, %147 : vector<16x1xf32>
    %cst_36 = arith.constant 0.999974429 : f32
    %157 = vector.broadcast %cst_36 : f32 to vector<16x1xf32>
    %158 = arith.mulf %156, %157 : vector<16x1xf32>
    %159 = arith.subf %155, %158 : vector<16x1xf32>
    %160 = vector.extract_strided_slice %141 {offsets = [0, 4], sizes = [16, 1], strides = [1, 1]} : vector<16x128xf32> to vector<16x1xf32>
    %161 = arith.mulf %160, %143 : vector<16x1xf32>
    %cst_37 = arith.constant 5.68434195E-21 : f32
    %162 = vector.broadcast %cst_37 : f32 to vector<16x1xf32>
    %163 = arith.addf %161, %162 : vector<16x1xf32>
    %164 = arith.mulf %147, %151 : vector<16x1xf32>
    %cst_38 = arith.constant 0.999974429 : f32
    %165 = vector.broadcast %cst_38 : f32 to vector<16x1xf32>
    %166 = arith.mulf %164, %165 : vector<16x1xf32>
    %167 = arith.subf %163, %166 : vector<16x1xf32>
    %168 = vector.extract_strided_slice %141 {offsets = [0, 5], sizes = [16, 1], strides = [1, 1]} : vector<16x128xf32> to vector<16x1xf32>
    %169 = arith.mulf %168, %143 : vector<16x1xf32>
    %cst_39 = arith.constant 9.671111E-6 : f32
    %170 = vector.broadcast %cst_39 : f32 to vector<16x1xf32>
    %171 = arith.addf %169, %170 : vector<16x1xf32>
    %172 = arith.mulf %151, %151 : vector<16x1xf32>
    %cst_40 = arith.constant 0.999974429 : f32
    %173 = vector.broadcast %cst_40 : f32 to vector<16x1xf32>
    %174 = arith.mulf %172, %173 : vector<16x1xf32>
    %175 = arith.subf %171, %174 : vector<16x1xf32>
    %c0_i32_41 = arith.constant 0 : i32
    %176 = vector.broadcast %c0_i32_41 : i32 to vector<16x8xi32>
    %177 = arith.cmpi eq, %4, %176 : vector<16x8xi32>
    %c1_i32_42 = arith.constant 1 : i32
    %178 = vector.broadcast %c1_i32_42 : i32 to vector<16x8xi32>
    %179 = arith.cmpi eq, %4, %178 : vector<16x8xi32>
    %c2_i32_43 = arith.constant 2 : i32
    %180 = vector.broadcast %c2_i32_43 : i32 to vector<16x8xi32>
    %181 = arith.cmpi eq, %4, %180 : vector<16x8xi32>
    %c3_i32_44 = arith.constant 3 : i32
    %182 = vector.broadcast %c3_i32_44 : i32 to vector<16x8xi32>
    %183 = arith.cmpi eq, %4, %182 : vector<16x8xi32>
    %c4_i32_45 = arith.constant 4 : i32
    %184 = vector.broadcast %c4_i32_45 : i32 to vector<16x8xi32>
    %185 = arith.cmpi eq, %4, %184 : vector<16x8xi32>
    %186 = arith.ori %183, %185 : vector<16x8xi1>
    %c5_i32_46 = arith.constant 5 : i32
    %187 = vector.broadcast %c5_i32_46 : i32 to vector<16x8xi32>
    %188 = arith.cmpi eq, %4, %187 : vector<16x8xi32>
    %cst_47 = arith.constant 0.000000e+00 : f32
    %189 = vector.shape_cast %175 : vector<16x1xf32> to vector<16x1xf32>
    %190 = vector.broadcast %189 : vector<16x1xf32> to vector<16x8xf32>
    %191 = vector.broadcast %cst_47 : f32 to vector<16x8xf32>
    %192 = arith.select %188, %190, %191 : vector<16x8xi1>, vector<16x8xf32>
    %193 = vector.shape_cast %167 : vector<16x1xf32> to vector<16x1xf32>
    %194 = vector.broadcast %193 : vector<16x1xf32> to vector<16x8xf32>
    %195 = arith.select %186, %194, %192 : vector<16x8xi1>, vector<16x8xf32>
    %196 = vector.shape_cast %159 : vector<16x1xf32> to vector<16x1xf32>
    %197 = vector.broadcast %196 : vector<16x1xf32> to vector<16x8xf32>
    %198 = arith.select %181, %197, %195 : vector<16x8xi1>, vector<16x8xf32>
    %199 = vector.shape_cast %151 : vector<16x1xf32> to vector<16x1xf32>
    %200 = vector.broadcast %199 : vector<16x1xf32> to vector<16x8xf32>
    %201 = arith.select %179, %200, %198 : vector<16x8xi1>, vector<16x8xf32>
    %202 = vector.shape_cast %147 : vector<16x1xf32> to vector<16x1xf32>
    %203 = vector.broadcast %202 : vector<16x1xf32> to vector<16x8xf32>
    %204 = arith.select %177, %203, %201 : vector<16x8xi1>, vector<16x8xf32>
    %205 = vector.extract_strided_slice %2 {offsets = [0, 0, 0], sizes = [1, 16, 256], strides = [1, 1, 1]} : vector<4x16x256xf32> to vector<1x16x256xf32>
    %206 = vector.shape_cast %205 : vector<1x16x256xf32> to vector<16x256xf32>
    %c0_48 = arith.constant 0 : index
    %c2_49 = arith.constant 2 : index
    %207 = memref.load %arg2[%c0_48, %c2_49] : memref<4x8xf32, #tpu.memory_space<smem>>
    %208 = arith.mulf %207, %0 : f32
    %209 = vector.broadcast %208 : f32 to vector<16x256xf32>
    %210 = arith.mulf %206, %209 : vector<16x256xf32>
    %211 = vector.extract_strided_slice %2 {offsets = [1, 0, 0], sizes = [1, 16, 256], strides = [1, 1, 1]} : vector<4x16x256xf32> to vector<1x16x256xf32>
    %212 = vector.shape_cast %211 : vector<1x16x256xf32> to vector<16x256xf32>
    %c1_50 = arith.constant 1 : index
    %c2_51 = arith.constant 2 : index
    %213 = memref.load %arg2[%c1_50, %c2_51] : memref<4x8xf32, #tpu.memory_space<smem>>
    %214 = arith.mulf %213, %0 : f32
    %215 = vector.broadcast %214 : f32 to vector<16x256xf32>
    %216 = arith.mulf %212, %215 : vector<16x256xf32>
    %217 = arith.addf %210, %216 : vector<16x256xf32>
    %218 = vector.extract_strided_slice %2 {offsets = [2, 0, 0], sizes = [1, 16, 256], strides = [1, 1, 1]} : vector<4x16x256xf32> to vector<1x16x256xf32>
    %219 = vector.shape_cast %218 : vector<1x16x256xf32> to vector<16x256xf32>
    %c2_52 = arith.constant 2 : index
    %c2_53 = arith.constant 2 : index
    %220 = memref.load %arg2[%c2_52, %c2_53] : memref<4x8xf32, #tpu.memory_space<smem>>
    %221 = arith.mulf %220, %0 : f32
    %222 = vector.broadcast %221 : f32 to vector<16x256xf32>
    %223 = arith.mulf %219, %222 : vector<16x256xf32>
    %224 = arith.addf %217, %223 : vector<16x256xf32>
    %225 = vector.extract_strided_slice %2 {offsets = [3, 0, 0], sizes = [1, 16, 256], strides = [1, 1, 1]} : vector<4x16x256xf32> to vector<1x16x256xf32>
    %226 = vector.shape_cast %225 : vector<1x16x256xf32> to vector<16x256xf32>
    %c3_54 = arith.constant 3 : index
    %c2_55 = arith.constant 2 : index
    %227 = memref.load %arg2[%c3_54, %c2_55] : memref<4x8xf32, #tpu.memory_space<smem>>
    %228 = arith.mulf %227, %0 : f32
    %229 = vector.broadcast %228 : f32 to vector<16x256xf32>
    %230 = arith.mulf %226, %229 : vector<16x256xf32>
    %231 = arith.addf %224, %230 : vector<16x256xf32>
    %c2_56 = arith.constant 2 : index
    %232 = memref.load %arg3[%c2_56] : memref<8xf32, #tpu.memory_space<smem>>
    %233 = arith.mulf %232, %0 : f32
    %234 = vector.broadcast %233 : f32 to vector<16x256xf32>
    %235 = arith.addf %231, %234 : vector<16x256xf32>
    %cst_57 = arith.constant dense<0xFF800000> : vector<16xf32>
    %236 = vector.multi_reduction <maximumf>, %235, %cst_57 [1] : vector<16x256xf32> to vector<16xf32>
    %237 = vector.shape_cast %236 : vector<16xf32> to vector<16x1xf32>
    %238 = vector.broadcast %237 : vector<16x1xf32> to vector<16x256xf32>
    %239 = arith.subf %235, %238 : vector<16x256xf32>
    %240 = math.exp %239 : vector<16x256xf32>
    %cst_58 = arith.constant dense<0.000000e+00> : vector<16x128xf32>
    %241 = tpu.matmul %240, %3, %cst_58 {dimension_numbers = #tpu.dot_dimension_numbers<[1], [0], [0], [1], [0, 0, 1, 1], [], []>, precision = #tpu.contract_precision<fp32>} : vector<16x256xf32>, vector<256x128xf32>, vector<16x128xf32> -> vector<16x128xf32>
    %242 = vector.extract_strided_slice %241 {offsets = [0, 0], sizes = [16, 1], strides = [1, 1]} : vector<16x128xf32> to vector<16x1xf32>
    %243 = tpu.reciprocal %242 : vector<16x1xf32> -> vector<16x1xf32>
    %244 = vector.extract_strided_slice %241 {offsets = [0, 1], sizes = [16, 1], strides = [1, 1]} : vector<16x128xf32> to vector<16x1xf32>
    %245 = arith.mulf %244, %243 : vector<16x1xf32>
    %cst_59 = arith.constant 3.81469731E-13 : f32
    %246 = vector.broadcast %cst_59 : f32 to vector<16x1xf32>
    %247 = arith.addf %245, %246 : vector<16x1xf32>
    %248 = vector.extract_strided_slice %241 {offsets = [0, 2], sizes = [16, 1], strides = [1, 1]} : vector<16x128xf32> to vector<16x1xf32>
    %249 = arith.mulf %248, %243 : vector<16x1xf32>
    %cst_60 = arith.constant 3.81469731E-13 : f32
    %250 = vector.broadcast %cst_60 : f32 to vector<16x1xf32>
    %251 = arith.addf %249, %250 : vector<16x1xf32>
    %252 = vector.extract_strided_slice %241 {offsets = [0, 3], sizes = [16, 1], strides = [1, 1]} : vector<16x128xf32> to vector<16x1xf32>
    %253 = arith.mulf %252, %243 : vector<16x1xf32>
    %cst_61 = arith.constant 9.671111E-6 : f32
    %254 = vector.broadcast %cst_61 : f32 to vector<16x1xf32>
    %255 = arith.addf %253, %254 : vector<16x1xf32>
    %256 = arith.mulf %247, %247 : vector<16x1xf32>
    %cst_62 = arith.constant 0.999974429 : f32
    %257 = vector.broadcast %cst_62 : f32 to vector<16x1xf32>
    %258 = arith.mulf %256, %257 : vector<16x1xf32>
    %259 = arith.subf %255, %258 : vector<16x1xf32>
    %260 = vector.extract_strided_slice %241 {offsets = [0, 4], sizes = [16, 1], strides = [1, 1]} : vector<16x128xf32> to vector<16x1xf32>
    %261 = arith.mulf %260, %243 : vector<16x1xf32>
    %cst_63 = arith.constant 5.68434195E-21 : f32
    %262 = vector.broadcast %cst_63 : f32 to vector<16x1xf32>
    %263 = arith.addf %261, %262 : vector<16x1xf32>
    %264 = arith.mulf %247, %251 : vector<16x1xf32>
    %cst_64 = arith.constant 0.999974429 : f32
    %265 = vector.broadcast %cst_64 : f32 to vector<16x1xf32>
    %266 = arith.mulf %264, %265 : vector<16x1xf32>
    %267 = arith.subf %263, %266 : vector<16x1xf32>
    %268 = vector.extract_strided_slice %241 {offsets = [0, 5], sizes = [16, 1], strides = [1, 1]} : vector<16x128xf32> to vector<16x1xf32>
    %269 = arith.mulf %268, %243 : vector<16x1xf32>
    %cst_65 = arith.constant 9.671111E-6 : f32
    %270 = vector.broadcast %cst_65 : f32 to vector<16x1xf32>
    %271 = arith.addf %269, %270 : vector<16x1xf32>
    %272 = arith.mulf %251, %251 : vector<16x1xf32>
    %cst_66 = arith.constant 0.999974429 : f32
    %273 = vector.broadcast %cst_66 : f32 to vector<16x1xf32>
    %274 = arith.mulf %272, %273 : vector<16x1xf32>
    %275 = arith.subf %271, %274 : vector<16x1xf32>
    %c0_i32_67 = arith.constant 0 : i32
    %276 = vector.broadcast %c0_i32_67 : i32 to vector<16x8xi32>
    %277 = arith.cmpi eq, %4, %276 : vector<16x8xi32>
    %c1_i32_68 = arith.constant 1 : i32
    %278 = vector.broadcast %c1_i32_68 : i32 to vector<16x8xi32>
    %279 = arith.cmpi eq, %4, %278 : vector<16x8xi32>
    %c2_i32_69 = arith.constant 2 : i32
    %280 = vector.broadcast %c2_i32_69 : i32 to vector<16x8xi32>
    %281 = arith.cmpi eq, %4, %280 : vector<16x8xi32>
    %c3_i32_70 = arith.constant 3 : i32
    %282 = vector.broadcast %c3_i32_70 : i32 to vector<16x8xi32>
    %283 = arith.cmpi eq, %4, %282 : vector<16x8xi32>
    %c4_i32_71 = arith.constant 4 : i32
    %284 = vector.broadcast %c4_i32_71 : i32 to vector<16x8xi32>
    %285 = arith.cmpi eq, %4, %284 : vector<16x8xi32>
    %286 = arith.ori %283, %285 : vector<16x8xi1>
    %c5_i32_72 = arith.constant 5 : i32
    %287 = vector.broadcast %c5_i32_72 : i32 to vector<16x8xi32>
    %288 = arith.cmpi eq, %4, %287 : vector<16x8xi32>
    %cst_73 = arith.constant 0.000000e+00 : f32
    %289 = vector.shape_cast %275 : vector<16x1xf32> to vector<16x1xf32>
    %290 = vector.broadcast %289 : vector<16x1xf32> to vector<16x8xf32>
    %291 = vector.broadcast %cst_73 : f32 to vector<16x8xf32>
    %292 = arith.select %288, %290, %291 : vector<16x8xi1>, vector<16x8xf32>
    %293 = vector.shape_cast %267 : vector<16x1xf32> to vector<16x1xf32>
    %294 = vector.broadcast %293 : vector<16x1xf32> to vector<16x8xf32>
    %295 = arith.select %286, %294, %292 : vector<16x8xi1>, vector<16x8xf32>
    %296 = vector.shape_cast %259 : vector<16x1xf32> to vector<16x1xf32>
    %297 = vector.broadcast %296 : vector<16x1xf32> to vector<16x8xf32>
    %298 = arith.select %281, %297, %295 : vector<16x8xi1>, vector<16x8xf32>
    %299 = vector.shape_cast %251 : vector<16x1xf32> to vector<16x1xf32>
    %300 = vector.broadcast %299 : vector<16x1xf32> to vector<16x8xf32>
    %301 = arith.select %279, %300, %298 : vector<16x8xi1>, vector<16x8xf32>
    %302 = vector.shape_cast %247 : vector<16x1xf32> to vector<16x1xf32>
    %303 = vector.broadcast %302 : vector<16x1xf32> to vector<16x8xf32>
    %304 = arith.select %277, %303, %301 : vector<16x8xi1>, vector<16x8xf32>
    %305 = vector.extract_strided_slice %2 {offsets = [0, 0, 0], sizes = [1, 16, 256], strides = [1, 1, 1]} : vector<4x16x256xf32> to vector<1x16x256xf32>
    %306 = vector.shape_cast %305 : vector<1x16x256xf32> to vector<16x256xf32>
    %c0_74 = arith.constant 0 : index
    %c3_75 = arith.constant 3 : index
    %307 = memref.load %arg2[%c0_74, %c3_75] : memref<4x8xf32, #tpu.memory_space<smem>>
    %308 = arith.mulf %307, %0 : f32
    %309 = vector.broadcast %308 : f32 to vector<16x256xf32>
    %310 = arith.mulf %306, %309 : vector<16x256xf32>
    %311 = vector.extract_strided_slice %2 {offsets = [1, 0, 0], sizes = [1, 16, 256], strides = [1, 1, 1]} : vector<4x16x256xf32> to vector<1x16x256xf32>
    %312 = vector.shape_cast %311 : vector<1x16x256xf32> to vector<16x256xf32>
    %c1_76 = arith.constant 1 : index
    %c3_77 = arith.constant 3 : index
    %313 = memref.load %arg2[%c1_76, %c3_77] : memref<4x8xf32, #tpu.memory_space<smem>>
    %314 = arith.mulf %313, %0 : f32
    %315 = vector.broadcast %314 : f32 to vector<16x256xf32>
    %316 = arith.mulf %312, %315 : vector<16x256xf32>
    %317 = arith.addf %310, %316 : vector<16x256xf32>
    %318 = vector.extract_strided_slice %2 {offsets = [2, 0, 0], sizes = [1, 16, 256], strides = [1, 1, 1]} : vector<4x16x256xf32> to vector<1x16x256xf32>
    %319 = vector.shape_cast %318 : vector<1x16x256xf32> to vector<16x256xf32>
    %c2_78 = arith.constant 2 : index
    %c3_79 = arith.constant 3 : index
    %320 = memref.load %arg2[%c2_78, %c3_79] : memref<4x8xf32, #tpu.memory_space<smem>>
    %321 = arith.mulf %320, %0 : f32
    %322 = vector.broadcast %321 : f32 to vector<16x256xf32>
    %323 = arith.mulf %319, %322 : vector<16x256xf32>
    %324 = arith.addf %317, %323 : vector<16x256xf32>
    %325 = vector.extract_strided_slice %2 {offsets = [3, 0, 0], sizes = [1, 16, 256], strides = [1, 1, 1]} : vector<4x16x256xf32> to vector<1x16x256xf32>
    %326 = vector.shape_cast %325 : vector<1x16x256xf32> to vector<16x256xf32>
    %c3_80 = arith.constant 3 : index
    %c3_81 = arith.constant 3 : index
    %327 = memref.load %arg2[%c3_80, %c3_81] : memref<4x8xf32, #tpu.memory_space<smem>>
    %328 = arith.mulf %327, %0 : f32
    %329 = vector.broadcast %328 : f32 to vector<16x256xf32>
    %330 = arith.mulf %326, %329 : vector<16x256xf32>
    %331 = arith.addf %324, %330 : vector<16x256xf32>
    %c3_82 = arith.constant 3 : index
    %332 = memref.load %arg3[%c3_82] : memref<8xf32, #tpu.memory_space<smem>>
    %333 = arith.mulf %332, %0 : f32
    %334 = vector.broadcast %333 : f32 to vector<16x256xf32>
    %335 = arith.addf %331, %334 : vector<16x256xf32>
    %cst_83 = arith.constant dense<0xFF800000> : vector<16xf32>
    %336 = vector.multi_reduction <maximumf>, %335, %cst_83 [1] : vector<16x256xf32> to vector<16xf32>
    %337 = vector.shape_cast %336 : vector<16xf32> to vector<16x1xf32>
    %338 = vector.broadcast %337 : vector<16x1xf32> to vector<16x256xf32>
    %339 = arith.subf %335, %338 : vector<16x256xf32>
    %340 = math.exp %339 : vector<16x256xf32>
    %cst_84 = arith.constant dense<0.000000e+00> : vector<16x128xf32>
    %341 = tpu.matmul %340, %3, %cst_84 {dimension_numbers = #tpu.dot_dimension_numbers<[1], [0], [0], [1], [0, 0, 1, 1], [], []>, precision = #tpu.contract_precision<fp32>} : vector<16x256xf32>, vector<256x128xf32>, vector<16x128xf32> -> vector<16x128xf32>
    %342 = vector.extract_strided_slice %341 {offsets = [0, 0], sizes = [16, 1], strides = [1, 1]} : vector<16x128xf32> to vector<16x1xf32>
    %343 = tpu.reciprocal %342 : vector<16x1xf32> -> vector<16x1xf32>
    %344 = vector.extract_strided_slice %341 {offsets = [0, 1], sizes = [16, 1], strides = [1, 1]} : vector<16x128xf32> to vector<16x1xf32>
    %345 = arith.mulf %344, %343 : vector<16x1xf32>
    %cst_85 = arith.constant 3.81469731E-13 : f32
    %346 = vector.broadcast %cst_85 : f32 to vector<16x1xf32>
    %347 = arith.addf %345, %346 : vector<16x1xf32>
    %348 = vector.extract_strided_slice %341 {offsets = [0, 2], sizes = [16, 1], strides = [1, 1]} : vector<16x128xf32> to vector<16x1xf32>
    %349 = arith.mulf %348, %343 : vector<16x1xf32>
    %cst_86 = arith.constant 3.81469731E-13 : f32
    %350 = vector.broadcast %cst_86 : f32 to vector<16x1xf32>
    %351 = arith.addf %349, %350 : vector<16x1xf32>
    %352 = vector.extract_strided_slice %341 {offsets = [0, 3], sizes = [16, 1], strides = [1, 1]} : vector<16x128xf32> to vector<16x1xf32>
    %353 = arith.mulf %352, %343 : vector<16x1xf32>
    %cst_87 = arith.constant 9.671111E-6 : f32
    %354 = vector.broadcast %cst_87 : f32 to vector<16x1xf32>
    %355 = arith.addf %353, %354 : vector<16x1xf32>
    %356 = arith.mulf %347, %347 : vector<16x1xf32>
    %cst_88 = arith.constant 0.999974429 : f32
    %357 = vector.broadcast %cst_88 : f32 to vector<16x1xf32>
    %358 = arith.mulf %356, %357 : vector<16x1xf32>
    %359 = arith.subf %355, %358 : vector<16x1xf32>
    %360 = vector.extract_strided_slice %341 {offsets = [0, 4], sizes = [16, 1], strides = [1, 1]} : vector<16x128xf32> to vector<16x1xf32>
    %361 = arith.mulf %360, %343 : vector<16x1xf32>
    %cst_89 = arith.constant 5.68434195E-21 : f32
    %362 = vector.broadcast %cst_89 : f32 to vector<16x1xf32>
    %363 = arith.addf %361, %362 : vector<16x1xf32>
    %364 = arith.mulf %347, %351 : vector<16x1xf32>
    %cst_90 = arith.constant 0.999974429 : f32
    %365 = vector.broadcast %cst_90 : f32 to vector<16x1xf32>
    %366 = arith.mulf %364, %365 : vector<16x1xf32>
    %367 = arith.subf %363, %366 : vector<16x1xf32>
    %368 = vector.extract_strided_slice %341 {offsets = [0, 5], sizes = [16, 1], strides = [1, 1]} : vector<16x128xf32> to vector<16x1xf32>
    %369 = arith.mulf %368, %343 : vector<16x1xf32>
    %cst_91 = arith.constant 9.671111E-6 : f32
    %370 = vector.broadcast %cst_91 : f32 to vector<16x1xf32>
    %371 = arith.addf %369, %370 : vector<16x1xf32>
    %372 = arith.mulf %351, %351 : vector<16x1xf32>
    %cst_92 = arith.constant 0.999974429 : f32
    %373 = vector.broadcast %cst_92 : f32 to vector<16x1xf32>
    %374 = arith.mulf %372, %373 : vector<16x1xf32>
    %375 = arith.subf %371, %374 : vector<16x1xf32>
    %c0_i32_93 = arith.constant 0 : i32
    %376 = vector.broadcast %c0_i32_93 : i32 to vector<16x8xi32>
    %377 = arith.cmpi eq, %4, %376 : vector<16x8xi32>
    %c1_i32_94 = arith.constant 1 : i32
    %378 = vector.broadcast %c1_i32_94 : i32 to vector<16x8xi32>
    %379 = arith.cmpi eq, %4, %378 : vector<16x8xi32>
    %c2_i32_95 = arith.constant 2 : i32
    %380 = vector.broadcast %c2_i32_95 : i32 to vector<16x8xi32>
    %381 = arith.cmpi eq, %4, %380 : vector<16x8xi32>
    %c3_i32_96 = arith.constant 3 : i32
    %382 = vector.broadcast %c3_i32_96 : i32 to vector<16x8xi32>
    %383 = arith.cmpi eq, %4, %382 : vector<16x8xi32>
    %c4_i32_97 = arith.constant 4 : i32
    %384 = vector.broadcast %c4_i32_97 : i32 to vector<16x8xi32>
    %385 = arith.cmpi eq, %4, %384 : vector<16x8xi32>
    %386 = arith.ori %383, %385 : vector<16x8xi1>
    %c5_i32_98 = arith.constant 5 : i32
    %387 = vector.broadcast %c5_i32_98 : i32 to vector<16x8xi32>
    %388 = arith.cmpi eq, %4, %387 : vector<16x8xi32>
    %cst_99 = arith.constant 0.000000e+00 : f32
    %389 = vector.shape_cast %375 : vector<16x1xf32> to vector<16x1xf32>
    %390 = vector.broadcast %389 : vector<16x1xf32> to vector<16x8xf32>
    %391 = vector.broadcast %cst_99 : f32 to vector<16x8xf32>
    %392 = arith.select %388, %390, %391 : vector<16x8xi1>, vector<16x8xf32>
    %393 = vector.shape_cast %367 : vector<16x1xf32> to vector<16x1xf32>
    %394 = vector.broadcast %393 : vector<16x1xf32> to vector<16x8xf32>
    %395 = arith.select %386, %394, %392 : vector<16x8xi1>, vector<16x8xf32>
    %396 = vector.shape_cast %359 : vector<16x1xf32> to vector<16x1xf32>
    %397 = vector.broadcast %396 : vector<16x1xf32> to vector<16x8xf32>
    %398 = arith.select %381, %397, %395 : vector<16x8xi1>, vector<16x8xf32>
    %399 = vector.shape_cast %351 : vector<16x1xf32> to vector<16x1xf32>
    %400 = vector.broadcast %399 : vector<16x1xf32> to vector<16x8xf32>
    %401 = arith.select %379, %400, %398 : vector<16x8xi1>, vector<16x8xf32>
    %402 = vector.shape_cast %347 : vector<16x1xf32> to vector<16x1xf32>
    %403 = vector.broadcast %402 : vector<16x1xf32> to vector<16x8xf32>
    %404 = arith.select %377, %403, %401 : vector<16x8xi1>, vector<16x8xf32>
    %405 = vector.extract_strided_slice %2 {offsets = [0, 0, 0], sizes = [1, 16, 256], strides = [1, 1, 1]} : vector<4x16x256xf32> to vector<1x16x256xf32>
    %406 = vector.shape_cast %405 : vector<1x16x256xf32> to vector<16x256xf32>
    %c0_100 = arith.constant 0 : index
    %c4 = arith.constant 4 : index
    %407 = memref.load %arg2[%c0_100, %c4] : memref<4x8xf32, #tpu.memory_space<smem>>
    %408 = arith.mulf %407, %0 : f32
    %409 = vector.broadcast %408 : f32 to vector<16x256xf32>
    %410 = arith.mulf %406, %409 : vector<16x256xf32>
    %411 = vector.extract_strided_slice %2 {offsets = [1, 0, 0], sizes = [1, 16, 256], strides = [1, 1, 1]} : vector<4x16x256xf32> to vector<1x16x256xf32>
    %412 = vector.shape_cast %411 : vector<1x16x256xf32> to vector<16x256xf32>
    %c1_101 = arith.constant 1 : index
    %c4_102 = arith.constant 4 : index
    %413 = memref.load %arg2[%c1_101, %c4_102] : memref<4x8xf32, #tpu.memory_space<smem>>
    %414 = arith.mulf %413, %0 : f32
    %415 = vector.broadcast %414 : f32 to vector<16x256xf32>
    %416 = arith.mulf %412, %415 : vector<16x256xf32>
    %417 = arith.addf %410, %416 : vector<16x256xf32>
    %418 = vector.extract_strided_slice %2 {offsets = [2, 0, 0], sizes = [1, 16, 256], strides = [1, 1, 1]} : vector<4x16x256xf32> to vector<1x16x256xf32>
    %419 = vector.shape_cast %418 : vector<1x16x256xf32> to vector<16x256xf32>
    %c2_103 = arith.constant 2 : index
    %c4_104 = arith.constant 4 : index
    %420 = memref.load %arg2[%c2_103, %c4_104] : memref<4x8xf32, #tpu.memory_space<smem>>
    %421 = arith.mulf %420, %0 : f32
    %422 = vector.broadcast %421 : f32 to vector<16x256xf32>
    %423 = arith.mulf %419, %422 : vector<16x256xf32>
    %424 = arith.addf %417, %423 : vector<16x256xf32>
    %425 = vector.extract_strided_slice %2 {offsets = [3, 0, 0], sizes = [1, 16, 256], strides = [1, 1, 1]} : vector<4x16x256xf32> to vector<1x16x256xf32>
    %426 = vector.shape_cast %425 : vector<1x16x256xf32> to vector<16x256xf32>
    %c3_105 = arith.constant 3 : index
    %c4_106 = arith.constant 4 : index
    %427 = memref.load %arg2[%c3_105, %c4_106] : memref<4x8xf32, #tpu.memory_space<smem>>
    %428 = arith.mulf %427, %0 : f32
    %429 = vector.broadcast %428 : f32 to vector<16x256xf32>
    %430 = arith.mulf %426, %429 : vector<16x256xf32>
    %431 = arith.addf %424, %430 : vector<16x256xf32>
    %c4_107 = arith.constant 4 : index
    %432 = memref.load %arg3[%c4_107] : memref<8xf32, #tpu.memory_space<smem>>
    %433 = arith.mulf %432, %0 : f32
    %434 = vector.broadcast %433 : f32 to vector<16x256xf32>
    %435 = arith.addf %431, %434 : vector<16x256xf32>
    %cst_108 = arith.constant dense<0xFF800000> : vector<16xf32>
    %436 = vector.multi_reduction <maximumf>, %435, %cst_108 [1] : vector<16x256xf32> to vector<16xf32>
    %437 = vector.shape_cast %436 : vector<16xf32> to vector<16x1xf32>
    %438 = vector.broadcast %437 : vector<16x1xf32> to vector<16x256xf32>
    %439 = arith.subf %435, %438 : vector<16x256xf32>
    %440 = math.exp %439 : vector<16x256xf32>
    %cst_109 = arith.constant dense<0.000000e+00> : vector<16x128xf32>
    %441 = tpu.matmul %440, %3, %cst_109 {dimension_numbers = #tpu.dot_dimension_numbers<[1], [0], [0], [1], [0, 0, 1, 1], [], []>, precision = #tpu.contract_precision<fp32>} : vector<16x256xf32>, vector<256x128xf32>, vector<16x128xf32> -> vector<16x128xf32>
    %442 = vector.extract_strided_slice %441 {offsets = [0, 0], sizes = [16, 1], strides = [1, 1]} : vector<16x128xf32> to vector<16x1xf32>
    %443 = tpu.reciprocal %442 : vector<16x1xf32> -> vector<16x1xf32>
    %444 = vector.extract_strided_slice %441 {offsets = [0, 1], sizes = [16, 1], strides = [1, 1]} : vector<16x128xf32> to vector<16x1xf32>
    %445 = arith.mulf %444, %443 : vector<16x1xf32>
    %cst_110 = arith.constant 3.81469731E-13 : f32
    %446 = vector.broadcast %cst_110 : f32 to vector<16x1xf32>
    %447 = arith.addf %445, %446 : vector<16x1xf32>
    %448 = vector.extract_strided_slice %441 {offsets = [0, 2], sizes = [16, 1], strides = [1, 1]} : vector<16x128xf32> to vector<16x1xf32>
    %449 = arith.mulf %448, %443 : vector<16x1xf32>
    %cst_111 = arith.constant 3.81469731E-13 : f32
    %450 = vector.broadcast %cst_111 : f32 to vector<16x1xf32>
    %451 = arith.addf %449, %450 : vector<16x1xf32>
    %452 = vector.extract_strided_slice %441 {offsets = [0, 3], sizes = [16, 1], strides = [1, 1]} : vector<16x128xf32> to vector<16x1xf32>
    %453 = arith.mulf %452, %443 : vector<16x1xf32>
    %cst_112 = arith.constant 9.671111E-6 : f32
    %454 = vector.broadcast %cst_112 : f32 to vector<16x1xf32>
    %455 = arith.addf %453, %454 : vector<16x1xf32>
    %456 = arith.mulf %447, %447 : vector<16x1xf32>
    %cst_113 = arith.constant 0.999974429 : f32
    %457 = vector.broadcast %cst_113 : f32 to vector<16x1xf32>
    %458 = arith.mulf %456, %457 : vector<16x1xf32>
    %459 = arith.subf %455, %458 : vector<16x1xf32>
    %460 = vector.extract_strided_slice %441 {offsets = [0, 4], sizes = [16, 1], strides = [1, 1]} : vector<16x128xf32> to vector<16x1xf32>
    %461 = arith.mulf %460, %443 : vector<16x1xf32>
    %cst_114 = arith.constant 5.68434195E-21 : f32
    %462 = vector.broadcast %cst_114 : f32 to vector<16x1xf32>
    %463 = arith.addf %461, %462 : vector<16x1xf32>
    %464 = arith.mulf %447, %451 : vector<16x1xf32>
    %cst_115 = arith.constant 0.999974429 : f32
    %465 = vector.broadcast %cst_115 : f32 to vector<16x1xf32>
    %466 = arith.mulf %464, %465 : vector<16x1xf32>
    %467 = arith.subf %463, %466 : vector<16x1xf32>
    %468 = vector.extract_strided_slice %441 {offsets = [0, 5], sizes = [16, 1], strides = [1, 1]} : vector<16x128xf32> to vector<16x1xf32>
    %469 = arith.mulf %468, %443 : vector<16x1xf32>
    %cst_116 = arith.constant 9.671111E-6 : f32
    %470 = vector.broadcast %cst_116 : f32 to vector<16x1xf32>
    %471 = arith.addf %469, %470 : vector<16x1xf32>
    %472 = arith.mulf %451, %451 : vector<16x1xf32>
    %cst_117 = arith.constant 0.999974429 : f32
    %473 = vector.broadcast %cst_117 : f32 to vector<16x1xf32>
    %474 = arith.mulf %472, %473 : vector<16x1xf32>
    %475 = arith.subf %471, %474 : vector<16x1xf32>
    %c0_i32_118 = arith.constant 0 : i32
    %476 = vector.broadcast %c0_i32_118 : i32 to vector<16x8xi32>
    %477 = arith.cmpi eq, %4, %476 : vector<16x8xi32>
    %c1_i32_119 = arith.constant 1 : i32
    %478 = vector.broadcast %c1_i32_119 : i32 to vector<16x8xi32>
    %479 = arith.cmpi eq, %4, %478 : vector<16x8xi32>
    %c2_i32_120 = arith.constant 2 : i32
    %480 = vector.broadcast %c2_i32_120 : i32 to vector<16x8xi32>
    %481 = arith.cmpi eq, %4, %480 : vector<16x8xi32>
    %c3_i32_121 = arith.constant 3 : i32
    %482 = vector.broadcast %c3_i32_121 : i32 to vector<16x8xi32>
    %483 = arith.cmpi eq, %4, %482 : vector<16x8xi32>
    %c4_i32_122 = arith.constant 4 : i32
    %484 = vector.broadcast %c4_i32_122 : i32 to vector<16x8xi32>
    %485 = arith.cmpi eq, %4, %484 : vector<16x8xi32>
    %486 = arith.ori %483, %485 : vector<16x8xi1>
    %c5_i32_123 = arith.constant 5 : i32
    %487 = vector.broadcast %c5_i32_123 : i32 to vector<16x8xi32>
    %488 = arith.cmpi eq, %4, %487 : vector<16x8xi32>
    %cst_124 = arith.constant 0.000000e+00 : f32
    %489 = vector.shape_cast %475 : vector<16x1xf32> to vector<16x1xf32>
    %490 = vector.broadcast %489 : vector<16x1xf32> to vector<16x8xf32>
    %491 = vector.broadcast %cst_124 : f32 to vector<16x8xf32>
    %492 = arith.select %488, %490, %491 : vector<16x8xi1>, vector<16x8xf32>
    %493 = vector.shape_cast %467 : vector<16x1xf32> to vector<16x1xf32>
    %494 = vector.broadcast %493 : vector<16x1xf32> to vector<16x8xf32>
    %495 = arith.select %486, %494, %492 : vector<16x8xi1>, vector<16x8xf32>
    %496 = vector.shape_cast %459 : vector<16x1xf32> to vector<16x1xf32>
    %497 = vector.broadcast %496 : vector<16x1xf32> to vector<16x8xf32>
    %498 = arith.select %481, %497, %495 : vector<16x8xi1>, vector<16x8xf32>
    %499 = vector.shape_cast %451 : vector<16x1xf32> to vector<16x1xf32>
    %500 = vector.broadcast %499 : vector<16x1xf32> to vector<16x8xf32>
    %501 = arith.select %479, %500, %498 : vector<16x8xi1>, vector<16x8xf32>
    %502 = vector.shape_cast %447 : vector<16x1xf32> to vector<16x1xf32>
    %503 = vector.broadcast %502 : vector<16x1xf32> to vector<16x8xf32>
    %504 = arith.select %477, %503, %501 : vector<16x8xi1>, vector<16x8xf32>
    %505 = vector.extract_strided_slice %2 {offsets = [0, 0, 0], sizes = [1, 16, 256], strides = [1, 1, 1]} : vector<4x16x256xf32> to vector<1x16x256xf32>
    %506 = vector.shape_cast %505 : vector<1x16x256xf32> to vector<16x256xf32>
    %c0_125 = arith.constant 0 : index
    %c5 = arith.constant 5 : index
    %507 = memref.load %arg2[%c0_125, %c5] : memref<4x8xf32, #tpu.memory_space<smem>>
    %508 = arith.mulf %507, %0 : f32
    %509 = vector.broadcast %508 : f32 to vector<16x256xf32>
    %510 = arith.mulf %506, %509 : vector<16x256xf32>
    %511 = vector.extract_strided_slice %2 {offsets = [1, 0, 0], sizes = [1, 16, 256], strides = [1, 1, 1]} : vector<4x16x256xf32> to vector<1x16x256xf32>
    %512 = vector.shape_cast %511 : vector<1x16x256xf32> to vector<16x256xf32>
    %c1_126 = arith.constant 1 : index
    %c5_127 = arith.constant 5 : index
    %513 = memref.load %arg2[%c1_126, %c5_127] : memref<4x8xf32, #tpu.memory_space<smem>>
    %514 = arith.mulf %513, %0 : f32
    %515 = vector.broadcast %514 : f32 to vector<16x256xf32>
    %516 = arith.mulf %512, %515 : vector<16x256xf32>
    %517 = arith.addf %510, %516 : vector<16x256xf32>
    %518 = vector.extract_strided_slice %2 {offsets = [2, 0, 0], sizes = [1, 16, 256], strides = [1, 1, 1]} : vector<4x16x256xf32> to vector<1x16x256xf32>
    %519 = vector.shape_cast %518 : vector<1x16x256xf32> to vector<16x256xf32>
    %c2_128 = arith.constant 2 : index
    %c5_129 = arith.constant 5 : index
    %520 = memref.load %arg2[%c2_128, %c5_129] : memref<4x8xf32, #tpu.memory_space<smem>>
    %521 = arith.mulf %520, %0 : f32
    %522 = vector.broadcast %521 : f32 to vector<16x256xf32>
    %523 = arith.mulf %519, %522 : vector<16x256xf32>
    %524 = arith.addf %517, %523 : vector<16x256xf32>
    %525 = vector.extract_strided_slice %2 {offsets = [3, 0, 0], sizes = [1, 16, 256], strides = [1, 1, 1]} : vector<4x16x256xf32> to vector<1x16x256xf32>
    %526 = vector.shape_cast %525 : vector<1x16x256xf32> to vector<16x256xf32>
    %c3_130 = arith.constant 3 : index
    %c5_131 = arith.constant 5 : index
    %527 = memref.load %arg2[%c3_130, %c5_131] : memref<4x8xf32, #tpu.memory_space<smem>>
    %528 = arith.mulf %527, %0 : f32
    %529 = vector.broadcast %528 : f32 to vector<16x256xf32>
    %530 = arith.mulf %526, %529 : vector<16x256xf32>
    %531 = arith.addf %524, %530 : vector<16x256xf32>
    %c5_132 = arith.constant 5 : index
    %532 = memref.load %arg3[%c5_132] : memref<8xf32, #tpu.memory_space<smem>>
    %533 = arith.mulf %532, %0 : f32
    %534 = vector.broadcast %533 : f32 to vector<16x256xf32>
    %535 = arith.addf %531, %534 : vector<16x256xf32>
    %cst_133 = arith.constant dense<0xFF800000> : vector<16xf32>
    %536 = vector.multi_reduction <maximumf>, %535, %cst_133 [1] : vector<16x256xf32> to vector<16xf32>
    %537 = vector.shape_cast %536 : vector<16xf32> to vector<16x1xf32>
    %538 = vector.broadcast %537 : vector<16x1xf32> to vector<16x256xf32>
    %539 = arith.subf %535, %538 : vector<16x256xf32>
    %540 = math.exp %539 : vector<16x256xf32>
    %cst_134 = arith.constant dense<0.000000e+00> : vector<16x128xf32>
    %541 = tpu.matmul %540, %3, %cst_134 {dimension_numbers = #tpu.dot_dimension_numbers<[1], [0], [0], [1], [0, 0, 1, 1], [], []>, precision = #tpu.contract_precision<fp32>} : vector<16x256xf32>, vector<256x128xf32>, vector<16x128xf32> -> vector<16x128xf32>
    %542 = vector.extract_strided_slice %541 {offsets = [0, 0], sizes = [16, 1], strides = [1, 1]} : vector<16x128xf32> to vector<16x1xf32>
    %543 = tpu.reciprocal %542 : vector<16x1xf32> -> vector<16x1xf32>
    %544 = vector.extract_strided_slice %541 {offsets = [0, 1], sizes = [16, 1], strides = [1, 1]} : vector<16x128xf32> to vector<16x1xf32>
    %545 = arith.mulf %544, %543 : vector<16x1xf32>
    %cst_135 = arith.constant 3.81469731E-13 : f32
    %546 = vector.broadcast %cst_135 : f32 to vector<16x1xf32>
    %547 = arith.addf %545, %546 : vector<16x1xf32>
    %548 = vector.extract_strided_slice %541 {offsets = [0, 2], sizes = [16, 1], strides = [1, 1]} : vector<16x128xf32> to vector<16x1xf32>
    %549 = arith.mulf %548, %543 : vector<16x1xf32>
    %cst_136 = arith.constant 3.81469731E-13 : f32
    %550 = vector.broadcast %cst_136 : f32 to vector<16x1xf32>
    %551 = arith.addf %549, %550 : vector<16x1xf32>
    %552 = vector.extract_strided_slice %541 {offsets = [0, 3], sizes = [16, 1], strides = [1, 1]} : vector<16x128xf32> to vector<16x1xf32>
    %553 = arith.mulf %552, %543 : vector<16x1xf32>
    %cst_137 = arith.constant 9.671111E-6 : f32
    %554 = vector.broadcast %cst_137 : f32 to vector<16x1xf32>
    %555 = arith.addf %553, %554 : vector<16x1xf32>
    %556 = arith.mulf %547, %547 : vector<16x1xf32>
    %cst_138 = arith.constant 0.999974429 : f32
    %557 = vector.broadcast %cst_138 : f32 to vector<16x1xf32>
    %558 = arith.mulf %556, %557 : vector<16x1xf32>
    %559 = arith.subf %555, %558 : vector<16x1xf32>
    %560 = vector.extract_strided_slice %541 {offsets = [0, 4], sizes = [16, 1], strides = [1, 1]} : vector<16x128xf32> to vector<16x1xf32>
    %561 = arith.mulf %560, %543 : vector<16x1xf32>
    %cst_139 = arith.constant 5.68434195E-21 : f32
    %562 = vector.broadcast %cst_139 : f32 to vector<16x1xf32>
    %563 = arith.addf %561, %562 : vector<16x1xf32>
    %564 = arith.mulf %547, %551 : vector<16x1xf32>
    %cst_140 = arith.constant 0.999974429 : f32
    %565 = vector.broadcast %cst_140 : f32 to vector<16x1xf32>
    %566 = arith.mulf %564, %565 : vector<16x1xf32>
    %567 = arith.subf %563, %566 : vector<16x1xf32>
    %568 = vector.extract_strided_slice %541 {offsets = [0, 5], sizes = [16, 1], strides = [1, 1]} : vector<16x128xf32> to vector<16x1xf32>
    %569 = arith.mulf %568, %543 : vector<16x1xf32>
    %cst_141 = arith.constant 9.671111E-6 : f32
    %570 = vector.broadcast %cst_141 : f32 to vector<16x1xf32>
    %571 = arith.addf %569, %570 : vector<16x1xf32>
    %572 = arith.mulf %551, %551 : vector<16x1xf32>
    %cst_142 = arith.constant 0.999974429 : f32
    %573 = vector.broadcast %cst_142 : f32 to vector<16x1xf32>
    %574 = arith.mulf %572, %573 : vector<16x1xf32>
    %575 = arith.subf %571, %574 : vector<16x1xf32>
    %c0_i32_143 = arith.constant 0 : i32
    %576 = vector.broadcast %c0_i32_143 : i32 to vector<16x8xi32>
    %577 = arith.cmpi eq, %4, %576 : vector<16x8xi32>
    %c1_i32_144 = arith.constant 1 : i32
    %578 = vector.broadcast %c1_i32_144 : i32 to vector<16x8xi32>
    %579 = arith.cmpi eq, %4, %578 : vector<16x8xi32>
    %c2_i32_145 = arith.constant 2 : i32
    %580 = vector.broadcast %c2_i32_145 : i32 to vector<16x8xi32>
    %581 = arith.cmpi eq, %4, %580 : vector<16x8xi32>
    %c3_i32_146 = arith.constant 3 : i32
    %582 = vector.broadcast %c3_i32_146 : i32 to vector<16x8xi32>
    %583 = arith.cmpi eq, %4, %582 : vector<16x8xi32>
    %c4_i32_147 = arith.constant 4 : i32
    %584 = vector.broadcast %c4_i32_147 : i32 to vector<16x8xi32>
    %585 = arith.cmpi eq, %4, %584 : vector<16x8xi32>
    %586 = arith.ori %583, %585 : vector<16x8xi1>
    %c5_i32_148 = arith.constant 5 : i32
    %587 = vector.broadcast %c5_i32_148 : i32 to vector<16x8xi32>
    %588 = arith.cmpi eq, %4, %587 : vector<16x8xi32>
    %cst_149 = arith.constant 0.000000e+00 : f32
    %589 = vector.shape_cast %575 : vector<16x1xf32> to vector<16x1xf32>
    %590 = vector.broadcast %589 : vector<16x1xf32> to vector<16x8xf32>
    %591 = vector.broadcast %cst_149 : f32 to vector<16x8xf32>
    %592 = arith.select %588, %590, %591 : vector<16x8xi1>, vector<16x8xf32>
    %593 = vector.shape_cast %567 : vector<16x1xf32> to vector<16x1xf32>
    %594 = vector.broadcast %593 : vector<16x1xf32> to vector<16x8xf32>
    %595 = arith.select %586, %594, %592 : vector<16x8xi1>, vector<16x8xf32>
    %596 = vector.shape_cast %559 : vector<16x1xf32> to vector<16x1xf32>
    %597 = vector.broadcast %596 : vector<16x1xf32> to vector<16x8xf32>
    %598 = arith.select %581, %597, %595 : vector<16x8xi1>, vector<16x8xf32>
    %599 = vector.shape_cast %551 : vector<16x1xf32> to vector<16x1xf32>
    %600 = vector.broadcast %599 : vector<16x1xf32> to vector<16x8xf32>
    %601 = arith.select %579, %600, %598 : vector<16x8xi1>, vector<16x8xf32>
    %602 = vector.shape_cast %547 : vector<16x1xf32> to vector<16x1xf32>
    %603 = vector.broadcast %602 : vector<16x1xf32> to vector<16x8xf32>
    %604 = arith.select %577, %603, %601 : vector<16x8xi1>, vector<16x8xf32>
    %605 = vector.extract_strided_slice %2 {offsets = [0, 0, 0], sizes = [1, 16, 256], strides = [1, 1, 1]} : vector<4x16x256xf32> to vector<1x16x256xf32>
    %606 = vector.shape_cast %605 : vector<1x16x256xf32> to vector<16x256xf32>
    %c0_150 = arith.constant 0 : index
    %c6 = arith.constant 6 : index
    %607 = memref.load %arg2[%c0_150, %c6] : memref<4x8xf32, #tpu.memory_space<smem>>
    %608 = arith.mulf %607, %0 : f32
    %609 = vector.broadcast %608 : f32 to vector<16x256xf32>
    %610 = arith.mulf %606, %609 : vector<16x256xf32>
    %611 = vector.extract_strided_slice %2 {offsets = [1, 0, 0], sizes = [1, 16, 256], strides = [1, 1, 1]} : vector<4x16x256xf32> to vector<1x16x256xf32>
    %612 = vector.shape_cast %611 : vector<1x16x256xf32> to vector<16x256xf32>
    %c1_151 = arith.constant 1 : index
    %c6_152 = arith.constant 6 : index
    %613 = memref.load %arg2[%c1_151, %c6_152] : memref<4x8xf32, #tpu.memory_space<smem>>
    %614 = arith.mulf %613, %0 : f32
    %615 = vector.broadcast %614 : f32 to vector<16x256xf32>
    %616 = arith.mulf %612, %615 : vector<16x256xf32>
    %617 = arith.addf %610, %616 : vector<16x256xf32>
    %618 = vector.extract_strided_slice %2 {offsets = [2, 0, 0], sizes = [1, 16, 256], strides = [1, 1, 1]} : vector<4x16x256xf32> to vector<1x16x256xf32>
    %619 = vector.shape_cast %618 : vector<1x16x256xf32> to vector<16x256xf32>
    %c2_153 = arith.constant 2 : index
    %c6_154 = arith.constant 6 : index
    %620 = memref.load %arg2[%c2_153, %c6_154] : memref<4x8xf32, #tpu.memory_space<smem>>
    %621 = arith.mulf %620, %0 : f32
    %622 = vector.broadcast %621 : f32 to vector<16x256xf32>
    %623 = arith.mulf %619, %622 : vector<16x256xf32>
    %624 = arith.addf %617, %623 : vector<16x256xf32>
    %625 = vector.extract_strided_slice %2 {offsets = [3, 0, 0], sizes = [1, 16, 256], strides = [1, 1, 1]} : vector<4x16x256xf32> to vector<1x16x256xf32>
    %626 = vector.shape_cast %625 : vector<1x16x256xf32> to vector<16x256xf32>
    %c3_155 = arith.constant 3 : index
    %c6_156 = arith.constant 6 : index
    %627 = memref.load %arg2[%c3_155, %c6_156] : memref<4x8xf32, #tpu.memory_space<smem>>
    %628 = arith.mulf %627, %0 : f32
    %629 = vector.broadcast %628 : f32 to vector<16x256xf32>
    %630 = arith.mulf %626, %629 : vector<16x256xf32>
    %631 = arith.addf %624, %630 : vector<16x256xf32>
    %c6_157 = arith.constant 6 : index
    %632 = memref.load %arg3[%c6_157] : memref<8xf32, #tpu.memory_space<smem>>
    %633 = arith.mulf %632, %0 : f32
    %634 = vector.broadcast %633 : f32 to vector<16x256xf32>
    %635 = arith.addf %631, %634 : vector<16x256xf32>
    %cst_158 = arith.constant dense<0xFF800000> : vector<16xf32>
    %636 = vector.multi_reduction <maximumf>, %635, %cst_158 [1] : vector<16x256xf32> to vector<16xf32>
    %637 = vector.shape_cast %636 : vector<16xf32> to vector<16x1xf32>
    %638 = vector.broadcast %637 : vector<16x1xf32> to vector<16x256xf32>
    %639 = arith.subf %635, %638 : vector<16x256xf32>
    %640 = math.exp %639 : vector<16x256xf32>
    %cst_159 = arith.constant dense<0.000000e+00> : vector<16x128xf32>
    %641 = tpu.matmul %640, %3, %cst_159 {dimension_numbers = #tpu.dot_dimension_numbers<[1], [0], [0], [1], [0, 0, 1, 1], [], []>, precision = #tpu.contract_precision<fp32>} : vector<16x256xf32>, vector<256x128xf32>, vector<16x128xf32> -> vector<16x128xf32>
    %642 = vector.extract_strided_slice %641 {offsets = [0, 0], sizes = [16, 1], strides = [1, 1]} : vector<16x128xf32> to vector<16x1xf32>
    %643 = tpu.reciprocal %642 : vector<16x1xf32> -> vector<16x1xf32>
    %644 = vector.extract_strided_slice %641 {offsets = [0, 1], sizes = [16, 1], strides = [1, 1]} : vector<16x128xf32> to vector<16x1xf32>
    %645 = arith.mulf %644, %643 : vector<16x1xf32>
    %cst_160 = arith.constant 3.81469731E-13 : f32
    %646 = vector.broadcast %cst_160 : f32 to vector<16x1xf32>
    %647 = arith.addf %645, %646 : vector<16x1xf32>
    %648 = vector.extract_strided_slice %641 {offsets = [0, 2], sizes = [16, 1], strides = [1, 1]} : vector<16x128xf32> to vector<16x1xf32>
    %649 = arith.mulf %648, %643 : vector<16x1xf32>
    %cst_161 = arith.constant 3.81469731E-13 : f32
    %650 = vector.broadcast %cst_161 : f32 to vector<16x1xf32>
    %651 = arith.addf %649, %650 : vector<16x1xf32>
    %652 = vector.extract_strided_slice %641 {offsets = [0, 3], sizes = [16, 1], strides = [1, 1]} : vector<16x128xf32> to vector<16x1xf32>
    %653 = arith.mulf %652, %643 : vector<16x1xf32>
    %cst_162 = arith.constant 9.671111E-6 : f32
    %654 = vector.broadcast %cst_162 : f32 to vector<16x1xf32>
    %655 = arith.addf %653, %654 : vector<16x1xf32>
    %656 = arith.mulf %647, %647 : vector<16x1xf32>
    %cst_163 = arith.constant 0.999974429 : f32
    %657 = vector.broadcast %cst_163 : f32 to vector<16x1xf32>
    %658 = arith.mulf %656, %657 : vector<16x1xf32>
    %659 = arith.subf %655, %658 : vector<16x1xf32>
    %660 = vector.extract_strided_slice %641 {offsets = [0, 4], sizes = [16, 1], strides = [1, 1]} : vector<16x128xf32> to vector<16x1xf32>
    %661 = arith.mulf %660, %643 : vector<16x1xf32>
    %cst_164 = arith.constant 5.68434195E-21 : f32
    %662 = vector.broadcast %cst_164 : f32 to vector<16x1xf32>
    %663 = arith.addf %661, %662 : vector<16x1xf32>
    %664 = arith.mulf %647, %651 : vector<16x1xf32>
    %cst_165 = arith.constant 0.999974429 : f32
    %665 = vector.broadcast %cst_165 : f32 to vector<16x1xf32>
    %666 = arith.mulf %664, %665 : vector<16x1xf32>
    %667 = arith.subf %663, %666 : vector<16x1xf32>
    %668 = vector.extract_strided_slice %641 {offsets = [0, 5], sizes = [16, 1], strides = [1, 1]} : vector<16x128xf32> to vector<16x1xf32>
    %669 = arith.mulf %668, %643 : vector<16x1xf32>
    %cst_166 = arith.constant 9.671111E-6 : f32
    %670 = vector.broadcast %cst_166 : f32 to vector<16x1xf32>
    %671 = arith.addf %669, %670 : vector<16x1xf32>
    %672 = arith.mulf %651, %651 : vector<16x1xf32>
    %cst_167 = arith.constant 0.999974429 : f32
    %673 = vector.broadcast %cst_167 : f32 to vector<16x1xf32>
    %674 = arith.mulf %672, %673 : vector<16x1xf32>
    %675 = arith.subf %671, %674 : vector<16x1xf32>
    %c0_i32_168 = arith.constant 0 : i32
    %676 = vector.broadcast %c0_i32_168 : i32 to vector<16x8xi32>
    %677 = arith.cmpi eq, %4, %676 : vector<16x8xi32>
    %c1_i32_169 = arith.constant 1 : i32
    %678 = vector.broadcast %c1_i32_169 : i32 to vector<16x8xi32>
    %679 = arith.cmpi eq, %4, %678 : vector<16x8xi32>
    %c2_i32_170 = arith.constant 2 : i32
    %680 = vector.broadcast %c2_i32_170 : i32 to vector<16x8xi32>
    %681 = arith.cmpi eq, %4, %680 : vector<16x8xi32>
    %c3_i32_171 = arith.constant 3 : i32
    %682 = vector.broadcast %c3_i32_171 : i32 to vector<16x8xi32>
    %683 = arith.cmpi eq, %4, %682 : vector<16x8xi32>
    %c4_i32_172 = arith.constant 4 : i32
    %684 = vector.broadcast %c4_i32_172 : i32 to vector<16x8xi32>
    %685 = arith.cmpi eq, %4, %684 : vector<16x8xi32>
    %686 = arith.ori %683, %685 : vector<16x8xi1>
    %c5_i32_173 = arith.constant 5 : i32
    %687 = vector.broadcast %c5_i32_173 : i32 to vector<16x8xi32>
    %688 = arith.cmpi eq, %4, %687 : vector<16x8xi32>
    %cst_174 = arith.constant 0.000000e+00 : f32
    %689 = vector.shape_cast %675 : vector<16x1xf32> to vector<16x1xf32>
    %690 = vector.broadcast %689 : vector<16x1xf32> to vector<16x8xf32>
    %691 = vector.broadcast %cst_174 : f32 to vector<16x8xf32>
    %692 = arith.select %688, %690, %691 : vector<16x8xi1>, vector<16x8xf32>
    %693 = vector.shape_cast %667 : vector<16x1xf32> to vector<16x1xf32>
    %694 = vector.broadcast %693 : vector<16x1xf32> to vector<16x8xf32>
    %695 = arith.select %686, %694, %692 : vector<16x8xi1>, vector<16x8xf32>
    %696 = vector.shape_cast %659 : vector<16x1xf32> to vector<16x1xf32>
    %697 = vector.broadcast %696 : vector<16x1xf32> to vector<16x8xf32>
    %698 = arith.select %681, %697, %695 : vector<16x8xi1>, vector<16x8xf32>
    %699 = vector.shape_cast %651 : vector<16x1xf32> to vector<16x1xf32>
    %700 = vector.broadcast %699 : vector<16x1xf32> to vector<16x8xf32>
    %701 = arith.select %679, %700, %698 : vector<16x8xi1>, vector<16x8xf32>
    %702 = vector.shape_cast %647 : vector<16x1xf32> to vector<16x1xf32>
    %703 = vector.broadcast %702 : vector<16x1xf32> to vector<16x8xf32>
    %704 = arith.select %677, %703, %701 : vector<16x8xi1>, vector<16x8xf32>
    %705 = vector.extract_strided_slice %2 {offsets = [0, 0, 0], sizes = [1, 16, 256], strides = [1, 1, 1]} : vector<4x16x256xf32> to vector<1x16x256xf32>
    %706 = vector.shape_cast %705 : vector<1x16x256xf32> to vector<16x256xf32>
    %c0_175 = arith.constant 0 : index
    %c7 = arith.constant 7 : index
    %707 = memref.load %arg2[%c0_175, %c7] : memref<4x8xf32, #tpu.memory_space<smem>>
    %708 = arith.mulf %707, %0 : f32
    %709 = vector.broadcast %708 : f32 to vector<16x256xf32>
    %710 = arith.mulf %706, %709 : vector<16x256xf32>
    %711 = vector.extract_strided_slice %2 {offsets = [1, 0, 0], sizes = [1, 16, 256], strides = [1, 1, 1]} : vector<4x16x256xf32> to vector<1x16x256xf32>
    %712 = vector.shape_cast %711 : vector<1x16x256xf32> to vector<16x256xf32>
    %c1_176 = arith.constant 1 : index
    %c7_177 = arith.constant 7 : index
    %713 = memref.load %arg2[%c1_176, %c7_177] : memref<4x8xf32, #tpu.memory_space<smem>>
    %714 = arith.mulf %713, %0 : f32
    %715 = vector.broadcast %714 : f32 to vector<16x256xf32>
    %716 = arith.mulf %712, %715 : vector<16x256xf32>
    %717 = arith.addf %710, %716 : vector<16x256xf32>
    %718 = vector.extract_strided_slice %2 {offsets = [2, 0, 0], sizes = [1, 16, 256], strides = [1, 1, 1]} : vector<4x16x256xf32> to vector<1x16x256xf32>
    %719 = vector.shape_cast %718 : vector<1x16x256xf32> to vector<16x256xf32>
    %c2_178 = arith.constant 2 : index
    %c7_179 = arith.constant 7 : index
    %720 = memref.load %arg2[%c2_178, %c7_179] : memref<4x8xf32, #tpu.memory_space<smem>>
    %721 = arith.mulf %720, %0 : f32
    %722 = vector.broadcast %721 : f32 to vector<16x256xf32>
    %723 = arith.mulf %719, %722 : vector<16x256xf32>
    %724 = arith.addf %717, %723 : vector<16x256xf32>
    %725 = vector.extract_strided_slice %2 {offsets = [3, 0, 0], sizes = [1, 16, 256], strides = [1, 1, 1]} : vector<4x16x256xf32> to vector<1x16x256xf32>
    %726 = vector.shape_cast %725 : vector<1x16x256xf32> to vector<16x256xf32>
    %c3_180 = arith.constant 3 : index
    %c7_181 = arith.constant 7 : index
    %727 = memref.load %arg2[%c3_180, %c7_181] : memref<4x8xf32, #tpu.memory_space<smem>>
    %728 = arith.mulf %727, %0 : f32
    %729 = vector.broadcast %728 : f32 to vector<16x256xf32>
    %730 = arith.mulf %726, %729 : vector<16x256xf32>
    %731 = arith.addf %724, %730 : vector<16x256xf32>
    %c7_182 = arith.constant 7 : index
    %732 = memref.load %arg3[%c7_182] : memref<8xf32, #tpu.memory_space<smem>>
    %733 = arith.mulf %732, %0 : f32
    %734 = vector.broadcast %733 : f32 to vector<16x256xf32>
    %735 = arith.addf %731, %734 : vector<16x256xf32>
    %cst_183 = arith.constant dense<0xFF800000> : vector<16xf32>
    %736 = vector.multi_reduction <maximumf>, %735, %cst_183 [1] : vector<16x256xf32> to vector<16xf32>
    %737 = vector.shape_cast %736 : vector<16xf32> to vector<16x1xf32>
    %738 = vector.broadcast %737 : vector<16x1xf32> to vector<16x256xf32>
    %739 = arith.subf %735, %738 : vector<16x256xf32>
    %740 = math.exp %739 : vector<16x256xf32>
    %cst_184 = arith.constant dense<0.000000e+00> : vector<16x128xf32>
    %741 = tpu.matmul %740, %3, %cst_184 {dimension_numbers = #tpu.dot_dimension_numbers<[1], [0], [0], [1], [0, 0, 1, 1], [], []>, precision = #tpu.contract_precision<fp32>} : vector<16x256xf32>, vector<256x128xf32>, vector<16x128xf32> -> vector<16x128xf32>
    %742 = vector.extract_strided_slice %741 {offsets = [0, 0], sizes = [16, 1], strides = [1, 1]} : vector<16x128xf32> to vector<16x1xf32>
    %743 = tpu.reciprocal %742 : vector<16x1xf32> -> vector<16x1xf32>
    %744 = vector.extract_strided_slice %741 {offsets = [0, 1], sizes = [16, 1], strides = [1, 1]} : vector<16x128xf32> to vector<16x1xf32>
    %745 = arith.mulf %744, %743 : vector<16x1xf32>
    %cst_185 = arith.constant 3.81469731E-13 : f32
    %746 = vector.broadcast %cst_185 : f32 to vector<16x1xf32>
    %747 = arith.addf %745, %746 : vector<16x1xf32>
    %748 = vector.extract_strided_slice %741 {offsets = [0, 2], sizes = [16, 1], strides = [1, 1]} : vector<16x128xf32> to vector<16x1xf32>
    %749 = arith.mulf %748, %743 : vector<16x1xf32>
    %cst_186 = arith.constant 3.81469731E-13 : f32
    %750 = vector.broadcast %cst_186 : f32 to vector<16x1xf32>
    %751 = arith.addf %749, %750 : vector<16x1xf32>
    %752 = vector.extract_strided_slice %741 {offsets = [0, 3], sizes = [16, 1], strides = [1, 1]} : vector<16x128xf32> to vector<16x1xf32>
    %753 = arith.mulf %752, %743 : vector<16x1xf32>
    %cst_187 = arith.constant 9.671111E-6 : f32
    %754 = vector.broadcast %cst_187 : f32 to vector<16x1xf32>
    %755 = arith.addf %753, %754 : vector<16x1xf32>
    %756 = arith.mulf %747, %747 : vector<16x1xf32>
    %cst_188 = arith.constant 0.999974429 : f32
    %757 = vector.broadcast %cst_188 : f32 to vector<16x1xf32>
    %758 = arith.mulf %756, %757 : vector<16x1xf32>
    %759 = arith.subf %755, %758 : vector<16x1xf32>
    %760 = vector.extract_strided_slice %741 {offsets = [0, 4], sizes = [16, 1], strides = [1, 1]} : vector<16x128xf32> to vector<16x1xf32>
    %761 = arith.mulf %760, %743 : vector<16x1xf32>
    %cst_189 = arith.constant 5.68434195E-21 : f32
    %762 = vector.broadcast %cst_189 : f32 to vector<16x1xf32>
    %763 = arith.addf %761, %762 : vector<16x1xf32>
    %764 = arith.mulf %747, %751 : vector<16x1xf32>
    %cst_190 = arith.constant 0.999974429 : f32
    %765 = vector.broadcast %cst_190 : f32 to vector<16x1xf32>
    %766 = arith.mulf %764, %765 : vector<16x1xf32>
    %767 = arith.subf %763, %766 : vector<16x1xf32>
    %768 = vector.extract_strided_slice %741 {offsets = [0, 5], sizes = [16, 1], strides = [1, 1]} : vector<16x128xf32> to vector<16x1xf32>
    %769 = arith.mulf %768, %743 : vector<16x1xf32>
    %cst_191 = arith.constant 9.671111E-6 : f32
    %770 = vector.broadcast %cst_191 : f32 to vector<16x1xf32>
    %771 = arith.addf %769, %770 : vector<16x1xf32>
    %772 = arith.mulf %751, %751 : vector<16x1xf32>
    %cst_192 = arith.constant 0.999974429 : f32
    %773 = vector.broadcast %cst_192 : f32 to vector<16x1xf32>
    %774 = arith.mulf %772, %773 : vector<16x1xf32>
    %775 = arith.subf %771, %774 : vector<16x1xf32>
    %c0_i32_193 = arith.constant 0 : i32
    %776 = vector.broadcast %c0_i32_193 : i32 to vector<16x8xi32>
    %777 = arith.cmpi eq, %4, %776 : vector<16x8xi32>
    %c1_i32_194 = arith.constant 1 : i32
    %778 = vector.broadcast %c1_i32_194 : i32 to vector<16x8xi32>
    %779 = arith.cmpi eq, %4, %778 : vector<16x8xi32>
    %c2_i32_195 = arith.constant 2 : i32
    %780 = vector.broadcast %c2_i32_195 : i32 to vector<16x8xi32>
    %781 = arith.cmpi eq, %4, %780 : vector<16x8xi32>
    %c3_i32_196 = arith.constant 3 : i32
    %782 = vector.broadcast %c3_i32_196 : i32 to vector<16x8xi32>
    %783 = arith.cmpi eq, %4, %782 : vector<16x8xi32>
    %c4_i32_197 = arith.constant 4 : i32
    %784 = vector.broadcast %c4_i32_197 : i32 to vector<16x8xi32>
    %785 = arith.cmpi eq, %4, %784 : vector<16x8xi32>
    %786 = arith.ori %783, %785 : vector<16x8xi1>
    %c5_i32_198 = arith.constant 5 : i32
    %787 = vector.broadcast %c5_i32_198 : i32 to vector<16x8xi32>
    %788 = arith.cmpi eq, %4, %787 : vector<16x8xi32>
    %cst_199 = arith.constant 0.000000e+00 : f32
    %789 = vector.shape_cast %775 : vector<16x1xf32> to vector<16x1xf32>
    %790 = vector.broadcast %789 : vector<16x1xf32> to vector<16x8xf32>
    %791 = vector.broadcast %cst_199 : f32 to vector<16x8xf32>
    %792 = arith.select %788, %790, %791 : vector<16x8xi1>, vector<16x8xf32>
    %793 = vector.shape_cast %767 : vector<16x1xf32> to vector<16x1xf32>
    %794 = vector.broadcast %793 : vector<16x1xf32> to vector<16x8xf32>
    %795 = arith.select %786, %794, %792 : vector<16x8xi1>, vector<16x8xf32>
    %796 = vector.shape_cast %759 : vector<16x1xf32> to vector<16x1xf32>
    %797 = vector.broadcast %796 : vector<16x1xf32> to vector<16x8xf32>
    %798 = arith.select %781, %797, %795 : vector<16x8xi1>, vector<16x8xf32>
    %799 = vector.shape_cast %751 : vector<16x1xf32> to vector<16x1xf32>
    %800 = vector.broadcast %799 : vector<16x1xf32> to vector<16x8xf32>
    %801 = arith.select %779, %800, %798 : vector<16x8xi1>, vector<16x8xf32>
    %802 = vector.shape_cast %747 : vector<16x1xf32> to vector<16x1xf32>
    %803 = vector.broadcast %802 : vector<16x1xf32> to vector<16x8xf32>
    %804 = arith.select %777, %803, %801 : vector<16x8xi1>, vector<16x8xf32>
    %cst_200 = arith.constant 0.000000e+00 : f32
    %805 = vector.broadcast %cst_200 : f32 to vector<16x64xf32>
    %806 = tpu.concatenate %104, %204, %304, %404, %504, %604, %704, %804, %805 in 1 : vector<16x8xf32>, vector<16x8xf32>, vector<16x8xf32>, vector<16x8xf32>, vector<16x8xf32>, vector<16x8xf32>, vector<16x8xf32>, vector<16x8xf32>, vector<16x64xf32> -> vector<16x128xf32>
    %c0_201 = arith.constant 0 : index
    %c0_202 = arith.constant 0 : index
    %c0_203 = arith.constant 0 : index
    %807 = vector.load %arg7[%c0_201, %c0_202, %c0_203] : memref<1x16x128xf32, #tpu.memory_space<vmem>>, vector<1x16x128xf32>
    %808 = vector.shape_cast %807 : vector<1x16x128xf32> to vector<16x128xf32>
    %809 = vector.shape_cast %806 : vector<16x128xf32> to vector<1x16x128xf32>
    tpu.vector_store %arg7[%c0_201, %c0_202, %c0_203], %809 {strides = array<i32>} : memref<1x16x128xf32, #tpu.memory_space<vmem>>, vector<1x16x128xf32>,
    return
  }
  func.func @transform_0(%arg0: i32, %arg1: i32) -> (i32, i32) {
    %c0_i32 = arith.constant 0 : i32
    %c0_i32_0 = arith.constant 0 : i32
    %c0_i32_1 = arith.constant 0 : i32
    return %c0_i32, %c0_i32_0 : i32, i32
  }
  func.func @transform_1(%arg0: i32, %arg1: i32) -> i32 {
    %c0_i32 = arith.constant 0 : i32
    %c0_i32_0 = arith.constant 0 : i32
    return %c0_i32 : i32
  }
  func.func @transform_2(%arg0: i32, %arg1: i32) -> i32 {
    %c0_i32 = arith.constant 0 : i32
    %c0_i32_0 = arith.constant 0 : i32
    return %c0_i32 : i32
  }
  func.func @transform_3(%arg0: i32, %arg1: i32) -> (i32, i32) {
    %c0_i32 = arith.constant 0 : i32
    %c0_i32_0 = arith.constant 0 : i32
    %c0_i32_1 = arith.constant 0 : i32
    return %c0_i32, %c0_i32_0 : i32, i32
  }
  func.func @transform_4(%arg0: i32, %arg1: i32) -> (i32, i32, i32, i32) {
    %c0_i32 = arith.constant 0 : i32
    %c0_i32_0 = arith.constant 0 : i32
    %c0_i32_1 = arith.constant 0 : i32
    return %arg0, %c0_i32, %arg1, %c0_i32_0 : i32, i32, i32, i32
  }
  func.func @transform_5(%arg0: i32, %arg1: i32) -> (i32, i32, i32) {
    %c0_i32 = arith.constant 0 : i32
    %c0_i32_0 = arith.constant 0 : i32
    return %arg0, %arg1, %c0_i32 : i32, i32, i32
  }
}

</mosaic_0001>

<llo_original>
// kernel: tpu_custom_call.1
$region0: #{tpu_custom_call.1}
  #allocation0 [shape = 'u32[]', space=smem, size = 0x4, offset = 0x4, fixed_abs, tag = 'smem constant byte address 0x4 - core index']
  #allocation1 [shape = 'u32[144,128]{1,0:T(1,128)}', space=vmem, size = 0x12000, scoped, tag = 'internal scratch']
  #allocation2 [shape = 'f32[1]{0:T(128)S(6)}', space=smem, size = 0x200, scoped, tag = 'scoped memory for tpu_custom_call.1']
  %s0 = inlined_call_operand.hbm [shape: f32[4,8], index: 0, kind: input, shape index: {}]
  %s1 = inlined_call_operand.vmem [shape: f32[8], index: 1, kind: input, shape index: {}]
  %s2 = inlined_call_operand.<no memory space> [shape: f32[1], index: 2, kind: input, shape index: {}]
  %s3 = inlined_call_operand.hbm [shape: f32[256,128], index: 3, kind: input, shape index: {}]
  %s4 = inlined_call_operand.hbm [shape: f32[2,4,16,256], index: 4, kind: input, shape index: {}]
  %s5 = inlined_call_operand.hbm [shape: f32[2,16,128], index: 5, kind: output, shape index: {}]
  %s6 = sld [smem:[#allocation0]]
  $region69: #{tpu_custom_call.1} parent=0
    _
  %s8 = ssub.s32 1, %s6
  %s9 = scalar_select 0, %s8, %s6
  %10 = sst [smem:[#allocation2]] %s2
  $region1: #{tpu_custom_call.1} parent=0
    #allocation3 [shape = 'u8[2048]{0}', space=smem, size = 0x800, scoped, tag = 'input window, operand 0, single buffered']
    #allocation4 [shape = 's32[2]{0}', space=sflag, size = 0x8, scoped, tag = 'scoped memory for tpu_custom_call.1']
    #allocation5 [shape = 's32[2]{0}', space=sflag, size = 0x8, scoped, tag = 'scoped memory for tpu_custom_call.1']
    #allocation6 [shape = 's32[2]{0}', space=sflag, size = 0x8, scoped, tag = 'scoped memory for tpu_custom_call.1']
    #allocation7 [shape = 's32[2]{0}', space=sflag, size = 0x8, scoped, tag = 'scoped memory for tpu_custom_call.1']
    #allocation8 [shape = 'u8[512]{0}', space=smem, size = 0x200, scoped, tag = 'input window, operand 1, single buffered']
    #allocation9 [shape = 'u8[131072]{0}', space=vmem, size = 0x20000, scoped, tag = 'input window, operand 3, single buffered']
    #allocation10 [shape = 'u8[131072]{0}', space=vmem, size = 0x20000, scoped, tag = 'input window, operand 4']
    #allocation11 [shape = 's32[2]{0}', space=sflag, size = 0x8, scoped, tag = 'scoped memory for tpu_custom_call.1']
    #allocation12 [shape = 'u8[16384]{0}', space=vmem, size = 0x4000, scoped, tag = 'output window, operand 0']
    %11 = vsyncpa [#allocation6], 0
    %12 = vsyncpa [#allocation7], 0
    %13 = vsyncpa [#allocation4], 0
    %14 = vsyncpa [#allocation11], 0
    %s15 = scalar_lea.sflag [#allocation11], 1
    %16 = vsyncpa %s15, 0
    %17 = vsyncpa [#allocation5], 0
    %s18 = scalar_lea.sflag [#allocation5], 1
    %19 = vsyncpa %s18, 0
    loop: start=0, step=1, limit=4
    $region2: #{tpu_custom_call.1} parent=1 // loop_pre_header
      _
    $region3: #{tpu_custom_call.1} parent=1 // loop_header
      %s21 = sphi 0, %s25
      %p22 = scmp.ge.s32.totalorder %s21, 4
      %s28 = sphi 0, %s40
      %s29 = sphi 0, %s36
      %s30 = sphi 0, %s28
      %s31 = sphi 0, %s29
      %s32 = sphi 0, %s30
      %s33 = sphi 0, %s31
      %s41 = sphi 0, %s41
      %s43 = sphi 0, %s41
      %s44 = sphi 0, %s43
      %s58 = sphi 0, %s44
      %s62 = sphi 0, %s62
      %s64 = sphi 0, %s62
      %s65 = sphi 0, %s64
      %s79 = sphi 0, %s65
      %s83 = sphi 0, %s83
      %s85 = sphi 0, %s83
      %s86 = sphi 0, %s85
      %s100 = sphi 0, %s86
      %s104 = sphi 0, %s104
      %s106 = sphi 0, %s104
      %s107 = sphi 0, %s106
      %s121 = sphi 0, %s107
      %s129 = sphi 0, %s131
      %s132 = sphi 0, %s129
      %s133 = sphi 0, %s132
      %s149 = sphi 0, %s133
      %s157 = sphi 0, %s159
      %s160 = sphi 0, %s157
      %s161 = sphi 0, %s160
      %s177 = sphi 0, %s161
    $region4: #{tpu_custom_call.1} parent=1 // loop_header_branch
      %24 = sbr.rel (%p22) target = $region8
    $region5: #{tpu_custom_call.1} parent=1 // loop_body
      %s26 = ssub.s32 %s21, 1
      %s27 = ssub.s32 %s21, 2
      %s34 = sadd.s32 1, %s29
      %p35 = scmp.ge.s32.totalorder %s34, 1
      %s36 = scalar_select %p35, 0, %s34
      %s37 = sadd.s32 1, %s28
      %s38 = scalar_select %p35, %s37, %s28
      %p39 = scmp.ge.s32.totalorder %s38, 2
      %s40 = scalar_select %p39, 0, %s38
      %s42 = sadd.s32 %s41, 1
      %p45 = scmp.eq.s32.totalorder %s21, 1
      %p46 = scmp.ne.s32.totalorder %s41, %s43
      %p47 = scmp.eq.s32.totalorder %s21, 0
      %p48 = por %p46, %p47
      %p49 = scmp.ne.s32.totalorder %s41, %s43
      %p50 = scmp.eq.s32.totalorder %s26, 1
      %p51 = por %p49, %p50
      %p52 = scmp.ne.s32.totalorder %s43, %s44
      %p53 = scmp.eq.s32.totalorder %s26, 0
      %p54 = por %p52, %p53
      %p55 = scmp.ne.s32.totalorder %s43, %s44
      %p56 = scmp.eq.s32.totalorder %s27, 1
      %p57 = por %p55, %p56
      %p59 = scmp.ne.s32.totalorder %s44, %s58
      %p60 = scmp.eq.s32.totalorder %s27, 0
      %p61 = por %p59, %p60
      %s63 = sadd.s32 %s62, 1
      %p66 = scmp.eq.s32.totalorder %s21, 1
      %p67 = scmp.ne.s32.totalorder %s62, %s64
      %p68 = scmp.eq.s32.totalorder %s21, 0
      %p69 = por %p67, %p68
      %p70 = scmp.ne.s32.totalorder %s62, %s64
      %p71 = scmp.eq.s32.totalorder %s26, 1
      %p72 = por %p70, %p71
      %p73 = scmp.ne.s32.totalorder %s64, %s65
      %p74 = scmp.eq.s32.totalorder %s26, 0
      %p75 = por %p73, %p74
      %p76 = scmp.ne.s32.totalorder %s64, %s65
      %p77 = scmp.eq.s32.totalorder %s27, 1
      %p78 = por %p76, %p77
      %p80 = scmp.ne.s32.totalorder %s65, %s79
      %p81 = scmp.eq.s32.totalorder %s27, 0
      %p82 = por %p80, %p81
      %s84 = sadd.s32 %s83, 1
      %p87 = scmp.eq.s32.totalorder %s21, 1
      %p88 = scmp.ne.s32.totalorder %s83, %s85
      %p89 = scmp.eq.s32.totalorder %s21, 0
      %p90 = por %p88, %p89
      %p91 = scmp.ne.s32.totalorder %s83, %s85
      %p92 = scmp.eq.s32.totalorder %s26, 1
      %p93 = por %p91, %p92
      %p94 = scmp.ne.s32.totalorder %s85, %s86
      %p95 = scmp.eq.s32.totalorder %s26, 0
      %p96 = por %p94, %p95
      %p97 = scmp.ne.s32.totalorder %s85, %s86
      %p98 = scmp.eq.s32.totalorder %s27, 1
      %p99 = por %p97, %p98
      %p101 = scmp.ne.s32.totalorder %s86, %s100
      %p102 = scmp.eq.s32.totalorder %s27, 0
      %p103 = por %p101, %p102
      %s105 = sadd.s32 %s104, 1
      %p108 = scmp.eq.s32.totalorder %s21, 1
      %p109 = scmp.ne.s32.totalorder %s104, %s106
      %p110 = scmp.eq.s32.totalorder %s21, 0
      %p111 = por %p109, %p110
      %p112 = scmp.ne.s32.totalorder %s104, %s106
      %p113 = scmp.eq.s32.totalorder %s26, 1
      %p114 = por %p112, %p113
      %p115 = scmp.ne.s32.totalorder %s106, %s107
      %p116 = scmp.eq.s32.totalorder %s26, 0
      %p117 = por %p115, %p116
      %p118 = scmp.ne.s32.totalorder %s106, %s107
      %p119 = scmp.eq.s32.totalorder %s27, 1
      %p120 = por %p118, %p119
      %p122 = scmp.ne.s32.totalorder %s107, %s121
      %p123 = scmp.eq.s32.totalorder %s27, 0
      %p124 = por %p122, %p123
      %s125 = ssub.s32 %s28, %s40
      %s126 = ssub.s32 %s29, %s36
      %s127 = sor.u32 %s125, %s126
      %p128 = scmp.eq.s32.totalorder %s127, 0
      %s130 = sadd.s32 %s129, 1
      %s131 = scalar_select %p128, %s129, %s130
      %p134 = pneg %p128
      %p135 = scmp.eq.s32.totalorder %s21, 1
      %p136 = por %p134, %p135
      %p137 = scmp.ne.s32.totalorder %s129, %s132
      %p138 = scmp.eq.s32.totalorder %s21, 0
      %p139 = por %p137, %p138
      %p140 = scmp.ne.s32.totalorder %s129, %s132
      %p141 = scmp.eq.s32.totalorder %s26, 1
      %p142 = por %p140, %p141
      %p143 = scmp.ne.s32.totalorder %s132, %s133
      %p144 = scmp.eq.s32.totalorder %s26, 0
      %p145 = por %p143, %p144
      %p146 = scmp.ne.s32.totalorder %s132, %s133
      %p147 = scmp.eq.s32.totalorder %s27, 1
      %p148 = por %p146, %p147
      %p150 = scmp.ne.s32.totalorder %s133, %s149
      %p151 = scmp.eq.s32.totalorder %s27, 0
      %p152 = por %p150, %p151
      %s153 = ssub.s32 %s28, %s40
      %s154 = ssub.s32 %s29, %s36
      %s155 = sor.u32 %s153, %s154
      %p156 = scmp.eq.s32.totalorder %s155, 0
      %s158 = sadd.s32 %s157, 1
      %s159 = scalar_select %p156, %s157, %s158
      %p162 = pneg %p156
      %p163 = scmp.eq.s32.totalorder %s21, 1
      %p164 = por %p162, %p163
      %p165 = scmp.ne.s32.totalorder %s157, %s160
      %p166 = scmp.eq.s32.totalorder %s21, 0
      %p167 = por %p165, %p166
      %p168 = scmp.ne.s32.totalorder %s157, %s160
      %p169 = scmp.eq.s32.totalorder %s26, 1
      %p170 = por %p168, %p169
      %p171 = scmp.ne.s32.totalorder %s160, %s161
      %p172 = scmp.eq.s32.totalorder %s26, 0
      %p173 = por %p171, %p172
      %p174 = scmp.ne.s32.totalorder %s160, %s161
      %p175 = scmp.eq.s32.totalorder %s27, 1
      %p176 = por %p174, %p175
      %p178 = scmp.ne.s32.totalorder %s161, %s177
      %p179 = scmp.eq.s32.totalorder %s27, 0
      %p180 = por %p178, %p179
      %p181 = scmp.le.s32.totalorder 1, %s21
      %p182 = scmp.lt.s32.totalorder %s21, 3
      %p183 = pnand %p181, %p182
      %p184 = pneg %p183
      // Predicated region
      $region9: #{tpu_custom_call.1} parent=5 // pred_check
        _
      $region10: #{tpu_custom_call.1} parent=5 // pred_check_branch
        %186 = sbr.rel (%p183) target = $region12
      $region11: #{tpu_custom_call.1} parent=5 // pred_region
        %s187 = ssub.s32 %s21, 1
        // Predicated region
        $region13: #{tpu_custom_call.1} parent=11 // pred_check
          %p188 = pneg %p54
        $region14: #{tpu_custom_call.1} parent=11 // pred_check_branch
          %190 = sbr.rel (%p188) target = $region16
        $region15: #{tpu_custom_call.1} parent=11 // pred_region
          %s192 = ssub.s32 64, 64
          %193 = vsyncadd [#allocation6], %s192
          %196 = dma.hbm_to_smem %s0, 64, [#allocation3], [#allocation6]
        $region16: #{tpu_custom_call.1} parent=11 // pred_fallthru
          _
        // Predicated region
        $region17: #{tpu_custom_call.1} parent=11 // pred_check
          %p197 = pneg %p75
        $region18: #{tpu_custom_call.1} parent=11 // pred_check_branch
          %199 = sbr.rel (%p197) target = $region20
        $region19: #{tpu_custom_call.1} parent=11 // pred_region
          %s201 = ssub.s32 16, 16
          %202 = vsyncadd [#allocation7], %s201
          %s204 = sshll.u32 %s1, 4
          %s205 = int_to_ptr.vmem [resolvable:$true] %s204
          %207 = dma.vmem_to_smem %s205, 16, [#allocation8], [#allocation7]
        $region20: #{tpu_custom_call.1} parent=11 // pred_fallthru
          _
        // Predicated region
        $region21: #{tpu_custom_call.1} parent=11 // pred_check
          %p208 = pneg %p96
        $region22: #{tpu_custom_call.1} parent=11 // pred_check_branch
          %210 = sbr.rel (%p208) target = $region24
        $region23: #{tpu_custom_call.1} parent=11 // pred_region
          _
        $region24: #{tpu_custom_call.1} parent=11 // pred_fallthru
          _
        // Predicated region
        $region25: #{tpu_custom_call.1} parent=11 // pred_check
          %p211 = pneg %p117
        $region26: #{tpu_custom_call.1} parent=11 // pred_check_branch
          %213 = sbr.rel (%p211) target = $region28
        $region27: #{tpu_custom_call.1} parent=11 // pred_region
          %s215 = ssub.s32 4096, 4096
          %216 = vsyncadd [#allocation4], %s215
          %s217 = sshll.u32 [#allocation9], 4
          %s218 = int_to_ptr.vmem [resolvable:$true] %s217
          %223 = dma.hbm_to_vmem [thread:$0]  %s3, 4096, %s218, [#allocation4], 128, 128, 8
        $region28: #{tpu_custom_call.1} parent=11 // pred_fallthru
          _
      $region12: #{tpu_custom_call.1} parent=5 // pred_fallthru
        _
      %p224 = scmp.lt.s32.totalorder %s21, 2
      // Predicated region
      $region29: #{tpu_custom_call.1} parent=5 // pred_check
        %p225 = pneg %p224
      $region30: #{tpu_custom_call.1} parent=5 // pred_check_branch
        %227 = sbr.rel (%p225) target = $region32
      $region31: #{tpu_custom_call.1} parent=5 // pred_region
        // Predicated region
        $region33: #{tpu_custom_call.1} parent=31 // pred_check
          %p228 = pneg %p139
        $region34: #{tpu_custom_call.1} parent=31 // pred_check_branch
          %230 = sbr.rel (%p228) target = $region36
        $region35: #{tpu_custom_call.1} parent=31 // pred_region
          %s231 = sand.u32 %s129, 1
          %s232 = scalar_lea.sflag [#allocation11], %s231
          %s233 = sand.u32 %s129, 1
          %s234 = smul.addr %s233, 128
          %s235 = scalar_lea.vmem [#allocation10], %s234
          %s236 = smul.u32 2, %s29
          %s238 = ssub.s32 2048, 2048
          %239 = vsyncadd %s232, %s238
          %s240 = smul.addr %s236, 2
          %s241 = smul.addr %s28, 16
          %s242 = sadd.s32 %s240, %s241
          %s243 = smul.addr %s242, 128
          %s244 = scalar_lea.hbm %s4, %s243
          %s245 = sshll.u32 %s235, 4
          %s246 = int_to_ptr.vmem [resolvable:$true] %s245
          %251 = dma.hbm_to_vmem [thread:$0]  %s244, 2048, %s246, %s232, 256, 256, 16
        $region36: #{tpu_custom_call.1} parent=31 // pred_fallthru
          _
      $region32: #{tpu_custom_call.1} parent=5 // pred_fallthru
        _
      %p252 = scmp.le.s32.totalorder 1, %s21
      %p253 = scmp.lt.s32.totalorder %s21, 3
      %p254 = pnand %p252, %p253
      %p255 = pneg %p254
      // Predicated region
      $region37: #{tpu_custom_call.1} parent=5 // pred_check
        _
      $region38: #{tpu_custom_call.1} parent=5 // pred_check_branch
        %257 = sbr.rel (%p254) target = $region40
      $region39: #{tpu_custom_call.1} parent=5 // pred_region
        %s258 = ssub.s32 %s21, 1
        // Predicated region
        $region41: #{tpu_custom_call.1} parent=39 // pred_check
          %p259 = pneg %p54
        $region42: #{tpu_custom_call.1} parent=39 // pred_check_branch
          %261 = sbr.rel (%p259) target = $region44
        $region43: #{tpu_custom_call.1} parent=39 // pred_region
          %262 = dma.done [#allocation6], 64
        $region44: #{tpu_custom_call.1} parent=39 // pred_fallthru
          _
        // Predicated region
        $region45: #{tpu_custom_call.1} parent=39 // pred_check
          %p263 = pneg %p75
        $region46: #{tpu_custom_call.1} parent=39 // pred_check_branch
          %265 = sbr.rel (%p263) target = $region48
        $region47: #{tpu_custom_call.1} parent=39 // pred_region
          %266 = dma.done [#allocation7], 16
        $region48: #{tpu_custom_call.1} parent=39 // pred_fallthru
          _
        // Predicated region
        $region49: #{tpu_custom_call.1} parent=39 // pred_check
          %p267 = pneg %p117
        $region50: #{tpu_custom_call.1} parent=39 // pred_check_branch
          %269 = sbr.rel (%p267) target = $region52
        $region51: #{tpu_custom_call.1} parent=39 // pred_region
          %270 = dma.done [#allocation4], 4096
        $region52: #{tpu_custom_call.1} parent=39 // pred_fallthru
          _
        %s271 = sand.u32 %s132, 1
        %s272 = scalar_lea.sflag [#allocation11], %s271
        %s273 = sand.u32 %s132, 1
        %s274 = smul.addr %s273, 128
        %s275 = scalar_lea.vmem [#allocation10], %s274
        // Predicated region
        $region53: #{tpu_custom_call.1} parent=39 // pred_check
          %p276 = pneg %p145
        $region54: #{tpu_custom_call.1} parent=39 // pred_check_branch
          %278 = sbr.rel (%p276) target = $region56
        $region55: #{tpu_custom_call.1} parent=39 // pred_region
          %279 = dma.done %s272, 2048
        $region56: #{tpu_custom_call.1} parent=39 // pred_fallthru
          _
        %280 = sfence
        %p281 = pneg %p54
        %p282 = pneg %p51
        %p283 = pneg %p75
        %p284 = pneg %p72
        %p285 = pneg %p96
        %p286 = pneg %p93
        %p287 = pneg %p117
        %p288 = pneg %p114
        %s289 = sand.u32 %s132, 1
        %s290 = scalar_lea.sflag [#allocation11], %s289
        %s291 = sand.u32 %s132, 1
        %s292 = smul.addr %s291, 128
        %s293 = scalar_lea.vmem [#allocation10], %s292
        %p294 = pneg %p145
        %p295 = pneg %p142
        %p296 = pneg %p173
        %p297 = pneg %p170
        %s298 = sand.u32 %s160, 1
        %s299 = scalar_lea.sflag [#allocation5], %s298
        %s300 = sand.u32 %s160, 1
        %s301 = smul.addr %s300, 16
        %s302 = scalar_lea.vmem [#allocation12], %s301
        %s303 = smul.u32 2, %s31
        %s304 = smul.u32 2, %s31
        %s305 = sld [smem:[#allocation2]]
        %v306 = vld [vmem:[%s275] sm:$0xff]
        %v307 = vld [vmem:[%s275 + $0x8] sm:$0xff]
        %v308 = vld [vmem:[%s275 + $0x10] sm:$0xff]
        %v309 = vld [vmem:[%s275 + $0x18] sm:$0xff]
        %v310 = vld [vmem:[%s275 + $0x20] sm:$0xff]
        %v311 = vld [vmem:[%s275 + $0x28] sm:$0xff]
        %v312 = vld [vmem:[%s275 + $0x30] sm:$0xff]
        %v313 = vld [vmem:[%s275 + $0x38] sm:$0xff]
        %v314 = vld [vmem:[%s275 + $0x40] sm:$0xff]
        %v315 = vld [vmem:[%s275 + $0x48] sm:$0xff]
        %v316 = vld [vmem:[%s275 + $0x50] sm:$0xff]
        %v317 = vld [vmem:[%s275 + $0x58] sm:$0xff]
        %v318 = vld [vmem:[%s275 + $0x60] sm:$0xff]
        %v319 = vld [vmem:[%s275 + $0x68] sm:$0xff]
        %v320 = vld [vmem:[%s275 + $0x70] sm:$0xff]
        %v321 = vld [vmem:[%s275 + $0x78] sm:$0xff]
        %v322 = vld [vmem:[#allocation9] sm:$0xff]
        %v323 = vld [vmem:[#allocation9 + $0x8] sm:$0xff]
        %v324 = vld [vmem:[#allocation9 + $0x10] sm:$0xff]
        %v325 = vld [vmem:[#allocation9 + $0x18] sm:$0xff]
        %v326 = vld [vmem:[#allocation9 + $0x20] sm:$0xff]
        %v327 = vld [vmem:[#allocation9 + $0x28] sm:$0xff]
        %v328 = vld [vmem:[#allocation9 + $0x30] sm:$0xff]
        %v329 = vld [vmem:[#allocation9 + $0x38] sm:$0xff]
        %v330 = vld [vmem:[#allocation9 + $0x40] sm:$0xff]
        %v331 = vld [vmem:[#allocation9 + $0x48] sm:$0xff]
        %v332 = vld [vmem:[#allocation9 + $0x50] sm:$0xff]
        %v333 = vld [vmem:[#allocation9 + $0x58] sm:$0xff]
        %v334 = vld [vmem:[#allocation9 + $0x60] sm:$0xff]
        %v335 = vld [vmem:[#allocation9 + $0x68] sm:$0xff]
        %v336 = vld [vmem:[#allocation9 + $0x70] sm:$0xff]
        %v337 = vld [vmem:[#allocation9 + $0x78] sm:$0xff]
        %v338 = vld [vmem:[#allocation9 + $0x80] sm:$0xff]
        %v339 = vld [vmem:[#allocation9 + $0x88] sm:$0xff]
        %v340 = vld [vmem:[#allocation9 + $0x90] sm:$0xff]
        %v341 = vld [vmem:[#allocation9 + $0x98] sm:$0xff]
        %v342 = vld [vmem:[#allocation9 + $0xa0] sm:$0xff]
        %v343 = vld [vmem:[#allocation9 + $0xa8] sm:$0xff]
        %v344 = vld [vmem:[#allocation9 + $0xb0] sm:$0xff]
        %v345 = vld [vmem:[#allocation9 + $0xb8] sm:$0xff]
        %v346 = vld [vmem:[#allocation9 + $0xc0] sm:$0xff]
        %v347 = vld [vmem:[#allocation9 + $0xc8] sm:$0xff]
        %v348 = vld [vmem:[#allocation9 + $0xd0] sm:$0xff]
        %v349 = vld [vmem:[#allocation9 + $0xd8] sm:$0xff]
        %v350 = vld [vmem:[#allocation9 + $0xe0] sm:$0xff]
        %v351 = vld [vmem:[#allocation9 + $0xe8] sm:$0xff]
        %v352 = vld [vmem:[#allocation9 + $0xf0] sm:$0xff]
        %v353 = vld [vmem:[#allocation9 + $0xf8] sm:$0xff]
        %v354 = vlaneseq
        %v355 = vand.u32 %v354, 127
        %s356 = sld [smem:[#allocation3]]
        %s357 = smul.f32 %s356, %s305
        %v358 = vstv %s357
        %v359 = vmul.f32 %v306, %v358
        %v360 = vmul.f32 %v307, %v358
        %v361 = vmul.f32 %v308, %v358
        %v362 = vmul.f32 %v309, %v358
        %s363 = sld [smem:[#allocation3 + $0x80]]
        %s364 = smul.f32 %s363, %s305
        %v365 = vstv %s364
        %v366 = vmul.f32 %v310, %v365
        %v367 = vmul.f32 %v311, %v365
        %v368 = vmul.f32 %v312, %v365
        %v369 = vmul.f32 %v313, %v365
        %v370 = vadd.f32 %v359, %v366
        %v371 = vadd.f32 %v360, %v367
        %v372 = vadd.f32 %v361, %v368
        %v373 = vadd.f32 %v362, %v369
        %s374 = sld [smem:[#allocation3 + $0x100]]
        %s375 = smul.f32 %s374, %s305
        %v376 = vstv %s375
        %v377 = vmul.f32 %v314, %v376
        %v378 = vmul.f32 %v315, %v376
        %v379 = vmul.f32 %v316, %v376
        %v380 = vmul.f32 %v317, %v376
        %v381 = vadd.f32 %v370, %v377
        %v382 = vadd.f32 %v371, %v378
        %v383 = vadd.f32 %v372, %v379
        %v384 = vadd.f32 %v373, %v380
        %s385 = sld [smem:[#allocation3 + $0x180]]
        %s386 = smul.f32 %s385, %s305
        %v387 = vstv %s386
        %v388 = vmul.f32 %v318, %v387
        %v389 = vmul.f32 %v319, %v387
        %v390 = vmul.f32 %v320, %v387
        %v391 = vmul.f32 %v321, %v387
        %v392 = vadd.f32 %v381, %v388
        %v393 = vadd.f32 %v382, %v389
        %v394 = vadd.f32 %v383, %v390
        %v395 = vadd.f32 %v384, %v391
        %s396 = sld [smem:[#allocation8]]
        %s397 = smul.f32 %s396, %s305
        %v398 = vstv %s397
        %v399 = vadd.f32 %v392, %v398
        %v400 = vadd.f32 %v393, %v398
        %v401 = vadd.f32 %v394, %v398
        %v402 = vadd.f32 %v395, %v398
        %v403 = vmax.f32 %v399, %v400
        %404 = vmax.xlane.f32.xlu0 %v403
        %v405 = vpop.xlane.xlu0 %404
        %v406 = vmax.f32 %v401, %v402
        %407 = vmax.xlane.f32.xlu0 %v406
        %v408 = vpop.xlane.xlu0 %407
        %v409 = vsub.f32 %v399, %v405
        %v410 = vsub.f32 %v400, %v405
        %v411 = vsub.f32 %v401, %v408
        %v412 = vsub.f32 %v402, %v408
        %v413 = vmul.f32 %v409, 1.442695
        %v414 = vpow.pop %v413
        %v415 = vmul.f32 %v410, 1.442695
        %v416 = vpow.pop %v415
        %v417 = vmul.f32 %v411, 1.442695
        %v418 = vpow.pop %v417
        %v419 = vmul.f32 %v412, 1.442695
        %v420 = vpow.pop %v419
        %421 = vmatprep.subr.mxu0 0.0
        %v422 = vand.u32 %v337, 4294901760
        %423 = vmatpush1.msra.mxu0 %v422
        %424 = vmatprep.subr.mxu0 0.0
        %v425 = vand.u32 %v336, 4294901760
        %426 = vmatpush1.msra.mxu0 %v425
        %427 = vmatprep.subr.mxu0 0.0
        %v428 = vand.u32 %v335, 4294901760
        %429 = vmatpush1.msra.mxu0 %v428
        %430 = vmatprep.subr.mxu0 0.0
        %v431 = vand.u32 %v334, 4294901760
        %432 = vmatpush1.msra.mxu0 %v431
        %433 = vmatprep.subr.mxu0 0.0
        %v434 = vand.u32 %v333, 4294901760
        %435 = vmatpush1.msra.mxu0 %v434
        %436 = vmatprep.subr.mxu0 0.0
        %v437 = vand.u32 %v332, 4294901760
        %438 = vmatpush1.msra.mxu0 %v437
        %439 = vmatprep.subr.mxu0 0.0
        %v440 = vand.u32 %v331, 4294901760
        %441 = vmatpush1.msra.mxu0 %v440
        %442 = vmatprep.subr.mxu0 0.0
        %v443 = vand.u32 %v330, 4294901760
        %444 = vmatpush1.msra.mxu0 %v443
        %445 = vmatprep.subr.mxu0 0.0
        %v446 = vand.u32 %v329, 4294901760
        %447 = vmatpush1.msra.mxu0 %v446
        %448 = vmatprep.subr.mxu0 0.0
        %v449 = vand.u32 %v328, 4294901760
        %450 = vmatpush1.msra.mxu0 %v449
        %451 = vmatprep.subr.mxu0 0.0
        %v452 = vand.u32 %v327, 4294901760
        %453 = vmatpush1.msra.mxu0 %v452
        %454 = vmatprep.subr.mxu0 0.0
        %v455 = vand.u32 %v326, 4294901760
        %456 = vmatpush1.msra.mxu0 %v455
        %457 = vmatprep.subr.mxu0 0.0
        %v458 = vand.u32 %v325, 4294901760
        %459 = vmatpush1.msra.mxu0 %v458
        %460 = vmatprep.subr.mxu0 0.0
        %v461 = vand.u32 %v324, 4294901760
        %462 = vmatpush1.msra.mxu0 %v461
        %463 = vmatprep.subr.mxu0 0.0
        %v464 = vand.u32 %v323, 4294901760
        %465 = vmatpush1.msra.mxu0 %v464
        %466 = vmatprep.subr.mxu0 0.0
        %v467 = vand.u32 %v322, 4294901760
        %468 = vmatpush1.msra.mxu0 %v467
        %469 = vmatprep.subr.mxu0 0.0
        %v470 = vand.u32 %v353, 4294901760
        %471 = vmatpush2.msra.mxu0 %v470
        %472 = vmatprep.subr.mxu0 0.0
        %v473 = vand.u32 %v352, 4294901760
        %474 = vmatpush2.msra.mxu0 %v473
        %475 = vmatprep.subr.mxu0 0.0
        %v476 = vand.u32 %v351, 4294901760
        %477 = vmatpush2.msra.mxu0 %v476
        %478 = vmatprep.subr.mxu0 0.0
        %v479 = vand.u32 %v350, 4294901760
        %480 = vmatpush2.msra.mxu0 %v479
        %481 = vmatprep.subr.mxu0 0.0
        %v482 = vand.u32 %v349, 4294901760
        %483 = vmatpush2.msra.mxu0 %v482
        %484 = vmatprep.subr.mxu0 0.0
        %v485 = vand.u32 %v348, 4294901760
        %486 = vmatpush2.msra.mxu0 %v485
        %487 = vmatprep.subr.mxu0 0.0
        %v488 = vand.u32 %v347, 4294901760
        %489 = vmatpush2.msra.mxu0 %v488
        %490 = vmatprep.subr.mxu0 0.0
        %v491 = vand.u32 %v346, 4294901760
        %492 = vmatpush2.msra.mxu0 %v491
        %493 = vmatprep.subr.mxu0 0.0
        %v494 = vand.u32 %v345, 4294901760
        %495 = vmatpush2.msra.mxu0 %v494
        %496 = vmatprep.subr.mxu0 0.0
        %v497 = vand.u32 %v344, 4294901760
        %498 = vmatpush2.msra.mxu0 %v497
        %499 = vmatprep.subr.mxu0 0.0
        %v500 = vand.u32 %v343, 4294901760
        %501 = vmatpush2.msra.mxu0 %v500
        %502 = vmatprep.subr.mxu0 0.0
        %v503 = vand.u32 %v342, 4294901760
        %504 = vmatpush2.msra.mxu0 %v503
        %505 = vmatprep.subr.mxu0 0.0
        %v506 = vand.u32 %v341, 4294901760
        %507 = vmatpush2.msra.mxu0 %v506
        %508 = vmatprep.subr.mxu0 0.0
        %v509 = vand.u32 %v340, 4294901760
        %510 = vmatpush2.msra.mxu0 %v509
        %511 = vmatprep.subr.mxu0 0.0
        %v512 = vand.u32 %v339, 4294901760
        %513 = vmatpush2.msra.mxu0 %v512
        %514 = vmatprep.subr.mxu0 0.0
        %v515 = vand.u32 %v338, 4294901760
        %516 = vmatpush2.msra.mxu0 %v515
        %v517 = vand.u32 %v416, 4294901760
        %v518 = vsub.f32 %v416, %v517
        %v519 = vand.u32 %v518, 4294901760
        %v520 = vsub.f32 %v518, %v519
        %v521 = vand.u32 %v520, 4294901760
        %522 = vmatprep.mubr.f32.mxu0 %v521
        %v523 = vand.u32 %v414, 4294901760
        %v524 = vsub.f32 %v414, %v523
        %v525 = vand.u32 %v524, 4294901760
        %v526 = vsub.f32 %v524, %v525
        %v527 = vand.u32 %v526, 4294901760
        %528 = vmatmul.mubr.f32.gmra.mxu0 %v527
        %v529 = vpop.f32.mrf.mxu0
        %v530 = vadd.f32 0.0, %v529
        %v531 = vpop.f32.mrf.mxu0
        %v532 = vand.u32 %v420, 4294901760
        %v533 = vsub.f32 %v420, %v532
        %v534 = vand.u32 %v533, 4294901760
        %v535 = vsub.f32 %v533, %v534
        %v536 = vand.u32 %v535, 4294901760
        %537 = vmatprep.mubr.f32.mxu0 %v536
        %v538 = vand.u32 %v418, 4294901760
        %v539 = vsub.f32 %v418, %v538
        %v540 = vand.u32 %v539, 4294901760
        %v541 = vsub.f32 %v539, %v540
        %v542 = vand.u32 %v541, 4294901760
        %543 = vmatmul.mubr.f32.gmra.mxu0 %v542
        %v544 = vpop.f32.mrf.mxu0
        %v545 = vadd.f32 0.0, %v544
        %v546 = vpop.f32.mrf.mxu0
        %547 = vdwg.mxu0
        %548 = vmatprep.subr.mxu0 0.0
        %v549 = vand.u32 %v337, 4294901760
        %v550 = vsub.f32 %v337, %v549
        %v551 = vand.u32 %v550, 4294901760
        %v552 = vsub.f32 %v550, %v551
        %v553 = vand.u32 %v552, 4294901760
        %554 = vmatpush1.msra.mxu0 %v553
        %555 = vmatprep.subr.mxu0 0.0
        %v556 = vand.u32 %v336, 4294901760
        %v557 = vsub.f32 %v336, %v556
        %v558 = vand.u32 %v557, 4294901760
        %v559 = vsub.f32 %v557, %v558
        %v560 = vand.u32 %v559, 4294901760
        %561 = vmatpush1.msra.mxu0 %v560
        %562 = vmatprep.subr.mxu0 0.0
        %v563 = vand.u32 %v335, 4294901760
        %v564 = vsub.f32 %v335, %v563
        %v565 = vand.u32 %v564, 4294901760
        %v566 = vsub.f32 %v564, %v565
        %v567 = vand.u32 %v566, 4294901760
        %568 = vmatpush1.msra.mxu0 %v567
        %569 = vmatprep.subr.mxu0 0.0
        %v570 = vand.u32 %v334, 4294901760
        %v571 = vsub.f32 %v334, %v570
        %v572 = vand.u32 %v571, 4294901760
        %v573 = vsub.f32 %v571, %v572
        %v574 = vand.u32 %v573, 4294901760
        %575 = vmatpush1.msra.mxu0 %v574
        %576 = vmatprep.subr.mxu0 0.0
        %v577 = vand.u32 %v333, 4294901760
        %v578 = vsub.f32 %v333, %v577
        %v579 = vand.u32 %v578, 4294901760
        %v580 = vsub.f32 %v578, %v579
        %v581 = vand.u32 %v580, 4294901760
        %582 = vmatpush1.msra.mxu0 %v581
        %583 = vmatprep.subr.mxu0 0.0
        %v584 = vand.u32 %v332, 4294901760
        %v585 = vsub.f32 %v332, %v584
        %v586 = vand.u32 %v585, 4294901760
        %v587 = vsub.f32 %v585, %v586
        %v588 = vand.u32 %v587, 4294901760
        %589 = vmatpush1.msra.mxu0 %v588
        %590 = vmatprep.subr.mxu0 0.0
        %v591 = vand.u32 %v331, 4294901760
        %v592 = vsub.f32 %v331, %v591
        %v593 = vand.u32 %v592, 4294901760
        %v594 = vsub.f32 %v592, %v593
        %v595 = vand.u32 %v594, 4294901760
        %596 = vmatpush1.msra.mxu0 %v595
        %597 = vmatprep.subr.mxu0 0.0
        %v598 = vand.u32 %v330, 4294901760
        %v599 = vsub.f32 %v330, %v598
        %v600 = vand.u32 %v599, 4294901760
        %v601 = vsub.f32 %v599, %v600
        %v602 = vand.u32 %v601, 4294901760
        %603 = vmatpush1.msra.mxu0 %v602
        %604 = vmatprep.subr.mxu0 0.0
        %v605 = vand.u32 %v329, 4294901760
        %v606 = vsub.f32 %v329, %v605
        %v607 = vand.u32 %v606, 4294901760
        %v608 = vsub.f32 %v606, %v607
        %v609 = vand.u32 %v608, 4294901760
        %610 = vmatpush1.msra.mxu0 %v609
        %611 = vmatprep.subr.mxu0 0.0
        %v612 = vand.u32 %v328, 4294901760
        %v613 = vsub.f32 %v328, %v612
        %v614 = vand.u32 %v613, 4294901760
        %v615 = vsub.f32 %v613, %v614
        %v616 = vand.u32 %v615, 4294901760
        %617 = vmatpush1.msra.mxu0 %v616
        %618 = vmatprep.subr.mxu0 0.0
        %v619 = vand.u32 %v327, 4294901760
        %v620 = vsub.f32 %v327, %v619
        %v621 = vand.u32 %v620, 4294901760
        %v622 = vsub.f32 %v620, %v621
        %v623 = vand.u32 %v622, 4294901760
        %624 = vmatpush1.msra.mxu0 %v623
        %625 = vmatprep.subr.mxu0 0.0
        %v626 = vand.u32 %v326, 4294901760
        %v627 = vsub.f32 %v326, %v626
        %v628 = vand.u32 %v627, 4294901760
        %v629 = vsub.f32 %v627, %v628
        %v630 = vand.u32 %v629, 4294901760
        %631 = vmatpush1.msra.mxu0 %v630
        %632 = vmatprep.subr.mxu0 0.0
        %v633 = vand.u32 %v325, 4294901760
        %v634 = vsub.f32 %v325, %v633
        %v635 = vand.u32 %v634, 4294901760
        %v636 = vsub.f32 %v634, %v635
        %v637 = vand.u32 %v636, 4294901760
        %638 = vmatpush1.msra.mxu0 %v637
        %639 = vmatprep.subr.mxu0 0.0
        %v640 = vand.u32 %v324, 4294901760
        %v641 = vsub.f32 %v324, %v640
        %v642 = vand.u32 %v641, 4294901760
        %v643 = vsub.f32 %v641, %v642
        %v644 = vand.u32 %v643, 4294901760
        %645 = vmatpush1.msra.mxu0 %v644
        %646 = vmatprep.subr.mxu0 0.0
        %v647 = vand.u32 %v323, 4294901760
        %v648 = vsub.f32 %v323, %v647
        %v649 = vand.u32 %v648, 4294901760
        %v650 = vsub.f32 %v648, %v649
        %v651 = vand.u32 %v650, 4294901760
        %652 = vmatpush1.msra.mxu0 %v651
        %653 = vmatprep.subr.mxu0 0.0
        %v654 = vand.u32 %v322, 4294901760
        %v655 = vsub.f32 %v322, %v654
        %v656 = vand.u32 %v655, 4294901760
        %v657 = vsub.f32 %v655, %v656
        %v658 = vand.u32 %v657, 4294901760
        %659 = vmatpush1.msra.mxu0 %v658
        %660 = vmatprep.subr.mxu0 0.0
        %v661 = vand.u32 %v353, 4294901760
        %v662 = vsub.f32 %v353, %v661
        %v663 = vand.u32 %v662, 4294901760
        %v664 = vsub.f32 %v662, %v663
        %v665 = vand.u32 %v664, 4294901760
        %666 = vmatpush2.msra.mxu0 %v665
        %667 = vmatprep.subr.mxu0 0.0
        %v668 = vand.u32 %v352, 4294901760
        %v669 = vsub.f32 %v352, %v668
        %v670 = vand.u32 %v669, 4294901760
        %v671 = vsub.f32 %v669, %v670
        %v672 = vand.u32 %v671, 4294901760
        %673 = vmatpush2.msra.mxu0 %v672
        %674 = vmatprep.subr.mxu0 0.0
        %v675 = vand.u32 %v351, 4294901760
        %v676 = vsub.f32 %v351, %v675
        %v677 = vand.u32 %v676, 4294901760
        %v678 = vsub.f32 %v676, %v677
        %v679 = vand.u32 %v678, 4294901760
        %680 = vmatpush2.msra.mxu0 %v679
        %681 = vmatprep.subr.mxu0 0.0
        %v682 = vand.u32 %v350, 4294901760
        %v683 = vsub.f32 %v350, %v682
        %v684 = vand.u32 %v683, 4294901760
        %v685 = vsub.f32 %v683, %v684
        %v686 = vand.u32 %v685, 4294901760
        %687 = vmatpush2.msra.mxu0 %v686
        %688 = vmatprep.subr.mxu0 0.0
        %v689 = vand.u32 %v349, 4294901760
        %v690 = vsub.f32 %v349, %v689
        %v691 = vand.u32 %v690, 4294901760
        %v692 = vsub.f32 %v690, %v691
        %v693 = vand.u32 %v692, 4294901760
        %694 = vmatpush2.msra.mxu0 %v693
        %695 = vmatprep.subr.mxu0 0.0
        %v696 = vand.u32 %v348, 4294901760
        %v697 = vsub.f32 %v348, %v696
        %v698 = vand.u32 %v697, 4294901760
        %v699 = vsub.f32 %v697, %v698
        %v700 = vand.u32 %v699, 4294901760
        %701 = vmatpush2.msra.mxu0 %v700
        %702 = vmatprep.subr.mxu0 0.0
        %v703 = vand.u32 %v347, 4294901760
        %v704 = vsub.f32 %v347, %v703
        %v705 = vand.u32 %v704, 4294901760
        %v706 = vsub.f32 %v704, %v705
        %v707 = vand.u32 %v706, 4294901760
        %708 = vmatpush2.msra.mxu0 %v707
        %709 = vmatprep.subr.mxu0 0.0
        %v710 = vand.u32 %v346, 4294901760
        %v711 = vsub.f32 %v346, %v710
        %v712 = vand.u32 %v711, 4294901760
        %v713 = vsub.f32 %v711, %v712
        %v714 = vand.u32 %v713, 4294901760
        %715 = vmatpush2.msra.mxu0 %v714
        %716 = vmatprep.subr.mxu0 0.0
        %v717 = vand.u32 %v345, 4294901760
        %v718 = vsub.f32 %v345, %v717
        %v719 = vand.u32 %v718, 4294901760
        %v720 = vsub.f32 %v718, %v719
        %v721 = vand.u32 %v720, 4294901760
        %722 = vmatpush2.msra.mxu0 %v721
        %723 = vmatprep.subr.mxu0 0.0
        %v724 = vand.u32 %v344, 4294901760
        %v725 = vsub.f32 %v344, %v724
        %v726 = vand.u32 %v725, 4294901760
        %v727 = vsub.f32 %v725, %v726
        %v728 = vand.u32 %v727, 4294901760
        %729 = vmatpush2.msra.mxu0 %v728
        %730 = vmatprep.subr.mxu0 0.0
        %v731 = vand.u32 %v343, 4294901760
        %v732 = vsub.f32 %v343, %v731
        %v733 = vand.u32 %v732, 4294901760
        %v734 = vsub.f32 %v732, %v733
        %v735 = vand.u32 %v734, 4294901760
        %736 = vmatpush2.msra.mxu0 %v735
        %737 = vmatprep.subr.mxu0 0.0
        %v738 = vand.u32 %v342, 4294901760
        %v739 = vsub.f32 %v342, %v738
        %v740 = vand.u32 %v739, 4294901760
        %v741 = vsub.f32 %v739, %v740
        %v742 = vand.u32 %v741, 4294901760
        %743 = vmatpush2.msra.mxu0 %v742
        %744 = vmatprep.subr.mxu0 0.0
        %v745 = vand.u32 %v341, 4294901760
        %v746 = vsub.f32 %v341, %v745
        %v747 = vand.u32 %v746, 4294901760
        %v748 = vsub.f32 %v746, %v747
        %v749 = vand.u32 %v748, 4294901760
        %750 = vmatpush2.msra.mxu0 %v749
        %751 = vmatprep.subr.mxu0 0.0
        %v752 = vand.u32 %v340, 4294901760
        %v753 = vsub.f32 %v340, %v752
        %v754 = vand.u32 %v753, 4294901760
        %v755 = vsub.f32 %v753, %v754
        %v756 = vand.u32 %v755, 4294901760
        %757 = vmatpush2.msra.mxu0 %v756
        %758 = vmatprep.subr.mxu0 0.0
        %v759 = vand.u32 %v339, 4294901760
        %v760 = vsub.f32 %v339, %v759
        %v761 = vand.u32 %v760, 4294901760
        %v762 = vsub.f32 %v760, %v761
        %v763 = vand.u32 %v762, 4294901760
        %764 = vmatpush2.msra.mxu0 %v763
        %765 = vmatprep.subr.mxu0 0.0
        %v766 = vand.u32 %v338, 4294901760
        %v767 = vsub.f32 %v338, %v766
        %v768 = vand.u32 %v767, 4294901760
        %v769 = vsub.f32 %v767, %v768
        %v770 = vand.u32 %v769, 4294901760
        %771 = vmatpush2.msra.mxu0 %v770
        %v772 = vand.u32 %v416, 4294901760
        %773 = vmatprep.mubr.f32.mxu0 %v772
        %v774 = vand.u32 %v414, 4294901760
        %775 = vmatmul.mubr.f32.gmra.mxu0 %v774
        %v776 = vpop.f32.mrf.mxu0
        %v777 = vadd.f32 %v530, %v776
        %v778 = vpop.f32.mrf.mxu0
        %v779 = vand.u32 %v420, 4294901760
        %780 = vmatprep.mubr.f32.mxu0 %v779
        %v781 = vand.u32 %v418, 4294901760
        %782 = vmatmul.mubr.f32.gmra.mxu0 %v781
        %v783 = vpop.f32.mrf.mxu0
        %v784 = vadd.f32 %v545, %v783
        %v785 = vpop.f32.mrf.mxu0
        %786 = vdwg.mxu0
        %787 = vmatprep.subr.mxu0 0.0
        %v788 = vand.u32 %v337, 4294901760
        %v789 = vsub.f32 %v337, %v788
        %790 = vmatpush1.msra.mxu0 %v789
        %791 = vmatprep.subr.mxu0 0.0
        %v792 = vand.u32 %v336, 4294901760
        %v793 = vsub.f32 %v336, %v792
        %794 = vmatpush1.msra.mxu0 %v793
        %795 = vmatprep.subr.mxu0 0.0
        %v796 = vand.u32 %v335, 4294901760
        %v797 = vsub.f32 %v335, %v796
        %798 = vmatpush1.msra.mxu0 %v797
        %799 = vmatprep.subr.mxu0 0.0
        %v800 = vand.u32 %v334, 4294901760
        %v801 = vsub.f32 %v334, %v800
        %802 = vmatpush1.msra.mxu0 %v801
        %803 = vmatprep.subr.mxu0 0.0
        %v804 = vand.u32 %v333, 4294901760
        %v805 = vsub.f32 %v333, %v804
        %806 = vmatpush1.msra.mxu0 %v805
        %807 = vmatprep.subr.mxu0 0.0
        %v808 = vand.u32 %v332, 4294901760
        %v809 = vsub.f32 %v332, %v808
        %810 = vmatpush1.msra.mxu0 %v809
        %811 = vmatprep.subr.mxu0 0.0
        %v812 = vand.u32 %v331, 4294901760
        %v813 = vsub.f32 %v331, %v812
        %814 = vmatpush1.msra.mxu0 %v813
        %815 = vmatprep.subr.mxu0 0.0
        %v816 = vand.u32 %v330, 4294901760
        %v817 = vsub.f32 %v330, %v816
        %818 = vmatpush1.msra.mxu0 %v817
        %819 = vmatprep.subr.mxu0 0.0
        %v820 = vand.u32 %v329, 4294901760
        %v821 = vsub.f32 %v329, %v820
        %822 = vmatpush1.msra.mxu0 %v821
        %823 = vmatprep.subr.mxu0 0.0
        %v824 = vand.u32 %v328, 4294901760
        %v825 = vsub.f32 %v328, %v824
        %826 = vmatpush1.msra.mxu0 %v825
        %827 = vmatprep.subr.mxu0 0.0
        %v828 = vand.u32 %v327, 4294901760
        %v829 = vsub.f32 %v327, %v828
        %830 = vmatpush1.msra.mxu0 %v829
        %831 = vmatprep.subr.mxu0 0.0
        %v832 = vand.u32 %v326, 4294901760
        %v833 = vsub.f32 %v326, %v832
        %834 = vmatpush1.msra.mxu0 %v833
        %835 = vmatprep.subr.mxu0 0.0
        %v836 = vand.u32 %v325, 4294901760
        %v837 = vsub.f32 %v325, %v836
        %838 = vmatpush1.msra.mxu0 %v837
        %839 = vmatprep.subr.mxu0 0.0
        %v840 = vand.u32 %v324, 4294901760
        %v841 = vsub.f32 %v324, %v840
        %842 = vmatpush1.msra.mxu0 %v841
        %843 = vmatprep.subr.mxu0 0.0
        %v844 = vand.u32 %v323, 4294901760
        %v845 = vsub.f32 %v323, %v844
        %846 = vmatpush1.msra.mxu0 %v845
        %847 = vmatprep.subr.mxu0 0.0
        %v848 = vand.u32 %v322, 4294901760
        %v849 = vsub.f32 %v322, %v848
        %850 = vmatpush1.msra.mxu0 %v849
        %851 = vmatprep.subr.mxu0 0.0
        %v852 = vand.u32 %v353, 4294901760
        %v853 = vsub.f32 %v353, %v852
        %854 = vmatpush2.msra.mxu0 %v853
        %855 = vmatprep.subr.mxu0 0.0
        %v856 = vand.u32 %v352, 4294901760
        %v857 = vsub.f32 %v352, %v856
        %858 = vmatpush2.msra.mxu0 %v857
        %859 = vmatprep.subr.mxu0 0.0
        %v860 = vand.u32 %v351, 4294901760
        %v861 = vsub.f32 %v351, %v860
        %862 = vmatpush2.msra.mxu0 %v861
        %863 = vmatprep.subr.mxu0 0.0
        %v864 = vand.u32 %v350, 4294901760
        %v865 = vsub.f32 %v350, %v864
        %866 = vmatpush2.msra.mxu0 %v865
        %867 = vmatprep.subr.mxu0 0.0
        %v868 = vand.u32 %v349, 4294901760
        %v869 = vsub.f32 %v349, %v868
        %870 = vmatpush2.msra.mxu0 %v869
        %871 = vmatprep.subr.mxu0 0.0
        %v872 = vand.u32 %v348, 4294901760
        %v873 = vsub.f32 %v348, %v872
        %874 = vmatpush2.msra.mxu0 %v873
        %875 = vmatprep.subr.mxu0 0.0
        %v876 = vand.u32 %v347, 4294901760
        %v877 = vsub.f32 %v347, %v876
        %878 = vmatpush2.msra.mxu0 %v877
        %879 = vmatprep.subr.mxu0 0.0
        %v880 = vand.u32 %v346, 4294901760
        %v881 = vsub.f32 %v346, %v880
        %882 = vmatpush2.msra.mxu0 %v881
        %883 = vmatprep.subr.mxu0 0.0
        %v884 = vand.u32 %v345, 4294901760
        %v885 = vsub.f32 %v345, %v884
        %886 = vmatpush2.msra.mxu0 %v885
        %887 = vmatprep.subr.mxu0 0.0
        %v888 = vand.u32 %v344, 4294901760
        %v889 = vsub.f32 %v344, %v888
        %890 = vmatpush2.msra.mxu0 %v889
        %891 = vmatprep.subr.mxu0 0.0
        %v892 = vand.u32 %v343, 4294901760
        %v893 = vsub.f32 %v343, %v892
        %894 = vmatpush2.msra.mxu0 %v893
        %895 = vmatprep.subr.mxu0 0.0
        %v896 = vand.u32 %v342, 4294901760
        %v897 = vsub.f32 %v342, %v896
        %898 = vmatpush2.msra.mxu0 %v897
        %899 = vmatprep.subr.mxu0 0.0
        %v900 = vand.u32 %v341, 4294901760
        %v901 = vsub.f32 %v341, %v900
        %902 = vmatpush2.msra.mxu0 %v901
        %903 = vmatprep.subr.mxu0 0.0
        %v904 = vand.u32 %v340, 4294901760
        %v905 = vsub.f32 %v340, %v904
        %906 = vmatpush2.msra.mxu0 %v905
        %907 = vmatprep.subr.mxu0 0.0
        %v908 = vand.u32 %v339, 4294901760
        %v909 = vsub.f32 %v339, %v908
        %910 = vmatpush2.msra.mxu0 %v909
        %911 = vmatprep.subr.mxu0 0.0
        %v912 = vand.u32 %v338, 4294901760
        %v913 = vsub.f32 %v338, %v912
        %914 = vmatpush2.msra.mxu0 %v913
        %v915 = vand.u32 %v416, 4294901760
        %v916 = vsub.f32 %v416, %v915
        %917 = vmatprep.mubr.f32.mxu0 %v916
        %v918 = vand.u32 %v414, 4294901760
        %v919 = vsub.f32 %v414, %v918
        %920 = vmatmul.mubr.f32.gmra.mxu0 %v919
        %v921 = vpop.f32.mrf.mxu0
        %v922 = vadd.f32 %v777, %v921
        %v923 = vpop.f32.mrf.mxu0
        %v924 = vand.u32 %v420, 4294901760
        %v925 = vsub.f32 %v420, %v924
        %926 = vmatprep.mubr.f32.mxu0 %v925
        %v927 = vand.u32 %v418, 4294901760
        %v928 = vsub.f32 %v418, %v927
        %929 = vmatmul.mubr.f32.gmra.mxu0 %v928
        %v930 = vpop.f32.mrf.mxu0
        %v931 = vadd.f32 %v784, %v930
        %v932 = vpop.f32.mrf.mxu0
        %933 = vdwg.mxu0
        %934 = vmatprep.subr.mxu0 0.0
        %v935 = vand.u32 %v337, 4294901760
        %936 = vmatpush1.msra.mxu0 %v935
        %937 = vmatprep.subr.mxu0 0.0
        %v938 = vand.u32 %v336, 4294901760
        %939 = vmatpush1.msra.mxu0 %v938
        %940 = vmatprep.subr.mxu0 0.0
        %v941 = vand.u32 %v335, 4294901760
        %942 = vmatpush1.msra.mxu0 %v941
        %943 = vmatprep.subr.mxu0 0.0
        %v944 = vand.u32 %v334, 4294901760
        %945 = vmatpush1.msra.mxu0 %v944
        %946 = vmatprep.subr.mxu0 0.0
        %v947 = vand.u32 %v333, 4294901760
        %948 = vmatpush1.msra.mxu0 %v947
        %949 = vmatprep.subr.mxu0 0.0
        %v950 = vand.u32 %v332, 4294901760
        %951 = vmatpush1.msra.mxu0 %v950
        %952 = vmatprep.subr.mxu0 0.0
        %v953 = vand.u32 %v331, 4294901760
        %954 = vmatpush1.msra.mxu0 %v953
        %955 = vmatprep.subr.mxu0 0.0
        %v956 = vand.u32 %v330, 4294901760
        %957 = vmatpush1.msra.mxu0 %v956
        %958 = vmatprep.subr.mxu0 0.0
        %v959 = vand.u32 %v329, 4294901760
        %960 = vmatpush1.msra.mxu0 %v959
        %961 = vmatprep.subr.mxu0 0.0
        %v962 = vand.u32 %v328, 4294901760
        %963 = vmatpush1.msra.mxu0 %v962
        %964 = vmatprep.subr.mxu0 0.0
        %v965 = vand.u32 %v327, 4294901760
        %966 = vmatpush1.msra.mxu0 %v965
        %967 = vmatprep.subr.mxu0 0.0
        %v968 = vand.u32 %v326, 4294901760
        %969 = vmatpush1.msra.mxu0 %v968
        %970 = vmatprep.subr.mxu0 0.0
        %v971 = vand.u32 %v325, 4294901760
        %972 = vmatpush1.msra.mxu0 %v971
        %973 = vmatprep.subr.mxu0 0.0
        %v974 = vand.u32 %v324, 4294901760
        %975 = vmatpush1.msra.mxu0 %v974
        %976 = vmatprep.subr.mxu0 0.0
        %v977 = vand.u32 %v323, 4294901760
        %978 = vmatpush1.msra.mxu0 %v977
        %979 = vmatprep.subr.mxu0 0.0
        %v980 = vand.u32 %v322, 4294901760
        %981 = vmatpush1.msra.mxu0 %v980
        %982 = vmatprep.subr.mxu0 0.0
        %v983 = vand.u32 %v353, 4294901760
        %984 = vmatpush2.msra.mxu0 %v983
        %985 = vmatprep.subr.mxu0 0.0
        %v986 = vand.u32 %v352, 4294901760
        %987 = vmatpush2.msra.mxu0 %v986
        %988 = vmatprep.subr.mxu0 0.0
        %v989 = vand.u32 %v351, 4294901760
        %990 = vmatpush2.msra.mxu0 %v989
        %991 = vmatprep.subr.mxu0 0.0
        %v992 = vand.u32 %v350, 4294901760
        %993 = vmatpush2.msra.mxu0 %v992
        %994 = vmatprep.subr.mxu0 0.0
        %v995 = vand.u32 %v349, 4294901760
        %996 = vmatpush2.msra.mxu0 %v995
        %997 = vmatprep.subr.mxu0 0.0
        %v998 = vand.u32 %v348, 4294901760
        %999 = vmatpush2.msra.mxu0 %v998
        %1000 = vmatprep.subr.mxu0 0.0
        %v1001 = vand.u32 %v347, 4294901760
        %1002 = vmatpush2.msra.mxu0 %v1001
        %1003 = vmatprep.subr.mxu0 0.0
        %v1004 = vand.u32 %v346, 4294901760
        %1005 = vmatpush2.msra.mxu0 %v1004
        %1006 = vmatprep.subr.mxu0 0.0
        %v1007 = vand.u32 %v345, 4294901760
        %1008 = vmatpush2.msra.mxu0 %v1007
        %1009 = vmatprep.subr.mxu0 0.0
        %v1010 = vand.u32 %v344, 4294901760
        %1011 = vmatpush2.msra.mxu0 %v1010
        %1012 = vmatprep.subr.mxu0 0.0
        %v1013 = vand.u32 %v343, 4294901760
        %1014 = vmatpush2.msra.mxu0 %v1013
        %1015 = vmatprep.subr.mxu0 0.0
        %v1016 = vand.u32 %v342, 4294901760
        %1017 = vmatpush2.msra.mxu0 %v1016
        %1018 = vmatprep.subr.mxu0 0.0
        %v1019 = vand.u32 %v341, 4294901760
        %1020 = vmatpush2.msra.mxu0 %v1019
        %1021 = vmatprep.subr.mxu0 0.0
        %v1022 = vand.u32 %v340, 4294901760
        %1023 = vmatpush2.msra.mxu0 %v1022
        %1024 = vmatprep.subr.mxu0 0.0
        %v1025 = vand.u32 %v339, 4294901760
        %1026 = vmatpush2.msra.mxu0 %v1025
        %1027 = vmatprep.subr.mxu0 0.0
        %v1028 = vand.u32 %v338, 4294901760
        %1029 = vmatpush2.msra.mxu0 %v1028
        %v1030 = vand.u32 %v416, 4294901760
        %v1031 = vsub.f32 %v416, %v1030
        %v1032 = vand.u32 %v1031, 4294901760
        %1033 = vmatprep.mubr.f32.mxu0 %v1032
        %v1034 = vand.u32 %v414, 4294901760
        %v1035 = vsub.f32 %v414, %v1034
        %v1036 = vand.u32 %v1035, 4294901760
        %1037 = vmatmul.mubr.f32.gmra.mxu0 %v1036
        %v1038 = vpop.f32.mrf.mxu0
        %v1039 = vadd.f32 %v922, %v1038
        %v1040 = vpop.f32.mrf.mxu0
        %v1041 = vand.u32 %v420, 4294901760
        %v1042 = vsub.f32 %v420, %v1041
        %v1043 = vand.u32 %v1042, 4294901760
        %1044 = vmatprep.mubr.f32.mxu0 %v1043
        %v1045 = vand.u32 %v418, 4294901760
        %v1046 = vsub.f32 %v418, %v1045
        %v1047 = vand.u32 %v1046, 4294901760
        %1048 = vmatmul.mubr.f32.gmra.mxu0 %v1047
        %v1049 = vpop.f32.mrf.mxu0
        %v1050 = vadd.f32 %v931, %v1049
        %v1051 = vpop.f32.mrf.mxu0
        %1052 = vdwg.mxu0
        %1053 = vmatprep.subr.mxu0 0.0
        %v1054 = vand.u32 %v337, 4294901760
        %v1055 = vsub.f32 %v337, %v1054
        %v1056 = vand.u32 %v1055, 4294901760
        %1057 = vmatpush1.msra.mxu0 %v1056
        %1058 = vmatprep.subr.mxu0 0.0
        %v1059 = vand.u32 %v336, 4294901760
        %v1060 = vsub.f32 %v336, %v1059
        %v1061 = vand.u32 %v1060, 4294901760
        %1062 = vmatpush1.msra.mxu0 %v1061
        %1063 = vmatprep.subr.mxu0 0.0
        %v1064 = vand.u32 %v335, 4294901760
        %v1065 = vsub.f32 %v335, %v1064
        %v1066 = vand.u32 %v1065, 4294901760
        %1067 = vmatpush1.msra.mxu0 %v1066
        %1068 = vmatprep.subr.mxu0 0.0
        %v1069 = vand.u32 %v334, 4294901760
        %v1070 = vsub.f32 %v334, %v1069
        %v1071 = vand.u32 %v1070, 4294901760
        %1072 = vmatpush1.msra.mxu0 %v1071
        %1073 = vmatprep.subr.mxu0 0.0
        %v1074 = vand.u32 %v333, 4294901760
        %v1075 = vsub.f32 %v333, %v1074
        %v1076 = vand.u32 %v1075, 4294901760
        %1077 = vmatpush1.msra.mxu0 %v1076
        %1078 = vmatprep.subr.mxu0 0.0
        %v1079 = vand.u32 %v332, 4294901760
        %v1080 = vsub.f32 %v332, %v1079
        %v1081 = vand.u32 %v1080, 4294901760
        %1082 = vmatpush1.msra.mxu0 %v1081
        %1083 = vmatprep.subr.mxu0 0.0
        %v1084 = vand.u32 %v331, 4294901760
        %v1085 = vsub.f32 %v331, %v1084
        %v1086 = vand.u32 %v1085, 4294901760
        %1087 = vmatpush1.msra.mxu0 %v1086
        %1088 = vmatprep.subr.mxu0 0.0
        %v1089 = vand.u32 %v330, 4294901760
        %v1090 = vsub.f32 %v330, %v1089
        %v1091 = vand.u32 %v1090, 4294901760
        %1092 = vmatpush1.msra.mxu0 %v1091
        %1093 = vmatprep.subr.mxu0 0.0
        %v1094 = vand.u32 %v329, 4294901760
        %v1095 = vsub.f32 %v329, %v1094
        %v1096 = vand.u32 %v1095, 4294901760
        %1097 = vmatpush1.msra.mxu0 %v1096
        %1098 = vmatprep.subr.mxu0 0.0
        %v1099 = vand.u32 %v328, 4294901760
        %v1100 = vsub.f32 %v328, %v1099
        %v1101 = vand.u32 %v1100, 4294901760
        %1102 = vmatpush1.msra.mxu0 %v1101
        %1103 = vmatprep.subr.mxu0 0.0
        %v1104 = vand.u32 %v327, 4294901760
        %v1105 = vsub.f32 %v327, %v1104
        %v1106 = vand.u32 %v1105, 4294901760
        %1107 = vmatpush1.msra.mxu0 %v1106
        %1108 = vmatprep.subr.mxu0 0.0
        %v1109 = vand.u32 %v326, 4294901760
        %v1110 = vsub.f32 %v326, %v1109
        %v1111 = vand.u32 %v1110, 4294901760
        %1112 = vmatpush1.msra.mxu0 %v1111
        %1113 = vmatprep.subr.mxu0 0.0
        %v1114 = vand.u32 %v325, 4294901760
        %v1115 = vsub.f32 %v325, %v1114
        %v1116 = vand.u32 %v1115, 4294901760
        %1117 = vmatpush1.msra.mxu0 %v1116
        %1118 = vmatprep.subr.mxu0 0.0
        %v1119 = vand.u32 %v324, 4294901760
        %v1120 = vsub.f32 %v324, %v1119
        %v1121 = vand.u32 %v1120, 4294901760
        %1122 = vmatpush1.msra.mxu0 %v1121
        %1123 = vmatprep.subr.mxu0 0.0
        %v1124 = vand.u32 %v323, 4294901760
        %v1125 = vsub.f32 %v323, %v1124
        %v1126 = vand.u32 %v1125, 4294901760
        %1127 = vmatpush1.msra.mxu0 %v1126
        %1128 = vmatprep.subr.mxu0 0.0
        %v1129 = vand.u32 %v322, 4294901760
        %v1130 = vsub.f32 %v322, %v1129
        %v1131 = vand.u32 %v1130, 4294901760
        %1132 = vmatpush1.msra.mxu0 %v1131
        %1133 = vmatprep.subr.mxu0 0.0
        %v1134 = vand.u32 %v353, 4294901760
        %v1135 = vsub.f32 %v353, %v1134
        %v1136 = vand.u32 %v1135, 4294901760
        %1137 = vmatpush2.msra.mxu0 %v1136
        %1138 = vmatprep.subr.mxu0 0.0
        %v1139 = vand.u32 %v352, 4294901760
        %v1140 = vsub.f32 %v352, %v1139
        %v1141 = vand.u32 %v1140, 4294901760
        %1142 = vmatpush2.msra.mxu0 %v1141
        %1143 = vmatprep.subr.mxu0 0.0
        %v1144 = vand.u32 %v351, 4294901760
        %v1145 = vsub.f32 %v351, %v1144
        %v1146 = vand.u32 %v1145, 4294901760
        %1147 = vmatpush2.msra.mxu0 %v1146
        %1148 = vmatprep.subr.mxu0 0.0
        %v1149 = vand.u32 %v350, 4294901760
        %v1150 = vsub.f32 %v350, %v1149
        %v1151 = vand.u32 %v1150, 4294901760
        %1152 = vmatpush2.msra.mxu0 %v1151
        %1153 = vmatprep.subr.mxu0 0.0
        %v1154 = vand.u32 %v349, 4294901760
        %v1155 = vsub.f32 %v349, %v1154
        %v1156 = vand.u32 %v1155, 4294901760
        %1157 = vmatpush2.msra.mxu0 %v1156
        %1158 = vmatprep.subr.mxu0 0.0
        %v1159 = vand.u32 %v348, 4294901760
        %v1160 = vsub.f32 %v348, %v1159
        %v1161 = vand.u32 %v1160, 4294901760
        %1162 = vmatpush2.msra.mxu0 %v1161
        %1163 = vmatprep.subr.mxu0 0.0
        %v1164 = vand.u32 %v347, 4294901760
        %v1165 = vsub.f32 %v347, %v1164
        %v1166 = vand.u32 %v1165, 4294901760
        %1167 = vmatpush2.msra.mxu0 %v1166
        %1168 = vmatprep.subr.mxu0 0.0
        %v1169 = vand.u32 %v346, 4294901760
        %v1170 = vsub.f32 %v346, %v1169
        %v1171 = vand.u32 %v1170, 4294901760
        %1172 = vmatpush2.msra.mxu0 %v1171
        %1173 = vmatprep.subr.mxu0 0.0
        %v1174 = vand.u32 %v345, 4294901760
        %v1175 = vsub.f32 %v345, %v1174
        %v1176 = vand.u32 %v1175, 4294901760
        %1177 = vmatpush2.msra.mxu0 %v1176
        %1178 = vmatprep.subr.mxu0 0.0
        %v1179 = vand.u32 %v344, 4294901760
        %v1180 = vsub.f32 %v344, %v1179
        %v1181 = vand.u32 %v1180, 4294901760
        %1182 = vmatpush2.msra.mxu0 %v1181
        %1183 = vmatprep.subr.mxu0 0.0
        %v1184 = vand.u32 %v343, 4294901760
        %v1185 = vsub.f32 %v343, %v1184
        %v1186 = vand.u32 %v1185, 4294901760
        %1187 = vmatpush2.msra.mxu0 %v1186
        %1188 = vmatprep.subr.mxu0 0.0
        %v1189 = vand.u32 %v342, 4294901760
        %v1190 = vsub.f32 %v342, %v1189
        %v1191 = vand.u32 %v1190, 4294901760
        %1192 = vmatpush2.msra.mxu0 %v1191
        %1193 = vmatprep.subr.mxu0 0.0
        %v1194 = vand.u32 %v341, 4294901760
        %v1195 = vsub.f32 %v341, %v1194
        %v1196 = vand.u32 %v1195, 4294901760
        %1197 = vmatpush2.msra.mxu0 %v1196
        %1198 = vmatprep.subr.mxu0 0.0
        %v1199 = vand.u32 %v340, 4294901760
        %v1200 = vsub.f32 %v340, %v1199
        %v1201 = vand.u32 %v1200, 4294901760
        %1202 = vmatpush2.msra.mxu0 %v1201
        %1203 = vmatprep.subr.mxu0 0.0
        %v1204 = vand.u32 %v339, 4294901760
        %v1205 = vsub.f32 %v339, %v1204
        %v1206 = vand.u32 %v1205, 4294901760
        %1207 = vmatpush2.msra.mxu0 %v1206
        %1208 = vmatprep.subr.mxu0 0.0
        %v1209 = vand.u32 %v338, 4294901760
        %v1210 = vsub.f32 %v338, %v1209
        %v1211 = vand.u32 %v1210, 4294901760
        %1212 = vmatpush2.msra.mxu0 %v1211
        %v1213 = vand.u32 %v416, 4294901760
        %1214 = vmatprep.mubr.f32.mxu0 %v1213
        %v1215 = vand.u32 %v414, 4294901760
        %1216 = vmatmul.mubr.f32.gmra.mxu0 %v1215
        %v1217 = vpop.f32.mrf.mxu0
        %v1218 = vadd.f32 %v1039, %v1217
        %v1219 = vpop.f32.mrf.mxu0
        %v1220 = vand.u32 %v420, 4294901760
        %1221 = vmatprep.mubr.f32.mxu0 %v1220
        %v1222 = vand.u32 %v418, 4294901760
        %1223 = vmatmul.mubr.f32.gmra.mxu0 %v1222
        %v1224 = vpop.f32.mrf.mxu0
        %v1225 = vadd.f32 %v1050, %v1224
        %v1226 = vpop.f32.mrf.mxu0
        %1227 = vdwg.mxu0
        %1228 = vmatprep.subr.mxu0 0.0
        %v1229 = vand.u32 %v337, 4294901760
        %1230 = vmatpush1.msra.mxu0 %v1229
        %1231 = vmatprep.subr.mxu0 0.0
        %v1232 = vand.u32 %v336, 4294901760
        %1233 = vmatpush1.msra.mxu0 %v1232
        %1234 = vmatprep.subr.mxu0 0.0
        %v1235 = vand.u32 %v335, 4294901760
        %1236 = vmatpush1.msra.mxu0 %v1235
        %1237 = vmatprep.subr.mxu0 0.0
        %v1238 = vand.u32 %v334, 4294901760
        %1239 = vmatpush1.msra.mxu0 %v1238
        %1240 = vmatprep.subr.mxu0 0.0
        %v1241 = vand.u32 %v333, 4294901760
        %1242 = vmatpush1.msra.mxu0 %v1241
        %1243 = vmatprep.subr.mxu0 0.0
        %v1244 = vand.u32 %v332, 4294901760
        %1245 = vmatpush1.msra.mxu0 %v1244
        %1246 = vmatprep.subr.mxu0 0.0
        %v1247 = vand.u32 %v331, 4294901760
        %1248 = vmatpush1.msra.mxu0 %v1247
        %1249 = vmatprep.subr.mxu0 0.0
        %v1250 = vand.u32 %v330, 4294901760
        %1251 = vmatpush1.msra.mxu0 %v1250
        %1252 = vmatprep.subr.mxu0 0.0
        %v1253 = vand.u32 %v329, 4294901760
        %1254 = vmatpush1.msra.mxu0 %v1253
        %1255 = vmatprep.subr.mxu0 0.0
        %v1256 = vand.u32 %v328, 4294901760
        %1257 = vmatpush1.msra.mxu0 %v1256
        %1258 = vmatprep.subr.mxu0 0.0
        %v1259 = vand.u32 %v327, 4294901760
        %1260 = vmatpush1.msra.mxu0 %v1259
        %1261 = vmatprep.subr.mxu0 0.0
        %v1262 = vand.u32 %v326, 4294901760
        %1263 = vmatpush1.msra.mxu0 %v1262
        %1264 = vmatprep.subr.mxu0 0.0
        %v1265 = vand.u32 %v325, 4294901760
        %1266 = vmatpush1.msra.mxu0 %v1265
        %1267 = vmatprep.subr.mxu0 0.0
        %v1268 = vand.u32 %v324, 4294901760
        %1269 = vmatpush1.msra.mxu0 %v1268
        %1270 = vmatprep.subr.mxu0 0.0
        %v1271 = vand.u32 %v323, 4294901760
        %1272 = vmatpush1.msra.mxu0 %v1271
        %1273 = vmatprep.subr.mxu0 0.0
        %v1274 = vand.u32 %v322, 4294901760
        %1275 = vmatpush1.msra.mxu0 %v1274
        %1276 = vmatprep.subr.mxu0 0.0
        %v1277 = vand.u32 %v353, 4294901760
        %1278 = vmatpush2.msra.mxu0 %v1277
        %1279 = vmatprep.subr.mxu0 0.0
        %v1280 = vand.u32 %v352, 4294901760
        %1281 = vmatpush2.msra.mxu0 %v1280
        %1282 = vmatprep.subr.mxu0 0.0
        %v1283 = vand.u32 %v351, 4294901760
        %1284 = vmatpush2.msra.mxu0 %v1283
        %1285 = vmatprep.subr.mxu0 0.0
        %v1286 = vand.u32 %v350, 4294901760
        %1287 = vmatpush2.msra.mxu0 %v1286
        %1288 = vmatprep.subr.mxu0 0.0
        %v1289 = vand.u32 %v349, 4294901760
        %1290 = vmatpush2.msra.mxu0 %v1289
        %1291 = vmatprep.subr.mxu0 0.0
        %v1292 = vand.u32 %v348, 4294901760
        %1293 = vmatpush2.msra.mxu0 %v1292
        %1294 = vmatprep.subr.mxu0 0.0
        %v1295 = vand.u32 %v347, 4294901760
        %1296 = vmatpush2.msra.mxu0 %v1295
        %1297 = vmatprep.subr.mxu0 0.0
        %v1298 = vand.u32 %v346, 4294901760
        %1299 = vmatpush2.msra.mxu0 %v1298
        %1300 = vmatprep.subr.mxu0 0.0
        %v1301 = vand.u32 %v345, 4294901760
        %1302 = vmatpush2.msra.mxu0 %v1301
        %1303 = vmatprep.subr.mxu0 0.0
        %v1304 = vand.u32 %v344, 4294901760
        %1305 = vmatpush2.msra.mxu0 %v1304
        %1306 = vmatprep.subr.mxu0 0.0
        %v1307 = vand.u32 %v343, 4294901760
        %1308 = vmatpush2.msra.mxu0 %v1307
        %1309 = vmatprep.subr.mxu0 0.0
        %v1310 = vand.u32 %v342, 4294901760
        %1311 = vmatpush2.msra.mxu0 %v1310
        %1312 = vmatprep.subr.mxu0 0.0
        %v1313 = vand.u32 %v341, 4294901760
        %1314 = vmatpush2.msra.mxu0 %v1313
        %1315 = vmatprep.subr.mxu0 0.0
        %v1316 = vand.u32 %v340, 4294901760
        %1317 = vmatpush2.msra.mxu0 %v1316
        %1318 = vmatprep.subr.mxu0 0.0
        %v1319 = vand.u32 %v339, 4294901760
        %1320 = vmatpush2.msra.mxu0 %v1319
        %1321 = vmatprep.subr.mxu0 0.0
        %v1322 = vand.u32 %v338, 4294901760
        %1323 = vmatpush2.msra.mxu0 %v1322
        %v1324 = vand.u32 %v416, 4294901760
        %1325 = vmatprep.mubr.f32.mxu0 %v1324
        %v1326 = vand.u32 %v414, 4294901760
        %1327 = vmatmul.mubr.f32.gmra.mxu0 %v1326
        %v1328 = vpop.f32.mrf.mxu0
        %v1329 = vadd.f32 %v1218, %v1328
        %v1330 = vpop.f32.mrf.mxu0
        %v1331 = vand.u32 %v420, 4294901760
        %1332 = vmatprep.mubr.f32.mxu0 %v1331
        %v1333 = vand.u32 %v418, 4294901760
        %1334 = vmatmul.mubr.f32.gmra.mxu0 %v1333
        %v1335 = vpop.f32.mrf.mxu0
        %v1336 = vadd.f32 %v1225, %v1335
        %v1337 = vpop.f32.mrf.mxu0
        %1338 = vdwg.mxu0
        %v1339 = vrcp.pop %v1329
        %v1340 = vrcp.pop %v1336
        %1343 = vrot.lane.b32.xlu0 %v1339, 1
        %v1344 = vpop.permute.xlu0 %1343
        %1345 = vrot.lane.b32.xlu0 %v1340, 1
        %v1346 = vpop.permute.xlu0 %1345
        %v1349 = vmul.f32 %v1329, %v1344
        %v1350 = vmul.f32 %v1336, %v1346
        %v1351 = vadd.f32 %v1349, 3.8146973e-13
        %v1352 = vadd.f32 %v1350, 3.8146973e-13
        %1353 = vrot.lane.b32.xlu0 %v1339, 2
        %v1354 = vpop.permute.xlu0 %1353
        %1355 = vrot.lane.b32.xlu0 %v1340, 2
        %v1356 = vpop.permute.xlu0 %1355
        %v1359 = vmul.f32 %v1329, %v1354
        %v1360 = vmul.f32 %v1336, %v1356
        %v1361 = vadd.f32 %v1359, 3.8146973e-13
        %v1362 = vadd.f32 %v1360, 3.8146973e-13
        %1363 = vrot.lane.b32.xlu0 %v1339, 3
        %v1364 = vpop.permute.xlu0 %1363
        %1365 = vrot.lane.b32.xlu0 %v1340, 3
        %v1366 = vpop.permute.xlu0 %1365
        %v1369 = vmul.f32 %v1329, %v1364
        %v1370 = vmul.f32 %v1336, %v1366
        %v1371 = vadd.f32 %v1369, 9.671111e-06
        %v1372 = vadd.f32 %v1370, 9.671111e-06
        %v1373 = vmul.f32 %v1351, %v1351
        %v1374 = vmul.f32 %v1352, %v1352
        %v1375 = vmul.f32 %v1373, 0.9999744
        %v1376 = vmul.f32 %v1374, 0.9999744
        %1379 = vrot.lane.b32.xlu0 %v1375, 2
        %v1380 = vpop.permute.xlu0 %1379
        %1381 = vrot.lane.b32.xlu0 %v1376, 2
        %v1382 = vpop.permute.xlu0 %1381
        %v1385 = vsub.f32 %v1371, %v1380
        %v1386 = vsub.f32 %v1372, %v1382
        %1387 = vrot.lane.b32.xlu0 %v1339, 4
        %v1388 = vpop.permute.xlu0 %1387
        %1389 = vrot.lane.b32.xlu0 %v1340, 4
        %v1390 = vpop.permute.xlu0 %1389
        %v1393 = vmul.f32 %v1329, %v1388
        %v1394 = vmul.f32 %v1336, %v1390
        %v1395 = vadd.f32 %v1393, 5.684342e-21
        %v1396 = vadd.f32 %v1394, 5.684342e-21
        %1399 = vrot.lane.b32.xlu0 %v1361, 127
        %v1400 = vpop.permute.xlu0 %1399
        %1401 = vrot.lane.b32.xlu0 %v1362, 127
        %v1402 = vpop.permute.xlu0 %1401
        %v1405 = vmul.f32 %v1351, %v1400
        %v1406 = vmul.f32 %v1352, %v1402
        %v1407 = vmul.f32 %v1405, 0.9999744
        %v1408 = vmul.f32 %v1406, 0.9999744
        %1411 = vrot.lane.b32.xlu0 %v1407, 3
        %v1412 = vpop.permute.xlu0 %1411
        %1413 = vrot.lane.b32.xlu0 %v1408, 3
        %v1414 = vpop.permute.xlu0 %1413
        %v1417 = vsub.f32 %v1395, %v1412
        %v1418 = vsub.f32 %v1396, %v1414
        %1419 = vrot.lane.b32.xlu0 %v1339, 5
        %v1420 = vpop.permute.xlu0 %1419
        %1421 = vrot.lane.b32.xlu0 %v1340, 5
        %v1422 = vpop.permute.xlu0 %1421
        %v1425 = vmul.f32 %v1329, %v1420
        %v1426 = vmul.f32 %v1336, %v1422
        %v1427 = vadd.f32 %v1425, 9.671111e-06
        %v1428 = vadd.f32 %v1426, 9.671111e-06
        %v1429 = vmul.f32 %v1361, %v1361
        %v1430 = vmul.f32 %v1362, %v1362
        %v1431 = vmul.f32 %v1429, 0.9999744
        %v1432 = vmul.f32 %v1430, 0.9999744
        %1435 = vrot.lane.b32.xlu0 %v1431, 3
        %v1436 = vpop.permute.xlu0 %1435
        %1437 = vrot.lane.b32.xlu0 %v1432, 3
        %v1438 = vpop.permute.xlu0 %1437
        %v1441 = vsub.f32 %v1427, %v1436
        %v1442 = vsub.f32 %v1428, %v1438
        %vm1443 = vcmp.eq.s32.totalorder %v355, 0
        %vm1444 = vcmp.eq.s32.totalorder %v355, 1
        %vm1445 = vcmp.eq.s32.totalorder %v355, 2
        %vm1446 = vcmp.eq.s32.totalorder %v355, 3
        %vm1447 = vcmp.eq.s32.totalorder %v355, 4
        %vm1448 = vmor %vm1446, %vm1447
        %vm1449 = vcmp.eq.s32.totalorder %v355, 5
        %1451 = vset.pattern.permute.xlu0 5
        %1452 = vperm.xlu0 %1451, %v1441
        %v1453 = vpop.permute.xlu0 %1452
        %1456 = vset.pattern.permute.xlu0 5
        %1457 = vperm.xlu0 %1456, %v1442
        %v1458 = vpop.permute.xlu0 %1457
        %v1460 = vsel %vm1449, %v1453, 0.0
        %v1461 = vsel %vm1449, %v1458, 0.0
        %1463 = vset.pattern.permute.xlu0 4
        %1464 = vperm.xlu0 %1463, %v1417
        %v1465 = vpop.permute.xlu0 %1464
        %1468 = vset.pattern.permute.xlu0 4
        %1469 = vperm.xlu0 %1468, %v1418
        %v1470 = vpop.permute.xlu0 %1469
        %v1472 = vsel %vm1448, %v1465, %v1460
        %v1473 = vsel %vm1448, %v1470, %v1461
        %1475 = vset.pattern.permute.xlu0 3
        %1476 = vperm.xlu0 %1475, %v1385
        %v1477 = vpop.permute.xlu0 %1476
        %1480 = vset.pattern.permute.xlu0 3
        %1481 = vperm.xlu0 %1480, %v1386
        %v1482 = vpop.permute.xlu0 %1481
        %v1484 = vsel %vm1445, %v1477, %v1472
        %v1485 = vsel %vm1445, %v1482, %v1473
        %1486 = vset.pattern.permute.xlu0 2
        %1487 = vperm.xlu0 %1486, %v1361
        %v1488 = vpop.permute.xlu0 %1487
        %1490 = vset.pattern.permute.xlu0 2
        %1491 = vperm.xlu0 %1490, %v1362
        %v1492 = vpop.permute.xlu0 %1491
        %v1494 = vsel %vm1444, %v1488, %v1484
        %v1495 = vsel %vm1444, %v1492, %v1485
        %1497 = vset.pattern.permute.xlu0 1
        %1498 = vperm.xlu0 %1497, %v1351
        %v1499 = vpop.permute.xlu0 %1498
        %1502 = vset.pattern.permute.xlu0 1
        %1503 = vperm.xlu0 %1502, %v1352
        %v1504 = vpop.permute.xlu0 %1503
        %v1506 = vsel %vm1443, %v1499, %v1494
        %v1507 = vsel %vm1443, %v1504, %v1495
        %s1508 = sld [smem:[#allocation3 + $0x1]]
        %s1509 = smul.f32 %s1508, %s305
        %v1510 = vstv %s1509
        %v1511 = vmul.f32 %v306, %v1510
        %v1512 = vmul.f32 %v307, %v1510
        %v1513 = vmul.f32 %v308, %v1510
        %v1514 = vmul.f32 %v309, %v1510
        %s1515 = sld [smem:[#allocation3 + $0x81]]
        %s1516 = smul.f32 %s1515, %s305
        %v1517 = vstv %s1516
        %v1518 = vmul.f32 %v310, %v1517
        %v1519 = vmul.f32 %v311, %v1517
        %v1520 = vmul.f32 %v312, %v1517
        %v1521 = vmul.f32 %v313, %v1517
        %v1522 = vadd.f32 %v1511, %v1518
        %v1523 = vadd.f32 %v1512, %v1519
        %v1524 = vadd.f32 %v1513, %v1520
        %v1525 = vadd.f32 %v1514, %v1521
        %s1526 = sld [smem:[#allocation3 + $0x101]]
        %s1527 = smul.f32 %s1526, %s305
        %v1528 = vstv %s1527
        %v1529 = vmul.f32 %v314, %v1528
        %v1530 = vmul.f32 %v315, %v1528
        %v1531 = vmul.f32 %v316, %v1528
        %v1532 = vmul.f32 %v317, %v1528
        %v1533 = vadd.f32 %v1522, %v1529
        %v1534 = vadd.f32 %v1523, %v1530
        %v1535 = vadd.f32 %v1524, %v1531
        %v1536 = vadd.f32 %v1525, %v1532
        %s1537 = sld [smem:[#allocation3 + $0x181]]
        %s1538 = smul.f32 %s1537, %s305
        %v1539 = vstv %s1538
        %v1540 = vmul.f32 %v318, %v1539
        %v1541 = vmul.f32 %v319, %v1539
        %v1542 = vmul.f32 %v320, %v1539
        %v1543 = vmul.f32 %v321, %v1539
        %v1544 = vadd.f32 %v1533, %v1540
        %v1545 = vadd.f32 %v1534, %v1541
        %v1546 = vadd.f32 %v1535, %v1542
        %v1547 = vadd.f32 %v1536, %v1543
        %s1548 = sld [smem:[#allocation8 + $0x1]]
        %s1549 = smul.f32 %s1548, %s305
        %v1550 = vstv %s1549
        %v1551 = vadd.f32 %v1544, %v1550
        %v1552 = vadd.f32 %v1545, %v1550
        %v1553 = vadd.f32 %v1546, %v1550
        %v1554 = vadd.f32 %v1547, %v1550
        %v1555 = vmax.f32 %v1551, %v1552
        %1556 = vmax.xlane.f32.xlu0 %v1555
        %v1557 = vpop.xlane.xlu0 %1556
        %v1558 = vmax.f32 %v1553, %v1554
        %1559 = vmax.xlane.f32.xlu0 %v1558
        %v1560 = vpop.xlane.xlu0 %1559
        %v1561 = vsub.f32 %v1551, %v1557
        %v1562 = vsub.f32 %v1552, %v1557
        %v1563 = vsub.f32 %v1553, %v1560
        %v1564 = vsub.f32 %v1554, %v1560
        %v1565 = vmul.f32 %v1561, 1.442695
        %v1566 = vpow.pop %v1565
        %v1567 = vmul.f32 %v1562, 1.442695
        %v1568 = vpow.pop %v1567
        %v1569 = vmul.f32 %v1563, 1.442695
        %v1570 = vpow.pop %v1569
        %v1571 = vmul.f32 %v1564, 1.442695
        %v1572 = vpow.pop %v1571
        %1573 = vmatprep.subr.mxu0 0.0
        %v1574 = vand.u32 %v337, 4294901760
        %1575 = vmatpush1.msra.mxu0 %v1574
        %1576 = vmatprep.subr.mxu0 0.0
        %v1577 = vand.u32 %v336, 4294901760
        %1578 = vmatpush1.msra.mxu0 %v1577
        %1579 = vmatprep.subr.mxu0 0.0
        %v1580 = vand.u32 %v335, 4294901760
        %1581 = vmatpush1.msra.mxu0 %v1580
        %1582 = vmatprep.subr.mxu0 0.0
        %v1583 = vand.u32 %v334, 4294901760
        %1584 = vmatpush1.msra.mxu0 %v1583
        %1585 = vmatprep.subr.mxu0 0.0
        %v1586 = vand.u32 %v333, 4294901760
        %1587 = vmatpush1.msra.mxu0 %v1586
        %1588 = vmatprep.subr.mxu0 0.0
        %v1589 = vand.u32 %v332, 4294901760
        %1590 = vmatpush1.msra.mxu0 %v1589
        %1591 = vmatprep.subr.mxu0 0.0
        %v1592 = vand.u32 %v331, 4294901760
        %1593 = vmatpush1.msra.mxu0 %v1592
        %1594 = vmatprep.subr.mxu0 0.0
        %v1595 = vand.u32 %v330, 4294901760
        %1596 = vmatpush1.msra.mxu0 %v1595
        %1597 = vmatprep.subr.mxu0 0.0
        %v1598 = vand.u32 %v329, 4294901760
        %1599 = vmatpush1.msra.mxu0 %v1598
        %1600 = vmatprep.subr.mxu0 0.0
        %v1601 = vand.u32 %v328, 4294901760
        %1602 = vmatpush1.msra.mxu0 %v1601
        %1603 = vmatprep.subr.mxu0 0.0
        %v1604 = vand.u32 %v327, 4294901760
        %1605 = vmatpush1.msra.mxu0 %v1604
        %1606 = vmatprep.subr.mxu0 0.0
        %v1607 = vand.u32 %v326, 4294901760
        %1608 = vmatpush1.msra.mxu0 %v1607
        %1609 = vmatprep.subr.mxu0 0.0
        %v1610 = vand.u32 %v325, 4294901760
        %1611 = vmatpush1.msra.mxu0 %v1610
        %1612 = vmatprep.subr.mxu0 0.0
        %v1613 = vand.u32 %v324, 4294901760
        %1614 = vmatpush1.msra.mxu0 %v1613
        %1615 = vmatprep.subr.mxu0 0.0
        %v1616 = vand.u32 %v323, 4294901760
        %1617 = vmatpush1.msra.mxu0 %v1616
        %1618 = vmatprep.subr.mxu0 0.0
        %v1619 = vand.u32 %v322, 4294901760
        %1620 = vmatpush1.msra.mxu0 %v1619
        %1621 = vmatprep.subr.mxu0 0.0
        %v1622 = vand.u32 %v353, 4294901760
        %1623 = vmatpush2.msra.mxu0 %v1622
        %1624 = vmatprep.subr.mxu0 0.0
        %v1625 = vand.u32 %v352, 4294901760
        %1626 = vmatpush2.msra.mxu0 %v1625
        %1627 = vmatprep.subr.mxu0 0.0
        %v1628 = vand.u32 %v351, 4294901760
        %1629 = vmatpush2.msra.mxu0 %v1628
        %1630 = vmatprep.subr.mxu0 0.0
        %v1631 = vand.u32 %v350, 4294901760
        %1632 = vmatpush2.msra.mxu0 %v1631
        %1633 = vmatprep.subr.mxu0 0.0
        %v1634 = vand.u32 %v349, 4294901760
        %1635 = vmatpush2.msra.mxu0 %v1634
        %1636 = vmatprep.subr.mxu0 0.0
        %v1637 = vand.u32 %v348, 4294901760
        %1638 = vmatpush2.msra.mxu0 %v1637
        %1639 = vmatprep.subr.mxu0 0.0
        %v1640 = vand.u32 %v347, 4294901760
        %1641 = vmatpush2.msra.mxu0 %v1640
        %1642 = vmatprep.subr.mxu0 0.0
        %v1643 = vand.u32 %v346, 4294901760
        %1644 = vmatpush2.msra.mxu0 %v1643
        %1645 = vmatprep.subr.mxu0 0.0
        %v1646 = vand.u32 %v345, 4294901760
        %1647 = vmatpush2.msra.mxu0 %v1646
        %1648 = vmatprep.subr.mxu0 0.0
        %v1649 = vand.u32 %v344, 4294901760
        %1650 = vmatpush2.msra.mxu0 %v1649
        %1651 = vmatprep.subr.mxu0 0.0
        %v1652 = vand.u32 %v343, 4294901760
        %1653 = vmatpush2.msra.mxu0 %v1652
        %1654 = vmatprep.subr.mxu0 0.0
        %v1655 = vand.u32 %v342, 4294901760
        %1656 = vmatpush2.msra.mxu0 %v1655
        %1657 = vmatprep.subr.mxu0 0.0
        %v1658 = vand.u32 %v341, 4294901760
        %1659 = vmatpush2.msra.mxu0 %v1658
        %1660 = vmatprep.subr.mxu0 0.0
        %v1661 = vand.u32 %v340, 4294901760
        %1662 = vmatpush2.msra.mxu0 %v1661
        %1663 = vmatprep.subr.mxu0 0.0
        %v1664 = vand.u32 %v339, 4294901760
        %1665 = vmatpush2.msra.mxu0 %v1664
        %1666 = vmatprep.subr.mxu0 0.0
        %v1667 = vand.u32 %v338, 4294901760
        %1668 = vmatpush2.msra.mxu0 %v1667
        %v1669 = vand.u32 %v1568, 4294901760
        %v1670 = vsub.f32 %v1568, %v1669
        %v1671 = vand.u32 %v1670, 4294901760
        %v1672 = vsub.f32 %v1670, %v1671
        %v1673 = vand.u32 %v1672, 4294901760
        %1674 = vmatprep.mubr.f32.mxu0 %v1673
        %v1675 = vand.u32 %v1566, 4294901760
        %v1676 = vsub.f32 %v1566, %v1675
        %v1677 = vand.u32 %v1676, 4294901760
        %v1678 = vsub.f32 %v1676, %v1677
        %v1679 = vand.u32 %v1678, 4294901760
        %1680 = vmatmul.mubr.f32.gmra.mxu0 %v1679
        %v1681 = vpop.f32.mrf.mxu0
        %v1682 = vadd.f32 0.0, %v1681
        %v1683 = vpop.f32.mrf.mxu0
        %v1684 = vand.u32 %v1572, 4294901760
        %v1685 = vsub.f32 %v1572, %v1684
        %v1686 = vand.u32 %v1685, 4294901760
        %v1687 = vsub.f32 %v1685, %v1686
        %v1688 = vand.u32 %v1687, 4294901760
        %1689 = vmatprep.mubr.f32.mxu0 %v1688
        %v1690 = vand.u32 %v1570, 4294901760
        %v1691 = vsub.f32 %v1570, %v1690
        %v1692 = vand.u32 %v1691, 4294901760
        %v1693 = vsub.f32 %v1691, %v1692
        %v1694 = vand.u32 %v1693, 4294901760
        %1695 = vmatmul.mubr.f32.gmra.mxu0 %v1694
        %v1696 = vpop.f32.mrf.mxu0
        %v1697 = vadd.f32 0.0, %v1696
        %v1698 = vpop.f32.mrf.mxu0
        %1699 = vdwg.mxu0
        %1700 = vmatprep.subr.mxu0 0.0
        %v1701 = vand.u32 %v337, 4294901760
        %v1702 = vsub.f32 %v337, %v1701
        %v1703 = vand.u32 %v1702, 4294901760
        %v1704 = vsub.f32 %v1702, %v1703
        %v1705 = vand.u32 %v1704, 4294901760
        %1706 = vmatpush1.msra.mxu0 %v1705
        %1707 = vmatprep.subr.mxu0 0.0
        %v1708 = vand.u32 %v336, 4294901760
        %v1709 = vsub.f32 %v336, %v1708
        %v1710 = vand.u32 %v1709, 4294901760
        %v1711 = vsub.f32 %v1709, %v1710
        %v1712 = vand.u32 %v1711, 4294901760
        %1713 = vmatpush1.msra.mxu0 %v1712
        %1714 = vmatprep.subr.mxu0 0.0
        %v1715 = vand.u32 %v335, 4294901760
        %v1716 = vsub.f32 %v335, %v1715
        %v1717 = vand.u32 %v1716, 4294901760
        %v1718 = vsub.f32 %v1716, %v1717
        %v1719 = vand.u32 %v1718, 4294901760
        %1720 = vmatpush1.msra.mxu0 %v1719
        %1721 = vmatprep.subr.mxu0 0.0
        %v1722 = vand.u32 %v334, 4294901760
        %v1723 = vsub.f32 %v334, %v1722
        %v1724 = vand.u32 %v1723, 4294901760
        %v1725 = vsub.f32 %v1723, %v1724
        %v1726 = vand.u32 %v1725, 4294901760
        %1727 = vmatpush1.msra.mxu0 %v1726
        %1728 = vmatprep.subr.mxu0 0.0
        %v1729 = vand.u32 %v333, 4294901760
        %v1730 = vsub.f32 %v333, %v1729
        %v1731 = vand.u32 %v1730, 4294901760
        %v1732 = vsub.f32 %v1730, %v1731
        %v1733 = vand.u32 %v1732, 4294901760
        %1734 = vmatpush1.msra.mxu0 %v1733
        %1735 = vmatprep.subr.mxu0 0.0
        %v1736 = vand.u32 %v332, 4294901760
        %v1737 = vsub.f32 %v332, %v1736
        %v1738 = vand.u32 %v1737, 4294901760
        %v1739 = vsub.f32 %v1737, %v1738
        %v1740 = vand.u32 %v1739, 4294901760
        %1741 = vmatpush1.msra.mxu0 %v1740
        %1742 = vmatprep.subr.mxu0 0.0
        %v1743 = vand.u32 %v331, 4294901760
        %v1744 = vsub.f32 %v331, %v1743
        %v1745 = vand.u32 %v1744, 4294901760
        %v1746 = vsub.f32 %v1744, %v1745
        %v1747 = vand.u32 %v1746, 4294901760
        %1748 = vmatpush1.msra.mxu0 %v1747
        %1749 = vmatprep.subr.mxu0 0.0
        %v1750 = vand.u32 %v330, 4294901760
        %v1751 = vsub.f32 %v330, %v1750
        %v1752 = vand.u32 %v1751, 4294901760
        %v1753 = vsub.f32 %v1751, %v1752
        %v1754 = vand.u32 %v1753, 4294901760
        %1755 = vmatpush1.msra.mxu0 %v1754
        %1756 = vmatprep.subr.mxu0 0.0
        %v1757 = vand.u32 %v329, 4294901760
        %v1758 = vsub.f32 %v329, %v1757
        %v1759 = vand.u32 %v1758, 4294901760
        %v1760 = vsub.f32 %v1758, %v1759
        %v1761 = vand.u32 %v1760, 4294901760
        %1762 = vmatpush1.msra.mxu0 %v1761
        %1763 = vmatprep.subr.mxu0 0.0
        %v1764 = vand.u32 %v328, 4294901760
        %v1765 = vsub.f32 %v328, %v1764
        %v1766 = vand.u32 %v1765, 4294901760
        %v1767 = vsub.f32 %v1765, %v1766
        %v1768 = vand.u32 %v1767, 4294901760
        %1769 = vmatpush1.msra.mxu0 %v1768
        %1770 = vmatprep.subr.mxu0 0.0
        %v1771 = vand.u32 %v327, 4294901760
        %v1772 = vsub.f32 %v327, %v1771
        %v1773 = vand.u32 %v1772, 4294901760
        %v1774 = vsub.f32 %v1772, %v1773
        %v1775 = vand.u32 %v1774, 4294901760
        %1776 = vmatpush1.msra.mxu0 %v1775
        %1777 = vmatprep.subr.mxu0 0.0
        %v1778 = vand.u32 %v326, 4294901760
        %v1779 = vsub.f32 %v326, %v1778
        %v1780 = vand.u32 %v1779, 4294901760
        %v1781 = vsub.f32 %v1779, %v1780
        %v1782 = vand.u32 %v1781, 4294901760
        %1783 = vmatpush1.msra.mxu0 %v1782
        %1784 = vmatprep.subr.mxu0 0.0
        %v1785 = vand.u32 %v325, 4294901760
        %v1786 = vsub.f32 %v325, %v1785
        %v1787 = vand.u32 %v1786, 4294901760
        %v1788 = vsub.f32 %v1786, %v1787
        %v1789 = vand.u32 %v1788, 4294901760
        %1790 = vmatpush1.msra.mxu0 %v1789
        %1791 = vmatprep.subr.mxu0 0.0
        %v1792 = vand.u32 %v324, 4294901760
        %v1793 = vsub.f32 %v324, %v1792
        %v1794 = vand.u32 %v1793, 4294901760
        %v1795 = vsub.f32 %v1793, %v1794
        %v1796 = vand.u32 %v1795, 4294901760
        %1797 = vmatpush1.msra.mxu0 %v1796
        %1798 = vmatprep.subr.mxu0 0.0
        %v1799 = vand.u32 %v323, 4294901760
        %v1800 = vsub.f32 %v323, %v1799
        %v1801 = vand.u32 %v1800, 4294901760
        %v1802 = vsub.f32 %v1800, %v1801
        %v1803 = vand.u32 %v1802, 4294901760
        %1804 = vmatpush1.msra.mxu0 %v1803
        %1805 = vmatprep.subr.mxu0 0.0
        %v1806 = vand.u32 %v322, 4294901760
        %v1807 = vsub.f32 %v322, %v1806
        %v1808 = vand.u32 %v1807, 4294901760
        %v1809 = vsub.f32 %v1807, %v1808
        %v1810 = vand.u32 %v1809, 4294901760
        %1811 = vmatpush1.msra.mxu0 %v1810
        %1812 = vmatprep.subr.mxu0 0.0
        %v1813 = vand.u32 %v353, 4294901760
        %v1814 = vsub.f32 %v353, %v1813
        %v1815 = vand.u32 %v1814, 4294901760
        %v1816 = vsub.f32 %v1814, %v1815
        %v1817 = vand.u32 %v1816, 4294901760
        %1818 = vmatpush2.msra.mxu0 %v1817
        %1819 = vmatprep.subr.mxu0 0.0
        %v1820 = vand.u32 %v352, 4294901760
        %v1821 = vsub.f32 %v352, %v1820
        %v1822 = vand.u32 %v1821, 4294901760
        %v1823 = vsub.f32 %v1821, %v1822
        %v1824 = vand.u32 %v1823, 4294901760
        %1825 = vmatpush2.msra.mxu0 %v1824
        %1826 = vmatprep.subr.mxu0 0.0
        %v1827 = vand.u32 %v351, 4294901760
        %v1828 = vsub.f32 %v351, %v1827
        %v1829 = vand.u32 %v1828, 4294901760
        %v1830 = vsub.f32 %v1828, %v1829
        %v1831 = vand.u32 %v1830, 4294901760
        %1832 = vmatpush2.msra.mxu0 %v1831
        %1833 = vmatprep.subr.mxu0 0.0
        %v1834 = vand.u32 %v350, 4294901760
        %v1835 = vsub.f32 %v350, %v1834
        %v1836 = vand.u32 %v1835, 4294901760
        %v1837 = vsub.f32 %v1835, %v1836
        %v1838 = vand.u32 %v1837, 4294901760
        %1839 = vmatpush2.msra.mxu0 %v1838
        %1840 = vmatprep.subr.mxu0 0.0
        %v1841 = vand.u32 %v349, 4294901760
        %v1842 = vsub.f32 %v349, %v1841
        %v1843 = vand.u32 %v1842, 4294901760
        %v1844 = vsub.f32 %v1842, %v1843
        %v1845 = vand.u32 %v1844, 4294901760
        %1846 = vmatpush2.msra.mxu0 %v1845
        %1847 = vmatprep.subr.mxu0 0.0
        %v1848 = vand.u32 %v348, 4294901760
        %v1849 = vsub.f32 %v348, %v1848
        %v1850 = vand.u32 %v1849, 4294901760
        %v1851 = vsub.f32 %v1849, %v1850
        %v1852 = vand.u32 %v1851, 4294901760
        %1853 = vmatpush2.msra.mxu0 %v1852
        %1854 = vmatprep.subr.mxu0 0.0
        %v1855 = vand.u32 %v347, 4294901760
        %v1856 = vsub.f32 %v347, %v1855
        %v1857 = vand.u32 %v1856, 4294901760
        %v1858 = vsub.f32 %v1856, %v1857
        %v1859 = vand.u32 %v1858, 4294901760
        %1860 = vmatpush2.msra.mxu0 %v1859
        %1861 = vmatprep.subr.mxu0 0.0
        %v1862 = vand.u32 %v346, 4294901760
        %v1863 = vsub.f32 %v346, %v1862
        %v1864 = vand.u32 %v1863, 4294901760
        %v1865 = vsub.f32 %v1863, %v1864
        %v1866 = vand.u32 %v1865, 4294901760
        %1867 = vmatpush2.msra.mxu0 %v1866
        %1868 = vmatprep.subr.mxu0 0.0
        %v1869 = vand.u32 %v345, 4294901760
        %v1870 = vsub.f32 %v345, %v1869
        %v1871 = vand.u32 %v1870, 4294901760
        %v1872 = vsub.f32 %v1870, %v1871
        %v1873 = vand.u32 %v1872, 4294901760
        %1874 = vmatpush2.msra.mxu0 %v1873
        %1875 = vmatprep.subr.mxu0 0.0
        %v1876 = vand.u32 %v344, 4294901760
        %v1877 = vsub.f32 %v344, %v1876
        %v1878 = vand.u32 %v1877, 4294901760
        %v1879 = vsub.f32 %v1877, %v1878
        %v1880 = vand.u32 %v1879, 4294901760
        %1881 = vmatpush2.msra.mxu0 %v1880
        %1882 = vmatprep.subr.mxu0 0.0
        %v1883 = vand.u32 %v343, 4294901760
        %v1884 = vsub.f32 %v343, %v1883
        %v1885 = vand.u32 %v1884, 4294901760
        %v1886 = vsub.f32 %v1884, %v1885
        %v1887 = vand.u32 %v1886, 4294901760
        %1888 = vmatpush2.msra.mxu0 %v1887
        %1889 = vmatprep.subr.mxu0 0.0
        %v1890 = vand.u32 %v342, 4294901760
        %v1891 = vsub.f32 %v342, %v1890
        %v1892 = vand.u32 %v1891, 4294901760
        %v1893 = vsub.f32 %v1891, %v1892
        %v1894 = vand.u32 %v1893, 4294901760
        %1895 = vmatpush2.msra.mxu0 %v1894
        %1896 = vmatprep.subr.mxu0 0.0
        %v1897 = vand.u32 %v341, 4294901760
        %v1898 = vsub.f32 %v341, %v1897
        %v1899 = vand.u32 %v1898, 4294901760
        %v1900 = vsub.f32 %v1898, %v1899
        %v1901 = vand.u32 %v1900, 4294901760
        %1902 = vmatpush2.msra.mxu0 %v1901
        %1903 = vmatprep.subr.mxu0 0.0
        %v1904 = vand.u32 %v340, 4294901760
        %v1905 = vsub.f32 %v340, %v1904
        %v1906 = vand.u32 %v1905, 4294901760
        %v1907 = vsub.f32 %v1905, %v1906
        %v1908 = vand.u32 %v1907, 4294901760
        %1909 = vmatpush2.msra.mxu0 %v1908
        %1910 = vmatprep.subr.mxu0 0.0
        %v1911 = vand.u32 %v339, 4294901760
        %v1912 = vsub.f32 %v339, %v1911
        %v1913 = vand.u32 %v1912, 4294901760
        %v1914 = vsub.f32 %v1912, %v1913
        %v1915 = vand.u32 %v1914, 4294901760
        %1916 = vmatpush2.msra.mxu0 %v1915
        %1917 = vmatprep.subr.mxu0 0.0
        %v1918 = vand.u32 %v338, 4294901760
        %v1919 = vsub.f32 %v338, %v1918
        %v1920 = vand.u32 %v1919, 4294901760
        %v1921 = vsub.f32 %v1919, %v1920
        %v1922 = vand.u32 %v1921, 4294901760
        %1923 = vmatpush2.msra.mxu0 %v1922
        %v1924 = vand.u32 %v1568, 4294901760
        %1925 = vmatprep.mubr.f32.mxu0 %v1924
        %v1926 = vand.u32 %v1566, 4294901760
        %1927 = vmatmul.mubr.f32.gmra.mxu0 %v1926
        %v1928 = vpop.f32.mrf.mxu0
        %v1929 = vadd.f32 %v1682, %v1928
        %v1930 = vpop.f32.mrf.mxu0
        %v1931 = vand.u32 %v1572, 4294901760
        %1932 = vmatprep.mubr.f32.mxu0 %v1931
        %v1933 = vand.u32 %v1570, 4294901760
        %1934 = vmatmul.mubr.f32.gmra.mxu0 %v1933
        %v1935 = vpop.f32.mrf.mxu0
        %v1936 = vadd.f32 %v1697, %v1935
        %v1937 = vpop.f32.mrf.mxu0
        %1938 = vdwg.mxu0
        %1939 = vmatprep.subr.mxu0 0.0
        %v1940 = vand.u32 %v337, 4294901760
        %v1941 = vsub.f32 %v337, %v1940
        %1942 = vmatpush1.msra.mxu0 %v1941
        %1943 = vmatprep.subr.mxu0 0.0
        %v1944 = vand.u32 %v336, 4294901760
        %v1945 = vsub.f32 %v336, %v1944
        %1946 = vmatpush1.msra.mxu0 %v1945
        %1947 = vmatprep.subr.mxu0 0.0
        %v1948 = vand.u32 %v335, 4294901760
        %v1949 = vsub.f32 %v335, %v1948
        %1950 = vmatpush1.msra.mxu0 %v1949
        %1951 = vmatprep.subr.mxu0 0.0
        %v1952 = vand.u32 %v334, 4294901760
        %v1953 = vsub.f32 %v334, %v1952
        %1954 = vmatpush1.msra.mxu0 %v1953
        %1955 = vmatprep.subr.mxu0 0.0
        %v1956 = vand.u32 %v333, 4294901760
        %v1957 = vsub.f32 %v333, %v1956
        %1958 = vmatpush1.msra.mxu0 %v1957
        %1959 = vmatprep.subr.mxu0 0.0
        %v1960 = vand.u32 %v332, 4294901760
        %v1961 = vsub.f32 %v332, %v1960
        %1962 = vmatpush1.msra.mxu0 %v1961
        %1963 = vmatprep.subr.mxu0 0.0
        %v1964 = vand.u32 %v331, 4294901760
        %v1965 = vsub.f32 %v331, %v1964
        %1966 = vmatpush1.msra.mxu0 %v1965
        %1967 = vmatprep.subr.mxu0 0.0
        %v1968 = vand.u32 %v330, 4294901760
        %v1969 = vsub.f32 %v330, %v1968
        %1970 = vmatpush1.msra.mxu0 %v1969
        %1971 = vmatprep.subr.mxu0 0.0
        %v1972 = vand.u32 %v329, 4294901760
        %v1973 = vsub.f32 %v329, %v1972
        %1974 = vmatpush1.msra.mxu0 %v1973
        %1975 = vmatprep.subr.mxu0 0.0
        %v1976 = vand.u32 %v328, 4294901760
        %v1977 = vsub.f32 %v328, %v1976
        %1978 = vmatpush1.msra.mxu0 %v1977
        %1979 = vmatprep.subr.mxu0 0.0
        %v1980 = vand.u32 %v327, 4294901760
        %v1981 = vsub.f32 %v327, %v1980
        %1982 = vmatpush1.msra.mxu0 %v1981
        %1983 = vmatprep.subr.mxu0 0.0
        %v1984 = vand.u32 %v326, 4294901760
        %v1985 = vsub.f32 %v326, %v1984
        %1986 = vmatpush1.msra.mxu0 %v1985
        %1987 = vmatprep.subr.mxu0 0.0
        %v1988 = vand.u32 %v325, 4294901760
        %v1989 = vsub.f32 %v325, %v1988
        %1990 = vmatpush1.msra.mxu0 %v1989
        %1991 = vmatprep.subr.mxu0 0.0
        %v1992 = vand.u32 %v324, 4294901760
        %v1993 = vsub.f32 %v324, %v1992
        %1994 = vmatpush1.msra.mxu0 %v1993
        %1995 = vmatprep.subr.mxu0 0.0
        %v1996 = vand.u32 %v323, 4294901760
        %v1997 = vsub.f32 %v323, %v1996
        %1998 = vmatpush1.msra.mxu0 %v1997
        %1999 = vmatprep.subr.mxu0 0.0
        %v2000 = vand.u32 %v322, 4294901760
        %v2001 = vsub.f32 %v322, %v2000
        %2002 = vmatpush1.msra.mxu0 %v2001
        %2003 = vmatprep.subr.mxu0 0.0
        %v2004 = vand.u32 %v353, 4294901760
        %v2005 = vsub.f32 %v353, %v2004
        %2006 = vmatpush2.msra.mxu0 %v2005
        %2007 = vmatprep.subr.mxu0 0.0
        %v2008 = vand.u32 %v352, 4294901760
        %v2009 = vsub.f32 %v352, %v2008
        %2010 = vmatpush2.msra.mxu0 %v2009
        %2011 = vmatprep.subr.mxu0 0.0
        %v2012 = vand.u32 %v351, 4294901760
        %v2013 = vsub.f32 %v351, %v2012
        %2014 = vmatpush2.msra.mxu0 %v2013
        %2015 = vmatprep.subr.mxu0 0.0
        %v2016 = vand.u32 %v350, 4294901760
        %v2017 = vsub.f32 %v350, %v2016
        %2018 = vmatpush2.msra.mxu0 %v2017
        %2019 = vmatprep.subr.mxu0 0.0
        %v2020 = vand.u32 %v349, 4294901760
        %v2021 = vsub.f32 %v349, %v2020
        %2022 = vmatpush2.msra.mxu0 %v2021
        %2023 = vmatprep.subr.mxu0 0.0
        %v2024 = vand.u32 %v348, 4294901760
        %v2025 = vsub.f32 %v348, %v2024
        %2026 = vmatpush2.msra.mxu0 %v2025
        %2027 = vmatprep.subr.mxu0 0.0
        %v2028 = vand.u32 %v347, 4294901760
        %v2029 = vsub.f32 %v347, %v2028
        %2030 = vmatpush2.msra.mxu0 %v2029
        %2031 = vmatprep.subr.mxu0 0.0
        %v2032 = vand.u32 %v346, 4294901760
        %v2033 = vsub.f32 %v346, %v2032
        %2034 = vmatpush2.msra.mxu0 %v2033
        %2035 = vmatprep.subr.mxu0 0.0
        %v2036 = vand.u32 %v345, 4294901760
        %v2037 = vsub.f32 %v345, %v2036
        %2038 = vmatpush2.msra.mxu0 %v2037
        %2039 = vmatprep.subr.mxu0 0.0
        %v2040 = vand.u32 %v344, 4294901760
        %v2041 = vsub.f32 %v344, %v2040
        %2042 = vmatpush2.msra.mxu0 %v2041
        %2043 = vmatprep.subr.mxu0 0.0
        %v2044 = vand.u32 %v343, 4294901760
        %v2045 = vsub.f32 %v343, %v2044
        %2046 = vmatpush2.msra.mxu0 %v2045
        %2047 = vmatprep.subr.mxu0 0.0
        %v2048 = vand.u32 %v342, 4294901760
        %v2049 = vsub.f32 %v342, %v2048
        %2050 = vmatpush2.msra.mxu0 %v2049
        %2051 = vmatprep.subr.mxu0 0.0
        %v2052 = vand.u32 %v341, 4294901760
        %v2053 = vsub.f32 %v341, %v2052
        %2054 = vmatpush2.msra.mxu0 %v2053
        %2055 = vmatprep.subr.mxu0 0.0
        %v2056 = vand.u32 %v340, 4294901760
        %v2057 = vsub.f32 %v340, %v2056
        %2058 = vmatpush2.msra.mxu0 %v2057
        %2059 = vmatprep.subr.mxu0 0.0
        %v2060 = vand.u32 %v339, 4294901760
        %v2061 = vsub.f32 %v339, %v2060
        %2062 = vmatpush2.msra.mxu0 %v2061
        %2063 = vmatprep.subr.mxu0 0.0
        %v2064 = vand.u32 %v338, 4294901760
        %v2065 = vsub.f32 %v338, %v2064
        %2066 = vmatpush2.msra.mxu0 %v2065
        %v2067 = vand.u32 %v1568, 4294901760
        %v2068 = vsub.f32 %v1568, %v2067
        %2069 = vmatprep.mubr.f32.mxu0 %v2068
        %v2070 = vand.u32 %v1566, 4294901760
        %v2071 = vsub.f32 %v1566, %v2070
        %2072 = vmatmul.mubr.f32.gmra.mxu0 %v2071
        %v2073 = vpop.f32.mrf.mxu0
        %v2074 = vadd.f32 %v1929, %v2073
        %v2075 = vpop.f32.mrf.mxu0
        %v2076 = vand.u32 %v1572, 4294901760
        %v2077 = vsub.f32 %v1572, %v2076
        %2078 = vmatprep.mubr.f32.mxu0 %v2077
        %v2079 = vand.u32 %v1570, 4294901760
        %v2080 = vsub.f32 %v1570, %v2079
        %2081 = vmatmul.mubr.f32.gmra.mxu0 %v2080
        %v2082 = vpop.f32.mrf.mxu0
        %v2083 = vadd.f32 %v1936, %v2082
        %v2084 = vpop.f32.mrf.mxu0
        %2085 = vdwg.mxu0
        %2086 = vmatprep.subr.mxu0 0.0
        %v2087 = vand.u32 %v337, 4294901760
        %2088 = vmatpush1.msra.mxu0 %v2087
        %2089 = vmatprep.subr.mxu0 0.0
        %v2090 = vand.u32 %v336, 4294901760
        %2091 = vmatpush1.msra.mxu0 %v2090
        %2092 = vmatprep.subr.mxu0 0.0
        %v2093 = vand.u32 %v335, 4294901760
        %2094 = vmatpush1.msra.mxu0 %v2093
        %2095 = vmatprep.subr.mxu0 0.0
        %v2096 = vand.u32 %v334, 4294901760
        %2097 = vmatpush1.msra.mxu0 %v2096
        %2098 = vmatprep.subr.mxu0 0.0
        %v2099 = vand.u32 %v333, 4294901760
        %2100 = vmatpush1.msra.mxu0 %v2099
        %2101 = vmatprep.subr.mxu0 0.0
        %v2102 = vand.u32 %v332, 4294901760
        %2103 = vmatpush1.msra.mxu0 %v2102
        %2104 = vmatprep.subr.mxu0 0.0
        %v2105 = vand.u32 %v331, 4294901760
        %2106 = vmatpush1.msra.mxu0 %v2105
        %2107 = vmatprep.subr.mxu0 0.0
        %v2108 = vand.u32 %v330, 4294901760
        %2109 = vmatpush1.msra.mxu0 %v2108
        %2110 = vmatprep.subr.mxu0 0.0
        %v2111 = vand.u32 %v329, 4294901760
        %2112 = vmatpush1.msra.mxu0 %v2111
        %2113 = vmatprep.subr.mxu0 0.0
        %v2114 = vand.u32 %v328, 4294901760
        %2115 = vmatpush1.msra.mxu0 %v2114
        %2116 = vmatprep.subr.mxu0 0.0
        %v2117 = vand.u32 %v327, 4294901760
        %2118 = vmatpush1.msra.mxu0 %v2117
        %2119 = vmatprep.subr.mxu0 0.0
        %v2120 = vand.u32 %v326, 4294901760
        %2121 = vmatpush1.msra.mxu0 %v2120
        %2122 = vmatprep.subr.mxu0 0.0
        %v2123 = vand.u32 %v325, 4294901760
        %2124 = vmatpush1.msra.mxu0 %v2123
        %2125 = vmatprep.subr.mxu0 0.0
        %v2126 = vand.u32 %v324, 4294901760
        %2127 = vmatpush1.msra.mxu0 %v2126
        %2128 = vmatprep.subr.mxu0 0.0
        %v2129 = vand.u32 %v323, 4294901760
        %2130 = vmatpush1.msra.mxu0 %v2129
        %2131 = vmatprep.subr.mxu0 0.0
        %v2132 = vand.u32 %v322, 4294901760
        %2133 = vmatpush1.msra.mxu0 %v2132
        %2134 = vmatprep.subr.mxu0 0.0
        %v2135 = vand.u32 %v353, 4294901760
        %2136 = vmatpush2.msra.mxu0 %v2135
        %2137 = vmatprep.subr.mxu0 0.0
        %v2138 = vand.u32 %v352, 4294901760
        %2139 = vmatpush2.msra.mxu0 %v2138
        %2140 = vmatprep.subr.mxu0 0.0
        %v2141 = vand.u32 %v351, 4294901760
        %2142 = vmatpush2.msra.mxu0 %v2141
        %2143 = vmatprep.subr.mxu0 0.0
        %v2144 = vand.u32 %v350, 4294901760
        %2145 = vmatpush2.msra.mxu0 %v2144
        %2146 = vmatprep.subr.mxu0 0.0
        %v2147 = vand.u32 %v349, 4294901760
        %2148 = vmatpush2.msra.mxu0 %v2147
        %2149 = vmatprep.subr.mxu0 0.0
        %v2150 = vand.u32 %v348, 4294901760
        %2151 = vmatpush2.msra.mxu0 %v2150
        %2152 = vmatprep.subr.mxu0 0.0
        %v2153 = vand.u32 %v347, 4294901760
        %2154 = vmatpush2.msra.mxu0 %v2153
        %2155 = vmatprep.subr.mxu0 0.0
        %v2156 = vand.u32 %v346, 4294901760
        %2157 = vmatpush2.msra.mxu0 %v2156
        %2158 = vmatprep.subr.mxu0 0.0
        %v2159 = vand.u32 %v345, 4294901760
        %2160 = vmatpush2.msra.mxu0 %v2159
        %2161 = vmatprep.subr.mxu0 0.0
        %v2162 = vand.u32 %v344, 4294901760
        %2163 = vmatpush2.msra.mxu0 %v2162
        %2164 = vmatprep.subr.mxu0 0.0
        %v2165 = vand.u32 %v343, 4294901760
        %2166 = vmatpush2.msra.mxu0 %v2165
        %2167 = vmatprep.subr.mxu0 0.0
        %v2168 = vand.u32 %v342, 4294901760
        %2169 = vmatpush2.msra.mxu0 %v2168
        %2170 = vmatprep.subr.mxu0 0.0
        %v2171 = vand.u32 %v341, 4294901760
        %2172 = vmatpush2.msra.mxu0 %v2171
        %2173 = vmatprep.subr.mxu0 0.0
        %v2174 = vand.u32 %v340, 4294901760
        %2175 = vmatpush2.msra.mxu0 %v2174
        %2176 = vmatprep.subr.mxu0 0.0
        %v2177 = vand.u32 %v339, 4294901760
        %2178 = vmatpush2.msra.mxu0 %v2177
        %2179 = vmatprep.subr.mxu0 0.0
        %v2180 = vand.u32 %v338, 4294901760
        %2181 = vmatpush2.msra.mxu0 %v2180
        %v2182 = vand.u32 %v1568, 4294901760
        %v2183 = vsub.f32 %v1568, %v2182
        %v2184 = vand.u32 %v2183, 4294901760
        %2185 = vmatprep.mubr.f32.mxu0 %v2184
        %v2186 = vand.u32 %v1566, 4294901760
        %v2187 = vsub.f32 %v1566, %v2186
        %v2188 = vand.u32 %v2187, 4294901760
        %2189 = vmatmul.mubr.f32.gmra.mxu0 %v2188
        %v2190 = vpop.f32.mrf.mxu0
        %v2191 = vadd.f32 %v2074, %v2190
        %v2192 = vpop.f32.mrf.mxu0
        %v2193 = vand.u32 %v1572, 4294901760
        %v2194 = vsub.f32 %v1572, %v2193
        %v2195 = vand.u32 %v2194, 4294901760
        %2196 = vmatprep.mubr.f32.mxu0 %v2195
        %v2197 = vand.u32 %v1570, 4294901760
        %v2198 = vsub.f32 %v1570, %v2197
        %v2199 = vand.u32 %v2198, 4294901760
        %2200 = vmatmul.mubr.f32.gmra.mxu0 %v2199
        %v2201 = vpop.f32.mrf.mxu0
        %v2202 = vadd.f32 %v2083, %v2201
        %v2203 = vpop.f32.mrf.mxu0
        %2204 = vdwg.mxu0
        %2205 = vmatprep.subr.mxu0 0.0
        %v2206 = vand.u32 %v337, 4294901760
        %v2207 = vsub.f32 %v337, %v2206
        %v2208 = vand.u32 %v2207, 4294901760
        %2209 = vmatpush1.msra.mxu0 %v2208
        %2210 = vmatprep.subr.mxu0 0.0
        %v2211 = vand.u32 %v336, 4294901760
        %v2212 = vsub.f32 %v336, %v2211
        %v2213 = vand.u32 %v2212, 4294901760
        %2214 = vmatpush1.msra.mxu0 %v2213
        %2215 = vmatprep.subr.mxu0 0.0
        %v2216 = vand.u32 %v335, 4294901760
        %v2217 = vsub.f32 %v335, %v2216
        %v2218 = vand.u32 %v2217, 4294901760
        %2219 = vmatpush1.msra.mxu0 %v2218
        %2220 = vmatprep.subr.mxu0 0.0
        %v2221 = vand.u32 %v334, 4294901760
        %v2222 = vsub.f32 %v334, %v2221
        %v2223 = vand.u32 %v2222, 4294901760
        %2224 = vmatpush1.msra.mxu0 %v2223
        %2225 = vmatprep.subr.mxu0 0.0
        %v2226 = vand.u32 %v333, 4294901760
        %v2227 = vsub.f32 %v333, %v2226
        %v2228 = vand.u32 %v2227, 4294901760
        %2229 = vmatpush1.msra.mxu0 %v2228
        %2230 = vmatprep.subr.mxu0 0.0
        %v2231 = vand.u32 %v332, 4294901760
        %v2232 = vsub.f32 %v332, %v2231
        %v2233 = vand.u32 %v2232, 4294901760
        %2234 = vmatpush1.msra.mxu0 %v2233
        %2235 = vmatprep.subr.mxu0 0.0
        %v2236 = vand.u32 %v331, 4294901760
        %v2237 = vsub.f32 %v331, %v2236
        %v2238 = vand.u32 %v2237, 4294901760
        %2239 = vmatpush1.msra.mxu0 %v2238
        %2240 = vmatprep.subr.mxu0 0.0
        %v2241 = vand.u32 %v330, 4294901760
        %v2242 = vsub.f32 %v330, %v2241
        %v2243 = vand.u32 %v2242, 4294901760
        %2244 = vmatpush1.msra.mxu0 %v2243
        %2245 = vmatprep.subr.mxu0 0.0
        %v2246 = vand.u32 %v329, 4294901760
        %v2247 = vsub.f32 %v329, %v2246
        %v2248 = vand.u32 %v2247, 4294901760
        %2249 = vmatpush1.msra.mxu0 %v2248
        %2250 = vmatprep.subr.mxu0 0.0
        %v2251 = vand.u32 %v328, 4294901760
        %v2252 = vsub.f32 %v328, %v2251
        %v2253 = vand.u32 %v2252, 4294901760
        %2254 = vmatpush1.msra.mxu0 %v2253
        %2255 = vmatprep.subr.mxu0 0.0
        %v2256 = vand.u32 %v327, 4294901760
        %v2257 = vsub.f32 %v327, %v2256
        %v2258 = vand.u32 %v2257, 4294901760
        %2259 = vmatpush1.msra.mxu0 %v2258
        %2260 = vmatprep.subr.mxu0 0.0
        %v2261 = vand.u32 %v326, 4294901760
        %v2262 = vsub.f32 %v326, %v2261
        %v2263 = vand.u32 %v2262, 4294901760
        %2264 = vmatpush1.msra.mxu0 %v2263
        %2265 = vmatprep.subr.mxu0 0.0
        %v2266 = vand.u32 %v325, 4294901760
        %v2267 = vsub.f32 %v325, %v2266
        %v2268 = vand.u32 %v2267, 4294901760
        %2269 = vmatpush1.msra.mxu0 %v2268
        %2270 = vmatprep.subr.mxu0 0.0
        %v2271 = vand.u32 %v324, 4294901760
        %v2272 = vsub.f32 %v324, %v2271
        %v2273 = vand.u32 %v2272, 4294901760
        %2274 = vmatpush1.msra.mxu0 %v2273
        %2275 = vmatprep.subr.mxu0 0.0
        %v2276 = vand.u32 %v323, 4294901760
        %v2277 = vsub.f32 %v323, %v2276
        %v2278 = vand.u32 %v2277, 4294901760
        %2279 = vmatpush1.msra.mxu0 %v2278
        %2280 = vmatprep.subr.mxu0 0.0
        %v2281 = vand.u32 %v322, 4294901760
        %v2282 = vsub.f32 %v322, %v2281
        %v2283 = vand.u32 %v2282, 4294901760
        %2284 = vmatpush1.msra.mxu0 %v2283
        %2285 = vmatprep.subr.mxu0 0.0
        %v2286 = vand.u32 %v353, 4294901760
        %v2287 = vsub.f32 %v353, %v2286
        %v2288 = vand.u32 %v2287, 4294901760
        %2289 = vmatpush2.msra.mxu0 %v2288
        %2290 = vmatprep.subr.mxu0 0.0
        %v2291 = vand.u32 %v352, 4294901760
        %v2292 = vsub.f32 %v352, %v2291
        %v2293 = vand.u32 %v2292, 4294901760
        %2294 = vmatpush2.msra.mxu0 %v2293
        %2295 = vmatprep.subr.mxu0 0.0
        %v2296 = vand.u32 %v351, 4294901760
        %v2297 = vsub.f32 %v351, %v2296
        %v2298 = vand.u32 %v2297, 4294901760
        %2299 = vmatpush2.msra.mxu0 %v2298
        %2300 = vmatprep.subr.mxu0 0.0
        %v2301 = vand.u32 %v350, 4294901760
        %v2302 = vsub.f32 %v350, %v2301
        %v2303 = vand.u32 %v2302, 4294901760
        %2304 = vmatpush2.msra.mxu0 %v2303
        %2305 = vmatprep.subr.mxu0 0.0
        %v2306 = vand.u32 %v349, 4294901760
        %v2307 = vsub.f32 %v349, %v2306
        %v2308 = vand.u32 %v2307, 4294901760
        %2309 = vmatpush2.msra.mxu0 %v2308
        %2310 = vmatprep.subr.mxu0 0.0
        %v2311 = vand.u32 %v348, 4294901760
        %v2312 = vsub.f32 %v348, %v2311
        %v2313 = vand.u32 %v2312, 4294901760
        %2314 = vmatpush2.msra.mxu0 %v2313
        %2315 = vmatprep.subr.mxu0 0.0
        %v2316 = vand.u32 %v347, 4294901760
        %v2317 = vsub.f32 %v347, %v2316
        %v2318 = vand.u32 %v2317, 4294901760
        %2319 = vmatpush2.msra.mxu0 %v2318
        %2320 = vmatprep.subr.mxu0 0.0
        %v2321 = vand.u32 %v346, 4294901760
        %v2322 = vsub.f32 %v346, %v2321
        %v2323 = vand.u32 %v2322, 4294901760
        %2324 = vmatpush2.msra.mxu0 %v2323
        %2325 = vmatprep.subr.mxu0 0.0
        %v2326 = vand.u32 %v345, 4294901760
        %v2327 = vsub.f32 %v345, %v2326
        %v2328 = vand.u32 %v2327, 4294901760
        %2329 = vmatpush2.msra.mxu0 %v2328
        %2330 = vmatprep.subr.mxu0 0.0
        %v2331 = vand.u32 %v344, 4294901760
        %v2332 = vsub.f32 %v344, %v2331
        %v2333 = vand.u32 %v2332, 4294901760
        %2334 = vmatpush2.msra.mxu0 %v2333
        %2335 = vmatprep.subr.mxu0 0.0
        %v2336 = vand.u32 %v343, 4294901760
        %v2337 = vsub.f32 %v343, %v2336
        %v2338 = vand.u32 %v2337, 4294901760
        %2339 = vmatpush2.msra.mxu0 %v2338
        %2340 = vmatprep.subr.mxu0 0.0
        %v2341 = vand.u32 %v342, 4294901760
        %v2342 = vsub.f32 %v342, %v2341
        %v2343 = vand.u32 %v2342, 4294901760
        %2344 = vmatpush2.msra.mxu0 %v2343
        %2345 = vmatprep.subr.mxu0 0.0
        %v2346 = vand.u32 %v341, 4294901760
        %v2347 = vsub.f32 %v341, %v2346
        %v2348 = vand.u32 %v2347, 4294901760
        %2349 = vmatpush2.msra.mxu0 %v2348
        %2350 = vmatprep.subr.mxu0 0.0
        %v2351 = vand.u32 %v340, 4294901760
        %v2352 = vsub.f32 %v340, %v2351
        %v2353 = vand.u32 %v2352, 4294901760
        %2354 = vmatpush2.msra.mxu0 %v2353
        %2355 = vmatprep.subr.mxu0 0.0
        %v2356 = vand.u32 %v339, 4294901760
        %v2357 = vsub.f32 %v339, %v2356
        %v2358 = vand.u32 %v2357, 4294901760
        %2359 = vmatpush2.msra.mxu0 %v2358
        %2360 = vmatprep.subr.mxu0 0.0
        %v2361 = vand.u32 %v338, 4294901760
        %v2362 = vsub.f32 %v338, %v2361
        %v2363 = vand.u32 %v2362, 4294901760
        %2364 = vmatpush2.msra.mxu0 %v2363
        %v2365 = vand.u32 %v1568, 4294901760
        %2366 = vmatprep.mubr.f32.mxu0 %v2365
        %v2367 = vand.u32 %v1566, 4294901760
        %2368 = vmatmul.mubr.f32.gmra.mxu0 %v2367
        %v2369 = vpop.f32.mrf.mxu0
        %v2370 = vadd.f32 %v2191, %v2369
        %v2371 = vpop.f32.mrf.mxu0
        %v2372 = vand.u32 %v1572, 4294901760
        %2373 = vmatprep.mubr.f32.mxu0 %v2372
        %v2374 = vand.u32 %v1570, 4294901760
        %2375 = vmatmul.mubr.f32.gmra.mxu0 %v2374
        %v2376 = vpop.f32.mrf.mxu0
        %v2377 = vadd.f32 %v2202, %v2376
        %v2378 = vpop.f32.mrf.mxu0
        %2379 = vdwg.mxu0
        %2380 = vmatprep.subr.mxu0 0.0
        %v2381 = vand.u32 %v337, 4294901760
        %2382 = vmatpush1.msra.mxu0 %v2381
        %2383 = vmatprep.subr.mxu0 0.0
        %v2384 = vand.u32 %v336, 4294901760
        %2385 = vmatpush1.msra.mxu0 %v2384
        %2386 = vmatprep.subr.mxu0 0.0
        %v2387 = vand.u32 %v335, 4294901760
        %2388 = vmatpush1.msra.mxu0 %v2387
        %2389 = vmatprep.subr.mxu0 0.0
        %v2390 = vand.u32 %v334, 4294901760
        %2391 = vmatpush1.msra.mxu0 %v2390
        %2392 = vmatprep.subr.mxu0 0.0
        %v2393 = vand.u32 %v333, 4294901760
        %2394 = vmatpush1.msra.mxu0 %v2393
        %2395 = vmatprep.subr.mxu0 0.0
        %v2396 = vand.u32 %v332, 4294901760
        %2397 = vmatpush1.msra.mxu0 %v2396
        %2398 = vmatprep.subr.mxu0 0.0
        %v2399 = vand.u32 %v331, 4294901760
        %2400 = vmatpush1.msra.mxu0 %v2399
        %2401 = vmatprep.subr.mxu0 0.0
        %v2402 = vand.u32 %v330, 4294901760
        %2403 = vmatpush1.msra.mxu0 %v2402
        %2404 = vmatprep.subr.mxu0 0.0
        %v2405 = vand.u32 %v329, 4294901760
        %2406 = vmatpush1.msra.mxu0 %v2405
        %2407 = vmatprep.subr.mxu0 0.0
        %v2408 = vand.u32 %v328, 4294901760
        %2409 = vmatpush1.msra.mxu0 %v2408
        %2410 = vmatprep.subr.mxu0 0.0
        %v2411 = vand.u32 %v327, 4294901760
        %2412 = vmatpush1.msra.mxu0 %v2411
        %2413 = vmatprep.subr.mxu0 0.0
        %v2414 = vand.u32 %v326, 4294901760
        %2415 = vmatpush1.msra.mxu0 %v2414
        %2416 = vmatprep.subr.mxu0 0.0
        %v2417 = vand.u32 %v325, 4294901760
        %2418 = vmatpush1.msra.mxu0 %v2417
        %2419 = vmatprep.subr.mxu0 0.0
        %v2420 = vand.u32 %v324, 4294901760
        %2421 = vmatpush1.msra.mxu0 %v2420
        %2422 = vmatprep.subr.mxu0 0.0
        %v2423 = vand.u32 %v323, 4294901760
        %2424 = vmatpush1.msra.mxu0 %v2423
        %2425 = vmatprep.subr.mxu0 0.0
        %v2426 = vand.u32 %v322, 4294901760
        %2427 = vmatpush1.msra.mxu0 %v2426
        %2428 = vmatprep.subr.mxu0 0.0
        %v2429 = vand.u32 %v353, 4294901760
        %2430 = vmatpush2.msra.mxu0 %v2429
        %2431 = vmatprep.subr.mxu0 0.0
        %v2432 = vand.u32 %v352, 4294901760
        %2433 = vmatpush2.msra.mxu0 %v2432
        %2434 = vmatprep.subr.mxu0 0.0
        %v2435 = vand.u32 %v351, 4294901760
        %2436 = vmatpush2.msra.mxu0 %v2435
        %2437 = vmatprep.subr.mxu0 0.0
        %v2438 = vand.u32 %v350, 4294901760
        %2439 = vmatpush2.msra.mxu0 %v2438
        %2440 = vmatprep.subr.mxu0 0.0
        %v2441 = vand.u32 %v349, 4294901760
        %2442 = vmatpush2.msra.mxu0 %v2441
        %2443 = vmatprep.subr.mxu0 0.0
        %v2444 = vand.u32 %v348, 4294901760
        %2445 = vmatpush2.msra.mxu0 %v2444
        %2446 = vmatprep.subr.mxu0 0.0
        %v2447 = vand.u32 %v347, 4294901760
        %2448 = vmatpush2.msra.mxu0 %v2447
        %2449 = vmatprep.subr.mxu0 0.0
        %v2450 = vand.u32 %v346, 4294901760
        %2451 = vmatpush2.msra.mxu0 %v2450
        %2452 = vmatprep.subr.mxu0 0.0
        %v2453 = vand.u32 %v345, 4294901760
        %2454 = vmatpush2.msra.mxu0 %v2453
        %2455 = vmatprep.subr.mxu0 0.0
        %v2456 = vand.u32 %v344, 4294901760
        %2457 = vmatpush2.msra.mxu0 %v2456
        %2458 = vmatprep.subr.mxu0 0.0
        %v2459 = vand.u32 %v343, 4294901760
        %2460 = vmatpush2.msra.mxu0 %v2459
        %2461 = vmatprep.subr.mxu0 0.0
        %v2462 = vand.u32 %v342, 4294901760
        %2463 = vmatpush2.msra.mxu0 %v2462
        %2464 = vmatprep.subr.mxu0 0.0
        %v2465 = vand.u32 %v341, 4294901760
        %2466 = vmatpush2.msra.mxu0 %v2465
        %2467 = vmatprep.subr.mxu0 0.0
        %v2468 = vand.u32 %v340, 4294901760
        %2469 = vmatpush2.msra.mxu0 %v2468
        %2470 = vmatprep.subr.mxu0 0.0
        %v2471 = vand.u32 %v339, 4294901760
        %2472 = vmatpush2.msra.mxu0 %v2471
        %2473 = vmatprep.subr.mxu0 0.0
        %v2474 = vand.u32 %v338, 4294901760
        %2475 = vmatpush2.msra.mxu0 %v2474
        %v2476 = vand.u32 %v1568, 4294901760
        %2477 = vmatprep.mubr.f32.mxu0 %v2476
        %v2478 = vand.u32 %v1566, 4294901760
        %2479 = vmatmul.mubr.f32.gmra.mxu0 %v2478
        %v2480 = vpop.f32.mrf.mxu0
        %v2481 = vadd.f32 %v2370, %v2480
        %v2482 = vpop.f32.mrf.mxu0
        %v2483 = vand.u32 %v1572, 4294901760
        %2484 = vmatprep.mubr.f32.mxu0 %v2483
        %v2485 = vand.u32 %v1570, 4294901760
        %2486 = vmatmul.mubr.f32.gmra.mxu0 %v2485
        %v2487 = vpop.f32.mrf.mxu0
        %v2488 = vadd.f32 %v2377, %v2487
        %v2489 = vpop.f32.mrf.mxu0
        %2490 = vdwg.mxu0
        %v2491 = vrcp.pop %v2481
        %v2492 = vrcp.pop %v2488
        %2495 = vrot.lane.b32.xlu0 %v2491, 1
        %v2496 = vpop.permute.xlu0 %2495
        %2497 = vrot.lane.b32.xlu0 %v2492, 1
        %v2498 = vpop.permute.xlu0 %2497
        %v2501 = vmul.f32 %v2481, %v2496
        %v2502 = vmul.f32 %v2488, %v2498
        %v2503 = vadd.f32 %v2501, 3.8146973e-13
        %v2504 = vadd.f32 %v2502, 3.8146973e-13
        %2505 = vrot.lane.b32.xlu0 %v2491, 2
        %v2506 = vpop.permute.xlu0 %2505
        %2507 = vrot.lane.b32.xlu0 %v2492, 2
        %v2508 = vpop.permute.xlu0 %2507
        %v2511 = vmul.f32 %v2481, %v2506
        %v2512 = vmul.f32 %v2488, %v2508
        %v2513 = vadd.f32 %v2511, 3.8146973e-13
        %v2514 = vadd.f32 %v2512, 3.8146973e-13
        %2515 = vrot.lane.b32.xlu0 %v2491, 3
        %v2516 = vpop.permute.xlu0 %2515
        %2517 = vrot.lane.b32.xlu0 %v2492, 3
        %v2518 = vpop.permute.xlu0 %2517
        %v2521 = vmul.f32 %v2481, %v2516
        %v2522 = vmul.f32 %v2488, %v2518
        %v2523 = vadd.f32 %v2521, 9.671111e-06
        %v2524 = vadd.f32 %v2522, 9.671111e-06
        %v2525 = vmul.f32 %v2503, %v2503
        %v2526 = vmul.f32 %v2504, %v2504
        %v2527 = vmul.f32 %v2525, 0.9999744
        %v2528 = vmul.f32 %v2526, 0.9999744
        %2531 = vrot.lane.b32.xlu0 %v2527, 2
        %v2532 = vpop.permute.xlu0 %2531
        %2533 = vrot.lane.b32.xlu0 %v2528, 2
        %v2534 = vpop.permute.xlu0 %2533
        %v2537 = vsub.f32 %v2523, %v2532
        %v2538 = vsub.f32 %v2524, %v2534
        %2539 = vrot.lane.b32.xlu0 %v2491, 4
        %v2540 = vpop.permute.xlu0 %2539
        %2541 = vrot.lane.b32.xlu0 %v2492, 4
        %v2542 = vpop.permute.xlu0 %2541
        %v2545 = vmul.f32 %v2481, %v2540
        %v2546 = vmul.f32 %v2488, %v2542
        %v2547 = vadd.f32 %v2545, 5.684342e-21
        %v2548 = vadd.f32 %v2546, 5.684342e-21
        %2551 = vrot.lane.b32.xlu0 %v2513, 127
        %v2552 = vpop.permute.xlu0 %2551
        %2553 = vrot.lane.b32.xlu0 %v2514, 127
        %v2554 = vpop.permute.xlu0 %2553
        %v2557 = vmul.f32 %v2503, %v2552
        %v2558 = vmul.f32 %v2504, %v2554
        %v2559 = vmul.f32 %v2557, 0.9999744
        %v2560 = vmul.f32 %v2558, 0.9999744
        %2563 = vrot.lane.b32.xlu0 %v2559, 3
        %v2564 = vpop.permute.xlu0 %2563
        %2565 = vrot.lane.b32.xlu0 %v2560, 3
        %v2566 = vpop.permute.xlu0 %2565
        %v2569 = vsub.f32 %v2547, %v2564
        %v2570 = vsub.f32 %v2548, %v2566
        %2571 = vrot.lane.b32.xlu0 %v2491, 5
        %v2572 = vpop.permute.xlu0 %2571
        %2573 = vrot.lane.b32.xlu0 %v2492, 5
        %v2574 = vpop.permute.xlu0 %2573
        %v2577 = vmul.f32 %v2481, %v2572
        %v2578 = vmul.f32 %v2488, %v2574
        %v2579 = vadd.f32 %v2577, 9.671111e-06
        %v2580 = vadd.f32 %v2578, 9.671111e-06
        %v2581 = vmul.f32 %v2513, %v2513
        %v2582 = vmul.f32 %v2514, %v2514
        %v2583 = vmul.f32 %v2581, 0.9999744
        %v2584 = vmul.f32 %v2582, 0.9999744
        %2587 = vrot.lane.b32.xlu0 %v2583, 3
        %v2588 = vpop.permute.xlu0 %2587
        %2589 = vrot.lane.b32.xlu0 %v2584, 3
        %v2590 = vpop.permute.xlu0 %2589
        %v2593 = vsub.f32 %v2579, %v2588
        %v2594 = vsub.f32 %v2580, %v2590
        %2596 = vset.pattern.permute.xlu0 5
        %2597 = vperm.xlu0 %2596, %v2593
        %v2598 = vpop.permute.xlu0 %2597
        %2601 = vset.pattern.permute.xlu0 5
        %2602 = vperm.xlu0 %2601, %v2594
        %v2603 = vpop.permute.xlu0 %2602
        %v2605 = vsel %vm1449, %v2598, 0.0
        %v2606 = vsel %vm1449, %v2603, 0.0
        %2608 = vset.pattern.permute.xlu0 4
        %2609 = vperm.xlu0 %2608, %v2569
        %v2610 = vpop.permute.xlu0 %2609
        %2613 = vset.pattern.permute.xlu0 4
        %2614 = vperm.xlu0 %2613, %v2570
        %v2615 = vpop.permute.xlu0 %2614
        %v2617 = vsel %vm1448, %v2610, %v2605
        %v2618 = vsel %vm1448, %v2615, %v2606
        %2620 = vset.pattern.permute.xlu0 3
        %2621 = vperm.xlu0 %2620, %v2537
        %v2622 = vpop.permute.xlu0 %2621
        %2625 = vset.pattern.permute.xlu0 3
        %2626 = vperm.xlu0 %2625, %v2538
        %v2627 = vpop.permute.xlu0 %2626
        %v2629 = vsel %vm1445, %v2622, %v2617
        %v2630 = vsel %vm1445, %v2627, %v2618
        %2631 = vset.pattern.permute.xlu0 2
        %2632 = vperm.xlu0 %2631, %v2513
        %v2633 = vpop.permute.xlu0 %2632
        %2635 = vset.pattern.permute.xlu0 2
        %2636 = vperm.xlu0 %2635, %v2514
        %v2637 = vpop.permute.xlu0 %2636
        %v2639 = vsel %vm1444, %v2633, %v2629
        %v2640 = vsel %vm1444, %v2637, %v2630
        %2642 = vset.pattern.permute.xlu0 1
        %2643 = vperm.xlu0 %2642, %v2503
        %v2644 = vpop.permute.xlu0 %2643
        %2647 = vset.pattern.permute.xlu0 1
        %2648 = vperm.xlu0 %2647, %v2504
        %v2649 = vpop.permute.xlu0 %2648
        %v2651 = vsel %vm1443, %v2644, %v2639
        %v2652 = vsel %vm1443, %v2649, %v2640
        %s2653 = sld [smem:[#allocation3 + $0x2]]
        %s2654 = smul.f32 %s2653, %s305
        %v2655 = vstv %s2654
        %v2656 = vmul.f32 %v306, %v2655
        %v2657 = vmul.f32 %v307, %v2655
        %v2658 = vmul.f32 %v308, %v2655
        %v2659 = vmul.f32 %v309, %v2655
        %s2660 = sld [smem:[#allocation3 + $0x82]]
        %s2661 = smul.f32 %s2660, %s305
        %v2662 = vstv %s2661
        %v2663 = vmul.f32 %v310, %v2662
        %v2664 = vmul.f32 %v311, %v2662
        %v2665 = vmul.f32 %v312, %v2662
        %v2666 = vmul.f32 %v313, %v2662
        %v2667 = vadd.f32 %v2656, %v2663
        %v2668 = vadd.f32 %v2657, %v2664
        %v2669 = vadd.f32 %v2658, %v2665
        %v2670 = vadd.f32 %v2659, %v2666
        %s2671 = sld [smem:[#allocation3 + $0x102]]
        %s2672 = smul.f32 %s2671, %s305
        %v2673 = vstv %s2672
        %v2674 = vmul.f32 %v314, %v2673
        %v2675 = vmul.f32 %v315, %v2673
        %v2676 = vmul.f32 %v316, %v2673
        %v2677 = vmul.f32 %v317, %v2673
        %v2678 = vadd.f32 %v2667, %v2674
        %v2679 = vadd.f32 %v2668, %v2675
        %v2680 = vadd.f32 %v2669, %v2676
        %v2681 = vadd.f32 %v2670, %v2677
        %s2682 = sld [smem:[#allocation3 + $0x182]]
        %s2683 = smul.f32 %s2682, %s305
        %v2684 = vstv %s2683
        %v2685 = vmul.f32 %v318, %v2684
        %v2686 = vmul.f32 %v319, %v2684
        %v2687 = vmul.f32 %v320, %v2684
        %v2688 = vmul.f32 %v321, %v2684
        %v2689 = vadd.f32 %v2678, %v2685
        %v2690 = vadd.f32 %v2679, %v2686
        %v2691 = vadd.f32 %v2680, %v2687
        %v2692 = vadd.f32 %v2681, %v2688
        %s2693 = sld [smem:[#allocation8 + $0x2]]
        %s2694 = smul.f32 %s2693, %s305
        %v2695 = vstv %s2694
        %v2696 = vadd.f32 %v2689, %v2695
        %v2697 = vadd.f32 %v2690, %v2695
        %v2698 = vadd.f32 %v2691, %v2695
        %v2699 = vadd.f32 %v2692, %v2695
        %v2700 = vmax.f32 %v2696, %v2697
        %2701 = vmax.xlane.f32.xlu0 %v2700
        %v2702 = vpop.xlane.xlu0 %2701
        %v2703 = vmax.f32 %v2698, %v2699
        %2704 = vmax.xlane.f32.xlu0 %v2703
        %v2705 = vpop.xlane.xlu0 %2704
        %v2706 = vsub.f32 %v2696, %v2702
        %v2707 = vsub.f32 %v2697, %v2702
        %v2708 = vsub.f32 %v2698, %v2705
        %v2709 = vsub.f32 %v2699, %v2705
        %v2710 = vmul.f32 %v2706, 1.442695
        %v2711 = vpow.pop %v2710
        %v2712 = vmul.f32 %v2707, 1.442695
        %v2713 = vpow.pop %v2712
        %v2714 = vmul.f32 %v2708, 1.442695
        %v2715 = vpow.pop %v2714
        %v2716 = vmul.f32 %v2709, 1.442695
        %v2717 = vpow.pop %v2716
        %2718 = vmatprep.subr.mxu0 0.0
        %v2719 = vand.u32 %v337, 4294901760
        %2720 = vmatpush1.msra.mxu0 %v2719
        %2721 = vmatprep.subr.mxu0 0.0
        %v2722 = vand.u32 %v336, 4294901760
        %2723 = vmatpush1.msra.mxu0 %v2722
        %2724 = vmatprep.subr.mxu0 0.0
        %v2725 = vand.u32 %v335, 4294901760
        %2726 = vmatpush1.msra.mxu0 %v2725
        %2727 = vmatprep.subr.mxu0 0.0
        %v2728 = vand.u32 %v334, 4294901760
        %2729 = vmatpush1.msra.mxu0 %v2728
        %2730 = vmatprep.subr.mxu0 0.0
        %v2731 = vand.u32 %v333, 4294901760
        %2732 = vmatpush1.msra.mxu0 %v2731
        %2733 = vmatprep.subr.mxu0 0.0
        %v2734 = vand.u32 %v332, 4294901760
        %2735 = vmatpush1.msra.mxu0 %v2734
        %2736 = vmatprep.subr.mxu0 0.0
        %v2737 = vand.u32 %v331, 4294901760
        %2738 = vmatpush1.msra.mxu0 %v2737
        %2739 = vmatprep.subr.mxu0 0.0
        %v2740 = vand.u32 %v330, 4294901760
        %2741 = vmatpush1.msra.mxu0 %v2740
        %2742 = vmatprep.subr.mxu0 0.0
        %v2743 = vand.u32 %v329, 4294901760
        %2744 = vmatpush1.msra.mxu0 %v2743
        %2745 = vmatprep.subr.mxu0 0.0
        %v2746 = vand.u32 %v328, 4294901760
        %2747 = vmatpush1.msra.mxu0 %v2746
        %2748 = vmatprep.subr.mxu0 0.0
        %v2749 = vand.u32 %v327, 4294901760
        %2750 = vmatpush1.msra.mxu0 %v2749
        %2751 = vmatprep.subr.mxu0 0.0
        %v2752 = vand.u32 %v326, 4294901760
        %2753 = vmatpush1.msra.mxu0 %v2752
        %2754 = vmatprep.subr.mxu0 0.0
        %v2755 = vand.u32 %v325, 4294901760
        %2756 = vmatpush1.msra.mxu0 %v2755
        %2757 = vmatprep.subr.mxu0 0.0
        %v2758 = vand.u32 %v324, 4294901760
        %2759 = vmatpush1.msra.mxu0 %v2758
        %2760 = vmatprep.subr.mxu0 0.0
        %v2761 = vand.u32 %v323, 4294901760
        %2762 = vmatpush1.msra.mxu0 %v2761
        %2763 = vmatprep.subr.mxu0 0.0
        %v2764 = vand.u32 %v322, 4294901760
        %2765 = vmatpush1.msra.mxu0 %v2764
        %2766 = vmatprep.subr.mxu0 0.0
        %v2767 = vand.u32 %v353, 4294901760
        %2768 = vmatpush2.msra.mxu0 %v2767
        %2769 = vmatprep.subr.mxu0 0.0
        %v2770 = vand.u32 %v352, 4294901760
        %2771 = vmatpush2.msra.mxu0 %v2770
        %2772 = vmatprep.subr.mxu0 0.0
        %v2773 = vand.u32 %v351, 4294901760
        %2774 = vmatpush2.msra.mxu0 %v2773
        %2775 = vmatprep.subr.mxu0 0.0
        %v2776 = vand.u32 %v350, 4294901760
        %2777 = vmatpush2.msra.mxu0 %v2776
        %2778 = vmatprep.subr.mxu0 0.0
        %v2779 = vand.u32 %v349, 4294901760
        %2780 = vmatpush2.msra.mxu0 %v2779
        %2781 = vmatprep.subr.mxu0 0.0
        %v2782 = vand.u32 %v348, 4294901760
        %2783 = vmatpush2.msra.mxu0 %v2782
        %2784 = vmatprep.subr.mxu0 0.0
        %v2785 = vand.u32 %v347, 4294901760
        %2786 = vmatpush2.msra.mxu0 %v2785
        %2787 = vmatprep.subr.mxu0 0.0
        %v2788 = vand.u32 %v346, 4294901760
        %2789 = vmatpush2.msra.mxu0 %v2788
        %2790 = vmatprep.subr.mxu0 0.0
        %v2791 = vand.u32 %v345, 4294901760
        %2792 = vmatpush2.msra.mxu0 %v2791
        %2793 = vmatprep.subr.mxu0 0.0
        %v2794 = vand.u32 %v344, 4294901760
        %2795 = vmatpush2.msra.mxu0 %v2794
        %2796 = vmatprep.subr.mxu0 0.0
        %v2797 = vand.u32 %v343, 4294901760
        %2798 = vmatpush2.msra.mxu0 %v2797
        %2799 = vmatprep.subr.mxu0 0.0
        %v2800 = vand.u32 %v342, 4294901760
        %2801 = vmatpush2.msra.mxu0 %v2800
        %2802 = vmatprep.subr.mxu0 0.0
        %v2803 = vand.u32 %v341, 4294901760
        %2804 = vmatpush2.msra.mxu0 %v2803
        %2805 = vmatprep.subr.mxu0 0.0
        %v2806 = vand.u32 %v340, 4294901760
        %2807 = vmatpush2.msra.mxu0 %v2806
        %2808 = vmatprep.subr.mxu0 0.0
        %v2809 = vand.u32 %v339, 4294901760
        %2810 = vmatpush2.msra.mxu0 %v2809
        %2811 = vmatprep.subr.mxu0 0.0
        %v2812 = vand.u32 %v338, 4294901760
        %2813 = vmatpush2.msra.mxu0 %v2812
        %v2814 = vand.u32 %v2713, 4294901760
        %v2815 = vsub.f32 %v2713, %v2814
        %v2816 = vand.u32 %v2815, 4294901760
        %v2817 = vsub.f32 %v2815, %v2816
        %v2818 = vand.u32 %v2817, 4294901760
        %2819 = vmatprep.mubr.f32.mxu0 %v2818
        %v2820 = vand.u32 %v2711, 4294901760
        %v2821 = vsub.f32 %v2711, %v2820
        %v2822 = vand.u32 %v2821, 4294901760
        %v2823 = vsub.f32 %v2821, %v2822
        %v2824 = vand.u32 %v2823, 4294901760
        %2825 = vmatmul.mubr.f32.gmra.mxu0 %v2824
        %v2826 = vpop.f32.mrf.mxu0
        %v2827 = vadd.f32 0.0, %v2826
        %v2828 = vpop.f32.mrf.mxu0
        %v2829 = vand.u32 %v2717, 4294901760
        %v2830 = vsub.f32 %v2717, %v2829
        %v2831 = vand.u32 %v2830, 4294901760
        %v2832 = vsub.f32 %v2830, %v2831
        %v2833 = vand.u32 %v2832, 4294901760
        %2834 = vmatprep.mubr.f32.mxu0 %v2833
        %v2835 = vand.u32 %v2715, 4294901760
        %v2836 = vsub.f32 %v2715, %v2835
        %v2837 = vand.u32 %v2836, 4294901760
        %v2838 = vsub.f32 %v2836, %v2837
        %v2839 = vand.u32 %v2838, 4294901760
        %2840 = vmatmul.mubr.f32.gmra.mxu0 %v2839
        %v2841 = vpop.f32.mrf.mxu0
        %v2842 = vadd.f32 0.0, %v2841
        %v2843 = vpop.f32.mrf.mxu0
        %2844 = vdwg.mxu0
        %2845 = vmatprep.subr.mxu0 0.0
        %v2846 = vand.u32 %v337, 4294901760
        %v2847 = vsub.f32 %v337, %v2846
        %v2848 = vand.u32 %v2847, 4294901760
        %v2849 = vsub.f32 %v2847, %v2848
        %v2850 = vand.u32 %v2849, 4294901760
        %2851 = vmatpush1.msra.mxu0 %v2850
        %2852 = vmatprep.subr.mxu0 0.0
        %v2853 = vand.u32 %v336, 4294901760
        %v2854 = vsub.f32 %v336, %v2853
        %v2855 = vand.u32 %v2854, 4294901760
        %v2856 = vsub.f32 %v2854, %v2855
        %v2857 = vand.u32 %v2856, 4294901760
        %2858 = vmatpush1.msra.mxu0 %v2857
        %2859 = vmatprep.subr.mxu0 0.0
        %v2860 = vand.u32 %v335, 4294901760
        %v2861 = vsub.f32 %v335, %v2860
        %v2862 = vand.u32 %v2861, 4294901760
        %v2863 = vsub.f32 %v2861, %v2862
        %v2864 = vand.u32 %v2863, 4294901760
        %2865 = vmatpush1.msra.mxu0 %v2864
        %2866 = vmatprep.subr.mxu0 0.0
        %v2867 = vand.u32 %v334, 4294901760
        %v2868 = vsub.f32 %v334, %v2867
        %v2869 = vand.u32 %v2868, 4294901760
        %v2870 = vsub.f32 %v2868, %v2869
        %v2871 = vand.u32 %v2870, 4294901760
        %2872 = vmatpush1.msra.mxu0 %v2871
        %2873 = vmatprep.subr.mxu0 0.0
        %v2874 = vand.u32 %v333, 4294901760
        %v2875 = vsub.f32 %v333, %v2874
        %v2876 = vand.u32 %v2875, 4294901760
        %v2877 = vsub.f32 %v2875, %v2876
        %v2878 = vand.u32 %v2877, 4294901760
        %2879 = vmatpush1.msra.mxu0 %v2878
        %2880 = vmatprep.subr.mxu0 0.0
        %v2881 = vand.u32 %v332, 4294901760
        %v2882 = vsub.f32 %v332, %v2881
        %v2883 = vand.u32 %v2882, 4294901760
        %v2884 = vsub.f32 %v2882, %v2883
        %v2885 = vand.u32 %v2884, 4294901760
        %2886 = vmatpush1.msra.mxu0 %v2885
        %2887 = vmatprep.subr.mxu0 0.0
        %v2888 = vand.u32 %v331, 4294901760
        %v2889 = vsub.f32 %v331, %v2888
        %v2890 = vand.u32 %v2889, 4294901760
        %v2891 = vsub.f32 %v2889, %v2890
        %v2892 = vand.u32 %v2891, 4294901760
        %2893 = vmatpush1.msra.mxu0 %v2892
        %2894 = vmatprep.subr.mxu0 0.0
        %v2895 = vand.u32 %v330, 4294901760
        %v2896 = vsub.f32 %v330, %v2895
        %v2897 = vand.u32 %v2896, 4294901760
        %v2898 = vsub.f32 %v2896, %v2897
        %v2899 = vand.u32 %v2898, 4294901760
        %2900 = vmatpush1.msra.mxu0 %v2899
        %2901 = vmatprep.subr.mxu0 0.0
        %v2902 = vand.u32 %v329, 4294901760
        %v2903 = vsub.f32 %v329, %v2902
        %v2904 = vand.u32 %v2903, 4294901760
        %v2905 = vsub.f32 %v2903, %v2904
        %v2906 = vand.u32 %v2905, 4294901760
        %2907 = vmatpush1.msra.mxu0 %v2906
        %2908 = vmatprep.subr.mxu0 0.0
        %v2909 = vand.u32 %v328, 4294901760
        %v2910 = vsub.f32 %v328, %v2909
        %v2911 = vand.u32 %v2910, 4294901760
        %v2912 = vsub.f32 %v2910, %v2911
        %v2913 = vand.u32 %v2912, 4294901760
        %2914 = vmatpush1.msra.mxu0 %v2913
        %2915 = vmatprep.subr.mxu0 0.0
        %v2916 = vand.u32 %v327, 4294901760
        %v2917 = vsub.f32 %v327, %v2916
        %v2918 = vand.u32 %v2917, 4294901760
        %v2919 = vsub.f32 %v2917, %v2918
        %v2920 = vand.u32 %v2919, 4294901760
        %2921 = vmatpush1.msra.mxu0 %v2920
        %2922 = vmatprep.subr.mxu0 0.0
        %v2923 = vand.u32 %v326, 4294901760
        %v2924 = vsub.f32 %v326, %v2923
        %v2925 = vand.u32 %v2924, 4294901760
        %v2926 = vsub.f32 %v2924, %v2925
        %v2927 = vand.u32 %v2926, 4294901760
        %2928 = vmatpush1.msra.mxu0 %v2927
        %2929 = vmatprep.subr.mxu0 0.0
        %v2930 = vand.u32 %v325, 4294901760
        %v2931 = vsub.f32 %v325, %v2930
        %v2932 = vand.u32 %v2931, 4294901760
        %v2933 = vsub.f32 %v2931, %v2932
        %v2934 = vand.u32 %v2933, 4294901760
        %2935 = vmatpush1.msra.mxu0 %v2934
        %2936 = vmatprep.subr.mxu0 0.0
        %v2937 = vand.u32 %v324, 4294901760
        %v2938 = vsub.f32 %v324, %v2937
        %v2939 = vand.u32 %v2938, 4294901760
        %v2940 = vsub.f32 %v2938, %v2939
        %v2941 = vand.u32 %v2940, 4294901760
        %2942 = vmatpush1.msra.mxu0 %v2941
        %2943 = vmatprep.subr.mxu0 0.0
        %v2944 = vand.u32 %v323, 4294901760
        %v2945 = vsub.f32 %v323, %v2944
        %v2946 = vand.u32 %v2945, 4294901760
        %v2947 = vsub.f32 %v2945, %v2946
        %v2948 = vand.u32 %v2947, 4294901760
        %2949 = vmatpush1.msra.mxu0 %v2948
        %2950 = vmatprep.subr.mxu0 0.0
        %v2951 = vand.u32 %v322, 4294901760
        %v2952 = vsub.f32 %v322, %v2951
        %v2953 = vand.u32 %v2952, 4294901760
        %v2954 = vsub.f32 %v2952, %v2953
        %v2955 = vand.u32 %v2954, 4294901760
        %2956 = vmatpush1.msra.mxu0 %v2955
        %2957 = vmatprep.subr.mxu0 0.0
        %v2958 = vand.u32 %v353, 4294901760
        %v2959 = vsub.f32 %v353, %v2958
        %v2960 = vand.u32 %v2959, 4294901760
        %v2961 = vsub.f32 %v2959, %v2960
        %v2962 = vand.u32 %v2961, 4294901760
        %2963 = vmatpush2.msra.mxu0 %v2962
        %2964 = vmatprep.subr.mxu0 0.0
        %v2965 = vand.u32 %v352, 4294901760
        %v2966 = vsub.f32 %v352, %v2965
        %v2967 = vand.u32 %v2966, 4294901760
        %v2968 = vsub.f32 %v2966, %v2967
        %v2969 = vand.u32 %v2968, 4294901760
        %2970 = vmatpush2.msra.mxu0 %v2969
        %2971 = vmatprep.subr.mxu0 0.0
        %v2972 = vand.u32 %v351, 4294901760
        %v2973 = vsub.f32 %v351, %v2972
        %v2974 = vand.u32 %v2973, 4294901760
        %v2975 = vsub.f32 %v2973, %v2974
        %v2976 = vand.u32 %v2975, 4294901760
        %2977 = vmatpush2.msra.mxu0 %v2976
        %2978 = vmatprep.subr.mxu0 0.0
        %v2979 = vand.u32 %v350, 4294901760
        %v2980 = vsub.f32 %v350, %v2979
        %v2981 = vand.u32 %v2980, 4294901760
        %v2982 = vsub.f32 %v2980, %v2981
        %v2983 = vand.u32 %v2982, 4294901760
        %2984 = vmatpush2.msra.mxu0 %v2983
        %2985 = vmatprep.subr.mxu0 0.0
        %v2986 = vand.u32 %v349, 4294901760
        %v2987 = vsub.f32 %v349, %v2986
        %v2988 = vand.u32 %v2987, 4294901760
        %v2989 = vsub.f32 %v2987, %v2988
        %v2990 = vand.u32 %v2989, 4294901760
        %2991 = vmatpush2.msra.mxu0 %v2990
        %2992 = vmatprep.subr.mxu0 0.0
        %v2993 = vand.u32 %v348, 4294901760
        %v2994 = vsub.f32 %v348, %v2993
        %v2995 = vand.u32 %v2994, 4294901760
        %v2996 = vsub.f32 %v2994, %v2995
        %v2997 = vand.u32 %v2996, 4294901760
        %2998 = vmatpush2.msra.mxu0 %v2997
        %2999 = vmatprep.subr.mxu0 0.0
        %v3000 = vand.u32 %v347, 4294901760
        %v3001 = vsub.f32 %v347, %v3000
        %v3002 = vand.u32 %v3001, 4294901760
        %v3003 = vsub.f32 %v3001, %v3002
        %v3004 = vand.u32 %v3003, 4294901760
        %3005 = vmatpush2.msra.mxu0 %v3004
        %3006 = vmatprep.subr.mxu0 0.0
        %v3007 = vand.u32 %v346, 4294901760
        %v3008 = vsub.f32 %v346, %v3007
        %v3009 = vand.u32 %v3008, 4294901760
        %v3010 = vsub.f32 %v3008, %v3009
        %v3011 = vand.u32 %v3010, 4294901760
        %3012 = vmatpush2.msra.mxu0 %v3011
        %3013 = vmatprep.subr.mxu0 0.0
        %v3014 = vand.u32 %v345, 4294901760
        %v3015 = vsub.f32 %v345, %v3014
        %v3016 = vand.u32 %v3015, 4294901760
        %v3017 = vsub.f32 %v3015, %v3016
        %v3018 = vand.u32 %v3017, 4294901760
        %3019 = vmatpush2.msra.mxu0 %v3018
        %3020 = vmatprep.subr.mxu0 0.0
        %v3021 = vand.u32 %v344, 4294901760
        %v3022 = vsub.f32 %v344, %v3021
        %v3023 = vand.u32 %v3022, 4294901760
        %v3024 = vsub.f32 %v3022, %v3023
        %v3025 = vand.u32 %v3024, 4294901760
        %3026 = vmatpush2.msra.mxu0 %v3025
        %3027 = vmatprep.subr.mxu0 0.0
        %v3028 = vand.u32 %v343, 4294901760
        %v3029 = vsub.f32 %v343, %v3028
        %v3030 = vand.u32 %v3029, 4294901760
        %v3031 = vsub.f32 %v3029, %v3030
        %v3032 = vand.u32 %v3031, 4294901760
        %3033 = vmatpush2.msra.mxu0 %v3032
        %3034 = vmatprep.subr.mxu0 0.0
        %v3035 = vand.u32 %v342, 4294901760
        %v3036 = vsub.f32 %v342, %v3035
        %v3037 = vand.u32 %v3036, 4294901760
        %v3038 = vsub.f32 %v3036, %v3037
        %v3039 = vand.u32 %v3038, 4294901760
        %3040 = vmatpush2.msra.mxu0 %v3039
        %3041 = vmatprep.subr.mxu0 0.0
        %v3042 = vand.u32 %v341, 4294901760
        %v3043 = vsub.f32 %v341, %v3042
        %v3044 = vand.u32 %v3043, 4294901760
        %v3045 = vsub.f32 %v3043, %v3044
        %v3046 = vand.u32 %v3045, 4294901760
        %3047 = vmatpush2.msra.mxu0 %v3046
        %3048 = vmatprep.subr.mxu0 0.0
        %v3049 = vand.u32 %v340, 4294901760
        %v3050 = vsub.f32 %v340, %v3049
        %v3051 = vand.u32 %v3050, 4294901760
        %v3052 = vsub.f32 %v3050, %v3051
        %v3053 = vand.u32 %v3052, 4294901760
        %3054 = vmatpush2.msra.mxu0 %v3053
        %3055 = vmatprep.subr.mxu0 0.0
        %v3056 = vand.u32 %v339, 4294901760
        %v3057 = vsub.f32 %v339, %v3056
        %v3058 = vand.u32 %v3057, 4294901760
        %v3059 = vsub.f32 %v3057, %v3058
        %v3060 = vand.u32 %v3059, 4294901760
        %3061 = vmatpush2.msra.mxu0 %v3060
        %3062 = vmatprep.subr.mxu0 0.0
        %v3063 = vand.u32 %v338, 4294901760
        %v3064 = vsub.f32 %v338, %v3063
        %v3065 = vand.u32 %v3064, 4294901760
        %v3066 = vsub.f32 %v3064, %v3065
        %v3067 = vand.u32 %v3066, 4294901760
        %3068 = vmatpush2.msra.mxu0 %v3067
        %v3069 = vand.u32 %v2713, 4294901760
        %3070 = vmatprep.mubr.f32.mxu0 %v3069
        %v3071 = vand.u32 %v2711, 4294901760
        %3072 = vmatmul.mubr.f32.gmra.mxu0 %v3071
        %v3073 = vpop.f32.mrf.mxu0
        %v3074 = vadd.f32 %v2827, %v3073
        %v3075 = vpop.f32.mrf.mxu0
        %v3076 = vand.u32 %v2717, 4294901760
        %3077 = vmatprep.mubr.f32.mxu0 %v3076
        %v3078 = vand.u32 %v2715, 4294901760
        %3079 = vmatmul.mubr.f32.gmra.mxu0 %v3078
        %v3080 = vpop.f32.mrf.mxu0
        %v3081 = vadd.f32 %v2842, %v3080
        %v3082 = vpop.f32.mrf.mxu0
        %3083 = vdwg.mxu0
        %3084 = vmatprep.subr.mxu0 0.0
        %v3085 = vand.u32 %v337, 4294901760
        %v3086 = vsub.f32 %v337, %v3085
        %3087 = vmatpush1.msra.mxu0 %v3086
        %3088 = vmatprep.subr.mxu0 0.0
        %v3089 = vand.u32 %v336, 4294901760
        %v3090 = vsub.f32 %v336, %v3089
        %3091 = vmatpush1.msra.mxu0 %v3090
        %3092 = vmatprep.subr.mxu0 0.0
        %v3093 = vand.u32 %v335, 4294901760
        %v3094 = vsub.f32 %v335, %v3093
        %3095 = vmatpush1.msra.mxu0 %v3094
        %3096 = vmatprep.subr.mxu0 0.0
        %v3097 = vand.u32 %v334, 4294901760
        %v3098 = vsub.f32 %v334, %v3097
        %3099 = vmatpush1.msra.mxu0 %v3098
        %3100 = vmatprep.subr.mxu0 0.0
        %v3101 = vand.u32 %v333, 4294901760
        %v3102 = vsub.f32 %v333, %v3101
        %3103 = vmatpush1.msra.mxu0 %v3102
        %3104 = vmatprep.subr.mxu0 0.0
        %v3105 = vand.u32 %v332, 4294901760
        %v3106 = vsub.f32 %v332, %v3105
        %3107 = vmatpush1.msra.mxu0 %v3106
        %3108 = vmatprep.subr.mxu0 0.0
        %v3109 = vand.u32 %v331, 4294901760
        %v3110 = vsub.f32 %v331, %v3109
        %3111 = vmatpush1.msra.mxu0 %v3110
        %3112 = vmatprep.subr.mxu0 0.0
        %v3113 = vand.u32 %v330, 4294901760
        %v3114 = vsub.f32 %v330, %v3113
        %3115 = vmatpush1.msra.mxu0 %v3114
        %3116 = vmatprep.subr.mxu0 0.0
        %v3117 = vand.u32 %v329, 4294901760
        %v3118 = vsub.f32 %v329, %v3117
        %3119 = vmatpush1.msra.mxu0 %v3118
        %3120 = vmatprep.subr.mxu0 0.0
        %v3121 = vand.u32 %v328, 4294901760
        %v3122 = vsub.f32 %v328, %v3121
        %3123 = vmatpush1.msra.mxu0 %v3122
        %3124 = vmatprep.subr.mxu0 0.0
        %v3125 = vand.u32 %v327, 4294901760
        %v3126 = vsub.f32 %v327, %v3125
        %3127 = vmatpush1.msra.mxu0 %v3126
        %3128 = vmatprep.subr.mxu0 0.0
        %v3129 = vand.u32 %v326, 4294901760
        %v3130 = vsub.f32 %v326, %v3129
        %3131 = vmatpush1.msra.mxu0 %v3130
        %3132 = vmatprep.subr.mxu0 0.0
        %v3133 = vand.u32 %v325, 4294901760
        %v3134 = vsub.f32 %v325, %v3133
        %3135 = vmatpush1.msra.mxu0 %v3134
        %3136 = vmatprep.subr.mxu0 0.0
        %v3137 = vand.u32 %v324, 4294901760
        %v3138 = vsub.f32 %v324, %v3137
        %3139 = vmatpush1.msra.mxu0 %v3138
        %3140 = vmatprep.subr.mxu0 0.0
        %v3141 = vand.u32 %v323, 4294901760
        %v3142 = vsub.f32 %v323, %v3141
        %3143 = vmatpush1.msra.mxu0 %v3142
        %3144 = vmatprep.subr.mxu0 0.0
        %v3145 = vand.u32 %v322, 4294901760
        %v3146 = vsub.f32 %v322, %v3145
        %3147 = vmatpush1.msra.mxu0 %v3146
        %3148 = vmatprep.subr.mxu0 0.0
        %v3149 = vand.u32 %v353, 4294901760
        %v3150 = vsub.f32 %v353, %v3149
        %3151 = vmatpush2.msra.mxu0 %v3150
        %3152 = vmatprep.subr.mxu0 0.0
        %v3153 = vand.u32 %v352, 4294901760
        %v3154 = vsub.f32 %v352, %v3153
        %3155 = vmatpush2.msra.mxu0 %v3154
        %3156 = vmatprep.subr.mxu0 0.0
        %v3157 = vand.u32 %v351, 4294901760
        %v3158 = vsub.f32 %v351, %v3157
        %3159 = vmatpush2.msra.mxu0 %v3158
        %3160 = vmatprep.subr.mxu0 0.0
        %v3161 = vand.u32 %v350, 4294901760
        %v3162 = vsub.f32 %v350, %v3161
        %3163 = vmatpush2.msra.mxu0 %v3162
        %3164 = vmatprep.subr.mxu0 0.0
        %v3165 = vand.u32 %v349, 4294901760
        %v3166 = vsub.f32 %v349, %v3165
        %3167 = vmatpush2.msra.mxu0 %v3166
        %3168 = vmatprep.subr.mxu0 0.0
        %v3169 = vand.u32 %v348, 4294901760
        %v3170 = vsub.f32 %v348, %v3169
        %3171 = vmatpush2.msra.mxu0 %v3170
        %3172 = vmatprep.subr.mxu0 0.0
        %v3173 = vand.u32 %v347, 4294901760
        %v3174 = vsub.f32 %v347, %v3173
        %3175 = vmatpush2.msra.mxu0 %v3174
        %3176 = vmatprep.subr.mxu0 0.0
        %v3177 = vand.u32 %v346, 4294901760
        %v3178 = vsub.f32 %v346, %v3177
        %3179 = vmatpush2.msra.mxu0 %v3178
        %3180 = vmatprep.subr.mxu0 0.0
        %v3181 = vand.u32 %v345, 4294901760
        %v3182 = vsub.f32 %v345, %v3181
        %3183 = vmatpush2.msra.mxu0 %v3182
        %3184 = vmatprep.subr.mxu0 0.0
        %v3185 = vand.u32 %v344, 4294901760
        %v3186 = vsub.f32 %v344, %v3185
        %3187 = vmatpush2.msra.mxu0 %v3186
        %3188 = vmatprep.subr.mxu0 0.0
        %v3189 = vand.u32 %v343, 4294901760
        %v3190 = vsub.f32 %v343, %v3189
        %3191 = vmatpush2.msra.mxu0 %v3190
        %3192 = vmatprep.subr.mxu0 0.0
        %v3193 = vand.u32 %v342, 4294901760
        %v3194 = vsub.f32 %v342, %v3193
        %3195 = vmatpush2.msra.mxu0 %v3194
        %3196 = vmatprep.subr.mxu0 0.0
        %v3197 = vand.u32 %v341, 4294901760
        %v3198 = vsub.f32 %v341, %v3197
        %3199 = vmatpush2.msra.mxu0 %v3198
        %3200 = vmatprep.subr.mxu0 0.0
        %v3201 = vand.u32 %v340, 4294901760
        %v3202 = vsub.f32 %v340, %v3201
        %3203 = vmatpush2.msra.mxu0 %v3202
        %3204 = vmatprep.subr.mxu0 0.0
        %v3205 = vand.u32 %v339, 4294901760
        %v3206 = vsub.f32 %v339, %v3205
        %3207 = vmatpush2.msra.mxu0 %v3206
        %3208 = vmatprep.subr.mxu0 0.0
        %v3209 = vand.u32 %v338, 4294901760
        %v3210 = vsub.f32 %v338, %v3209
        %3211 = vmatpush2.msra.mxu0 %v3210
        %v3212 = vand.u32 %v2713, 4294901760
        %v3213 = vsub.f32 %v2713, %v3212
        %3214 = vmatprep.mubr.f32.mxu0 %v3213
        %v3215 = vand.u32 %v2711, 4294901760
        %v3216 = vsub.f32 %v2711, %v3215
        %3217 = vmatmul.mubr.f32.gmra.mxu0 %v3216
        %v3218 = vpop.f32.mrf.mxu0
        %v3219 = vadd.f32 %v3074, %v3218
        %v3220 = vpop.f32.mrf.mxu0
        %v3221 = vand.u32 %v2717, 4294901760
        %v3222 = vsub.f32 %v2717, %v3221
        %3223 = vmatprep.mubr.f32.mxu0 %v3222
        %v3224 = vand.u32 %v2715, 4294901760
        %v3225 = vsub.f32 %v2715, %v3224
        %3226 = vmatmul.mubr.f32.gmra.mxu0 %v3225
        %v3227 = vpop.f32.mrf.mxu0
        %v3228 = vadd.f32 %v3081, %v3227
        %v3229 = vpop.f32.mrf.mxu0
        %3230 = vdwg.mxu0
        %3231 = vmatprep.subr.mxu0 0.0
        %v3232 = vand.u32 %v337, 4294901760
        %3233 = vmatpush1.msra.mxu0 %v3232
        %3234 = vmatprep.subr.mxu0 0.0
        %v3235 = vand.u32 %v336, 4294901760
        %3236 = vmatpush1.msra.mxu0 %v3235
        %3237 = vmatprep.subr.mxu0 0.0
        %v3238 = vand.u32 %v335, 4294901760
        %3239 = vmatpush1.msra.mxu0 %v3238
        %3240 = vmatprep.subr.mxu0 0.0
        %v3241 = vand.u32 %v334, 4294901760
        %3242 = vmatpush1.msra.mxu0 %v3241
        %3243 = vmatprep.subr.mxu0 0.0
        %v3244 = vand.u32 %v333, 4294901760
        %3245 = vmatpush1.msra.mxu0 %v3244
        %3246 = vmatprep.subr.mxu0 0.0
        %v3247 = vand.u32 %v332, 4294901760
        %3248 = vmatpush1.msra.mxu0 %v3247
        %3249 = vmatprep.subr.mxu0 0.0
        %v3250 = vand.u32 %v331, 4294901760
        %3251 = vmatpush1.msra.mxu0 %v3250
        %3252 = vmatprep.subr.mxu0 0.0
        %v3253 = vand.u32 %v330, 4294901760
        %3254 = vmatpush1.msra.mxu0 %v3253
        %3255 = vmatprep.subr.mxu0 0.0
        %v3256 = vand.u32 %v329, 4294901760
        %3257 = vmatpush1.msra.mxu0 %v3256
        %3258 = vmatprep.subr.mxu0 0.0
        %v3259 = vand.u32 %v328, 4294901760
        %3260 = vmatpush1.msra.mxu0 %v3259
        %3261 = vmatprep.subr.mxu0 0.0
        %v3262 = vand.u32 %v327, 4294901760
        %3263 = vmatpush1.msra.mxu0 %v3262
        %3264 = vmatprep.subr.mxu0 0.0
        %v3265 = vand.u32 %v326, 4294901760
        %3266 = vmatpush1.msra.mxu0 %v3265
        %3267 = vmatprep.subr.mxu0 0.0
        %v3268 = vand.u32 %v325, 4294901760
        %3269 = vmatpush1.msra.mxu0 %v3268
        %3270 = vmatprep.subr.mxu0 0.0
        %v3271 = vand.u32 %v324, 4294901760
        %3272 = vmatpush1.msra.mxu0 %v3271
        %3273 = vmatprep.subr.mxu0 0.0
        %v3274 = vand.u32 %v323, 4294901760
        %3275 = vmatpush1.msra.mxu0 %v3274
        %3276 = vmatprep.subr.mxu0 0.0
        %v3277 = vand.u32 %v322, 4294901760
        %3278 = vmatpush1.msra.mxu0 %v3277
        %3279 = vmatprep.subr.mxu0 0.0
        %v3280 = vand.u32 %v353, 4294901760
        %3281 = vmatpush2.msra.mxu0 %v3280
        %3282 = vmatprep.subr.mxu0 0.0
        %v3283 = vand.u32 %v352, 4294901760
        %3284 = vmatpush2.msra.mxu0 %v3283
        %3285 = vmatprep.subr.mxu0 0.0
        %v3286 = vand.u32 %v351, 4294901760
        %3287 = vmatpush2.msra.mxu0 %v3286
        %3288 = vmatprep.subr.mxu0 0.0
        %v3289 = vand.u32 %v350, 4294901760
        %3290 = vmatpush2.msra.mxu0 %v3289
        %3291 = vmatprep.subr.mxu0 0.0
        %v3292 = vand.u32 %v349, 4294901760
        %3293 = vmatpush2.msra.mxu0 %v3292
        %3294 = vmatprep.subr.mxu0 0.0
        %v3295 = vand.u32 %v348, 4294901760
        %3296 = vmatpush2.msra.mxu0 %v3295
        %3297 = vmatprep.subr.mxu0 0.0
        %v3298 = vand.u32 %v347, 4294901760
        %3299 = vmatpush2.msra.mxu0 %v3298
        %3300 = vmatprep.subr.mxu0 0.0
        %v3301 = vand.u32 %v346, 4294901760
        %3302 = vmatpush2.msra.mxu0 %v3301
        %3303 = vmatprep.subr.mxu0 0.0
        %v3304 = vand.u32 %v345, 4294901760
        %3305 = vmatpush2.msra.mxu0 %v3304
        %3306 = vmatprep.subr.mxu0 0.0
        %v3307 = vand.u32 %v344, 4294901760
        %3308 = vmatpush2.msra.mxu0 %v3307
        %3309 = vmatprep.subr.mxu0 0.0
        %v3310 = vand.u32 %v343, 4294901760
        %3311 = vmatpush2.msra.mxu0 %v3310
        %3312 = vmatprep.subr.mxu0 0.0
        %v3313 = vand.u32 %v342, 4294901760
        %3314 = vmatpush2.msra.mxu0 %v3313
        %3315 = vmatprep.subr.mxu0 0.0
        %v3316 = vand.u32 %v341, 4294901760
        %3317 = vmatpush2.msra.mxu0 %v3316
        %3318 = vmatprep.subr.mxu0 0.0
        %v3319 = vand.u32 %v340, 4294901760
        %3320 = vmatpush2.msra.mxu0 %v3319
        %3321 = vmatprep.subr.mxu0 0.0
        %v3322 = vand.u32 %v339, 4294901760
        %3323 = vmatpush2.msra.mxu0 %v3322
        %3324 = vmatprep.subr.mxu0 0.0
        %v3325 = vand.u32 %v338, 4294901760
        %3326 = vmatpush2.msra.mxu0 %v3325
        %v3327 = vand.u32 %v2713, 4294901760
        %v3328 = vsub.f32 %v2713, %v3327
        %v3329 = vand.u32 %v3328, 4294901760
        %3330 = vmatprep.mubr.f32.mxu0 %v3329
        %v3331 = vand.u32 %v2711, 4294901760
        %v3332 = vsub.f32 %v2711, %v3331
        %v3333 = vand.u32 %v3332, 4294901760
        %3334 = vmatmul.mubr.f32.gmra.mxu0 %v3333
        %v3335 = vpop.f32.mrf.mxu0
        %v3336 = vadd.f32 %v3219, %v3335
        %v3337 = vpop.f32.mrf.mxu0
        %v3338 = vand.u32 %v2717, 4294901760
        %v3339 = vsub.f32 %v2717, %v3338
        %v3340 = vand.u32 %v3339, 4294901760
        %3341 = vmatprep.mubr.f32.mxu0 %v3340
        %v3342 = vand.u32 %v2715, 4294901760
        %v3343 = vsub.f32 %v2715, %v3342
        %v3344 = vand.u32 %v3343, 4294901760
        %3345 = vmatmul.mubr.f32.gmra.mxu0 %v3344
        %v3346 = vpop.f32.mrf.mxu0
        %v3347 = vadd.f32 %v3228, %v3346
        %v3348 = vpop.f32.mrf.mxu0
        %3349 = vdwg.mxu0
        %3350 = vmatprep.subr.mxu0 0.0
        %v3351 = vand.u32 %v337, 4294901760
        %v3352 = vsub.f32 %v337, %v3351
        %v3353 = vand.u32 %v3352, 4294901760
        %3354 = vmatpush1.msra.mxu0 %v3353
        %3355 = vmatprep.subr.mxu0 0.0
        %v3356 = vand.u32 %v336, 4294901760
        %v3357 = vsub.f32 %v336, %v3356
        %v3358 = vand.u32 %v3357, 4294901760
        %3359 = vmatpush1.msra.mxu0 %v3358
        %3360 = vmatprep.subr.mxu0 0.0
        %v3361 = vand.u32 %v335, 4294901760
        %v3362 = vsub.f32 %v335, %v3361
        %v3363 = vand.u32 %v3362, 4294901760
        %3364 = vmatpush1.msra.mxu0 %v3363
        %3365 = vmatprep.subr.mxu0 0.0
        %v3366 = vand.u32 %v334, 4294901760
        %v3367 = vsub.f32 %v334, %v3366
        %v3368 = vand.u32 %v3367, 4294901760
        %3369 = vmatpush1.msra.mxu0 %v3368
        %3370 = vmatprep.subr.mxu0 0.0
        %v3371 = vand.u32 %v333, 4294901760
        %v3372 = vsub.f32 %v333, %v3371
        %v3373 = vand.u32 %v3372, 4294901760
        %3374 = vmatpush1.msra.mxu0 %v3373
        %3375 = vmatprep.subr.mxu0 0.0
        %v3376 = vand.u32 %v332, 4294901760
        %v3377 = vsub.f32 %v332, %v3376
        %v3378 = vand.u32 %v3377, 4294901760
        %3379 = vmatpush1.msra.mxu0 %v3378
        %3380 = vmatprep.subr.mxu0 0.0
        %v3381 = vand.u32 %v331, 4294901760
        %v3382 = vsub.f32 %v331, %v3381
        %v3383 = vand.u32 %v3382, 4294901760
        %3384 = vmatpush1.msra.mxu0 %v3383
        %3385 = vmatprep.subr.mxu0 0.0
        %v3386 = vand.u32 %v330, 4294901760
        %v3387 = vsub.f32 %v330, %v3386
        %v3388 = vand.u32 %v3387, 4294901760
        %3389 = vmatpush1.msra.mxu0 %v3388
        %3390 = vmatprep.subr.mxu0 0.0
        %v3391 = vand.u32 %v329, 4294901760
        %v3392 = vsub.f32 %v329, %v3391
        %v3393 = vand.u32 %v3392, 4294901760
        %3394 = vmatpush1.msra.mxu0 %v3393
        %3395 = vmatprep.subr.mxu0 0.0
        %v3396 = vand.u32 %v328, 4294901760
        %v3397 = vsub.f32 %v328, %v3396
        %v3398 = vand.u32 %v3397, 4294901760
        %3399 = vmatpush1.msra.mxu0 %v3398
        %3400 = vmatprep.subr.mxu0 0.0
        %v3401 = vand.u32 %v327, 4294901760
        %v3402 = vsub.f32 %v327, %v3401
        %v3403 = vand.u32 %v3402, 4294901760
        %3404 = vmatpush1.msra.mxu0 %v3403
        %3405 = vmatprep.subr.mxu0 0.0
        %v3406 = vand.u32 %v326, 4294901760
        %v3407 = vsub.f32 %v326, %v3406
        %v3408 = vand.u32 %v3407, 4294901760
        %3409 = vmatpush1.msra.mxu0 %v3408
        %3410 = vmatprep.subr.mxu0 0.0
        %v3411 = vand.u32 %v325, 4294901760
        %v3412 = vsub.f32 %v325, %v3411
        %v3413 = vand.u32 %v3412, 4294901760
        %3414 = vmatpush1.msra.mxu0 %v3413
        %3415 = vmatprep.subr.mxu0 0.0
        %v3416 = vand.u32 %v324, 4294901760
        %v3417 = vsub.f32 %v324, %v3416
        %v3418 = vand.u32 %v3417, 4294901760
        %3419 = vmatpush1.msra.mxu0 %v3418
        %3420 = vmatprep.subr.mxu0 0.0
        %v3421 = vand.u32 %v323, 4294901760
        %v3422 = vsub.f32 %v323, %v3421
        %v3423 = vand.u32 %v3422, 4294901760
        %3424 = vmatpush1.msra.mxu0 %v3423
        %3425 = vmatprep.subr.mxu0 0.0
        %v3426 = vand.u32 %v322, 4294901760
        %v3427 = vsub.f32 %v322, %v3426
        %v3428 = vand.u32 %v3427, 4294901760
        %3429 = vmatpush1.msra.mxu0 %v3428
        %3430 = vmatprep.subr.mxu0 0.0
        %v3431 = vand.u32 %v353, 4294901760
        %v3432 = vsub.f32 %v353, %v3431
        %v3433 = vand.u32 %v3432, 4294901760
        %3434 = vmatpush2.msra.mxu0 %v3433
        %3435 = vmatprep.subr.mxu0 0.0
        %v3436 = vand.u32 %v352, 4294901760
        %v3437 = vsub.f32 %v352, %v3436
        %v3438 = vand.u32 %v3437, 4294901760
        %3439 = vmatpush2.msra.mxu0 %v3438
        %3440 = vmatprep.subr.mxu0 0.0
        %v3441 = vand.u32 %v351, 4294901760
        %v3442 = vsub.f32 %v351, %v3441
        %v3443 = vand.u32 %v3442, 4294901760
        %3444 = vmatpush2.msra.mxu0 %v3443
        %3445 = vmatprep.subr.mxu0 0.0
        %v3446 = vand.u32 %v350, 4294901760
        %v3447 = vsub.f32 %v350, %v3446
        %v3448 = vand.u32 %v3447, 4294901760
        %3449 = vmatpush2.msra.mxu0 %v3448
        %3450 = vmatprep.subr.mxu0 0.0
        %v3451 = vand.u32 %v349, 4294901760
        %v3452 = vsub.f32 %v349, %v3451
        %v3453 = vand.u32 %v3452, 4294901760
        %3454 = vmatpush2.msra.mxu0 %v3453
        %3455 = vmatprep.subr.mxu0 0.0
        %v3456 = vand.u32 %v348, 4294901760
        %v3457 = vsub.f32 %v348, %v3456
        %v3458 = vand.u32 %v3457, 4294901760
        %3459 = vmatpush2.msra.mxu0 %v3458
        %3460 = vmatprep.subr.mxu0 0.0
        %v3461 = vand.u32 %v347, 4294901760
        %v3462 = vsub.f32 %v347, %v3461
        %v3463 = vand.u32 %v3462, 4294901760
        %3464 = vmatpush2.msra.mxu0 %v3463
        %3465 = vmatprep.subr.mxu0 0.0
        %v3466 = vand.u32 %v346, 4294901760
        %v3467 = vsub.f32 %v346, %v3466
        %v3468 = vand.u32 %v3467, 4294901760
        %3469 = vmatpush2.msra.mxu0 %v3468
        %3470 = vmatprep.subr.mxu0 0.0
        %v3471 = vand.u32 %v345, 4294901760
        %v3472 = vsub.f32 %v345, %v3471
        %v3473 = vand.u32 %v3472, 4294901760
        %3474 = vmatpush2.msra.mxu0 %v3473
        %3475 = vmatprep.subr.mxu0 0.0
        %v3476 = vand.u32 %v344, 4294901760
        %v3477 = vsub.f32 %v344, %v3476
        %v3478 = vand.u32 %v3477, 4294901760
        %3479 = vmatpush2.msra.mxu0 %v3478
        %3480 = vmatprep.subr.mxu0 0.0
        %v3481 = vand.u32 %v343, 4294901760
        %v3482 = vsub.f32 %v343, %v3481
        %v3483 = vand.u32 %v3482, 4294901760
        %3484 = vmatpush2.msra.mxu0 %v3483
        %3485 = vmatprep.subr.mxu0 0.0
        %v3486 = vand.u32 %v342, 4294901760
        %v3487 = vsub.f32 %v342, %v3486
        %v3488 = vand.u32 %v3487, 4294901760
        %3489 = vmatpush2.msra.mxu0 %v3488
        %3490 = vmatprep.subr.mxu0 0.0
        %v3491 = vand.u32 %v341, 4294901760
        %v3492 = vsub.f32 %v341, %v3491
        %v3493 = vand.u32 %v3492, 4294901760
        %3494 = vmatpush2.msra.mxu0 %v3493
        %3495 = vmatprep.subr.mxu0 0.0
        %v3496 = vand.u32 %v340, 4294901760
        %v3497 = vsub.f32 %v340, %v3496
        %v3498 = vand.u32 %v3497, 4294901760
        %3499 = vmatpush2.msra.mxu0 %v3498
        %3500 = vmatprep.subr.mxu0 0.0
        %v3501 = vand.u32 %v339, 4294901760
        %v3502 = vsub.f32 %v339, %v3501
        %v3503 = vand.u32 %v3502, 4294901760
        %3504 = vmatpush2.msra.mxu0 %v3503
        %3505 = vmatprep.subr.mxu0 0.0
        %v3506 = vand.u32 %v338, 4294901760
        %v3507 = vsub.f32 %v338, %v3506
        %v3508 = vand.u32 %v3507, 4294901760
        %3509 = vmatpush2.msra.mxu0 %v3508
        %v3510 = vand.u32 %v2713, 4294901760
        %3511 = vmatprep.mubr.f32.mxu0 %v3510
        %v3512 = vand.u32 %v2711, 4294901760
        %3513 = vmatmul.mubr.f32.gmra.mxu0 %v3512
        %v3514 = vpop.f32.mrf.mxu0
        %v3515 = vadd.f32 %v3336, %v3514
        %v3516 = vpop.f32.mrf.mxu0
        %v3517 = vand.u32 %v2717, 4294901760
        %3518 = vmatprep.mubr.f32.mxu0 %v3517
        %v3519 = vand.u32 %v2715, 4294901760
        %3520 = vmatmul.mubr.f32.gmra.mxu0 %v3519
        %v3521 = vpop.f32.mrf.mxu0
        %v3522 = vadd.f32 %v3347, %v3521
        %v3523 = vpop.f32.mrf.mxu0
        %3524 = vdwg.mxu0
        %3525 = vmatprep.subr.mxu0 0.0
        %v3526 = vand.u32 %v337, 4294901760
        %3527 = vmatpush1.msra.mxu0 %v3526
        %3528 = vmatprep.subr.mxu0 0.0
        %v3529 = vand.u32 %v336, 4294901760
        %3530 = vmatpush1.msra.mxu0 %v3529
        %3531 = vmatprep.subr.mxu0 0.0
        %v3532 = vand.u32 %v335, 4294901760
        %3533 = vmatpush1.msra.mxu0 %v3532
        %3534 = vmatprep.subr.mxu0 0.0
        %v3535 = vand.u32 %v334, 4294901760
        %3536 = vmatpush1.msra.mxu0 %v3535
        %3537 = vmatprep.subr.mxu0 0.0
        %v3538 = vand.u32 %v333, 4294901760
        %3539 = vmatpush1.msra.mxu0 %v3538
        %3540 = vmatprep.subr.mxu0 0.0
        %v3541 = vand.u32 %v332, 4294901760
        %3542 = vmatpush1.msra.mxu0 %v3541
        %3543 = vmatprep.subr.mxu0 0.0
        %v3544 = vand.u32 %v331, 4294901760
        %3545 = vmatpush1.msra.mxu0 %v3544
        %3546 = vmatprep.subr.mxu0 0.0
        %v3547 = vand.u32 %v330, 4294901760
        %3548 = vmatpush1.msra.mxu0 %v3547
        %3549 = vmatprep.subr.mxu0 0.0
        %v3550 = vand.u32 %v329, 4294901760
        %3551 = vmatpush1.msra.mxu0 %v3550
        %3552 = vmatprep.subr.mxu0 0.0
        %v3553 = vand.u32 %v328, 4294901760
        %3554 = vmatpush1.msra.mxu0 %v3553
        %3555 = vmatprep.subr.mxu0 0.0
        %v3556 = vand.u32 %v327, 4294901760
        %3557 = vmatpush1.msra.mxu0 %v3556
        %3558 = vmatprep.subr.mxu0 0.0
        %v3559 = vand.u32 %v326, 4294901760
        %3560 = vmatpush1.msra.mxu0 %v3559
        %3561 = vmatprep.subr.mxu0 0.0
        %v3562 = vand.u32 %v325, 4294901760
        %3563 = vmatpush1.msra.mxu0 %v3562
        %3564 = vmatprep.subr.mxu0 0.0
        %v3565 = vand.u32 %v324, 4294901760
        %3566 = vmatpush1.msra.mxu0 %v3565
        %3567 = vmatprep.subr.mxu0 0.0
        %v3568 = vand.u32 %v323, 4294901760
        %3569 = vmatpush1.msra.mxu0 %v3568
        %3570 = vmatprep.subr.mxu0 0.0
        %v3571 = vand.u32 %v322, 4294901760
        %3572 = vmatpush1.msra.mxu0 %v3571
        %3573 = vmatprep.subr.mxu0 0.0
        %v3574 = vand.u32 %v353, 4294901760
        %3575 = vmatpush2.msra.mxu0 %v3574
        %3576 = vmatprep.subr.mxu0 0.0
        %v3577 = vand.u32 %v352, 4294901760
        %3578 = vmatpush2.msra.mxu0 %v3577
        %3579 = vmatprep.subr.mxu0 0.0
        %v3580 = vand.u32 %v351, 4294901760
        %3581 = vmatpush2.msra.mxu0 %v3580
        %3582 = vmatprep.subr.mxu0 0.0
        %v3583 = vand.u32 %v350, 4294901760
        %3584 = vmatpush2.msra.mxu0 %v3583
        %3585 = vmatprep.subr.mxu0 0.0
        %v3586 = vand.u32 %v349, 4294901760
        %3587 = vmatpush2.msra.mxu0 %v3586
        %3588 = vmatprep.subr.mxu0 0.0
        %v3589 = vand.u32 %v348, 4294901760
        %3590 = vmatpush2.msra.mxu0 %v3589
        %3591 = vmatprep.subr.mxu0 0.0
        %v3592 = vand.u32 %v347, 4294901760
        %3593 = vmatpush2.msra.mxu0 %v3592
        %3594 = vmatprep.subr.mxu0 0.0
        %v3595 = vand.u32 %v346, 4294901760
        %3596 = vmatpush2.msra.mxu0 %v3595
        %3597 = vmatprep.subr.mxu0 0.0
        %v3598 = vand.u32 %v345, 4294901760
        %3599 = vmatpush2.msra.mxu0 %v3598
        %3600 = vmatprep.subr.mxu0 0.0
        %v3601 = vand.u32 %v344, 4294901760
        %3602 = vmatpush2.msra.mxu0 %v3601
        %3603 = vmatprep.subr.mxu0 0.0
        %v3604 = vand.u32 %v343, 4294901760
        %3605 = vmatpush2.msra.mxu0 %v3604
        %3606 = vmatprep.subr.mxu0 0.0
        %v3607 = vand.u32 %v342, 4294901760
        %3608 = vmatpush2.msra.mxu0 %v3607
        %3609 = vmatprep.subr.mxu0 0.0
        %v3610 = vand.u32 %v341, 4294901760
        %3611 = vmatpush2.msra.mxu0 %v3610
        %3612 = vmatprep.subr.mxu0 0.0
        %v3613 = vand.u32 %v340, 4294901760
        %3614 = vmatpush2.msra.mxu0 %v3613
        %3615 = vmatprep.subr.mxu0 0.0
        %v3616 = vand.u32 %v339, 4294901760
        %3617 = vmatpush2.msra.mxu0 %v3616
        %3618 = vmatprep.subr.mxu0 0.0
        %v3619 = vand.u32 %v338, 4294901760
        %3620 = vmatpush2.msra.mxu0 %v3619
        %v3621 = vand.u32 %v2713, 4294901760
        %3622 = vmatprep.mubr.f32.mxu0 %v3621
        %v3623 = vand.u32 %v2711, 4294901760
        %3624 = vmatmul.mubr.f32.gmra.mxu0 %v3623
        %v3625 = vpop.f32.mrf.mxu0
        %v3626 = vadd.f32 %v3515, %v3625
        %v3627 = vpop.f32.mrf.mxu0
        %v3628 = vand.u32 %v2717, 4294901760
        %3629 = vmatprep.mubr.f32.mxu0 %v3628
        %v3630 = vand.u32 %v2715, 4294901760
        %3631 = vmatmul.mubr.f32.gmra.mxu0 %v3630
        %v3632 = vpop.f32.mrf.mxu0
        %v3633 = vadd.f32 %v3522, %v3632
        %v3634 = vpop.f32.mrf.mxu0
        %3635 = vdwg.mxu0
        %v3636 = vrcp.pop %v3626
        %v3637 = vrcp.pop %v3633
        %3640 = vrot.lane.b32.xlu0 %v3636, 1
        %v3641 = vpop.permute.xlu0 %3640
        %3642 = vrot.lane.b32.xlu0 %v3637, 1
        %v3643 = vpop.permute.xlu0 %3642
        %v3646 = vmul.f32 %v3626, %v3641
        %v3647 = vmul.f32 %v3633, %v3643
        %v3648 = vadd.f32 %v3646, 3.8146973e-13
        %v3649 = vadd.f32 %v3647, 3.8146973e-13
        %3650 = vrot.lane.b32.xlu0 %v3636, 2
        %v3651 = vpop.permute.xlu0 %3650
        %3652 = vrot.lane.b32.xlu0 %v3637, 2
        %v3653 = vpop.permute.xlu0 %3652
        %v3656 = vmul.f32 %v3626, %v3651
        %v3657 = vmul.f32 %v3633, %v3653
        %v3658 = vadd.f32 %v3656, 3.8146973e-13
        %v3659 = vadd.f32 %v3657, 3.8146973e-13
        %3660 = vrot.lane.b32.xlu0 %v3636, 3
        %v3661 = vpop.permute.xlu0 %3660
        %3662 = vrot.lane.b32.xlu0 %v3637, 3
        %v3663 = vpop.permute.xlu0 %3662
        %v3666 = vmul.f32 %v3626, %v3661
        %v3667 = vmul.f32 %v3633, %v3663
        %v3668 = vadd.f32 %v3666, 9.671111e-06
        %v3669 = vadd.f32 %v3667, 9.671111e-06
        %v3670 = vmul.f32 %v3648, %v3648
        %v3671 = vmul.f32 %v3649, %v3649
        %v3672 = vmul.f32 %v3670, 0.9999744
        %v3673 = vmul.f32 %v3671, 0.9999744
        %3676 = vrot.lane.b32.xlu0 %v3672, 2
        %v3677 = vpop.permute.xlu0 %3676
        %3678 = vrot.lane.b32.xlu0 %v3673, 2
        %v3679 = vpop.permute.xlu0 %3678
        %v3682 = vsub.f32 %v3668, %v3677
        %v3683 = vsub.f32 %v3669, %v3679
        %3684 = vrot.lane.b32.xlu0 %v3636, 4
        %v3685 = vpop.permute.xlu0 %3684
        %3686 = vrot.lane.b32.xlu0 %v3637, 4
        %v3687 = vpop.permute.xlu0 %3686
        %v3690 = vmul.f32 %v3626, %v3685
        %v3691 = vmul.f32 %v3633, %v3687
        %v3692 = vadd.f32 %v3690, 5.684342e-21
        %v3693 = vadd.f32 %v3691, 5.684342e-21
        %3696 = vrot.lane.b32.xlu0 %v3658, 127
        %v3697 = vpop.permute.xlu0 %3696
        %3698 = vrot.lane.b32.xlu0 %v3659, 127
        %v3699 = vpop.permute.xlu0 %3698
        %v3702 = vmul.f32 %v3648, %v3697
        %v3703 = vmul.f32 %v3649, %v3699
        %v3704 = vmul.f32 %v3702, 0.9999744
        %v3705 = vmul.f32 %v3703, 0.9999744
        %3708 = vrot.lane.b32.xlu0 %v3704, 3
        %v3709 = vpop.permute.xlu0 %3708
        %3710 = vrot.lane.b32.xlu0 %v3705, 3
        %v3711 = vpop.permute.xlu0 %3710
        %v3714 = vsub.f32 %v3692, %v3709
        %v3715 = vsub.f32 %v3693, %v3711
        %3716 = vrot.lane.b32.xlu0 %v3636, 5
        %v3717 = vpop.permute.xlu0 %3716
        %3718 = vrot.lane.b32.xlu0 %v3637, 5
        %v3719 = vpop.permute.xlu0 %3718
        %v3722 = vmul.f32 %v3626, %v3717
        %v3723 = vmul.f32 %v3633, %v3719
        %v3724 = vadd.f32 %v3722, 9.671111e-06
        %v3725 = vadd.f32 %v3723, 9.671111e-06
        %v3726 = vmul.f32 %v3658, %v3658
        %v3727 = vmul.f32 %v3659, %v3659
        %v3728 = vmul.f32 %v3726, 0.9999744
        %v3729 = vmul.f32 %v3727, 0.9999744
        %3732 = vrot.lane.b32.xlu0 %v3728, 3
        %v3733 = vpop.permute.xlu0 %3732
        %3734 = vrot.lane.b32.xlu0 %v3729, 3
        %v3735 = vpop.permute.xlu0 %3734
        %v3738 = vsub.f32 %v3724, %v3733
        %v3739 = vsub.f32 %v3725, %v3735
        %3741 = vset.pattern.permute.xlu0 5
        %3742 = vperm.xlu0 %3741, %v3738
        %v3743 = vpop.permute.xlu0 %3742
        %3746 = vset.pattern.permute.xlu0 5
        %3747 = vperm.xlu0 %3746, %v3739
        %v3748 = vpop.permute.xlu0 %3747
        %v3750 = vsel %vm1449, %v3743, 0.0
        %v3751 = vsel %vm1449, %v3748, 0.0
        %3753 = vset.pattern.permute.xlu0 4
        %3754 = vperm.xlu0 %3753, %v3714
        %v3755 = vpop.permute.xlu0 %3754
        %3758 = vset.pattern.permute.xlu0 4
        %3759 = vperm.xlu0 %3758, %v3715
        %v3760 = vpop.permute.xlu0 %3759
        %v3762 = vsel %vm1448, %v3755, %v3750
        %v3763 = vsel %vm1448, %v3760, %v3751
        %3765 = vset.pattern.permute.xlu0 3
        %3766 = vperm.xlu0 %3765, %v3682
        %v3767 = vpop.permute.xlu0 %3766
        %3770 = vset.pattern.permute.xlu0 3
        %3771 = vperm.xlu0 %3770, %v3683
        %v3772 = vpop.permute.xlu0 %3771
        %v3774 = vsel %vm1445, %v3767, %v3762
        %v3775 = vsel %vm1445, %v3772, %v3763
        %3776 = vset.pattern.permute.xlu0 2
        %3777 = vperm.xlu0 %3776, %v3658
        %v3778 = vpop.permute.xlu0 %3777
        %3780 = vset.pattern.permute.xlu0 2
        %3781 = vperm.xlu0 %3780, %v3659
        %v3782 = vpop.permute.xlu0 %3781
        %v3784 = vsel %vm1444, %v3778, %v3774
        %v3785 = vsel %vm1444, %v3782, %v3775
        %3787 = vset.pattern.permute.xlu0 1
        %3788 = vperm.xlu0 %3787, %v3648
        %v3789 = vpop.permute.xlu0 %3788
        %3792 = vset.pattern.permute.xlu0 1
        %3793 = vperm.xlu0 %3792, %v3649
        %v3794 = vpop.permute.xlu0 %3793
        %v3796 = vsel %vm1443, %v3789, %v3784
        %v3797 = vsel %vm1443, %v3794, %v3785
        %s3798 = sld [smem:[#allocation3 + $0x3]]
        %s3799 = smul.f32 %s3798, %s305
        %v3800 = vstv %s3799
        %v3801 = vmul.f32 %v306, %v3800
        %v3802 = vmul.f32 %v307, %v3800
        %v3803 = vmul.f32 %v308, %v3800
        %v3804 = vmul.f32 %v309, %v3800
        %s3805 = sld [smem:[#allocation3 + $0x83]]
        %s3806 = smul.f32 %s3805, %s305
        %v3807 = vstv %s3806
        %v3808 = vmul.f32 %v310, %v3807
        %v3809 = vmul.f32 %v311, %v3807
        %v3810 = vmul.f32 %v312, %v3807
        %v3811 = vmul.f32 %v313, %v3807
        %v3812 = vadd.f32 %v3801, %v3808
        %v3813 = vadd.f32 %v3802, %v3809
        %v3814 = vadd.f32 %v3803, %v3810
        %v3815 = vadd.f32 %v3804, %v3811
        %s3816 = sld [smem:[#allocation3 + $0x103]]
        %s3817 = smul.f32 %s3816, %s305
        %v3818 = vstv %s3817
        %v3819 = vmul.f32 %v314, %v3818
        %v3820 = vmul.f32 %v315, %v3818
        %v3821 = vmul.f32 %v316, %v3818
        %v3822 = vmul.f32 %v317, %v3818
        %v3823 = vadd.f32 %v3812, %v3819
        %v3824 = vadd.f32 %v3813, %v3820
        %v3825 = vadd.f32 %v3814, %v3821
        %v3826 = vadd.f32 %v3815, %v3822
        %s3827 = sld [smem:[#allocation3 + $0x183]]
        %s3828 = smul.f32 %s3827, %s305
        %v3829 = vstv %s3828
        %v3830 = vmul.f32 %v318, %v3829
        %v3831 = vmul.f32 %v319, %v3829
        %v3832 = vmul.f32 %v320, %v3829
        %v3833 = vmul.f32 %v321, %v3829
        %v3834 = vadd.f32 %v3823, %v3830
        %v3835 = vadd.f32 %v3824, %v3831
        %v3836 = vadd.f32 %v3825, %v3832
        %v3837 = vadd.f32 %v3826, %v3833
        %s3838 = sld [smem:[#allocation8 + $0x3]]
        %s3839 = smul.f32 %s3838, %s305
        %v3840 = vstv %s3839
        %v3841 = vadd.f32 %v3834, %v3840
        %v3842 = vadd.f32 %v3835, %v3840
        %v3843 = vadd.f32 %v3836, %v3840
        %v3844 = vadd.f32 %v3837, %v3840
        %v3845 = vmax.f32 %v3841, %v3842
        %3846 = vmax.xlane.f32.xlu0 %v3845
        %v3847 = vpop.xlane.xlu0 %3846
        %v3848 = vmax.f32 %v3843, %v3844
        %3849 = vmax.xlane.f32.xlu0 %v3848
        %v3850 = vpop.xlane.xlu0 %3849
        %v3851 = vsub.f32 %v3841, %v3847
        %v3852 = vsub.f32 %v3842, %v3847
        %v3853 = vsub.f32 %v3843, %v3850
        %v3854 = vsub.f32 %v3844, %v3850
        %v3855 = vmul.f32 %v3851, 1.442695
        %v3856 = vpow.pop %v3855
        %v3857 = vmul.f32 %v3852, 1.442695
        %v3858 = vpow.pop %v3857
        %v3859 = vmul.f32 %v3853, 1.442695
        %v3860 = vpow.pop %v3859
        %v3861 = vmul.f32 %v3854, 1.442695
        %v3862 = vpow.pop %v3861
        %3863 = vmatprep.subr.mxu0 0.0
        %v3864 = vand.u32 %v337, 4294901760
        %3865 = vmatpush1.msra.mxu0 %v3864
        %3866 = vmatprep.subr.mxu0 0.0
        %v3867 = vand.u32 %v336, 4294901760
        %3868 = vmatpush1.msra.mxu0 %v3867
        %3869 = vmatprep.subr.mxu0 0.0
        %v3870 = vand.u32 %v335, 4294901760
        %3871 = vmatpush1.msra.mxu0 %v3870
        %3872 = vmatprep.subr.mxu0 0.0
        %v3873 = vand.u32 %v334, 4294901760
        %3874 = vmatpush1.msra.mxu0 %v3873
        %3875 = vmatprep.subr.mxu0 0.0
        %v3876 = vand.u32 %v333, 4294901760
        %3877 = vmatpush1.msra.mxu0 %v3876
        %3878 = vmatprep.subr.mxu0 0.0
        %v3879 = vand.u32 %v332, 4294901760
        %3880 = vmatpush1.msra.mxu0 %v3879
        %3881 = vmatprep.subr.mxu0 0.0
        %v3882 = vand.u32 %v331, 4294901760
        %3883 = vmatpush1.msra.mxu0 %v3882
        %3884 = vmatprep.subr.mxu0 0.0
        %v3885 = vand.u32 %v330, 4294901760
        %3886 = vmatpush1.msra.mxu0 %v3885
        %3887 = vmatprep.subr.mxu0 0.0
        %v3888 = vand.u32 %v329, 4294901760
        %3889 = vmatpush1.msra.mxu0 %v3888
        %3890 = vmatprep.subr.mxu0 0.0
        %v3891 = vand.u32 %v328, 4294901760
        %3892 = vmatpush1.msra.mxu0 %v3891
        %3893 = vmatprep.subr.mxu0 0.0
        %v3894 = vand.u32 %v327, 4294901760
        %3895 = vmatpush1.msra.mxu0 %v3894
        %3896 = vmatprep.subr.mxu0 0.0
        %v3897 = vand.u32 %v326, 4294901760
        %3898 = vmatpush1.msra.mxu0 %v3897
        %3899 = vmatprep.subr.mxu0 0.0
        %v3900 = vand.u32 %v325, 4294901760
        %3901 = vmatpush1.msra.mxu0 %v3900
        %3902 = vmatprep.subr.mxu0 0.0
        %v3903 = vand.u32 %v324, 4294901760
        %3904 = vmatpush1.msra.mxu0 %v3903
        %3905 = vmatprep.subr.mxu0 0.0
        %v3906 = vand.u32 %v323, 4294901760
        %3907 = vmatpush1.msra.mxu0 %v3906
        %3908 = vmatprep.subr.mxu0 0.0
        %v3909 = vand.u32 %v322, 4294901760
        %3910 = vmatpush1.msra.mxu0 %v3909
        %3911 = vmatprep.subr.mxu0 0.0
        %v3912 = vand.u32 %v353, 4294901760
        %3913 = vmatpush2.msra.mxu0 %v3912
        %3914 = vmatprep.subr.mxu0 0.0
        %v3915 = vand.u32 %v352, 4294901760
        %3916 = vmatpush2.msra.mxu0 %v3915
        %3917 = vmatprep.subr.mxu0 0.0
        %v3918 = vand.u32 %v351, 4294901760
        %3919 = vmatpush2.msra.mxu0 %v3918
        %3920 = vmatprep.subr.mxu0 0.0
        %v3921 = vand.u32 %v350, 4294901760
        %3922 = vmatpush2.msra.mxu0 %v3921
        %3923 = vmatprep.subr.mxu0 0.0
        %v3924 = vand.u32 %v349, 4294901760
        %3925 = vmatpush2.msra.mxu0 %v3924
        %3926 = vmatprep.subr.mxu0 0.0
        %v3927 = vand.u32 %v348, 4294901760
        %3928 = vmatpush2.msra.mxu0 %v3927
        %3929 = vmatprep.subr.mxu0 0.0
        %v3930 = vand.u32 %v347, 4294901760
        %3931 = vmatpush2.msra.mxu0 %v3930
        %3932 = vmatprep.subr.mxu0 0.0
        %v3933 = vand.u32 %v346, 4294901760
        %3934 = vmatpush2.msra.mxu0 %v3933
        %3935 = vmatprep.subr.mxu0 0.0
        %v3936 = vand.u32 %v345, 4294901760
        %3937 = vmatpush2.msra.mxu0 %v3936
        %3938 = vmatprep.subr.mxu0 0.0
        %v3939 = vand.u32 %v344, 4294901760
        %3940 = vmatpush2.msra.mxu0 %v3939
        %3941 = vmatprep.subr.mxu0 0.0
        %v3942 = vand.u32 %v343, 4294901760
        %3943 = vmatpush2.msra.mxu0 %v3942
        %3944 = vmatprep.subr.mxu0 0.0
        %v3945 = vand.u32 %v342, 4294901760
        %3946 = vmatpush2.msra.mxu0 %v3945
        %3947 = vmatprep.subr.mxu0 0.0
        %v3948 = vand.u32 %v341, 4294901760
        %3949 = vmatpush2.msra.mxu0 %v3948
        %3950 = vmatprep.subr.mxu0 0.0
        %v3951 = vand.u32 %v340, 4294901760
        %3952 = vmatpush2.msra.mxu0 %v3951
        %3953 = vmatprep.subr.mxu0 0.0
        %v3954 = vand.u32 %v339, 4294901760
        %3955 = vmatpush2.msra.mxu0 %v3954
        %3956 = vmatprep.subr.mxu0 0.0
        %v3957 = vand.u32 %v338, 4294901760
        %3958 = vmatpush2.msra.mxu0 %v3957
        %v3959 = vand.u32 %v3858, 4294901760
        %v3960 = vsub.f32 %v3858, %v3959
        %v3961 = vand.u32 %v3960, 4294901760
        %v3962 = vsub.f32 %v3960, %v3961
        %v3963 = vand.u32 %v3962, 4294901760
        %3964 = vmatprep.mubr.f32.mxu0 %v3963
        %v3965 = vand.u32 %v3856, 4294901760
        %v3966 = vsub.f32 %v3856, %v3965
        %v3967 = vand.u32 %v3966, 4294901760
        %v3968 = vsub.f32 %v3966, %v3967
        %v3969 = vand.u32 %v3968, 4294901760
        %3970 = vmatmul.mubr.f32.gmra.mxu0 %v3969
        %v3971 = vpop.f32.mrf.mxu0
        %v3972 = vadd.f32 0.0, %v3971
        %v3973 = vpop.f32.mrf.mxu0
        %v3974 = vand.u32 %v3862, 4294901760
        %v3975 = vsub.f32 %v3862, %v3974
        %v3976 = vand.u32 %v3975, 4294901760
        %v3977 = vsub.f32 %v3975, %v3976
        %v3978 = vand.u32 %v3977, 4294901760
        %3979 = vmatprep.mubr.f32.mxu0 %v3978
        %v3980 = vand.u32 %v3860, 4294901760
        %v3981 = vsub.f32 %v3860, %v3980
        %v3982 = vand.u32 %v3981, 4294901760
        %v3983 = vsub.f32 %v3981, %v3982
        %v3984 = vand.u32 %v3983, 4294901760
        %3985 = vmatmul.mubr.f32.gmra.mxu0 %v3984
        %v3986 = vpop.f32.mrf.mxu0
        %v3987 = vadd.f32 0.0, %v3986
        %v3988 = vpop.f32.mrf.mxu0
        %3989 = vdwg.mxu0
        %3990 = vmatprep.subr.mxu0 0.0
        %v3991 = vand.u32 %v337, 4294901760
        %v3992 = vsub.f32 %v337, %v3991
        %v3993 = vand.u32 %v3992, 4294901760
        %v3994 = vsub.f32 %v3992, %v3993
        %v3995 = vand.u32 %v3994, 4294901760
        %3996 = vmatpush1.msra.mxu0 %v3995
        %3997 = vmatprep.subr.mxu0 0.0
        %v3998 = vand.u32 %v336, 4294901760
        %v3999 = vsub.f32 %v336, %v3998
        %v4000 = vand.u32 %v3999, 4294901760
        %v4001 = vsub.f32 %v3999, %v4000
        %v4002 = vand.u32 %v4001, 4294901760
        %4003 = vmatpush1.msra.mxu0 %v4002
        %4004 = vmatprep.subr.mxu0 0.0
        %v4005 = vand.u32 %v335, 4294901760
        %v4006 = vsub.f32 %v335, %v4005
        %v4007 = vand.u32 %v4006, 4294901760
        %v4008 = vsub.f32 %v4006, %v4007
        %v4009 = vand.u32 %v4008, 4294901760
        %4010 = vmatpush1.msra.mxu0 %v4009
        %4011 = vmatprep.subr.mxu0 0.0
        %v4012 = vand.u32 %v334, 4294901760
        %v4013 = vsub.f32 %v334, %v4012
        %v4014 = vand.u32 %v4013, 4294901760
        %v4015 = vsub.f32 %v4013, %v4014
        %v4016 = vand.u32 %v4015, 4294901760
        %4017 = vmatpush1.msra.mxu0 %v4016
        %4018 = vmatprep.subr.mxu0 0.0
        %v4019 = vand.u32 %v333, 4294901760
        %v4020 = vsub.f32 %v333, %v4019
        %v4021 = vand.u32 %v4020, 4294901760
        %v4022 = vsub.f32 %v4020, %v4021
        %v4023 = vand.u32 %v4022, 4294901760
        %4024 = vmatpush1.msra.mxu0 %v4023
        %4025 = vmatprep.subr.mxu0 0.0
        %v4026 = vand.u32 %v332, 4294901760
        %v4027 = vsub.f32 %v332, %v4026
        %v4028 = vand.u32 %v4027, 4294901760
        %v4029 = vsub.f32 %v4027, %v4028
        %v4030 = vand.u32 %v4029, 4294901760
        %4031 = vmatpush1.msra.mxu0 %v4030
        %4032 = vmatprep.subr.mxu0 0.0
        %v4033 = vand.u32 %v331, 4294901760
        %v4034 = vsub.f32 %v331, %v4033
        %v4035 = vand.u32 %v4034, 4294901760
        %v4036 = vsub.f32 %v4034, %v4035
        %v4037 = vand.u32 %v4036, 4294901760
        %4038 = vmatpush1.msra.mxu0 %v4037
        %4039 = vmatprep.subr.mxu0 0.0
        %v4040 = vand.u32 %v330, 4294901760
        %v4041 = vsub.f32 %v330, %v4040
        %v4042 = vand.u32 %v4041, 4294901760
        %v4043 = vsub.f32 %v4041, %v4042
        %v4044 = vand.u32 %v4043, 4294901760
        %4045 = vmatpush1.msra.mxu0 %v4044
        %4046 = vmatprep.subr.mxu0 0.0
        %v4047 = vand.u32 %v329, 4294901760
        %v4048 = vsub.f32 %v329, %v4047
        %v4049 = vand.u32 %v4048, 4294901760
        %v4050 = vsub.f32 %v4048, %v4049
        %v4051 = vand.u32 %v4050, 4294901760
        %4052 = vmatpush1.msra.mxu0 %v4051
        %4053 = vmatprep.subr.mxu0 0.0
        %v4054 = vand.u32 %v328, 4294901760
        %v4055 = vsub.f32 %v328, %v4054
        %v4056 = vand.u32 %v4055, 4294901760
        %v4057 = vsub.f32 %v4055, %v4056
        %v4058 = vand.u32 %v4057, 4294901760
        %4059 = vmatpush1.msra.mxu0 %v4058
        %4060 = vmatprep.subr.mxu0 0.0
        %v4061 = vand.u32 %v327, 4294901760
        %v4062 = vsub.f32 %v327, %v4061
        %v4063 = vand.u32 %v4062, 4294901760
        %v4064 = vsub.f32 %v4062, %v4063
        %v4065 = vand.u32 %v4064, 4294901760
        %4066 = vmatpush1.msra.mxu0 %v4065
        %4067 = vmatprep.subr.mxu0 0.0
        %v4068 = vand.u32 %v326, 4294901760
        %v4069 = vsub.f32 %v326, %v4068
        %v4070 = vand.u32 %v4069, 4294901760
        %v4071 = vsub.f32 %v4069, %v4070
        %v4072 = vand.u32 %v4071, 4294901760
        %4073 = vmatpush1.msra.mxu0 %v4072
        %4074 = vmatprep.subr.mxu0 0.0
        %v4075 = vand.u32 %v325, 4294901760
        %v4076 = vsub.f32 %v325, %v4075
        %v4077 = vand.u32 %v4076, 4294901760
        %v4078 = vsub.f32 %v4076, %v4077
        %v4079 = vand.u32 %v4078, 4294901760
        %4080 = vmatpush1.msra.mxu0 %v4079
        %4081 = vmatprep.subr.mxu0 0.0
        %v4082 = vand.u32 %v324, 4294901760
        %v4083 = vsub.f32 %v324, %v4082
        %v4084 = vand.u32 %v4083, 4294901760
        %v4085 = vsub.f32 %v4083, %v4084
        %v4086 = vand.u32 %v4085, 4294901760
        %4087 = vmatpush1.msra.mxu0 %v4086
        %4088 = vmatprep.subr.mxu0 0.0
        %v4089 = vand.u32 %v323, 4294901760
        %v4090 = vsub.f32 %v323, %v4089
        %v4091 = vand.u32 %v4090, 4294901760
        %v4092 = vsub.f32 %v4090, %v4091
        %v4093 = vand.u32 %v4092, 4294901760
        %4094 = vmatpush1.msra.mxu0 %v4093
        %4095 = vmatprep.subr.mxu0 0.0
        %v4096 = vand.u32 %v322, 4294901760
        %v4097 = vsub.f32 %v322, %v4096
        %v4098 = vand.u32 %v4097, 4294901760
        %v4099 = vsub.f32 %v4097, %v4098
        %v4100 = vand.u32 %v4099, 4294901760
        %4101 = vmatpush1.msra.mxu0 %v4100
        %4102 = vmatprep.subr.mxu0 0.0
        %v4103 = vand.u32 %v353, 4294901760
        %v4104 = vsub.f32 %v353, %v4103
        %v4105 = vand.u32 %v4104, 4294901760
        %v4106 = vsub.f32 %v4104, %v4105
        %v4107 = vand.u32 %v4106, 4294901760
        %4108 = vmatpush2.msra.mxu0 %v4107
        %4109 = vmatprep.subr.mxu0 0.0
        %v4110 = vand.u32 %v352, 4294901760
        %v4111 = vsub.f32 %v352, %v4110
        %v4112 = vand.u32 %v4111, 4294901760
        %v4113 = vsub.f32 %v4111, %v4112
        %v4114 = vand.u32 %v4113, 4294901760
        %4115 = vmatpush2.msra.mxu0 %v4114
        %4116 = vmatprep.subr.mxu0 0.0
        %v4117 = vand.u32 %v351, 4294901760
        %v4118 = vsub.f32 %v351, %v4117
        %v4119 = vand.u32 %v4118, 4294901760
        %v4120 = vsub.f32 %v4118, %v4119
        %v4121 = vand.u32 %v4120, 4294901760
        %4122 = vmatpush2.msra.mxu0 %v4121
        %4123 = vmatprep.subr.mxu0 0.0
        %v4124 = vand.u32 %v350, 4294901760
        %v4125 = vsub.f32 %v350, %v4124
        %v4126 = vand.u32 %v4125, 4294901760
        %v4127 = vsub.f32 %v4125, %v4126
        %v4128 = vand.u32 %v4127, 4294901760
        %4129 = vmatpush2.msra.mxu0 %v4128
        %4130 = vmatprep.subr.mxu0 0.0
        %v4131 = vand.u32 %v349, 4294901760
        %v4132 = vsub.f32 %v349, %v4131
        %v4133 = vand.u32 %v4132, 4294901760
        %v4134 = vsub.f32 %v4132, %v4133
        %v4135 = vand.u32 %v4134, 4294901760
        %4136 = vmatpush2.msra.mxu0 %v4135
        %4137 = vmatprep.subr.mxu0 0.0
        %v4138 = vand.u32 %v348, 4294901760
        %v4139 = vsub.f32 %v348, %v4138
        %v4140 = vand.u32 %v4139, 4294901760
        %v4141 = vsub.f32 %v4139, %v4140
        %v4142 = vand.u32 %v4141, 4294901760
        %4143 = vmatpush2.msra.mxu0 %v4142
        %4144 = vmatprep.subr.mxu0 0.0
        %v4145 = vand.u32 %v347, 4294901760
        %v4146 = vsub.f32 %v347, %v4145
        %v4147 = vand.u32 %v4146, 4294901760
        %v4148 = vsub.f32 %v4146, %v4147
        %v4149 = vand.u32 %v4148, 4294901760
        %4150 = vmatpush2.msra.mxu0 %v4149
        %4151 = vmatprep.subr.mxu0 0.0
        %v4152 = vand.u32 %v346, 4294901760
        %v4153 = vsub.f32 %v346, %v4152
        %v4154 = vand.u32 %v4153, 4294901760
        %v4155 = vsub.f32 %v4153, %v4154
        %v4156 = vand.u32 %v4155, 4294901760
        %4157 = vmatpush2.msra.mxu0 %v4156
        %4158 = vmatprep.subr.mxu0 0.0
        %v4159 = vand.u32 %v345, 4294901760
        %v4160 = vsub.f32 %v345, %v4159
        %v4161 = vand.u32 %v4160, 4294901760
        %v4162 = vsub.f32 %v4160, %v4161
        %v4163 = vand.u32 %v4162, 4294901760
        %4164 = vmatpush2.msra.mxu0 %v4163
        %4165 = vmatprep.subr.mxu0 0.0
        %v4166 = vand.u32 %v344, 4294901760
        %v4167 = vsub.f32 %v344, %v4166
        %v4168 = vand.u32 %v4167, 4294901760
        %v4169 = vsub.f32 %v4167, %v4168
        %v4170 = vand.u32 %v4169, 4294901760
        %4171 = vmatpush2.msra.mxu0 %v4170
        %4172 = vmatprep.subr.mxu0 0.0
        %v4173 = vand.u32 %v343, 4294901760
        %v4174 = vsub.f32 %v343, %v4173
        %v4175 = vand.u32 %v4174, 4294901760
        %v4176 = vsub.f32 %v4174, %v4175
        %v4177 = vand.u32 %v4176, 4294901760
        %4178 = vmatpush2.msra.mxu0 %v4177
        %4179 = vmatprep.subr.mxu0 0.0
        %v4180 = vand.u32 %v342, 4294901760
        %v4181 = vsub.f32 %v342, %v4180
        %v4182 = vand.u32 %v4181, 4294901760
        %v4183 = vsub.f32 %v4181, %v4182
        %v4184 = vand.u32 %v4183, 4294901760
        %4185 = vmatpush2.msra.mxu0 %v4184
        %4186 = vmatprep.subr.mxu0 0.0
        %v4187 = vand.u32 %v341, 4294901760
        %v4188 = vsub.f32 %v341, %v4187
        %v4189 = vand.u32 %v4188, 4294901760
        %v4190 = vsub.f32 %v4188, %v4189
        %v4191 = vand.u32 %v4190, 4294901760
        %4192 = vmatpush2.msra.mxu0 %v4191
        %4193 = vmatprep.subr.mxu0 0.0
        %v4194 = vand.u32 %v340, 4294901760
        %v4195 = vsub.f32 %v340, %v4194
        %v4196 = vand.u32 %v4195, 4294901760
        %v4197 = vsub.f32 %v4195, %v4196
        %v4198 = vand.u32 %v4197, 4294901760
        %4199 = vmatpush2.msra.mxu0 %v4198
        %4200 = vmatprep.subr.mxu0 0.0
        %v4201 = vand.u32 %v339, 4294901760
        %v4202 = vsub.f32 %v339, %v4201
        %v4203 = vand.u32 %v4202, 4294901760
        %v4204 = vsub.f32 %v4202, %v4203
        %v4205 = vand.u32 %v4204, 4294901760
        %4206 = vmatpush2.msra.mxu0 %v4205
        %4207 = vmatprep.subr.mxu0 0.0
        %v4208 = vand.u32 %v338, 4294901760
        %v4209 = vsub.f32 %v338, %v4208
        %v4210 = vand.u32 %v4209, 4294901760
        %v4211 = vsub.f32 %v4209, %v4210
        %v4212 = vand.u32 %v4211, 4294901760
        %4213 = vmatpush2.msra.mxu0 %v4212
        %v4214 = vand.u32 %v3858, 4294901760
        %4215 = vmatprep.mubr.f32.mxu0 %v4214
        %v4216 = vand.u32 %v3856, 4294901760
        %4217 = vmatmul.mubr.f32.gmra.mxu0 %v4216
        %v4218 = vpop.f32.mrf.mxu0
        %v4219 = vadd.f32 %v3972, %v4218
        %v4220 = vpop.f32.mrf.mxu0
        %v4221 = vand.u32 %v3862, 4294901760
        %4222 = vmatprep.mubr.f32.mxu0 %v4221
        %v4223 = vand.u32 %v3860, 4294901760
        %4224 = vmatmul.mubr.f32.gmra.mxu0 %v4223
        %v4225 = vpop.f32.mrf.mxu0
        %v4226 = vadd.f32 %v3987, %v4225
        %v4227 = vpop.f32.mrf.mxu0
        %4228 = vdwg.mxu0
        %4229 = vmatprep.subr.mxu0 0.0
        %v4230 = vand.u32 %v337, 4294901760
        %v4231 = vsub.f32 %v337, %v4230
        %4232 = vmatpush1.msra.mxu0 %v4231
        %4233 = vmatprep.subr.mxu0 0.0
        %v4234 = vand.u32 %v336, 4294901760
        %v4235 = vsub.f32 %v336, %v4234
        %4236 = vmatpush1.msra.mxu0 %v4235
        %4237 = vmatprep.subr.mxu0 0.0
        %v4238 = vand.u32 %v335, 4294901760
        %v4239 = vsub.f32 %v335, %v4238
        %4240 = vmatpush1.msra.mxu0 %v4239
        %4241 = vmatprep.subr.mxu0 0.0
        %v4242 = vand.u32 %v334, 4294901760
        %v4243 = vsub.f32 %v334, %v4242
        %4244 = vmatpush1.msra.mxu0 %v4243
        %4245 = vmatprep.subr.mxu0 0.0
        %v4246 = vand.u32 %v333, 4294901760
        %v4247 = vsub.f32 %v333, %v4246
        %4248 = vmatpush1.msra.mxu0 %v4247
        %4249 = vmatprep.subr.mxu0 0.0
        %v4250 = vand.u32 %v332, 4294901760
        %v4251 = vsub.f32 %v332, %v4250
        %4252 = vmatpush1.msra.mxu0 %v4251
        %4253 = vmatprep.subr.mxu0 0.0
        %v4254 = vand.u32 %v331, 4294901760
        %v4255 = vsub.f32 %v331, %v4254
        %4256 = vmatpush1.msra.mxu0 %v4255
        %4257 = vmatprep.subr.mxu0 0.0
        %v4258 = vand.u32 %v330, 4294901760
        %v4259 = vsub.f32 %v330, %v4258
        %4260 = vmatpush1.msra.mxu0 %v4259
        %4261 = vmatprep.subr.mxu0 0.0
        %v4262 = vand.u32 %v329, 4294901760
        %v4263 = vsub.f32 %v329, %v4262
        %4264 = vmatpush1.msra.mxu0 %v4263
        %4265 = vmatprep.subr.mxu0 0.0
        %v4266 = vand.u32 %v328, 4294901760
        %v4267 = vsub.f32 %v328, %v4266
        %4268 = vmatpush1.msra.mxu0 %v4267
        %4269 = vmatprep.subr.mxu0 0.0
        %v4270 = vand.u32 %v327, 4294901760
        %v4271 = vsub.f32 %v327, %v4270
        %4272 = vmatpush1.msra.mxu0 %v4271
        %4273 = vmatprep.subr.mxu0 0.0
        %v4274 = vand.u32 %v326, 4294901760
        %v4275 = vsub.f32 %v326, %v4274
        %4276 = vmatpush1.msra.mxu0 %v4275
        %4277 = vmatprep.subr.mxu0 0.0
        %v4278 = vand.u32 %v325, 4294901760
        %v4279 = vsub.f32 %v325, %v4278
        %4280 = vmatpush1.msra.mxu0 %v4279
        %4281 = vmatprep.subr.mxu0 0.0
        %v4282 = vand.u32 %v324, 4294901760
        %v4283 = vsub.f32 %v324, %v4282
        %4284 = vmatpush1.msra.mxu0 %v4283
        %4285 = vmatprep.subr.mxu0 0.0
        %v4286 = vand.u32 %v323, 4294901760
        %v4287 = vsub.f32 %v323, %v4286
        %4288 = vmatpush1.msra.mxu0 %v4287
        %4289 = vmatprep.subr.mxu0 0.0
        %v4290 = vand.u32 %v322, 4294901760
        %v4291 = vsub.f32 %v322, %v4290
        %4292 = vmatpush1.msra.mxu0 %v4291
        %4293 = vmatprep.subr.mxu0 0.0
        %v4294 = vand.u32 %v353, 4294901760
        %v4295 = vsub.f32 %v353, %v4294
        %4296 = vmatpush2.msra.mxu0 %v4295
        %4297 = vmatprep.subr.mxu0 0.0
        %v4298 = vand.u32 %v352, 4294901760
        %v4299 = vsub.f32 %v352, %v4298
        %4300 = vmatpush2.msra.mxu0 %v4299
        %4301 = vmatprep.subr.mxu0 0.0
        %v4302 = vand.u32 %v351, 4294901760
        %v4303 = vsub.f32 %v351, %v4302
        %4304 = vmatpush2.msra.mxu0 %v4303
        %4305 = vmatprep.subr.mxu0 0.0
        %v4306 = vand.u32 %v350, 4294901760
        %v4307 = vsub.f32 %v350, %v4306
        %4308 = vmatpush2.msra.mxu0 %v4307
        %4309 = vmatprep.subr.mxu0 0.0
        %v4310 = vand.u32 %v349, 4294901760
        %v4311 = vsub.f32 %v349, %v4310
        %4312 = vmatpush2.msra.mxu0 %v4311
        %4313 = vmatprep.subr.mxu0 0.0
        %v4314 = vand.u32 %v348, 4294901760
        %v4315 = vsub.f32 %v348, %v4314
        %4316 = vmatpush2.msra.mxu0 %v4315
        %4317 = vmatprep.subr.mxu0 0.0
        %v4318 = vand.u32 %v347, 4294901760
        %v4319 = vsub.f32 %v347, %v4318
        %4320 = vmatpush2.msra.mxu0 %v4319
        %4321 = vmatprep.subr.mxu0 0.0
        %v4322 = vand.u32 %v346, 4294901760
        %v4323 = vsub.f32 %v346, %v4322
        %4324 = vmatpush2.msra.mxu0 %v4323
        %4325 = vmatprep.subr.mxu0 0.0
        %v4326 = vand.u32 %v345, 4294901760
        %v4327 = vsub.f32 %v345, %v4326
        %4328 = vmatpush2.msra.mxu0 %v4327
        %4329 = vmatprep.subr.mxu0 0.0
        %v4330 = vand.u32 %v344, 4294901760
        %v4331 = vsub.f32 %v344, %v4330
        %4332 = vmatpush2.msra.mxu0 %v4331
        %4333 = vmatprep.subr.mxu0 0.0
        %v4334 = vand.u32 %v343, 4294901760
        %v4335 = vsub.f32 %v343, %v4334
        %4336 = vmatpush2.msra.mxu0 %v4335
        %4337 = vmatprep.subr.mxu0 0.0
        %v4338 = vand.u32 %v342, 4294901760
        %v4339 = vsub.f32 %v342, %v4338
        %4340 = vmatpush2.msra.mxu0 %v4339
        %4341 = vmatprep.subr.mxu0 0.0
        %v4342 = vand.u32 %v341, 4294901760
        %v4343 = vsub.f32 %v341, %v4342
        %4344 = vmatpush2.msra.mxu0 %v4343
        %4345 = vmatprep.subr.mxu0 0.0
        %v4346 = vand.u32 %v340, 4294901760
        %v4347 = vsub.f32 %v340, %v4346
        %4348 = vmatpush2.msra.mxu0 %v4347
        %4349 = vmatprep.subr.mxu0 0.0
        %v4350 = vand.u32 %v339, 4294901760
        %v4351 = vsub.f32 %v339, %v4350
        %4352 = vmatpush2.msra.mxu0 %v4351
        %4353 = vmatprep.subr.mxu0 0.0
        %v4354 = vand.u32 %v338, 4294901760
        %v4355 = vsub.f32 %v338, %v4354
        %4356 = vmatpush2.msra.mxu0 %v4355
        %v4357 = vand.u32 %v3858, 4294901760
        %v4358 = vsub.f32 %v3858, %v4357
        %4359 = vmatprep.mubr.f32.mxu0 %v4358
        %v4360 = vand.u32 %v3856, 4294901760
        %v4361 = vsub.f32 %v3856, %v4360
        %4362 = vmatmul.mubr.f32.gmra.mxu0 %v4361
        %v4363 = vpop.f32.mrf.mxu0
        %v4364 = vadd.f32 %v4219, %v4363
        %v4365 = vpop.f32.mrf.mxu0
        %v4366 = vand.u32 %v3862, 4294901760
        %v4367 = vsub.f32 %v3862, %v4366
        %4368 = vmatprep.mubr.f32.mxu0 %v4367
        %v4369 = vand.u32 %v3860, 4294901760
        %v4370 = vsub.f32 %v3860, %v4369
        %4371 = vmatmul.mubr.f32.gmra.mxu0 %v4370
        %v4372 = vpop.f32.mrf.mxu0
        %v4373 = vadd.f32 %v4226, %v4372
        %v4374 = vpop.f32.mrf.mxu0
        %4375 = vdwg.mxu0
        %4376 = vmatprep.subr.mxu0 0.0
        %v4377 = vand.u32 %v337, 4294901760
        %4378 = vmatpush1.msra.mxu0 %v4377
        %4379 = vmatprep.subr.mxu0 0.0
        %v4380 = vand.u32 %v336, 4294901760
        %4381 = vmatpush1.msra.mxu0 %v4380
        %4382 = vmatprep.subr.mxu0 0.0
        %v4383 = vand.u32 %v335, 4294901760
        %4384 = vmatpush1.msra.mxu0 %v4383
        %4385 = vmatprep.subr.mxu0 0.0
        %v4386 = vand.u32 %v334, 4294901760
        %4387 = vmatpush1.msra.mxu0 %v4386
        %4388 = vmatprep.subr.mxu0 0.0
        %v4389 = vand.u32 %v333, 4294901760
        %4390 = vmatpush1.msra.mxu0 %v4389
        %4391 = vmatprep.subr.mxu0 0.0
        %v4392 = vand.u32 %v332, 4294901760
        %4393 = vmatpush1.msra.mxu0 %v4392
        %4394 = vmatprep.subr.mxu0 0.0
        %v4395 = vand.u32 %v331, 4294901760
        %4396 = vmatpush1.msra.mxu0 %v4395
        %4397 = vmatprep.subr.mxu0 0.0
        %v4398 = vand.u32 %v330, 4294901760
        %4399 = vmatpush1.msra.mxu0 %v4398
        %4400 = vmatprep.subr.mxu0 0.0
        %v4401 = vand.u32 %v329, 4294901760
        %4402 = vmatpush1.msra.mxu0 %v4401
        %4403 = vmatprep.subr.mxu0 0.0
        %v4404 = vand.u32 %v328, 4294901760
        %4405 = vmatpush1.msra.mxu0 %v4404
        %4406 = vmatprep.subr.mxu0 0.0
        %v4407 = vand.u32 %v327, 4294901760
        %4408 = vmatpush1.msra.mxu0 %v4407
        %4409 = vmatprep.subr.mxu0 0.0
        %v4410 = vand.u32 %v326, 4294901760
        %4411 = vmatpush1.msra.mxu0 %v4410
        %4412 = vmatprep.subr.mxu0 0.0
        %v4413 = vand.u32 %v325, 4294901760
        %4414 = vmatpush1.msra.mxu0 %v4413
        %4415 = vmatprep.subr.mxu0 0.0
        %v4416 = vand.u32 %v324, 4294901760
        %4417 = vmatpush1.msra.mxu0 %v4416
        %4418 = vmatprep.subr.mxu0 0.0
        %v4419 = vand.u32 %v323, 4294901760
        %4420 = vmatpush1.msra.mxu0 %v4419
        %4421 = vmatprep.subr.mxu0 0.0
        %v4422 = vand.u32 %v322, 4294901760
        %4423 = vmatpush1.msra.mxu0 %v4422
        %4424 = vmatprep.subr.mxu0 0.0
        %v4425 = vand.u32 %v353, 4294901760
        %4426 = vmatpush2.msra.mxu0 %v4425
        %4427 = vmatprep.subr.mxu0 0.0
        %v4428 = vand.u32 %v352, 4294901760
        %4429 = vmatpush2.msra.mxu0 %v4428
        %4430 = vmatprep.subr.mxu0 0.0
        %v4431 = vand.u32 %v351, 4294901760
        %4432 = vmatpush2.msra.mxu0 %v4431
        %4433 = vmatprep.subr.mxu0 0.0
        %v4434 = vand.u32 %v350, 4294901760
        %4435 = vmatpush2.msra.mxu0 %v4434
        %4436 = vmatprep.subr.mxu0 0.0
        %v4437 = vand.u32 %v349, 4294901760
        %4438 = vmatpush2.msra.mxu0 %v4437
        %4439 = vmatprep.subr.mxu0 0.0
        %v4440 = vand.u32 %v348, 4294901760
        %4441 = vmatpush2.msra.mxu0 %v4440
        %4442 = vmatprep.subr.mxu0 0.0
        %v4443 = vand.u32 %v347, 4294901760
        %4444 = vmatpush2.msra.mxu0 %v4443
        %4445 = vmatprep.subr.mxu0 0.0
        %v4446 = vand.u32 %v346, 4294901760
        %4447 = vmatpush2.msra.mxu0 %v4446
        %4448 = vmatprep.subr.mxu0 0.0
        %v4449 = vand.u32 %v345, 4294901760
        %4450 = vmatpush2.msra.mxu0 %v4449
        %4451 = vmatprep.subr.mxu0 0.0
        %v4452 = vand.u32 %v344, 4294901760
        %4453 = vmatpush2.msra.mxu0 %v4452
        %4454 = vmatprep.subr.mxu0 0.0
        %v4455 = vand.u32 %v343, 4294901760
        %4456 = vmatpush2.msra.mxu0 %v4455
        %4457 = vmatprep.subr.mxu0 0.0
        %v4458 = vand.u32 %v342, 4294901760
        %4459 = vmatpush2.msra.mxu0 %v4458
        %4460 = vmatprep.subr.mxu0 0.0
        %v4461 = vand.u32 %v341, 4294901760
        %4462 = vmatpush2.msra.mxu0 %v4461
        %4463 = vmatprep.subr.mxu0 0.0
        %v4464 = vand.u32 %v340, 4294901760
        %4465 = vmatpush2.msra.mxu0 %v4464
        %4466 = vmatprep.subr.mxu0 0.0
        %v4467 = vand.u32 %v339, 4294901760
        %4468 = vmatpush2.msra.mxu0 %v4467
        %4469 = vmatprep.subr.mxu0 0.0
        %v4470 = vand.u32 %v338, 4294901760
        %4471 = vmatpush2.msra.mxu0 %v4470
        %v4472 = vand.u32 %v3858, 4294901760
        %v4473 = vsub.f32 %v3858, %v4472
        %v4474 = vand.u32 %v4473, 4294901760
        %4475 = vmatprep.mubr.f32.mxu0 %v4474
        %v4476 = vand.u32 %v3856, 4294901760
        %v4477 = vsub.f32 %v3856, %v4476
        %v4478 = vand.u32 %v4477, 4294901760
        %4479 = vmatmul.mubr.f32.gmra.mxu0 %v4478
        %v4480 = vpop.f32.mrf.mxu0
        %v4481 = vadd.f32 %v4364, %v4480
        %v4482 = vpop.f32.mrf.mxu0
        %v4483 = vand.u32 %v3862, 4294901760
        %v4484 = vsub.f32 %v3862, %v4483
        %v4485 = vand.u32 %v4484, 4294901760
        %4486 = vmatprep.mubr.f32.mxu0 %v4485
        %v4487 = vand.u32 %v3860, 4294901760
        %v4488 = vsub.f32 %v3860, %v4487
        %v4489 = vand.u32 %v4488, 4294901760
        %4490 = vmatmul.mubr.f32.gmra.mxu0 %v4489
        %v4491 = vpop.f32.mrf.mxu0
        %v4492 = vadd.f32 %v4373, %v4491
        %v4493 = vpop.f32.mrf.mxu0
        %4494 = vdwg.mxu0
        %4495 = vmatprep.subr.mxu0 0.0
        %v4496 = vand.u32 %v337, 4294901760
        %v4497 = vsub.f32 %v337, %v4496
        %v4498 = vand.u32 %v4497, 4294901760
        %4499 = vmatpush1.msra.mxu0 %v4498
        %4500 = vmatprep.subr.mxu0 0.0
        %v4501 = vand.u32 %v336, 4294901760
        %v4502 = vsub.f32 %v336, %v4501
        %v4503 = vand.u32 %v4502, 4294901760
        %4504 = vmatpush1.msra.mxu0 %v4503
        %4505 = vmatprep.subr.mxu0 0.0
        %v4506 = vand.u32 %v335, 4294901760
        %v4507 = vsub.f32 %v335, %v4506
        %v4508 = vand.u32 %v4507, 4294901760
        %4509 = vmatpush1.msra.mxu0 %v4508
        %4510 = vmatprep.subr.mxu0 0.0
        %v4511 = vand.u32 %v334, 4294901760
        %v4512 = vsub.f32 %v334, %v4511
        %v4513 = vand.u32 %v4512, 4294901760
        %4514 = vmatpush1.msra.mxu0 %v4513
        %4515 = vmatprep.subr.mxu0 0.0
        %v4516 = vand.u32 %v333, 4294901760
        %v4517 = vsub.f32 %v333, %v4516
        %v4518 = vand.u32 %v4517, 4294901760
        %4519 = vmatpush1.msra.mxu0 %v4518
        %4520 = vmatprep.subr.mxu0 0.0
        %v4521 = vand.u32 %v332, 4294901760
        %v4522 = vsub.f32 %v332, %v4521
        %v4523 = vand.u32 %v4522, 4294901760
        %4524 = vmatpush1.msra.mxu0 %v4523
        %4525 = vmatprep.subr.mxu0 0.0
        %v4526 = vand.u32 %v331, 4294901760
        %v4527 = vsub.f32 %v331, %v4526
        %v4528 = vand.u32 %v4527, 4294901760
        %4529 = vmatpush1.msra.mxu0 %v4528
        %4530 = vmatprep.subr.mxu0 0.0
        %v4531 = vand.u32 %v330, 4294901760
        %v4532 = vsub.f32 %v330, %v4531
        %v4533 = vand.u32 %v4532, 4294901760
        %4534 = vmatpush1.msra.mxu0 %v4533
        %4535 = vmatprep.subr.mxu0 0.0
        %v4536 = vand.u32 %v329, 4294901760
        %v4537 = vsub.f32 %v329, %v4536
        %v4538 = vand.u32 %v4537, 4294901760
        %4539 = vmatpush1.msra.mxu0 %v4538
        %4540 = vmatprep.subr.mxu0 0.0
        %v4541 = vand.u32 %v328, 4294901760
        %v4542 = vsub.f32 %v328, %v4541
        %v4543 = vand.u32 %v4542, 4294901760
        %4544 = vmatpush1.msra.mxu0 %v4543
        %4545 = vmatprep.subr.mxu0 0.0
        %v4546 = vand.u32 %v327, 4294901760
        %v4547 = vsub.f32 %v327, %v4546
        %v4548 = vand.u32 %v4547, 4294901760
        %4549 = vmatpush1.msra.mxu0 %v4548
        %4550 = vmatprep.subr.mxu0 0.0
        %v4551 = vand.u32 %v326, 4294901760
        %v4552 = vsub.f32 %v326, %v4551
        %v4553 = vand.u32 %v4552, 4294901760
        %4554 = vmatpush1.msra.mxu0 %v4553
        %4555 = vmatprep.subr.mxu0 0.0
        %v4556 = vand.u32 %v325, 4294901760
        %v4557 = vsub.f32 %v325, %v4556
        %v4558 = vand.u32 %v4557, 4294901760
        %4559 = vmatpush1.msra.mxu0 %v4558
        %4560 = vmatprep.subr.mxu0 0.0
        %v4561 = vand.u32 %v324, 4294901760
        %v4562 = vsub.f32 %v324, %v4561
        %v4563 = vand.u32 %v4562, 4294901760
        %4564 = vmatpush1.msra.mxu0 %v4563
        %4565 = vmatprep.subr.mxu0 0.0
        %v4566 = vand.u32 %v323, 4294901760
        %v4567 = vsub.f32 %v323, %v4566
        %v4568 = vand.u32 %v4567, 4294901760
        %4569 = vmatpush1.msra.mxu0 %v4568
        %4570 = vmatprep.subr.mxu0 0.0
        %v4571 = vand.u32 %v322, 4294901760
        %v4572 = vsub.f32 %v322, %v4571
        %v4573 = vand.u32 %v4572, 4294901760
        %4574 = vmatpush1.msra.mxu0 %v4573
        %4575 = vmatprep.subr.mxu0 0.0
        %v4576 = vand.u32 %v353, 4294901760
        %v4577 = vsub.f32 %v353, %v4576
        %v4578 = vand.u32 %v4577, 4294901760
        %4579 = vmatpush2.msra.mxu0 %v4578
        %4580 = vmatprep.subr.mxu0 0.0
        %v4581 = vand.u32 %v352, 4294901760
        %v4582 = vsub.f32 %v352, %v4581
        %v4583 = vand.u32 %v4582, 4294901760
        %4584 = vmatpush2.msra.mxu0 %v4583
        %4585 = vmatprep.subr.mxu0 0.0
        %v4586 = vand.u32 %v351, 4294901760
        %v4587 = vsub.f32 %v351, %v4586
        %v4588 = vand.u32 %v4587, 4294901760
        %4589 = vmatpush2.msra.mxu0 %v4588
        %4590 = vmatprep.subr.mxu0 0.0
        %v4591 = vand.u32 %v350, 4294901760
        %v4592 = vsub.f32 %v350, %v4591
        %v4593 = vand.u32 %v4592, 4294901760
        %4594 = vmatpush2.msra.mxu0 %v4593
        %4595 = vmatprep.subr.mxu0 0.0
        %v4596 = vand.u32 %v349, 4294901760
        %v4597 = vsub.f32 %v349, %v4596
        %v4598 = vand.u32 %v4597, 4294901760
        %4599 = vmatpush2.msra.mxu0 %v4598
        %4600 = vmatprep.subr.mxu0 0.0
        %v4601 = vand.u32 %v348, 4294901760
        %v4602 = vsub.f32 %v348, %v4601
        %v4603 = vand.u32 %v4602, 4294901760
        %4604 = vmatpush2.msra.mxu0 %v4603
        %4605 = vmatprep.subr.mxu0 0.0
        %v4606 = vand.u32 %v347, 4294901760
        %v4607 = vsub.f32 %v347, %v4606
        %v4608 = vand.u32 %v4607, 4294901760
        %4609 = vmatpush2.msra.mxu0 %v4608
        %4610 = vmatprep.subr.mxu0 0.0
        %v4611 = vand.u32 %v346, 4294901760
        %v4612 = vsub.f32 %v346, %v4611
        %v4613 = vand.u32 %v4612, 4294901760
        %4614 = vmatpush2.msra.mxu0 %v4613
        %4615 = vmatprep.subr.mxu0 0.0
        %v4616 = vand.u32 %v345, 4294901760
        %v4617 = vsub.f32 %v345, %v4616
        %v4618 = vand.u32 %v4617, 4294901760
        %4619 = vmatpush2.msra.mxu0 %v4618
        %4620 = vmatprep.subr.mxu0 0.0
        %v4621 = vand.u32 %v344, 4294901760
        %v4622 = vsub.f32 %v344, %v4621
        %v4623 = vand.u32 %v4622, 4294901760
        %4624 = vmatpush2.msra.mxu0 %v4623
        %4625 = vmatprep.subr.mxu0 0.0
        %v4626 = vand.u32 %v343, 4294901760
        %v4627 = vsub.f32 %v343, %v4626
        %v4628 = vand.u32 %v4627, 4294901760
        %4629 = vmatpush2.msra.mxu0 %v4628
        %4630 = vmatprep.subr.mxu0 0.0
        %v4631 = vand.u32 %v342, 4294901760
        %v4632 = vsub.f32 %v342, %v4631
        %v4633 = vand.u32 %v4632, 4294901760
        %4634 = vmatpush2.msra.mxu0 %v4633
        %4635 = vmatprep.subr.mxu0 0.0
        %v4636 = vand.u32 %v341, 4294901760
        %v4637 = vsub.f32 %v341, %v4636
        %v4638 = vand.u32 %v4637, 4294901760
        %4639 = vmatpush2.msra.mxu0 %v4638
        %4640 = vmatprep.subr.mxu0 0.0
        %v4641 = vand.u32 %v340, 4294901760
        %v4642 = vsub.f32 %v340, %v4641
        %v4643 = vand.u32 %v4642, 4294901760
        %4644 = vmatpush2.msra.mxu0 %v4643
        %4645 = vmatprep.subr.mxu0 0.0
        %v4646 = vand.u32 %v339, 4294901760
        %v4647 = vsub.f32 %v339, %v4646
        %v4648 = vand.u32 %v4647, 4294901760
        %4649 = vmatpush2.msra.mxu0 %v4648
        %4650 = vmatprep.subr.mxu0 0.0
        %v4651 = vand.u32 %v338, 4294901760
        %v4652 = vsub.f32 %v338, %v4651
        %v4653 = vand.u32 %v4652, 4294901760
        %4654 = vmatpush2.msra.mxu0 %v4653
        %v4655 = vand.u32 %v3858, 4294901760
        %4656 = vmatprep.mubr.f32.mxu0 %v4655
        %v4657 = vand.u32 %v3856, 4294901760
        %4658 = vmatmul.mubr.f32.gmra.mxu0 %v4657
        %v4659 = vpop.f32.mrf.mxu0
        %v4660 = vadd.f32 %v4481, %v4659
        %v4661 = vpop.f32.mrf.mxu0
        %v4662 = vand.u32 %v3862, 4294901760
        %4663 = vmatprep.mubr.f32.mxu0 %v4662
        %v4664 = vand.u32 %v3860, 4294901760
        %4665 = vmatmul.mubr.f32.gmra.mxu0 %v4664
        %v4666 = vpop.f32.mrf.mxu0
        %v4667 = vadd.f32 %v4492, %v4666
        %v4668 = vpop.f32.mrf.mxu0
        %4669 = vdwg.mxu0
        %4670 = vmatprep.subr.mxu0 0.0
        %v4671 = vand.u32 %v337, 4294901760
        %4672 = vmatpush1.msra.mxu0 %v4671
        %4673 = vmatprep.subr.mxu0 0.0
        %v4674 = vand.u32 %v336, 4294901760
        %4675 = vmatpush1.msra.mxu0 %v4674
        %4676 = vmatprep.subr.mxu0 0.0
        %v4677 = vand.u32 %v335, 4294901760
        %4678 = vmatpush1.msra.mxu0 %v4677
        %4679 = vmatprep.subr.mxu0 0.0
        %v4680 = vand.u32 %v334, 4294901760
        %4681 = vmatpush1.msra.mxu0 %v4680
        %4682 = vmatprep.subr.mxu0 0.0
        %v4683 = vand.u32 %v333, 4294901760
        %4684 = vmatpush1.msra.mxu0 %v4683
        %4685 = vmatprep.subr.mxu0 0.0
        %v4686 = vand.u32 %v332, 4294901760
        %4687 = vmatpush1.msra.mxu0 %v4686
        %4688 = vmatprep.subr.mxu0 0.0
        %v4689 = vand.u32 %v331, 4294901760
        %4690 = vmatpush1.msra.mxu0 %v4689
        %4691 = vmatprep.subr.mxu0 0.0
        %v4692 = vand.u32 %v330, 4294901760
        %4693 = vmatpush1.msra.mxu0 %v4692
        %4694 = vmatprep.subr.mxu0 0.0
        %v4695 = vand.u32 %v329, 4294901760
        %4696 = vmatpush1.msra.mxu0 %v4695
        %4697 = vmatprep.subr.mxu0 0.0
        %v4698 = vand.u32 %v328, 4294901760
        %4699 = vmatpush1.msra.mxu0 %v4698
        %4700 = vmatprep.subr.mxu0 0.0
        %v4701 = vand.u32 %v327, 4294901760
        %4702 = vmatpush1.msra.mxu0 %v4701
        %4703 = vmatprep.subr.mxu0 0.0
        %v4704 = vand.u32 %v326, 4294901760
        %4705 = vmatpush1.msra.mxu0 %v4704
        %4706 = vmatprep.subr.mxu0 0.0
        %v4707 = vand.u32 %v325, 4294901760
        %4708 = vmatpush1.msra.mxu0 %v4707
        %4709 = vmatprep.subr.mxu0 0.0
        %v4710 = vand.u32 %v324, 4294901760
        %4711 = vmatpush1.msra.mxu0 %v4710
        %4712 = vmatprep.subr.mxu0 0.0
        %v4713 = vand.u32 %v323, 4294901760
        %4714 = vmatpush1.msra.mxu0 %v4713
        %4715 = vmatprep.subr.mxu0 0.0
        %v4716 = vand.u32 %v322, 4294901760
        %4717 = vmatpush1.msra.mxu0 %v4716
        %4718 = vmatprep.subr.mxu0 0.0
        %v4719 = vand.u32 %v353, 4294901760
        %4720 = vmatpush2.msra.mxu0 %v4719
        %4721 = vmatprep.subr.mxu0 0.0
        %v4722 = vand.u32 %v352, 4294901760
        %4723 = vmatpush2.msra.mxu0 %v4722
        %4724 = vmatprep.subr.mxu0 0.0
        %v4725 = vand.u32 %v351, 4294901760
        %4726 = vmatpush2.msra.mxu0 %v4725
        %4727 = vmatprep.subr.mxu0 0.0
        %v4728 = vand.u32 %v350, 4294901760
        %4729 = vmatpush2.msra.mxu0 %v4728
        %4730 = vmatprep.subr.mxu0 0.0
        %v4731 = vand.u32 %v349, 4294901760
        %4732 = vmatpush2.msra.mxu0 %v4731
        %4733 = vmatprep.subr.mxu0 0.0
        %v4734 = vand.u32 %v348, 4294901760
        %4735 = vmatpush2.msra.mxu0 %v4734
        %4736 = vmatprep.subr.mxu0 0.0
        %v4737 = vand.u32 %v347, 4294901760
        %4738 = vmatpush2.msra.mxu0 %v4737
        %4739 = vmatprep.subr.mxu0 0.0
        %v4740 = vand.u32 %v346, 4294901760
        %4741 = vmatpush2.msra.mxu0 %v4740
        %4742 = vmatprep.subr.mxu0 0.0
        %v4743 = vand.u32 %v345, 4294901760
        %4744 = vmatpush2.msra.mxu0 %v4743
        %4745 = vmatprep.subr.mxu0 0.0
        %v4746 = vand.u32 %v344, 4294901760
        %4747 = vmatpush2.msra.mxu0 %v4746
        %4748 = vmatprep.subr.mxu0 0.0
        %v4749 = vand.u32 %v343, 4294901760
        %4750 = vmatpush2.msra.mxu0 %v4749
        %4751 = vmatprep.subr.mxu0 0.0
        %v4752 = vand.u32 %v342, 4294901760
        %4753 = vmatpush2.msra.mxu0 %v4752
        %4754 = vmatprep.subr.mxu0 0.0
        %v4755 = vand.u32 %v341, 4294901760
        %4756 = vmatpush2.msra.mxu0 %v4755
        %4757 = vmatprep.subr.mxu0 0.0
        %v4758 = vand.u32 %v340, 4294901760
        %4759 = vmatpush2.msra.mxu0 %v4758
        %4760 = vmatprep.subr.mxu0 0.0
        %v4761 = vand.u32 %v339, 4294901760
        %4762 = vmatpush2.msra.mxu0 %v4761
        %4763 = vmatprep.subr.mxu0 0.0
        %v4764 = vand.u32 %v338, 4294901760
        %4765 = vmatpush2.msra.mxu0 %v4764
        %v4766 = vand.u32 %v3858, 4294901760
        %4767 = vmatprep.mubr.f32.mxu0 %v4766
        %v4768 = vand.u32 %v3856, 4294901760
        %4769 = vmatmul.mubr.f32.gmra.mxu0 %v4768
        %v4770 = vpop.f32.mrf.mxu0
        %v4771 = vadd.f32 %v4660, %v4770
        %v4772 = vpop.f32.mrf.mxu0
        %v4773 = vand.u32 %v3862, 4294901760
        %4774 = vmatprep.mubr.f32.mxu0 %v4773
        %v4775 = vand.u32 %v3860, 4294901760
        %4776 = vmatmul.mubr.f32.gmra.mxu0 %v4775
        %v4777 = vpop.f32.mrf.mxu0
        %v4778 = vadd.f32 %v4667, %v4777
        %v4779 = vpop.f32.mrf.mxu0
        %4780 = vdwg.mxu0
        %v4781 = vrcp.pop %v4771
        %v4782 = vrcp.pop %v4778
        %4785 = vrot.lane.b32.xlu0 %v4781, 1
        %v4786 = vpop.permute.xlu0 %4785
        %4787 = vrot.lane.b32.xlu0 %v4782, 1
        %v4788 = vpop.permute.xlu0 %4787
        %v4791 = vmul.f32 %v4771, %v4786
        %v4792 = vmul.f32 %v4778, %v4788
        %v4793 = vadd.f32 %v4791, 3.8146973e-13
        %v4794 = vadd.f32 %v4792, 3.8146973e-13
        %4795 = vrot.lane.b32.xlu0 %v4781, 2
        %v4796 = vpop.permute.xlu0 %4795
        %4797 = vrot.lane.b32.xlu0 %v4782, 2
        %v4798 = vpop.permute.xlu0 %4797
        %v4801 = vmul.f32 %v4771, %v4796
        %v4802 = vmul.f32 %v4778, %v4798
        %v4803 = vadd.f32 %v4801, 3.8146973e-13
        %v4804 = vadd.f32 %v4802, 3.8146973e-13
        %4805 = vrot.lane.b32.xlu0 %v4781, 3
        %v4806 = vpop.permute.xlu0 %4805
        %4807 = vrot.lane.b32.xlu0 %v4782, 3
        %v4808 = vpop.permute.xlu0 %4807
        %v4811 = vmul.f32 %v4771, %v4806
        %v4812 = vmul.f32 %v4778, %v4808
        %v4813 = vadd.f32 %v4811, 9.671111e-06
        %v4814 = vadd.f32 %v4812, 9.671111e-06
        %v4815 = vmul.f32 %v4793, %v4793
        %v4816 = vmul.f32 %v4794, %v4794
        %v4817 = vmul.f32 %v4815, 0.9999744
        %v4818 = vmul.f32 %v4816, 0.9999744
        %4821 = vrot.lane.b32.xlu0 %v4817, 2
        %v4822 = vpop.permute.xlu0 %4821
        %4823 = vrot.lane.b32.xlu0 %v4818, 2
        %v4824 = vpop.permute.xlu0 %4823
        %v4827 = vsub.f32 %v4813, %v4822
        %v4828 = vsub.f32 %v4814, %v4824
        %4829 = vrot.lane.b32.xlu0 %v4781, 4
        %v4830 = vpop.permute.xlu0 %4829
        %4831 = vrot.lane.b32.xlu0 %v4782, 4
        %v4832 = vpop.permute.xlu0 %4831
        %v4835 = vmul.f32 %v4771, %v4830
        %v4836 = vmul.f32 %v4778, %v4832
        %v4837 = vadd.f32 %v4835, 5.684342e-21
        %v4838 = vadd.f32 %v4836, 5.684342e-21
        %4841 = vrot.lane.b32.xlu0 %v4803, 127
        %v4842 = vpop.permute.xlu0 %4841
        %4843 = vrot.lane.b32.xlu0 %v4804, 127
        %v4844 = vpop.permute.xlu0 %4843
        %v4847 = vmul.f32 %v4793, %v4842
        %v4848 = vmul.f32 %v4794, %v4844
        %v4849 = vmul.f32 %v4847, 0.9999744
        %v4850 = vmul.f32 %v4848, 0.9999744
        %4853 = vrot.lane.b32.xlu0 %v4849, 3
        %v4854 = vpop.permute.xlu0 %4853
        %4855 = vrot.lane.b32.xlu0 %v4850, 3
        %v4856 = vpop.permute.xlu0 %4855
        %v4859 = vsub.f32 %v4837, %v4854
        %v4860 = vsub.f32 %v4838, %v4856
        %4861 = vrot.lane.b32.xlu0 %v4781, 5
        %v4862 = vpop.permute.xlu0 %4861
        %4863 = vrot.lane.b32.xlu0 %v4782, 5
        %v4864 = vpop.permute.xlu0 %4863
        %v4867 = vmul.f32 %v4771, %v4862
        %v4868 = vmul.f32 %v4778, %v4864
        %v4869 = vadd.f32 %v4867, 9.671111e-06
        %v4870 = vadd.f32 %v4868, 9.671111e-06
        %v4871 = vmul.f32 %v4803, %v4803
        %v4872 = vmul.f32 %v4804, %v4804
        %v4873 = vmul.f32 %v4871, 0.9999744
        %v4874 = vmul.f32 %v4872, 0.9999744
        %4877 = vrot.lane.b32.xlu0 %v4873, 3
        %v4878 = vpop.permute.xlu0 %4877
        %4879 = vrot.lane.b32.xlu0 %v4874, 3
        %v4880 = vpop.permute.xlu0 %4879
        %v4883 = vsub.f32 %v4869, %v4878
        %v4884 = vsub.f32 %v4870, %v4880
        %4886 = vset.pattern.permute.xlu0 5
        %4887 = vperm.xlu0 %4886, %v4883
        %v4888 = vpop.permute.xlu0 %4887
        %4891 = vset.pattern.permute.xlu0 5
        %4892 = vperm.xlu0 %4891, %v4884
        %v4893 = vpop.permute.xlu0 %4892
        %v4895 = vsel %vm1449, %v4888, 0.0
        %v4896 = vsel %vm1449, %v4893, 0.0
        %4898 = vset.pattern.permute.xlu0 4
        %4899 = vperm.xlu0 %4898, %v4859
        %v4900 = vpop.permute.xlu0 %4899
        %4903 = vset.pattern.permute.xlu0 4
        %4904 = vperm.xlu0 %4903, %v4860
        %v4905 = vpop.permute.xlu0 %4904
        %v4907 = vsel %vm1448, %v4900, %v4895
        %v4908 = vsel %vm1448, %v4905, %v4896
        %4910 = vset.pattern.permute.xlu0 3
        %4911 = vperm.xlu0 %4910, %v4827
        %v4912 = vpop.permute.xlu0 %4911
        %4915 = vset.pattern.permute.xlu0 3
        %4916 = vperm.xlu0 %4915, %v4828
        %v4917 = vpop.permute.xlu0 %4916
        %v4919 = vsel %vm1445, %v4912, %v4907
        %v4920 = vsel %vm1445, %v4917, %v4908
        %4921 = vset.pattern.permute.xlu0 2
        %4922 = vperm.xlu0 %4921, %v4803
        %v4923 = vpop.permute.xlu0 %4922
        %4925 = vset.pattern.permute.xlu0 2
        %4926 = vperm.xlu0 %4925, %v4804
        %v4927 = vpop.permute.xlu0 %4926
        %v4929 = vsel %vm1444, %v4923, %v4919
        %v4930 = vsel %vm1444, %v4927, %v4920
        %4932 = vset.pattern.permute.xlu0 1
        %4933 = vperm.xlu0 %4932, %v4793
        %v4934 = vpop.permute.xlu0 %4933
        %4937 = vset.pattern.permute.xlu0 1
        %4938 = vperm.xlu0 %4937, %v4794
        %v4939 = vpop.permute.xlu0 %4938
        %v4941 = vsel %vm1443, %v4934, %v4929
        %v4942 = vsel %vm1443, %v4939, %v4930
        %s4943 = sld [smem:[#allocation3 + $0x4]]
        %s4944 = smul.f32 %s4943, %s305
        %v4945 = vstv %s4944
        %v4946 = vmul.f32 %v306, %v4945
        %v4947 = vmul.f32 %v307, %v4945
        %v4948 = vmul.f32 %v308, %v4945
        %v4949 = vmul.f32 %v309, %v4945
        %s4950 = sld [smem:[#allocation3 + $0x84]]
        %s4951 = smul.f32 %s4950, %s305
        %v4952 = vstv %s4951
        %v4953 = vmul.f32 %v310, %v4952
        %v4954 = vmul.f32 %v311, %v4952
        %v4955 = vmul.f32 %v312, %v4952
        %v4956 = vmul.f32 %v313, %v4952
        %v4957 = vadd.f32 %v4946, %v4953
        %v4958 = vadd.f32 %v4947, %v4954
        %v4959 = vadd.f32 %v4948, %v4955
        %v4960 = vadd.f32 %v4949, %v4956
        %s4961 = sld [smem:[#allocation3 + $0x104]]
        %s4962 = smul.f32 %s4961, %s305
        %v4963 = vstv %s4962
        %v4964 = vmul.f32 %v314, %v4963
        %v4965 = vmul.f32 %v315, %v4963
        %v4966 = vmul.f32 %v316, %v4963
        %v4967 = vmul.f32 %v317, %v4963
        %v4968 = vadd.f32 %v4957, %v4964
        %v4969 = vadd.f32 %v4958, %v4965
        %v4970 = vadd.f32 %v4959, %v4966
        %v4971 = vadd.f32 %v4960, %v4967
        %s4972 = sld [smem:[#allocation3 + $0x184]]
        %s4973 = smul.f32 %s4972, %s305
        %v4974 = vstv %s4973
        %v4975 = vmul.f32 %v318, %v4974
        %v4976 = vmul.f32 %v319, %v4974
        %v4977 = vmul.f32 %v320, %v4974
        %v4978 = vmul.f32 %v321, %v4974
        %v4979 = vadd.f32 %v4968, %v4975
        %v4980 = vadd.f32 %v4969, %v4976
        %v4981 = vadd.f32 %v4970, %v4977
        %v4982 = vadd.f32 %v4971, %v4978
        %s4983 = sld [smem:[#allocation8 + $0x4]]
        %s4984 = smul.f32 %s4983, %s305
        %v4985 = vstv %s4984
        %v4986 = vadd.f32 %v4979, %v4985
        %v4987 = vadd.f32 %v4980, %v4985
        %v4988 = vadd.f32 %v4981, %v4985
        %v4989 = vadd.f32 %v4982, %v4985
        %v4990 = vmax.f32 %v4986, %v4987
        %4991 = vmax.xlane.f32.xlu0 %v4990
        %v4992 = vpop.xlane.xlu0 %4991
        %v4993 = vmax.f32 %v4988, %v4989
        %4994 = vmax.xlane.f32.xlu0 %v4993
        %v4995 = vpop.xlane.xlu0 %4994
        %v4996 = vsub.f32 %v4986, %v4992
        %v4997 = vsub.f32 %v4987, %v4992
        %v4998 = vsub.f32 %v4988, %v4995
        %v4999 = vsub.f32 %v4989, %v4995
        %v5000 = vmul.f32 %v4996, 1.442695
        %v5001 = vpow.pop %v5000
        %v5002 = vmul.f32 %v4997, 1.442695
        %v5003 = vpow.pop %v5002
        %v5004 = vmul.f32 %v4998, 1.442695
        %v5005 = vpow.pop %v5004
        %v5006 = vmul.f32 %v4999, 1.442695
        %v5007 = vpow.pop %v5006
        %5008 = vmatprep.subr.mxu0 0.0
        %v5009 = vand.u32 %v337, 4294901760
        %5010 = vmatpush1.msra.mxu0 %v5009
        %5011 = vmatprep.subr.mxu0 0.0
        %v5012 = vand.u32 %v336, 4294901760
        %5013 = vmatpush1.msra.mxu0 %v5012
        %5014 = vmatprep.subr.mxu0 0.0
        %v5015 = vand.u32 %v335, 4294901760
        %5016 = vmatpush1.msra.mxu0 %v5015
        %5017 = vmatprep.subr.mxu0 0.0
        %v5018 = vand.u32 %v334, 4294901760
        %5019 = vmatpush1.msra.mxu0 %v5018
        %5020 = vmatprep.subr.mxu0 0.0
        %v5021 = vand.u32 %v333, 4294901760
        %5022 = vmatpush1.msra.mxu0 %v5021
        %5023 = vmatprep.subr.mxu0 0.0
        %v5024 = vand.u32 %v332, 4294901760
        %5025 = vmatpush1.msra.mxu0 %v5024
        %5026 = vmatprep.subr.mxu0 0.0
        %v5027 = vand.u32 %v331, 4294901760
        %5028 = vmatpush1.msra.mxu0 %v5027
        %5029 = vmatprep.subr.mxu0 0.0
        %v5030 = vand.u32 %v330, 4294901760
        %5031 = vmatpush1.msra.mxu0 %v5030
        %5032 = vmatprep.subr.mxu0 0.0
        %v5033 = vand.u32 %v329, 4294901760
        %5034 = vmatpush1.msra.mxu0 %v5033
        %5035 = vmatprep.subr.mxu0 0.0
        %v5036 = vand.u32 %v328, 4294901760
        %5037 = vmatpush1.msra.mxu0 %v5036
        %5038 = vmatprep.subr.mxu0 0.0
        %v5039 = vand.u32 %v327, 4294901760
        %5040 = vmatpush1.msra.mxu0 %v5039
        %5041 = vmatprep.subr.mxu0 0.0
        %v5042 = vand.u32 %v326, 4294901760
        %5043 = vmatpush1.msra.mxu0 %v5042
        %5044 = vmatprep.subr.mxu0 0.0
        %v5045 = vand.u32 %v325, 4294901760
        %5046 = vmatpush1.msra.mxu0 %v5045
        %5047 = vmatprep.subr.mxu0 0.0
        %v5048 = vand.u32 %v324, 4294901760
        %5049 = vmatpush1.msra.mxu0 %v5048
        %5050 = vmatprep.subr.mxu0 0.0
        %v5051 = vand.u32 %v323, 4294901760
        %5052 = vmatpush1.msra.mxu0 %v5051
        %5053 = vmatprep.subr.mxu0 0.0
        %v5054 = vand.u32 %v322, 4294901760
        %5055 = vmatpush1.msra.mxu0 %v5054
        %5056 = vmatprep.subr.mxu0 0.0
        %v5057 = vand.u32 %v353, 4294901760
        %5058 = vmatpush2.msra.mxu0 %v5057
        %5059 = vmatprep.subr.mxu0 0.0
        %v5060 = vand.u32 %v352, 4294901760
        %5061 = vmatpush2.msra.mxu0 %v5060
        %5062 = vmatprep.subr.mxu0 0.0
        %v5063 = vand.u32 %v351, 4294901760
        %5064 = vmatpush2.msra.mxu0 %v5063
        %5065 = vmatprep.subr.mxu0 0.0
        %v5066 = vand.u32 %v350, 4294901760
        %5067 = vmatpush2.msra.mxu0 %v5066
        %5068 = vmatprep.subr.mxu0 0.0
        %v5069 = vand.u32 %v349, 4294901760
        %5070 = vmatpush2.msra.mxu0 %v5069
        %5071 = vmatprep.subr.mxu0 0.0
        %v5072 = vand.u32 %v348, 4294901760
        %5073 = vmatpush2.msra.mxu0 %v5072
        %5074 = vmatprep.subr.mxu0 0.0
        %v5075 = vand.u32 %v347, 4294901760
        %5076 = vmatpush2.msra.mxu0 %v5075
        %5077 = vmatprep.subr.mxu0 0.0
        %v5078 = vand.u32 %v346, 4294901760
        %5079 = vmatpush2.msra.mxu0 %v5078
        %5080 = vmatprep.subr.mxu0 0.0
        %v5081 = vand.u32 %v345, 4294901760
        %5082 = vmatpush2.msra.mxu0 %v5081
        %5083 = vmatprep.subr.mxu0 0.0
        %v5084 = vand.u32 %v344, 4294901760
        %5085 = vmatpush2.msra.mxu0 %v5084
        %5086 = vmatprep.subr.mxu0 0.0
        %v5087 = vand.u32 %v343, 4294901760
        %5088 = vmatpush2.msra.mxu0 %v5087
        %5089 = vmatprep.subr.mxu0 0.0
        %v5090 = vand.u32 %v342, 4294901760
        %5091 = vmatpush2.msra.mxu0 %v5090
        %5092 = vmatprep.subr.mxu0 0.0
        %v5093 = vand.u32 %v341, 4294901760
        %5094 = vmatpush2.msra.mxu0 %v5093
        %5095 = vmatprep.subr.mxu0 0.0
        %v5096 = vand.u32 %v340, 4294901760
        %5097 = vmatpush2.msra.mxu0 %v5096
        %5098 = vmatprep.subr.mxu0 0.0
        %v5099 = vand.u32 %v339, 4294901760
        %5100 = vmatpush2.msra.mxu0 %v5099
        %5101 = vmatprep.subr.mxu0 0.0
        %v5102 = vand.u32 %v338, 4294901760
        %5103 = vmatpush2.msra.mxu0 %v5102
        %v5104 = vand.u32 %v5003, 4294901760
        %v5105 = vsub.f32 %v5003, %v5104
        %v5106 = vand.u32 %v5105, 4294901760
        %v5107 = vsub.f32 %v5105, %v5106
        %v5108 = vand.u32 %v5107, 4294901760
        %5109 = vmatprep.mubr.f32.mxu0 %v5108
        %v5110 = vand.u32 %v5001, 4294901760
        %v5111 = vsub.f32 %v5001, %v5110
        %v5112 = vand.u32 %v5111, 4294901760
        %v5113 = vsub.f32 %v5111, %v5112
        %v5114 = vand.u32 %v5113, 4294901760
        %5115 = vmatmul.mubr.f32.gmra.mxu0 %v5114
        %v5116 = vpop.f32.mrf.mxu0
        %v5117 = vadd.f32 0.0, %v5116
        %v5118 = vpop.f32.mrf.mxu0
        %v5119 = vand.u32 %v5007, 4294901760
        %v5120 = vsub.f32 %v5007, %v5119
        %v5121 = vand.u32 %v5120, 4294901760
        %v5122 = vsub.f32 %v5120, %v5121
        %v5123 = vand.u32 %v5122, 4294901760
        %5124 = vmatprep.mubr.f32.mxu0 %v5123
        %v5125 = vand.u32 %v5005, 4294901760
        %v5126 = vsub.f32 %v5005, %v5125
        %v5127 = vand.u32 %v5126, 4294901760
        %v5128 = vsub.f32 %v5126, %v5127
        %v5129 = vand.u32 %v5128, 4294901760
        %5130 = vmatmul.mubr.f32.gmra.mxu0 %v5129
        %v5131 = vpop.f32.mrf.mxu0
        %v5132 = vadd.f32 0.0, %v5131
        %v5133 = vpop.f32.mrf.mxu0
        %5134 = vdwg.mxu0
        %5135 = vmatprep.subr.mxu0 0.0
        %v5136 = vand.u32 %v337, 4294901760
        %v5137 = vsub.f32 %v337, %v5136
        %v5138 = vand.u32 %v5137, 4294901760
        %v5139 = vsub.f32 %v5137, %v5138
        %v5140 = vand.u32 %v5139, 4294901760
        %5141 = vmatpush1.msra.mxu0 %v5140
        %5142 = vmatprep.subr.mxu0 0.0
        %v5143 = vand.u32 %v336, 4294901760
        %v5144 = vsub.f32 %v336, %v5143
        %v5145 = vand.u32 %v5144, 4294901760
        %v5146 = vsub.f32 %v5144, %v5145
        %v5147 = vand.u32 %v5146, 4294901760
        %5148 = vmatpush1.msra.mxu0 %v5147
        %5149 = vmatprep.subr.mxu0 0.0
        %v5150 = vand.u32 %v335, 4294901760
        %v5151 = vsub.f32 %v335, %v5150
        %v5152 = vand.u32 %v5151, 4294901760
        %v5153 = vsub.f32 %v5151, %v5152
        %v5154 = vand.u32 %v5153, 4294901760
        %5155 = vmatpush1.msra.mxu0 %v5154
        %5156 = vmatprep.subr.mxu0 0.0
        %v5157 = vand.u32 %v334, 4294901760
        %v5158 = vsub.f32 %v334, %v5157
        %v5159 = vand.u32 %v5158, 4294901760
        %v5160 = vsub.f32 %v5158, %v5159
        %v5161 = vand.u32 %v5160, 4294901760
        %5162 = vmatpush1.msra.mxu0 %v5161
        %5163 = vmatprep.subr.mxu0 0.0
        %v5164 = vand.u32 %v333, 4294901760
        %v5165 = vsub.f32 %v333, %v5164
        %v5166 = vand.u32 %v5165, 4294901760
        %v5167 = vsub.f32 %v5165, %v5166
        %v5168 = vand.u32 %v5167, 4294901760
        %5169 = vmatpush1.msra.mxu0 %v5168
        %5170 = vmatprep.subr.mxu0 0.0
        %v5171 = vand.u32 %v332, 4294901760
        %v5172 = vsub.f32 %v332, %v5171
        %v5173 = vand.u32 %v5172, 4294901760
        %v5174 = vsub.f32 %v5172, %v5173
        %v5175 = vand.u32 %v5174, 4294901760
        %5176 = vmatpush1.msra.mxu0 %v5175
        %5177 = vmatprep.subr.mxu0 0.0
        %v5178 = vand.u32 %v331, 4294901760
        %v5179 = vsub.f32 %v331, %v5178
        %v5180 = vand.u32 %v5179, 4294901760
        %v5181 = vsub.f32 %v5179, %v5180
        %v5182 = vand.u32 %v5181, 4294901760
        %5183 = vmatpush1.msra.mxu0 %v5182
        %5184 = vmatprep.subr.mxu0 0.0
        %v5185 = vand.u32 %v330, 4294901760
        %v5186 = vsub.f32 %v330, %v5185
        %v5187 = vand.u32 %v5186, 4294901760
        %v5188 = vsub.f32 %v5186, %v5187
        %v5189 = vand.u32 %v5188, 4294901760
        %5190 = vmatpush1.msra.mxu0 %v5189
        %5191 = vmatprep.subr.mxu0 0.0
        %v5192 = vand.u32 %v329, 4294901760
        %v5193 = vsub.f32 %v329, %v5192
        %v5194 = vand.u32 %v5193, 4294901760
        %v5195 = vsub.f32 %v5193, %v5194
        %v5196 = vand.u32 %v5195, 4294901760
        %5197 = vmatpush1.msra.mxu0 %v5196
        %5198 = vmatprep.subr.mxu0 0.0
        %v5199 = vand.u32 %v328, 4294901760
        %v5200 = vsub.f32 %v328, %v5199
        %v5201 = vand.u32 %v5200, 4294901760
        %v5202 = vsub.f32 %v5200, %v5201
        %v5203 = vand.u32 %v5202, 4294901760
        %5204 = vmatpush1.msra.mxu0 %v5203
        %5205 = vmatprep.subr.mxu0 0.0
        %v5206 = vand.u32 %v327, 4294901760
        %v5207 = vsub.f32 %v327, %v5206
        %v5208 = vand.u32 %v5207, 4294901760
        %v5209 = vsub.f32 %v5207, %v5208
        %v5210 = vand.u32 %v5209, 4294901760
        %5211 = vmatpush1.msra.mxu0 %v5210
        %5212 = vmatprep.subr.mxu0 0.0
        %v5213 = vand.u32 %v326, 4294901760
        %v5214 = vsub.f32 %v326, %v5213
        %v5215 = vand.u32 %v5214, 4294901760
        %v5216 = vsub.f32 %v5214, %v5215
        %v5217 = vand.u32 %v5216, 4294901760
        %5218 = vmatpush1.msra.mxu0 %v5217
        %5219 = vmatprep.subr.mxu0 0.0
        %v5220 = vand.u32 %v325, 4294901760
        %v5221 = vsub.f32 %v325, %v5220
        %v5222 = vand.u32 %v5221, 4294901760
        %v5223 = vsub.f32 %v5221, %v5222
        %v5224 = vand.u32 %v5223, 4294901760
        %5225 = vmatpush1.msra.mxu0 %v5224
        %5226 = vmatprep.subr.mxu0 0.0
        %v5227 = vand.u32 %v324, 4294901760
        %v5228 = vsub.f32 %v324, %v5227
        %v5229 = vand.u32 %v5228, 4294901760
        %v5230 = vsub.f32 %v5228, %v5229
        %v5231 = vand.u32 %v5230, 4294901760
        %5232 = vmatpush1.msra.mxu0 %v5231
        %5233 = vmatprep.subr.mxu0 0.0
        %v5234 = vand.u32 %v323, 4294901760
        %v5235 = vsub.f32 %v323, %v5234
        %v5236 = vand.u32 %v5235, 4294901760
        %v5237 = vsub.f32 %v5235, %v5236
        %v5238 = vand.u32 %v5237, 4294901760
        %5239 = vmatpush1.msra.mxu0 %v5238
        %5240 = vmatprep.subr.mxu0 0.0
        %v5241 = vand.u32 %v322, 4294901760
        %v5242 = vsub.f32 %v322, %v5241
        %v5243 = vand.u32 %v5242, 4294901760
        %v5244 = vsub.f32 %v5242, %v5243
        %v5245 = vand.u32 %v5244, 4294901760
        %5246 = vmatpush1.msra.mxu0 %v5245
        %5247 = vmatprep.subr.mxu0 0.0
        %v5248 = vand.u32 %v353, 4294901760
        %v5249 = vsub.f32 %v353, %v5248
        %v5250 = vand.u32 %v5249, 4294901760
        %v5251 = vsub.f32 %v5249, %v5250
        %v5252 = vand.u32 %v5251, 4294901760
        %5253 = vmatpush2.msra.mxu0 %v5252
        %5254 = vmatprep.subr.mxu0 0.0
        %v5255 = vand.u32 %v352, 4294901760
        %v5256 = vsub.f32 %v352, %v5255
        %v5257 = vand.u32 %v5256, 4294901760
        %v5258 = vsub.f32 %v5256, %v5257
        %v5259 = vand.u32 %v5258, 4294901760
        %5260 = vmatpush2.msra.mxu0 %v5259
        %5261 = vmatprep.subr.mxu0 0.0
        %v5262 = vand.u32 %v351, 4294901760
        %v5263 = vsub.f32 %v351, %v5262
        %v5264 = vand.u32 %v5263, 4294901760
        %v5265 = vsub.f32 %v5263, %v5264
        %v5266 = vand.u32 %v5265, 4294901760
        %5267 = vmatpush2.msra.mxu0 %v5266
        %5268 = vmatprep.subr.mxu0 0.0
        %v5269 = vand.u32 %v350, 4294901760
        %v5270 = vsub.f32 %v350, %v5269
        %v5271 = vand.u32 %v5270, 4294901760
        %v5272 = vsub.f32 %v5270, %v5271
        %v5273 = vand.u32 %v5272, 4294901760
        %5274 = vmatpush2.msra.mxu0 %v5273
        %5275 = vmatprep.subr.mxu0 0.0
        %v5276 = vand.u32 %v349, 4294901760
        %v5277 = vsub.f32 %v349, %v5276
        %v5278 = vand.u32 %v5277, 4294901760
        %v5279 = vsub.f32 %v5277, %v5278
        %v5280 = vand.u32 %v5279, 4294901760
        %5281 = vmatpush2.msra.mxu0 %v5280
        %5282 = vmatprep.subr.mxu0 0.0
        %v5283 = vand.u32 %v348, 4294901760
        %v5284 = vsub.f32 %v348, %v5283
        %v5285 = vand.u32 %v5284, 4294901760
        %v5286 = vsub.f32 %v5284, %v5285
        %v5287 = vand.u32 %v5286, 4294901760
        %5288 = vmatpush2.msra.mxu0 %v5287
        %5289 = vmatprep.subr.mxu0 0.0
        %v5290 = vand.u32 %v347, 4294901760
        %v5291 = vsub.f32 %v347, %v5290
        %v5292 = vand.u32 %v5291, 4294901760
        %v5293 = vsub.f32 %v5291, %v5292
        %v5294 = vand.u32 %v5293, 4294901760
        %5295 = vmatpush2.msra.mxu0 %v5294
        %5296 = vmatprep.subr.mxu0 0.0
        %v5297 = vand.u32 %v346, 4294901760
        %v5298 = vsub.f32 %v346, %v5297
        %v5299 = vand.u32 %v5298, 4294901760
        %v5300 = vsub.f32 %v5298, %v5299
        %v5301 = vand.u32 %v5300, 4294901760
        %5302 = vmatpush2.msra.mxu0 %v5301
        %5303 = vmatprep.subr.mxu0 0.0
        %v5304 = vand.u32 %v345, 4294901760
        %v5305 = vsub.f32 %v345, %v5304
        %v5306 = vand.u32 %v5305, 4294901760
        %v5307 = vsub.f32 %v5305, %v5306
        %v5308 = vand.u32 %v5307, 4294901760
        %5309 = vmatpush2.msra.mxu0 %v5308
        %5310 = vmatprep.subr.mxu0 0.0
        %v5311 = vand.u32 %v344, 4294901760
        %v5312 = vsub.f32 %v344, %v5311
        %v5313 = vand.u32 %v5312, 4294901760
        %v5314 = vsub.f32 %v5312, %v5313
        %v5315 = vand.u32 %v5314, 4294901760
        %5316 = vmatpush2.msra.mxu0 %v5315
        %5317 = vmatprep.subr.mxu0 0.0
        %v5318 = vand.u32 %v343, 4294901760
        %v5319 = vsub.f32 %v343, %v5318
        %v5320 = vand.u32 %v5319, 4294901760
        %v5321 = vsub.f32 %v5319, %v5320
        %v5322 = vand.u32 %v5321, 4294901760
        %5323 = vmatpush2.msra.mxu0 %v5322
        %5324 = vmatprep.subr.mxu0 0.0
        %v5325 = vand.u32 %v342, 4294901760
        %v5326 = vsub.f32 %v342, %v5325
        %v5327 = vand.u32 %v5326, 4294901760
        %v5328 = vsub.f32 %v5326, %v5327
        %v5329 = vand.u32 %v5328, 4294901760
        %5330 = vmatpush2.msra.mxu0 %v5329
        %5331 = vmatprep.subr.mxu0 0.0
        %v5332 = vand.u32 %v341, 4294901760
        %v5333 = vsub.f32 %v341, %v5332
        %v5334 = vand.u32 %v5333, 4294901760
        %v5335 = vsub.f32 %v5333, %v5334
        %v5336 = vand.u32 %v5335, 4294901760
        %5337 = vmatpush2.msra.mxu0 %v5336
        %5338 = vmatprep.subr.mxu0 0.0
        %v5339 = vand.u32 %v340, 4294901760
        %v5340 = vsub.f32 %v340, %v5339
        %v5341 = vand.u32 %v5340, 4294901760
        %v5342 = vsub.f32 %v5340, %v5341
        %v5343 = vand.u32 %v5342, 4294901760
        %5344 = vmatpush2.msra.mxu0 %v5343
        %5345 = vmatprep.subr.mxu0 0.0
        %v5346 = vand.u32 %v339, 4294901760
        %v5347 = vsub.f32 %v339, %v5346
        %v5348 = vand.u32 %v5347, 4294901760
        %v5349 = vsub.f32 %v5347, %v5348
        %v5350 = vand.u32 %v5349, 4294901760
        %5351 = vmatpush2.msra.mxu0 %v5350
        %5352 = vmatprep.subr.mxu0 0.0
        %v5353 = vand.u32 %v338, 4294901760
        %v5354 = vsub.f32 %v338, %v5353
        %v5355 = vand.u32 %v5354, 4294901760
        %v5356 = vsub.f32 %v5354, %v5355
        %v5357 = vand.u32 %v5356, 4294901760
        %5358 = vmatpush2.msra.mxu0 %v5357
        %v5359 = vand.u32 %v5003, 4294901760
        %5360 = vmatprep.mubr.f32.mxu0 %v5359
        %v5361 = vand.u32 %v5001, 4294901760
        %5362 = vmatmul.mubr.f32.gmra.mxu0 %v5361
        %v5363 = vpop.f32.mrf.mxu0
        %v5364 = vadd.f32 %v5117, %v5363
        %v5365 = vpop.f32.mrf.mxu0
        %v5366 = vand.u32 %v5007, 4294901760
        %5367 = vmatprep.mubr.f32.mxu0 %v5366
        %v5368 = vand.u32 %v5005, 4294901760
        %5369 = vmatmul.mubr.f32.gmra.mxu0 %v5368
        %v5370 = vpop.f32.mrf.mxu0
        %v5371 = vadd.f32 %v5132, %v5370
        %v5372 = vpop.f32.mrf.mxu0
        %5373 = vdwg.mxu0
        %5374 = vmatprep.subr.mxu0 0.0
        %v5375 = vand.u32 %v337, 4294901760
        %v5376 = vsub.f32 %v337, %v5375
        %5377 = vmatpush1.msra.mxu0 %v5376
        %5378 = vmatprep.subr.mxu0 0.0
        %v5379 = vand.u32 %v336, 4294901760
        %v5380 = vsub.f32 %v336, %v5379
        %5381 = vmatpush1.msra.mxu0 %v5380
        %5382 = vmatprep.subr.mxu0 0.0
        %v5383 = vand.u32 %v335, 4294901760
        %v5384 = vsub.f32 %v335, %v5383
        %5385 = vmatpush1.msra.mxu0 %v5384
        %5386 = vmatprep.subr.mxu0 0.0
        %v5387 = vand.u32 %v334, 4294901760
        %v5388 = vsub.f32 %v334, %v5387
        %5389 = vmatpush1.msra.mxu0 %v5388
        %5390 = vmatprep.subr.mxu0 0.0
        %v5391 = vand.u32 %v333, 4294901760
        %v5392 = vsub.f32 %v333, %v5391
        %5393 = vmatpush1.msra.mxu0 %v5392
        %5394 = vmatprep.subr.mxu0 0.0
        %v5395 = vand.u32 %v332, 4294901760
        %v5396 = vsub.f32 %v332, %v5395
        %5397 = vmatpush1.msra.mxu0 %v5396
        %5398 = vmatprep.subr.mxu0 0.0
        %v5399 = vand.u32 %v331, 4294901760
        %v5400 = vsub.f32 %v331, %v5399
        %5401 = vmatpush1.msra.mxu0 %v5400
        %5402 = vmatprep.subr.mxu0 0.0
        %v5403 = vand.u32 %v330, 4294901760
        %v5404 = vsub.f32 %v330, %v5403
        %5405 = vmatpush1.msra.mxu0 %v5404
        %5406 = vmatprep.subr.mxu0 0.0
        %v5407 = vand.u32 %v329, 4294901760
        %v5408 = vsub.f32 %v329, %v5407
        %5409 = vmatpush1.msra.mxu0 %v5408
        %5410 = vmatprep.subr.mxu0 0.0
        %v5411 = vand.u32 %v328, 4294901760
        %v5412 = vsub.f32 %v328, %v5411
        %5413 = vmatpush1.msra.mxu0 %v5412
        %5414 = vmatprep.subr.mxu0 0.0
        %v5415 = vand.u32 %v327, 4294901760
        %v5416 = vsub.f32 %v327, %v5415
        %5417 = vmatpush1.msra.mxu0 %v5416
        %5418 = vmatprep.subr.mxu0 0.0
        %v5419 = vand.u32 %v326, 4294901760
        %v5420 = vsub.f32 %v326, %v5419
        %5421 = vmatpush1.msra.mxu0 %v5420
        %5422 = vmatprep.subr.mxu0 0.0
        %v5423 = vand.u32 %v325, 4294901760
        %v5424 = vsub.f32 %v325, %v5423
        %5425 = vmatpush1.msra.mxu0 %v5424
        %5426 = vmatprep.subr.mxu0 0.0
        %v5427 = vand.u32 %v324, 4294901760
        %v5428 = vsub.f32 %v324, %v5427
        %5429 = vmatpush1.msra.mxu0 %v5428
        %5430 = vmatprep.subr.mxu0 0.0
        %v5431 = vand.u32 %v323, 4294901760
        %v5432 = vsub.f32 %v323, %v5431
        %5433 = vmatpush1.msra.mxu0 %v5432
        %5434 = vmatprep.subr.mxu0 0.0
        %v5435 = vand.u32 %v322, 4294901760
        %v5436 = vsub.f32 %v322, %v5435
        %5437 = vmatpush1.msra.mxu0 %v5436
        %5438 = vmatprep.subr.mxu0 0.0
        %v5439 = vand.u32 %v353, 4294901760
        %v5440 = vsub.f32 %v353, %v5439
        %5441 = vmatpush2.msra.mxu0 %v5440
        %5442 = vmatprep.subr.mxu0 0.0
        %v5443 = vand.u32 %v352, 4294901760
        %v5444 = vsub.f32 %v352, %v5443
        %5445 = vmatpush2.msra.mxu0 %v5444
        %5446 = vmatprep.subr.mxu0 0.0
        %v5447 = vand.u32 %v351, 4294901760
        %v5448 = vsub.f32 %v351, %v5447
        %5449 = vmatpush2.msra.mxu0 %v5448
        %5450 = vmatprep.subr.mxu0 0.0
        %v5451 = vand.u32 %v350, 4294901760
        %v5452 = vsub.f32 %v350, %v5451
        %5453 = vmatpush2.msra.mxu0 %v5452
        %5454 = vmatprep.subr.mxu0 0.0
        %v5455 = vand.u32 %v349, 4294901760
        %v5456 = vsub.f32 %v349, %v5455
        %5457 = vmatpush2.msra.mxu0 %v5456
        %5458 = vmatprep.subr.mxu0 0.0
        %v5459 = vand.u32 %v348, 4294901760
        %v5460 = vsub.f32 %v348, %v5459
        %5461 = vmatpush2.msra.mxu0 %v5460
        %5462 = vmatprep.subr.mxu0 0.0
        %v5463 = vand.u32 %v347, 4294901760
        %v5464 = vsub.f32 %v347, %v5463
        %5465 = vmatpush2.msra.mxu0 %v5464
        %5466 = vmatprep.subr.mxu0 0.0
        %v5467 = vand.u32 %v346, 4294901760
        %v5468 = vsub.f32 %v346, %v5467
        %5469 = vmatpush2.msra.mxu0 %v5468
        %5470 = vmatprep.subr.mxu0 0.0
        %v5471 = vand.u32 %v345, 4294901760
        %v5472 = vsub.f32 %v345, %v5471
        %5473 = vmatpush2.msra.mxu0 %v5472
        %5474 = vmatprep.subr.mxu0 0.0
        %v5475 = vand.u32 %v344, 4294901760
        %v5476 = vsub.f32 %v344, %v5475
        %5477 = vmatpush2.msra.mxu0 %v5476
        %5478 = vmatprep.subr.mxu0 0.0
        %v5479 = vand.u32 %v343, 4294901760
        %v5480 = vsub.f32 %v343, %v5479
        %5481 = vmatpush2.msra.mxu0 %v5480
        %5482 = vmatprep.subr.mxu0 0.0
        %v5483 = vand.u32 %v342, 4294901760
        %v5484 = vsub.f32 %v342, %v5483
        %5485 = vmatpush2.msra.mxu0 %v5484
        %5486 = vmatprep.subr.mxu0 0.0
        %v5487 = vand.u32 %v341, 4294901760
        %v5488 = vsub.f32 %v341, %v5487
        %5489 = vmatpush2.msra.mxu0 %v5488
        %5490 = vmatprep.subr.mxu0 0.0
        %v5491 = vand.u32 %v340, 4294901760
        %v5492 = vsub.f32 %v340, %v5491
        %5493 = vmatpush2.msra.mxu0 %v5492
        %5494 = vmatprep.subr.mxu0 0.0
        %v5495 = vand.u32 %v339, 4294901760
        %v5496 = vsub.f32 %v339, %v5495
        %5497 = vmatpush2.msra.mxu0 %v5496
        %5498 = vmatprep.subr.mxu0 0.0
        %v5499 = vand.u32 %v338, 4294901760
        %v5500 = vsub.f32 %v338, %v5499
        %5501 = vmatpush2.msra.mxu0 %v5500
        %v5502 = vand.u32 %v5003, 4294901760
        %v5503 = vsub.f32 %v5003, %v5502
        %5504 = vmatprep.mubr.f32.mxu0 %v5503
        %v5505 = vand.u32 %v5001, 4294901760
        %v5506 = vsub.f32 %v5001, %v5505
        %5507 = vmatmul.mubr.f32.gmra.mxu0 %v5506
        %v5508 = vpop.f32.mrf.mxu0
        %v5509 = vadd.f32 %v5364, %v5508
        %v5510 = vpop.f32.mrf.mxu0
        %v5511 = vand.u32 %v5007, 4294901760
        %v5512 = vsub.f32 %v5007, %v5511
        %5513 = vmatprep.mubr.f32.mxu0 %v5512
        %v5514 = vand.u32 %v5005, 4294901760
        %v5515 = vsub.f32 %v5005, %v5514
        %5516 = vmatmul.mubr.f32.gmra.mxu0 %v5515
        %v5517 = vpop.f32.mrf.mxu0
        %v5518 = vadd.f32 %v5371, %v5517
        %v5519 = vpop.f32.mrf.mxu0
        %5520 = vdwg.mxu0
        %5521 = vmatprep.subr.mxu0 0.0
        %v5522 = vand.u32 %v337, 4294901760
        %5523 = vmatpush1.msra.mxu0 %v5522
        %5524 = vmatprep.subr.mxu0 0.0
        %v5525 = vand.u32 %v336, 4294901760
        %5526 = vmatpush1.msra.mxu0 %v5525
        %5527 = vmatprep.subr.mxu0 0.0
        %v5528 = vand.u32 %v335, 4294901760
        %5529 = vmatpush1.msra.mxu0 %v5528
        %5530 = vmatprep.subr.mxu0 0.0
        %v5531 = vand.u32 %v334, 4294901760
        %5532 = vmatpush1.msra.mxu0 %v5531
        %5533 = vmatprep.subr.mxu0 0.0
        %v5534 = vand.u32 %v333, 4294901760
        %5535 = vmatpush1.msra.mxu0 %v5534
        %5536 = vmatprep.subr.mxu0 0.0
        %v5537 = vand.u32 %v332, 4294901760
        %5538 = vmatpush1.msra.mxu0 %v5537
        %5539 = vmatprep.subr.mxu0 0.0
        %v5540 = vand.u32 %v331, 4294901760
        %5541 = vmatpush1.msra.mxu0 %v5540
        %5542 = vmatprep.subr.mxu0 0.0
        %v5543 = vand.u32 %v330, 4294901760
        %5544 = vmatpush1.msra.mxu0 %v5543
        %5545 = vmatprep.subr.mxu0 0.0
        %v5546 = vand.u32 %v329, 4294901760
        %5547 = vmatpush1.msra.mxu0 %v5546
        %5548 = vmatprep.subr.mxu0 0.0
        %v5549 = vand.u32 %v328, 4294901760
        %5550 = vmatpush1.msra.mxu0 %v5549
        %5551 = vmatprep.subr.mxu0 0.0
        %v5552 = vand.u32 %v327, 4294901760
        %5553 = vmatpush1.msra.mxu0 %v5552
        %5554 = vmatprep.subr.mxu0 0.0
        %v5555 = vand.u32 %v326, 4294901760
        %5556 = vmatpush1.msra.mxu0 %v5555
        %5557 = vmatprep.subr.mxu0 0.0
        %v5558 = vand.u32 %v325, 4294901760
        %5559 = vmatpush1.msra.mxu0 %v5558
        %5560 = vmatprep.subr.mxu0 0.0
        %v5561 = vand.u32 %v324, 4294901760
        %5562 = vmatpush1.msra.mxu0 %v5561
        %5563 = vmatprep.subr.mxu0 0.0
        %v5564 = vand.u32 %v323, 4294901760
        %5565 = vmatpush1.msra.mxu0 %v5564
        %5566 = vmatprep.subr.mxu0 0.0
        %v5567 = vand.u32 %v322, 4294901760
        %5568 = vmatpush1.msra.mxu0 %v5567
        %5569 = vmatprep.subr.mxu0 0.0
        %v5570 = vand.u32 %v353, 4294901760
        %5571 = vmatpush2.msra.mxu0 %v5570
        %5572 = vmatprep.subr.mxu0 0.0
        %v5573 = vand.u32 %v352, 4294901760
        %5574 = vmatpush2.msra.mxu0 %v5573
        %5575 = vmatprep.subr.mxu0 0.0
        %v5576 = vand.u32 %v351, 4294901760
        %5577 = vmatpush2.msra.mxu0 %v5576
        %5578 = vmatprep.subr.mxu0 0.0
        %v5579 = vand.u32 %v350, 4294901760
        %5580 = vmatpush2.msra.mxu0 %v5579
        %5581 = vmatprep.subr.mxu0 0.0
        %v5582 = vand.u32 %v349, 4294901760
        %5583 = vmatpush2.msra.mxu0 %v5582
        %5584 = vmatprep.subr.mxu0 0.0
        %v5585 = vand.u32 %v348, 4294901760
        %5586 = vmatpush2.msra.mxu0 %v5585
        %5587 = vmatprep.subr.mxu0 0.0
        %v5588 = vand.u32 %v347, 4294901760
        %5589 = vmatpush2.msra.mxu0 %v5588
        %5590 = vmatprep.subr.mxu0 0.0
        %v5591 = vand.u32 %v346, 4294901760
        %5592 = vmatpush2.msra.mxu0 %v5591
        %5593 = vmatprep.subr.mxu0 0.0
        %v5594 = vand.u32 %v345, 4294901760
        %5595 = vmatpush2.msra.mxu0 %v5594
        %5596 = vmatprep.subr.mxu0 0.0
        %v5597 = vand.u32 %v344, 4294901760
        %5598 = vmatpush2.msra.mxu0 %v5597
        %5599 = vmatprep.subr.mxu0 0.0
        %v5600 = vand.u32 %v343, 4294901760
        %5601 = vmatpush2.msra.mxu0 %v5600
        %5602 = vmatprep.subr.mxu0 0.0
        %v5603 = vand.u32 %v342, 4294901760
        %5604 = vmatpush2.msra.mxu0 %v5603
        %5605 = vmatprep.subr.mxu0 0.0
        %v5606 = vand.u32 %v341, 4294901760
        %5607 = vmatpush2.msra.mxu0 %v5606
        %5608 = vmatprep.subr.mxu0 0.0
        %v5609 = vand.u32 %v340, 4294901760
        %5610 = vmatpush2.msra.mxu0 %v5609
        %5611 = vmatprep.subr.mxu0 0.0
        %v5612 = vand.u32 %v339, 4294901760
        %5613 = vmatpush2.msra.mxu0 %v5612
        %5614 = vmatprep.subr.mxu0 0.0
        %v5615 = vand.u32 %v338, 4294901760
        %5616 = vmatpush2.msra.mxu0 %v5615
        %v5617 = vand.u32 %v5003, 4294901760
        %v5618 = vsub.f32 %v5003, %v5617
        %v5619 = vand.u32 %v5618, 4294901760
        %5620 = vmatprep.mubr.f32.mxu0 %v5619
        %v5621 = vand.u32 %v5001, 4294901760
        %v5622 = vsub.f32 %v5001, %v5621
        %v5623 = vand.u32 %v5622, 4294901760
        %5624 = vmatmul.mubr.f32.gmra.mxu0 %v5623
        %v5625 = vpop.f32.mrf.mxu0
        %v5626 = vadd.f32 %v5509, %v5625
        %v5627 = vpop.f32.mrf.mxu0
        %v5628 = vand.u32 %v5007, 4294901760
        %v5629 = vsub.f32 %v5007, %v5628
        %v5630 = vand.u32 %v5629, 4294901760
        %5631 = vmatprep.mubr.f32.mxu0 %v5630
        %v5632 = vand.u32 %v5005, 4294901760
        %v5633 = vsub.f32 %v5005, %v5632
        %v5634 = vand.u32 %v5633, 4294901760
        %5635 = vmatmul.mubr.f32.gmra.mxu0 %v5634
        %v5636 = vpop.f32.mrf.mxu0
        %v5637 = vadd.f32 %v5518, %v5636
        %v5638 = vpop.f32.mrf.mxu0
        %5639 = vdwg.mxu0
        %5640 = vmatprep.subr.mxu0 0.0
        %v5641 = vand.u32 %v337, 4294901760
        %v5642 = vsub.f32 %v337, %v5641
        %v5643 = vand.u32 %v5642, 4294901760
        %5644 = vmatpush1.msra.mxu0 %v5643
        %5645 = vmatprep.subr.mxu0 0.0
        %v5646 = vand.u32 %v336, 4294901760
        %v5647 = vsub.f32 %v336, %v5646
        %v5648 = vand.u32 %v5647, 4294901760
        %5649 = vmatpush1.msra.mxu0 %v5648
        %5650 = vmatprep.subr.mxu0 0.0
        %v5651 = vand.u32 %v335, 4294901760
        %v5652 = vsub.f32 %v335, %v5651
        %v5653 = vand.u32 %v5652, 4294901760
        %5654 = vmatpush1.msra.mxu0 %v5653
        %5655 = vmatprep.subr.mxu0 0.0
        %v5656 = vand.u32 %v334, 4294901760
        %v5657 = vsub.f32 %v334, %v5656
        %v5658 = vand.u32 %v5657, 4294901760
        %5659 = vmatpush1.msra.mxu0 %v5658
        %5660 = vmatprep.subr.mxu0 0.0
        %v5661 = vand.u32 %v333, 4294901760
        %v5662 = vsub.f32 %v333, %v5661
        %v5663 = vand.u32 %v5662, 4294901760
        %5664 = vmatpush1.msra.mxu0 %v5663
        %5665 = vmatprep.subr.mxu0 0.0
        %v5666 = vand.u32 %v332, 4294901760
        %v5667 = vsub.f32 %v332, %v5666
        %v5668 = vand.u32 %v5667, 4294901760
        %5669 = vmatpush1.msra.mxu0 %v5668
        %5670 = vmatprep.subr.mxu0 0.0
        %v5671 = vand.u32 %v331, 4294901760
        %v5672 = vsub.f32 %v331, %v5671
        %v5673 = vand.u32 %v5672, 4294901760
        %5674 = vmatpush1.msra.mxu0 %v5673
        %5675 = vmatprep.subr.mxu0 0.0
        %v5676 = vand.u32 %v330, 4294901760
        %v5677 = vsub.f32 %v330, %v5676
        %v5678 = vand.u32 %v5677, 4294901760
        %5679 = vmatpush1.msra.mxu0 %v5678
        %5680 = vmatprep.subr.mxu0 0.0
        %v5681 = vand.u32 %v329, 4294901760
        %v5682 = vsub.f32 %v329, %v5681
        %v5683 = vand.u32 %v5682, 4294901760
        %5684 = vmatpush1.msra.mxu0 %v5683
        %5685 = vmatprep.subr.mxu0 0.0
        %v5686 = vand.u32 %v328, 4294901760
        %v5687 = vsub.f32 %v328, %v5686
        %v5688 = vand.u32 %v5687, 4294901760
        %5689 = vmatpush1.msra.mxu0 %v5688
        %5690 = vmatprep.subr.mxu0 0.0
        %v5691 = vand.u32 %v327, 4294901760
        %v5692 = vsub.f32 %v327, %v5691
        %v5693 = vand.u32 %v5692, 4294901760
        %5694 = vmatpush1.msra.mxu0 %v5693
        %5695 = vmatprep.subr.mxu0 0.0
        %v5696 = vand.u32 %v326, 4294901760
        %v5697 = vsub.f32 %v326, %v5696
        %v5698 = vand.u32 %v5697, 4294901760
        %5699 = vmatpush1.msra.mxu0 %v5698
        %5700 = vmatprep.subr.mxu0 0.0
        %v5701 = vand.u32 %v325, 4294901760
        %v5702 = vsub.f32 %v325, %v5701
        %v5703 = vand.u32 %v5702, 4294901760
        %5704 = vmatpush1.msra.mxu0 %v5703
        %5705 = vmatprep.subr.mxu0 0.0
        %v5706 = vand.u32 %v324, 4294901760
        %v5707 = vsub.f32 %v324, %v5706
        %v5708 = vand.u32 %v5707, 4294901760
        %5709 = vmatpush1.msra.mxu0 %v5708
        %5710 = vmatprep.subr.mxu0 0.0
        %v5711 = vand.u32 %v323, 4294901760
        %v5712 = vsub.f32 %v323, %v5711
        %v5713 = vand.u32 %v5712, 4294901760
        %5714 = vmatpush1.msra.mxu0 %v5713
        %5715 = vmatprep.subr.mxu0 0.0
        %v5716 = vand.u32 %v322, 4294901760
        %v5717 = vsub.f32 %v322, %v5716
        %v5718 = vand.u32 %v5717, 4294901760
        %5719 = vmatpush1.msra.mxu0 %v5718
        %5720 = vmatprep.subr.mxu0 0.0
        %v5721 = vand.u32 %v353, 4294901760
        %v5722 = vsub.f32 %v353, %v5721
        %v5723 = vand.u32 %v5722, 4294901760
        %5724 = vmatpush2.msra.mxu0 %v5723
        %5725 = vmatprep.subr.mxu0 0.0
        %v5726 = vand.u32 %v352, 4294901760
        %v5727 = vsub.f32 %v352, %v5726
        %v5728 = vand.u32 %v5727, 4294901760
        %5729 = vmatpush2.msra.mxu0 %v5728
        %5730 = vmatprep.subr.mxu0 0.0
        %v5731 = vand.u32 %v351, 4294901760
        %v5732 = vsub.f32 %v351, %v5731
        %v5733 = vand.u32 %v5732, 4294901760
        %5734 = vmatpush2.msra.mxu0 %v5733
        %5735 = vmatprep.subr.mxu0 0.0
        %v5736 = vand.u32 %v350, 4294901760
        %v5737 = vsub.f32 %v350, %v5736
        %v5738 = vand.u32 %v5737, 4294901760
        %5739 = vmatpush2.msra.mxu0 %v5738
        %5740 = vmatprep.subr.mxu0 0.0
        %v5741 = vand.u32 %v349, 4294901760
        %v5742 = vsub.f32 %v349, %v5741
        %v5743 = vand.u32 %v5742, 4294901760
        %5744 = vmatpush2.msra.mxu0 %v5743
        %5745 = vmatprep.subr.mxu0 0.0
        %v5746 = vand.u32 %v348, 4294901760
        %v5747 = vsub.f32 %v348, %v5746
        %v5748 = vand.u32 %v5747, 4294901760
        %5749 = vmatpush2.msra.mxu0 %v5748
        %5750 = vmatprep.subr.mxu0 0.0
        %v5751 = vand.u32 %v347, 4294901760
        %v5752 = vsub.f32 %v347, %v5751
        %v5753 = vand.u32 %v5752, 4294901760
        %5754 = vmatpush2.msra.mxu0 %v5753
        %5755 = vmatprep.subr.mxu0 0.0
        %v5756 = vand.u32 %v346, 4294901760
        %v5757 = vsub.f32 %v346, %v5756
        %v5758 = vand.u32 %v5757, 4294901760
        %5759 = vmatpush2.msra.mxu0 %v5758
        %5760 = vmatprep.subr.mxu0 0.0
        %v5761 = vand.u32 %v345, 4294901760
        %v5762 = vsub.f32 %v345, %v5761
        %v5763 = vand.u32 %v5762, 4294901760
        %5764 = vmatpush2.msra.mxu0 %v5763
        %5765 = vmatprep.subr.mxu0 0.0
        %v5766 = vand.u32 %v344, 4294901760
        %v5767 = vsub.f32 %v344, %v5766
        %v5768 = vand.u32 %v5767, 4294901760
        %5769 = vmatpush2.msra.mxu0 %v5768
        %5770 = vmatprep.subr.mxu0 0.0
        %v5771 = vand.u32 %v343, 4294901760
        %v5772 = vsub.f32 %v343, %v5771
        %v5773 = vand.u32 %v5772, 4294901760
        %5774 = vmatpush2.msra.mxu0 %v5773
        %5775 = vmatprep.subr.mxu0 0.0
        %v5776 = vand.u32 %v342, 4294901760
        %v5777 = vsub.f32 %v342, %v5776
        %v5778 = vand.u32 %v5777, 4294901760
        %5779 = vmatpush2.msra.mxu0 %v5778
        %5780 = vmatprep.subr.mxu0 0.0
        %v5781 = vand.u32 %v341, 4294901760
        %v5782 = vsub.f32 %v341, %v5781
        %v5783 = vand.u32 %v5782, 4294901760
        %5784 = vmatpush2.msra.mxu0 %v5783
        %5785 = vmatprep.subr.mxu0 0.0
        %v5786 = vand.u32 %v340, 4294901760
        %v5787 = vsub.f32 %v340, %v5786
        %v5788 = vand.u32 %v5787, 4294901760
        %5789 = vmatpush2.msra.mxu0 %v5788
        %5790 = vmatprep.subr.mxu0 0.0
        %v5791 = vand.u32 %v339, 4294901760
        %v5792 = vsub.f32 %v339, %v5791
        %v5793 = vand.u32 %v5792, 4294901760
        %5794 = vmatpush2.msra.mxu0 %v5793
        %5795 = vmatprep.subr.mxu0 0.0
        %v5796 = vand.u32 %v338, 4294901760
        %v5797 = vsub.f32 %v338, %v5796
        %v5798 = vand.u32 %v5797, 4294901760
        %5799 = vmatpush2.msra.mxu0 %v5798
        %v5800 = vand.u32 %v5003, 4294901760
        %5801 = vmatprep.mubr.f32.mxu0 %v5800
        %v5802 = vand.u32 %v5001, 4294901760
        %5803 = vmatmul.mubr.f32.gmra.mxu0 %v5802
        %v5804 = vpop.f32.mrf.mxu0
        %v5805 = vadd.f32 %v5626, %v5804
        %v5806 = vpop.f32.mrf.mxu0
        %v5807 = vand.u32 %v5007, 4294901760
        %5808 = vmatprep.mubr.f32.mxu0 %v5807
        %v5809 = vand.u32 %v5005, 4294901760
        %5810 = vmatmul.mubr.f32.gmra.mxu0 %v5809
        %v5811 = vpop.f32.mrf.mxu0
        %v5812 = vadd.f32 %v5637, %v5811
        %v5813 = vpop.f32.mrf.mxu0
        %5814 = vdwg.mxu0
        %5815 = vmatprep.subr.mxu0 0.0
        %v5816 = vand.u32 %v337, 4294901760
        %5817 = vmatpush1.msra.mxu0 %v5816
        %5818 = vmatprep.subr.mxu0 0.0
        %v5819 = vand.u32 %v336, 4294901760
        %5820 = vmatpush1.msra.mxu0 %v5819
        %5821 = vmatprep.subr.mxu0 0.0
        %v5822 = vand.u32 %v335, 4294901760
        %5823 = vmatpush1.msra.mxu0 %v5822
        %5824 = vmatprep.subr.mxu0 0.0
        %v5825 = vand.u32 %v334, 4294901760
        %5826 = vmatpush1.msra.mxu0 %v5825
        %5827 = vmatprep.subr.mxu0 0.0
        %v5828 = vand.u32 %v333, 4294901760
        %5829 = vmatpush1.msra.mxu0 %v5828
        %5830 = vmatprep.subr.mxu0 0.0
        %v5831 = vand.u32 %v332, 4294901760
        %5832 = vmatpush1.msra.mxu0 %v5831
        %5833 = vmatprep.subr.mxu0 0.0
        %v5834 = vand.u32 %v331, 4294901760
        %5835 = vmatpush1.msra.mxu0 %v5834
        %5836 = vmatprep.subr.mxu0 0.0
        %v5837 = vand.u32 %v330, 4294901760
        %5838 = vmatpush1.msra.mxu0 %v5837
        %5839 = vmatprep.subr.mxu0 0.0
        %v5840 = vand.u32 %v329, 4294901760
        %5841 = vmatpush1.msra.mxu0 %v5840
        %5842 = vmatprep.subr.mxu0 0.0
        %v5843 = vand.u32 %v328, 4294901760
        %5844 = vmatpush1.msra.mxu0 %v5843
        %5845 = vmatprep.subr.mxu0 0.0
        %v5846 = vand.u32 %v327, 4294901760
        %5847 = vmatpush1.msra.mxu0 %v5846
        %5848 = vmatprep.subr.mxu0 0.0
        %v5849 = vand.u32 %v326, 4294901760
        %5850 = vmatpush1.msra.mxu0 %v5849
        %5851 = vmatprep.subr.mxu0 0.0
        %v5852 = vand.u32 %v325, 4294901760
        %5853 = vmatpush1.msra.mxu0 %v5852
        %5854 = vmatprep.subr.mxu0 0.0
        %v5855 = vand.u32 %v324, 4294901760
        %5856 = vmatpush1.msra.mxu0 %v5855
        %5857 = vmatprep.subr.mxu0 0.0
        %v5858 = vand.u32 %v323, 4294901760
        %5859 = vmatpush1.msra.mxu0 %v5858
        %5860 = vmatprep.subr.mxu0 0.0
        %v5861 = vand.u32 %v322, 4294901760
        %5862 = vmatpush1.msra.mxu0 %v5861
        %5863 = vmatprep.subr.mxu0 0.0
        %v5864 = vand.u32 %v353, 4294901760
        %5865 = vmatpush2.msra.mxu0 %v5864
        %5866 = vmatprep.subr.mxu0 0.0
        %v5867 = vand.u32 %v352, 4294901760
        %5868 = vmatpush2.msra.mxu0 %v5867
        %5869 = vmatprep.subr.mxu0 0.0
        %v5870 = vand.u32 %v351, 4294901760
        %5871 = vmatpush2.msra.mxu0 %v5870
        %5872 = vmatprep.subr.mxu0 0.0
        %v5873 = vand.u32 %v350, 4294901760
        %5874 = vmatpush2.msra.mxu0 %v5873
        %5875 = vmatprep.subr.mxu0 0.0
        %v5876 = vand.u32 %v349, 4294901760
        %5877 = vmatpush2.msra.mxu0 %v5876
        %5878 = vmatprep.subr.mxu0 0.0
        %v5879 = vand.u32 %v348, 4294901760
        %5880 = vmatpush2.msra.mxu0 %v5879
        %5881 = vmatprep.subr.mxu0 0.0
        %v5882 = vand.u32 %v347, 4294901760
        %5883 = vmatpush2.msra.mxu0 %v5882
        %5884 = vmatprep.subr.mxu0 0.0
        %v5885 = vand.u32 %v346, 4294901760
        %5886 = vmatpush2.msra.mxu0 %v5885
        %5887 = vmatprep.subr.mxu0 0.0
        %v5888 = vand.u32 %v345, 4294901760
        %5889 = vmatpush2.msra.mxu0 %v5888
        %5890 = vmatprep.subr.mxu0 0.0
        %v5891 = vand.u32 %v344, 4294901760
        %5892 = vmatpush2.msra.mxu0 %v5891
        %5893 = vmatprep.subr.mxu0 0.0
        %v5894 = vand.u32 %v343, 4294901760
        %5895 = vmatpush2.msra.mxu0 %v5894
        %5896 = vmatprep.subr.mxu0 0.0
        %v5897 = vand.u32 %v342, 4294901760
        %5898 = vmatpush2.msra.mxu0 %v5897
        %5899 = vmatprep.subr.mxu0 0.0
        %v5900 = vand.u32 %v341, 4294901760
        %5901 = vmatpush2.msra.mxu0 %v5900
        %5902 = vmatprep.subr.mxu0 0.0
        %v5903 = vand.u32 %v340, 4294901760
        %5904 = vmatpush2.msra.mxu0 %v5903
        %5905 = vmatprep.subr.mxu0 0.0
        %v5906 = vand.u32 %v339, 4294901760
        %5907 = vmatpush2.msra.mxu0 %v5906
        %5908 = vmatprep.subr.mxu0 0.0
        %v5909 = vand.u32 %v338, 4294901760
        %5910 = vmatpush2.msra.mxu0 %v5909
        %v5911 = vand.u32 %v5003, 4294901760
        %5912 = vmatprep.mubr.f32.mxu0 %v5911
        %v5913 = vand.u32 %v5001, 4294901760
        %5914 = vmatmul.mubr.f32.gmra.mxu0 %v5913
        %v5915 = vpop.f32.mrf.mxu0
        %v5916 = vadd.f32 %v5805, %v5915
        %v5917 = vpop.f32.mrf.mxu0
        %v5918 = vand.u32 %v5007, 4294901760
        %5919 = vmatprep.mubr.f32.mxu0 %v5918
        %v5920 = vand.u32 %v5005, 4294901760
        %5921 = vmatmul.mubr.f32.gmra.mxu0 %v5920
        %v5922 = vpop.f32.mrf.mxu0
        %v5923 = vadd.f32 %v5812, %v5922
        %v5924 = vpop.f32.mrf.mxu0
        %5925 = vdwg.mxu0
        %v5926 = vrcp.pop %v5916
        %v5927 = vrcp.pop %v5923
        %5930 = vrot.lane.b32.xlu0 %v5926, 1
        %v5931 = vpop.permute.xlu0 %5930
        %5932 = vrot.lane.b32.xlu0 %v5927, 1
        %v5933 = vpop.permute.xlu0 %5932
        %v5936 = vmul.f32 %v5916, %v5931
        %v5937 = vmul.f32 %v5923, %v5933
        %v5938 = vadd.f32 %v5936, 3.8146973e-13
        %v5939 = vadd.f32 %v5937, 3.8146973e-13
        %5940 = vrot.lane.b32.xlu0 %v5926, 2
        %v5941 = vpop.permute.xlu0 %5940
        %5942 = vrot.lane.b32.xlu0 %v5927, 2
        %v5943 = vpop.permute.xlu0 %5942
        %v5946 = vmul.f32 %v5916, %v5941
        %v5947 = vmul.f32 %v5923, %v5943
        %v5948 = vadd.f32 %v5946, 3.8146973e-13
        %v5949 = vadd.f32 %v5947, 3.8146973e-13
        %5950 = vrot.lane.b32.xlu0 %v5926, 3
        %v5951 = vpop.permute.xlu0 %5950
        %5952 = vrot.lane.b32.xlu0 %v5927, 3
        %v5953 = vpop.permute.xlu0 %5952
        %v5956 = vmul.f32 %v5916, %v5951
        %v5957 = vmul.f32 %v5923, %v5953
        %v5958 = vadd.f32 %v5956, 9.671111e-06
        %v5959 = vadd.f32 %v5957, 9.671111e-06
        %v5960 = vmul.f32 %v5938, %v5938
        %v5961 = vmul.f32 %v5939, %v5939
        %v5962 = vmul.f32 %v5960, 0.9999744
        %v5963 = vmul.f32 %v5961, 0.9999744
        %5966 = vrot.lane.b32.xlu0 %v5962, 2
        %v5967 = vpop.permute.xlu0 %5966
        %5968 = vrot.lane.b32.xlu0 %v5963, 2
        %v5969 = vpop.permute.xlu0 %5968
        %v5972 = vsub.f32 %v5958, %v5967
        %v5973 = vsub.f32 %v5959, %v5969
        %5974 = vrot.lane.b32.xlu0 %v5926, 4
        %v5975 = vpop.permute.xlu0 %5974
        %5976 = vrot.lane.b32.xlu0 %v5927, 4
        %v5977 = vpop.permute.xlu0 %5976
        %v5980 = vmul.f32 %v5916, %v5975
        %v5981 = vmul.f32 %v5923, %v5977
        %v5982 = vadd.f32 %v5980, 5.684342e-21
        %v5983 = vadd.f32 %v5981, 5.684342e-21
        %5986 = vrot.lane.b32.xlu0 %v5948, 127
        %v5987 = vpop.permute.xlu0 %5986
        %5988 = vrot.lane.b32.xlu0 %v5949, 127
        %v5989 = vpop.permute.xlu0 %5988
        %v5992 = vmul.f32 %v5938, %v5987
        %v5993 = vmul.f32 %v5939, %v5989
        %v5994 = vmul.f32 %v5992, 0.9999744
        %v5995 = vmul.f32 %v5993, 0.9999744
        %5998 = vrot.lane.b32.xlu0 %v5994, 3
        %v5999 = vpop.permute.xlu0 %5998
        %6000 = vrot.lane.b32.xlu0 %v5995, 3
        %v6001 = vpop.permute.xlu0 %6000
        %v6004 = vsub.f32 %v5982, %v5999
        %v6005 = vsub.f32 %v5983, %v6001
        %6006 = vrot.lane.b32.xlu0 %v5926, 5
        %v6007 = vpop.permute.xlu0 %6006
        %6008 = vrot.lane.b32.xlu0 %v5927, 5
        %v6009 = vpop.permute.xlu0 %6008
        %v6012 = vmul.f32 %v5916, %v6007
        %v6013 = vmul.f32 %v5923, %v6009
        %v6014 = vadd.f32 %v6012, 9.671111e-06
        %v6015 = vadd.f32 %v6013, 9.671111e-06
        %v6016 = vmul.f32 %v5948, %v5948
        %v6017 = vmul.f32 %v5949, %v5949
        %v6018 = vmul.f32 %v6016, 0.9999744
        %v6019 = vmul.f32 %v6017, 0.9999744
        %6022 = vrot.lane.b32.xlu0 %v6018, 3
        %v6023 = vpop.permute.xlu0 %6022
        %6024 = vrot.lane.b32.xlu0 %v6019, 3
        %v6025 = vpop.permute.xlu0 %6024
        %v6028 = vsub.f32 %v6014, %v6023
        %v6029 = vsub.f32 %v6015, %v6025
        %6031 = vset.pattern.permute.xlu0 5
        %6032 = vperm.xlu0 %6031, %v6028
        %v6033 = vpop.permute.xlu0 %6032
        %6036 = vset.pattern.permute.xlu0 5
        %6037 = vperm.xlu0 %6036, %v6029
        %v6038 = vpop.permute.xlu0 %6037
        %v6040 = vsel %vm1449, %v6033, 0.0
        %v6041 = vsel %vm1449, %v6038, 0.0
        %6043 = vset.pattern.permute.xlu0 4
        %6044 = vperm.xlu0 %6043, %v6004
        %v6045 = vpop.permute.xlu0 %6044
        %6048 = vset.pattern.permute.xlu0 4
        %6049 = vperm.xlu0 %6048, %v6005
        %v6050 = vpop.permute.xlu0 %6049
        %v6052 = vsel %vm1448, %v6045, %v6040
        %v6053 = vsel %vm1448, %v6050, %v6041
        %6055 = vset.pattern.permute.xlu0 3
        %6056 = vperm.xlu0 %6055, %v5972
        %v6057 = vpop.permute.xlu0 %6056
        %6060 = vset.pattern.permute.xlu0 3
        %6061 = vperm.xlu0 %6060, %v5973
        %v6062 = vpop.permute.xlu0 %6061
        %v6064 = vsel %vm1445, %v6057, %v6052
        %v6065 = vsel %vm1445, %v6062, %v6053
        %6066 = vset.pattern.permute.xlu0 2
        %6067 = vperm.xlu0 %6066, %v5948
        %v6068 = vpop.permute.xlu0 %6067
        %6070 = vset.pattern.permute.xlu0 2
        %6071 = vperm.xlu0 %6070, %v5949
        %v6072 = vpop.permute.xlu0 %6071
        %v6074 = vsel %vm1444, %v6068, %v6064
        %v6075 = vsel %vm1444, %v6072, %v6065
        %6077 = vset.pattern.permute.xlu0 1
        %6078 = vperm.xlu0 %6077, %v5938
        %v6079 = vpop.permute.xlu0 %6078
        %6082 = vset.pattern.permute.xlu0 1
        %6083 = vperm.xlu0 %6082, %v5939
        %v6084 = vpop.permute.xlu0 %6083
        %v6086 = vsel %vm1443, %v6079, %v6074
        %v6087 = vsel %vm1443, %v6084, %v6075
        %s6088 = sld [smem:[#allocation3 + $0x5]]
        %s6089 = smul.f32 %s6088, %s305
        %v6090 = vstv %s6089
        %v6091 = vmul.f32 %v306, %v6090
        %v6092 = vmul.f32 %v307, %v6090
        %v6093 = vmul.f32 %v308, %v6090
        %v6094 = vmul.f32 %v309, %v6090
        %s6095 = sld [smem:[#allocation3 + $0x85]]
        %s6096 = smul.f32 %s6095, %s305
        %v6097 = vstv %s6096
        %v6098 = vmul.f32 %v310, %v6097
        %v6099 = vmul.f32 %v311, %v6097
        %v6100 = vmul.f32 %v312, %v6097
        %v6101 = vmul.f32 %v313, %v6097
        %v6102 = vadd.f32 %v6091, %v6098
        %v6103 = vadd.f32 %v6092, %v6099
        %v6104 = vadd.f32 %v6093, %v6100
        %v6105 = vadd.f32 %v6094, %v6101
        %s6106 = sld [smem:[#allocation3 + $0x105]]
        %s6107 = smul.f32 %s6106, %s305
        %v6108 = vstv %s6107
        %v6109 = vmul.f32 %v314, %v6108
        %v6110 = vmul.f32 %v315, %v6108
        %v6111 = vmul.f32 %v316, %v6108
        %v6112 = vmul.f32 %v317, %v6108
        %v6113 = vadd.f32 %v6102, %v6109
        %v6114 = vadd.f32 %v6103, %v6110
        %v6115 = vadd.f32 %v6104, %v6111
        %v6116 = vadd.f32 %v6105, %v6112
        %s6117 = sld [smem:[#allocation3 + $0x185]]
        %s6118 = smul.f32 %s6117, %s305
        %v6119 = vstv %s6118
        %v6120 = vmul.f32 %v318, %v6119
        %v6121 = vmul.f32 %v319, %v6119
        %v6122 = vmul.f32 %v320, %v6119
        %v6123 = vmul.f32 %v321, %v6119
        %v6124 = vadd.f32 %v6113, %v6120
        %v6125 = vadd.f32 %v6114, %v6121
        %v6126 = vadd.f32 %v6115, %v6122
        %v6127 = vadd.f32 %v6116, %v6123
        %s6128 = sld [smem:[#allocation8 + $0x5]]
        %s6129 = smul.f32 %s6128, %s305
        %v6130 = vstv %s6129
        %v6131 = vadd.f32 %v6124, %v6130
        %v6132 = vadd.f32 %v6125, %v6130
        %v6133 = vadd.f32 %v6126, %v6130
        %v6134 = vadd.f32 %v6127, %v6130
        %v6135 = vmax.f32 %v6131, %v6132
        %6136 = vmax.xlane.f32.xlu0 %v6135
        %v6137 = vpop.xlane.xlu0 %6136
        %v6138 = vmax.f32 %v6133, %v6134
        %6139 = vmax.xlane.f32.xlu0 %v6138
        %v6140 = vpop.xlane.xlu0 %6139
        %v6141 = vsub.f32 %v6131, %v6137
        %v6142 = vsub.f32 %v6132, %v6137
        %v6143 = vsub.f32 %v6133, %v6140
        %v6144 = vsub.f32 %v6134, %v6140
        %v6145 = vmul.f32 %v6141, 1.442695
        %v6146 = vpow.pop %v6145
        %v6147 = vmul.f32 %v6142, 1.442695
        %v6148 = vpow.pop %v6147
        %v6149 = vmul.f32 %v6143, 1.442695
        %v6150 = vpow.pop %v6149
        %v6151 = vmul.f32 %v6144, 1.442695
        %v6152 = vpow.pop %v6151
        %6153 = vmatprep.subr.mxu0 0.0
        %v6154 = vand.u32 %v337, 4294901760
        %6155 = vmatpush1.msra.mxu0 %v6154
        %6156 = vmatprep.subr.mxu0 0.0
        %v6157 = vand.u32 %v336, 4294901760
        %6158 = vmatpush1.msra.mxu0 %v6157
        %6159 = vmatprep.subr.mxu0 0.0
        %v6160 = vand.u32 %v335, 4294901760
        %6161 = vmatpush1.msra.mxu0 %v6160
        %6162 = vmatprep.subr.mxu0 0.0
        %v6163 = vand.u32 %v334, 4294901760
        %6164 = vmatpush1.msra.mxu0 %v6163
        %6165 = vmatprep.subr.mxu0 0.0
        %v6166 = vand.u32 %v333, 4294901760
        %6167 = vmatpush1.msra.mxu0 %v6166
        %6168 = vmatprep.subr.mxu0 0.0
        %v6169 = vand.u32 %v332, 4294901760
        %6170 = vmatpush1.msra.mxu0 %v6169
        %6171 = vmatprep.subr.mxu0 0.0
        %v6172 = vand.u32 %v331, 4294901760
        %6173 = vmatpush1.msra.mxu0 %v6172
        %6174 = vmatprep.subr.mxu0 0.0
        %v6175 = vand.u32 %v330, 4294901760
        %6176 = vmatpush1.msra.mxu0 %v6175
        %6177 = vmatprep.subr.mxu0 0.0
        %v6178 = vand.u32 %v329, 4294901760
        %6179 = vmatpush1.msra.mxu0 %v6178
        %6180 = vmatprep.subr.mxu0 0.0
        %v6181 = vand.u32 %v328, 4294901760
        %6182 = vmatpush1.msra.mxu0 %v6181
        %6183 = vmatprep.subr.mxu0 0.0
        %v6184 = vand.u32 %v327, 4294901760
        %6185 = vmatpush1.msra.mxu0 %v6184
        %6186 = vmatprep.subr.mxu0 0.0
        %v6187 = vand.u32 %v326, 4294901760
        %6188 = vmatpush1.msra.mxu0 %v6187
        %6189 = vmatprep.subr.mxu0 0.0
        %v6190 = vand.u32 %v325, 4294901760
        %6191 = vmatpush1.msra.mxu0 %v6190
        %6192 = vmatprep.subr.mxu0 0.0
        %v6193 = vand.u32 %v324, 4294901760
        %6194 = vmatpush1.msra.mxu0 %v6193
        %6195 = vmatprep.subr.mxu0 0.0
        %v6196 = vand.u32 %v323, 4294901760
        %6197 = vmatpush1.msra.mxu0 %v6196
        %6198 = vmatprep.subr.mxu0 0.0
        %v6199 = vand.u32 %v322, 4294901760
        %6200 = vmatpush1.msra.mxu0 %v6199
        %6201 = vmatprep.subr.mxu0 0.0
        %v6202 = vand.u32 %v353, 4294901760
        %6203 = vmatpush2.msra.mxu0 %v6202
        %6204 = vmatprep.subr.mxu0 0.0
        %v6205 = vand.u32 %v352, 4294901760
        %6206 = vmatpush2.msra.mxu0 %v6205
        %6207 = vmatprep.subr.mxu0 0.0
        %v6208 = vand.u32 %v351, 4294901760
        %6209 = vmatpush2.msra.mxu0 %v6208
        %6210 = vmatprep.subr.mxu0 0.0
        %v6211 = vand.u32 %v350, 4294901760
        %6212 = vmatpush2.msra.mxu0 %v6211
        %6213 = vmatprep.subr.mxu0 0.0
        %v6214 = vand.u32 %v349, 4294901760
        %6215 = vmatpush2.msra.mxu0 %v6214
        %6216 = vmatprep.subr.mxu0 0.0
        %v6217 = vand.u32 %v348, 4294901760
        %6218 = vmatpush2.msra.mxu0 %v6217
        %6219 = vmatprep.subr.mxu0 0.0
        %v6220 = vand.u32 %v347, 4294901760
        %6221 = vmatpush2.msra.mxu0 %v6220
        %6222 = vmatprep.subr.mxu0 0.0
        %v6223 = vand.u32 %v346, 4294901760
        %6224 = vmatpush2.msra.mxu0 %v6223
        %6225 = vmatprep.subr.mxu0 0.0
        %v6226 = vand.u32 %v345, 4294901760
        %6227 = vmatpush2.msra.mxu0 %v6226
        %6228 = vmatprep.subr.mxu0 0.0
        %v6229 = vand.u32 %v344, 4294901760
        %6230 = vmatpush2.msra.mxu0 %v6229
        %6231 = vmatprep.subr.mxu0 0.0
        %v6232 = vand.u32 %v343, 4294901760
        %6233 = vmatpush2.msra.mxu0 %v6232
        %6234 = vmatprep.subr.mxu0 0.0
        %v6235 = vand.u32 %v342, 4294901760
        %6236 = vmatpush2.msra.mxu0 %v6235
        %6237 = vmatprep.subr.mxu0 0.0
        %v6238 = vand.u32 %v341, 4294901760
        %6239 = vmatpush2.msra.mxu0 %v6238
        %6240 = vmatprep.subr.mxu0 0.0
        %v6241 = vand.u32 %v340, 4294901760
        %6242 = vmatpush2.msra.mxu0 %v6241
        %6243 = vmatprep.subr.mxu0 0.0
        %v6244 = vand.u32 %v339, 4294901760
        %6245 = vmatpush2.msra.mxu0 %v6244
        %6246 = vmatprep.subr.mxu0 0.0
        %v6247 = vand.u32 %v338, 4294901760
        %6248 = vmatpush2.msra.mxu0 %v6247
        %v6249 = vand.u32 %v6148, 4294901760
        %v6250 = vsub.f32 %v6148, %v6249
        %v6251 = vand.u32 %v6250, 4294901760
        %v6252 = vsub.f32 %v6250, %v6251
        %v6253 = vand.u32 %v6252, 4294901760
        %6254 = vmatprep.mubr.f32.mxu0 %v6253
        %v6255 = vand.u32 %v6146, 4294901760
        %v6256 = vsub.f32 %v6146, %v6255
        %v6257 = vand.u32 %v6256, 4294901760
        %v6258 = vsub.f32 %v6256, %v6257
        %v6259 = vand.u32 %v6258, 4294901760
        %6260 = vmatmul.mubr.f32.gmra.mxu0 %v6259
        %v6261 = vpop.f32.mrf.mxu0
        %v6262 = vadd.f32 0.0, %v6261
        %v6263 = vpop.f32.mrf.mxu0
        %v6264 = vand.u32 %v6152, 4294901760
        %v6265 = vsub.f32 %v6152, %v6264
        %v6266 = vand.u32 %v6265, 4294901760
        %v6267 = vsub.f32 %v6265, %v6266
        %v6268 = vand.u32 %v6267, 4294901760
        %6269 = vmatprep.mubr.f32.mxu0 %v6268
        %v6270 = vand.u32 %v6150, 4294901760
        %v6271 = vsub.f32 %v6150, %v6270
        %v6272 = vand.u32 %v6271, 4294901760
        %v6273 = vsub.f32 %v6271, %v6272
        %v6274 = vand.u32 %v6273, 4294901760
        %6275 = vmatmul.mubr.f32.gmra.mxu0 %v6274
        %v6276 = vpop.f32.mrf.mxu0
        %v6277 = vadd.f32 0.0, %v6276
        %v6278 = vpop.f32.mrf.mxu0
        %6279 = vdwg.mxu0
        %6280 = vmatprep.subr.mxu0 0.0
        %v6281 = vand.u32 %v337, 4294901760
        %v6282 = vsub.f32 %v337, %v6281
        %v6283 = vand.u32 %v6282, 4294901760
        %v6284 = vsub.f32 %v6282, %v6283
        %v6285 = vand.u32 %v6284, 4294901760
        %6286 = vmatpush1.msra.mxu0 %v6285
        %6287 = vmatprep.subr.mxu0 0.0
        %v6288 = vand.u32 %v336, 4294901760
        %v6289 = vsub.f32 %v336, %v6288
        %v6290 = vand.u32 %v6289, 4294901760
        %v6291 = vsub.f32 %v6289, %v6290
        %v6292 = vand.u32 %v6291, 4294901760
        %6293 = vmatpush1.msra.mxu0 %v6292
        %6294 = vmatprep.subr.mxu0 0.0
        %v6295 = vand.u32 %v335, 4294901760
        %v6296 = vsub.f32 %v335, %v6295
        %v6297 = vand.u32 %v6296, 4294901760
        %v6298 = vsub.f32 %v6296, %v6297
        %v6299 = vand.u32 %v6298, 4294901760
        %6300 = vmatpush1.msra.mxu0 %v6299
        %6301 = vmatprep.subr.mxu0 0.0
        %v6302 = vand.u32 %v334, 4294901760
        %v6303 = vsub.f32 %v334, %v6302
        %v6304 = vand.u32 %v6303, 4294901760
        %v6305 = vsub.f32 %v6303, %v6304
        %v6306 = vand.u32 %v6305, 4294901760
        %6307 = vmatpush1.msra.mxu0 %v6306
        %6308 = vmatprep.subr.mxu0 0.0
        %v6309 = vand.u32 %v333, 4294901760
        %v6310 = vsub.f32 %v333, %v6309
        %v6311 = vand.u32 %v6310, 4294901760
        %v6312 = vsub.f32 %v6310, %v6311
        %v6313 = vand.u32 %v6312, 4294901760
        %6314 = vmatpush1.msra.mxu0 %v6313
        %6315 = vmatprep.subr.mxu0 0.0
        %v6316 = vand.u32 %v332, 4294901760
        %v6317 = vsub.f32 %v332, %v6316
        %v6318 = vand.u32 %v6317, 4294901760
        %v6319 = vsub.f32 %v6317, %v6318
        %v6320 = vand.u32 %v6319, 4294901760
        %6321 = vmatpush1.msra.mxu0 %v6320
        %6322 = vmatprep.subr.mxu0 0.0
        %v6323 = vand.u32 %v331, 4294901760
        %v6324 = vsub.f32 %v331, %v6323
        %v6325 = vand.u32 %v6324, 4294901760
        %v6326 = vsub.f32 %v6324, %v6325
        %v6327 = vand.u32 %v6326, 4294901760
        %6328 = vmatpush1.msra.mxu0 %v6327
        %6329 = vmatprep.subr.mxu0 0.0
        %v6330 = vand.u32 %v330, 4294901760
        %v6331 = vsub.f32 %v330, %v6330
        %v6332 = vand.u32 %v6331, 4294901760
        %v6333 = vsub.f32 %v6331, %v6332
        %v6334 = vand.u32 %v6333, 4294901760
        %6335 = vmatpush1.msra.mxu0 %v6334
        %6336 = vmatprep.subr.mxu0 0.0
        %v6337 = vand.u32 %v329, 4294901760
        %v6338 = vsub.f32 %v329, %v6337
        %v6339 = vand.u32 %v6338, 4294901760
        %v6340 = vsub.f32 %v6338, %v6339
        %v6341 = vand.u32 %v6340, 4294901760
        %6342 = vmatpush1.msra.mxu0 %v6341
        %6343 = vmatprep.subr.mxu0 0.0
        %v6344 = vand.u32 %v328, 4294901760
        %v6345 = vsub.f32 %v328, %v6344
        %v6346 = vand.u32 %v6345, 4294901760
        %v6347 = vsub.f32 %v6345, %v6346
        %v6348 = vand.u32 %v6347, 4294901760
        %6349 = vmatpush1.msra.mxu0 %v6348
        %6350 = vmatprep.subr.mxu0 0.0
        %v6351 = vand.u32 %v327, 4294901760
        %v6352 = vsub.f32 %v327, %v6351
        %v6353 = vand.u32 %v6352, 4294901760
        %v6354 = vsub.f32 %v6352, %v6353
        %v6355 = vand.u32 %v6354, 4294901760
        %6356 = vmatpush1.msra.mxu0 %v6355
        %6357 = vmatprep.subr.mxu0 0.0
        %v6358 = vand.u32 %v326, 4294901760
        %v6359 = vsub.f32 %v326, %v6358
        %v6360 = vand.u32 %v6359, 4294901760
        %v6361 = vsub.f32 %v6359, %v6360
        %v6362 = vand.u32 %v6361, 4294901760
        %6363 = vmatpush1.msra.mxu0 %v6362
        %6364 = vmatprep.subr.mxu0 0.0
        %v6365 = vand.u32 %v325, 4294901760
        %v6366 = vsub.f32 %v325, %v6365
        %v6367 = vand.u32 %v6366, 4294901760
        %v6368 = vsub.f32 %v6366, %v6367
        %v6369 = vand.u32 %v6368, 4294901760
        %6370 = vmatpush1.msra.mxu0 %v6369
        %6371 = vmatprep.subr.mxu0 0.0
        %v6372 = vand.u32 %v324, 4294901760
        %v6373 = vsub.f32 %v324, %v6372
        %v6374 = vand.u32 %v6373, 4294901760
        %v6375 = vsub.f32 %v6373, %v6374
        %v6376 = vand.u32 %v6375, 4294901760
        %6377 = vmatpush1.msra.mxu0 %v6376
        %6378 = vmatprep.subr.mxu0 0.0
        %v6379 = vand.u32 %v323, 4294901760
        %v6380 = vsub.f32 %v323, %v6379
        %v6381 = vand.u32 %v6380, 4294901760
        %v6382 = vsub.f32 %v6380, %v6381
        %v6383 = vand.u32 %v6382, 4294901760
        %6384 = vmatpush1.msra.mxu0 %v6383
        %6385 = vmatprep.subr.mxu0 0.0
        %v6386 = vand.u32 %v322, 4294901760
        %v6387 = vsub.f32 %v322, %v6386
        %v6388 = vand.u32 %v6387, 4294901760
        %v6389 = vsub.f32 %v6387, %v6388
        %v6390 = vand.u32 %v6389, 4294901760
        %6391 = vmatpush1.msra.mxu0 %v6390
        %6392 = vmatprep.subr.mxu0 0.0
        %v6393 = vand.u32 %v353, 4294901760
        %v6394 = vsub.f32 %v353, %v6393
        %v6395 = vand.u32 %v6394, 4294901760
        %v6396 = vsub.f32 %v6394, %v6395
        %v6397 = vand.u32 %v6396, 4294901760
        %6398 = vmatpush2.msra.mxu0 %v6397
        %6399 = vmatprep.subr.mxu0 0.0
        %v6400 = vand.u32 %v352, 4294901760
        %v6401 = vsub.f32 %v352, %v6400
        %v6402 = vand.u32 %v6401, 4294901760
        %v6403 = vsub.f32 %v6401, %v6402
        %v6404 = vand.u32 %v6403, 4294901760
        %6405 = vmatpush2.msra.mxu0 %v6404
        %6406 = vmatprep.subr.mxu0 0.0
        %v6407 = vand.u32 %v351, 4294901760
        %v6408 = vsub.f32 %v351, %v6407
        %v6409 = vand.u32 %v6408, 4294901760
        %v6410 = vsub.f32 %v6408, %v6409
        %v6411 = vand.u32 %v6410, 4294901760
        %6412 = vmatpush2.msra.mxu0 %v6411
        %6413 = vmatprep.subr.mxu0 0.0
        %v6414 = vand.u32 %v350, 4294901760
        %v6415 = vsub.f32 %v350, %v6414
        %v6416 = vand.u32 %v6415, 4294901760
        %v6417 = vsub.f32 %v6415, %v6416
        %v6418 = vand.u32 %v6417, 4294901760
        %6419 = vmatpush2.msra.mxu0 %v6418
        %6420 = vmatprep.subr.mxu0 0.0
        %v6421 = vand.u32 %v349, 4294901760
        %v6422 = vsub.f32 %v349, %v6421
        %v6423 = vand.u32 %v6422, 4294901760
        %v6424 = vsub.f32 %v6422, %v6423
        %v6425 = vand.u32 %v6424, 4294901760
        %6426 = vmatpush2.msra.mxu0 %v6425
        %6427 = vmatprep.subr.mxu0 0.0
        %v6428 = vand.u32 %v348, 4294901760
        %v6429 = vsub.f32 %v348, %v6428
        %v6430 = vand.u32 %v6429, 4294901760
        %v6431 = vsub.f32 %v6429, %v6430
        %v6432 = vand.u32 %v6431, 4294901760
        %6433 = vmatpush2.msra.mxu0 %v6432
        %6434 = vmatprep.subr.mxu0 0.0
        %v6435 = vand.u32 %v347, 4294901760
        %v6436 = vsub.f32 %v347, %v6435
        %v6437 = vand.u32 %v6436, 4294901760
        %v6438 = vsub.f32 %v6436, %v6437
        %v6439 = vand.u32 %v6438, 4294901760
        %6440 = vmatpush2.msra.mxu0 %v6439
        %6441 = vmatprep.subr.mxu0 0.0
        %v6442 = vand.u32 %v346, 4294901760
        %v6443 = vsub.f32 %v346, %v6442
        %v6444 = vand.u32 %v6443, 4294901760
        %v6445 = vsub.f32 %v6443, %v6444
        %v6446 = vand.u32 %v6445, 4294901760
        %6447 = vmatpush2.msra.mxu0 %v6446
        %6448 = vmatprep.subr.mxu0 0.0
        %v6449 = vand.u32 %v345, 4294901760
        %v6450 = vsub.f32 %v345, %v6449
        %v6451 = vand.u32 %v6450, 4294901760
        %v6452 = vsub.f32 %v6450, %v6451
        %v6453 = vand.u32 %v6452, 4294901760
        %6454 = vmatpush2.msra.mxu0 %v6453
        %6455 = vmatprep.subr.mxu0 0.0
        %v6456 = vand.u32 %v344, 4294901760
        %v6457 = vsub.f32 %v344, %v6456
        %v6458 = vand.u32 %v6457, 4294901760
        %v6459 = vsub.f32 %v6457, %v6458
        %v6460 = vand.u32 %v6459, 4294901760
        %6461 = vmatpush2.msra.mxu0 %v6460
        %6462 = vmatprep.subr.mxu0 0.0
        %v6463 = vand.u32 %v343, 4294901760
        %v6464 = vsub.f32 %v343, %v6463
        %v6465 = vand.u32 %v6464, 4294901760
        %v6466 = vsub.f32 %v6464, %v6465
        %v6467 = vand.u32 %v6466, 4294901760
        %6468 = vmatpush2.msra.mxu0 %v6467
        %6469 = vmatprep.subr.mxu0 0.0
        %v6470 = vand.u32 %v342, 4294901760
        %v6471 = vsub.f32 %v342, %v6470
        %v6472 = vand.u32 %v6471, 4294901760
        %v6473 = vsub.f32 %v6471, %v6472
        %v6474 = vand.u32 %v6473, 4294901760
        %6475 = vmatpush2.msra.mxu0 %v6474
        %6476 = vmatprep.subr.mxu0 0.0
        %v6477 = vand.u32 %v341, 4294901760
        %v6478 = vsub.f32 %v341, %v6477
        %v6479 = vand.u32 %v6478, 4294901760
        %v6480 = vsub.f32 %v6478, %v6479
        %v6481 = vand.u32 %v6480, 4294901760
        %6482 = vmatpush2.msra.mxu0 %v6481
        %6483 = vmatprep.subr.mxu0 0.0
        %v6484 = vand.u32 %v340, 4294901760
        %v6485 = vsub.f32 %v340, %v6484
        %v6486 = vand.u32 %v6485, 4294901760
        %v6487 = vsub.f32 %v6485, %v6486
        %v6488 = vand.u32 %v6487, 4294901760
        %6489 = vmatpush2.msra.mxu0 %v6488
        %6490 = vmatprep.subr.mxu0 0.0
        %v6491 = vand.u32 %v339, 4294901760
        %v6492 = vsub.f32 %v339, %v6491
        %v6493 = vand.u32 %v6492, 4294901760
        %v6494 = vsub.f32 %v6492, %v6493
        %v6495 = vand.u32 %v6494, 4294901760
        %6496 = vmatpush2.msra.mxu0 %v6495
        %6497 = vmatprep.subr.mxu0 0.0
        %v6498 = vand.u32 %v338, 4294901760
        %v6499 = vsub.f32 %v338, %v6498
        %v6500 = vand.u32 %v6499, 4294901760
        %v6501 = vsub.f32 %v6499, %v6500
        %v6502 = vand.u32 %v6501, 4294901760
        %6503 = vmatpush2.msra.mxu0 %v6502
        %v6504 = vand.u32 %v6148, 4294901760
        %6505 = vmatprep.mubr.f32.mxu0 %v6504
        %v6506 = vand.u32 %v6146, 4294901760
        %6507 = vmatmul.mubr.f32.gmra.mxu0 %v6506
        %v6508 = vpop.f32.mrf.mxu0
        %v6509 = vadd.f32 %v6262, %v6508
        %v6510 = vpop.f32.mrf.mxu0
        %v6511 = vand.u32 %v6152, 4294901760
        %6512 = vmatprep.mubr.f32.mxu0 %v6511
        %v6513 = vand.u32 %v6150, 4294901760
        %6514 = vmatmul.mubr.f32.gmra.mxu0 %v6513
        %v6515 = vpop.f32.mrf.mxu0
        %v6516 = vadd.f32 %v6277, %v6515
        %v6517 = vpop.f32.mrf.mxu0
        %6518 = vdwg.mxu0
        %6519 = vmatprep.subr.mxu0 0.0
        %v6520 = vand.u32 %v337, 4294901760
        %v6521 = vsub.f32 %v337, %v6520
        %6522 = vmatpush1.msra.mxu0 %v6521
        %6523 = vmatprep.subr.mxu0 0.0
        %v6524 = vand.u32 %v336, 4294901760
        %v6525 = vsub.f32 %v336, %v6524
        %6526 = vmatpush1.msra.mxu0 %v6525
        %6527 = vmatprep.subr.mxu0 0.0
        %v6528 = vand.u32 %v335, 4294901760
        %v6529 = vsub.f32 %v335, %v6528
        %6530 = vmatpush1.msra.mxu0 %v6529
        %6531 = vmatprep.subr.mxu0 0.0
        %v6532 = vand.u32 %v334, 4294901760
        %v6533 = vsub.f32 %v334, %v6532
        %6534 = vmatpush1.msra.mxu0 %v6533
        %6535 = vmatprep.subr.mxu0 0.0
        %v6536 = vand.u32 %v333, 4294901760
        %v6537 = vsub.f32 %v333, %v6536
        %6538 = vmatpush1.msra.mxu0 %v6537
        %6539 = vmatprep.subr.mxu0 0.0
        %v6540 = vand.u32 %v332, 4294901760
        %v6541 = vsub.f32 %v332, %v6540
        %6542 = vmatpush1.msra.mxu0 %v6541
        %6543 = vmatprep.subr.mxu0 0.0
        %v6544 = vand.u32 %v331, 4294901760
        %v6545 = vsub.f32 %v331, %v6544
        %6546 = vmatpush1.msra.mxu0 %v6545
        %6547 = vmatprep.subr.mxu0 0.0
        %v6548 = vand.u32 %v330, 4294901760
        %v6549 = vsub.f32 %v330, %v6548
        %6550 = vmatpush1.msra.mxu0 %v6549
        %6551 = vmatprep.subr.mxu0 0.0
        %v6552 = vand.u32 %v329, 4294901760
        %v6553 = vsub.f32 %v329, %v6552
        %6554 = vmatpush1.msra.mxu0 %v6553
        %6555 = vmatprep.subr.mxu0 0.0
        %v6556 = vand.u32 %v328, 4294901760
        %v6557 = vsub.f32 %v328, %v6556
        %6558 = vmatpush1.msra.mxu0 %v6557
        %6559 = vmatprep.subr.mxu0 0.0
        %v6560 = vand.u32 %v327, 4294901760
        %v6561 = vsub.f32 %v327, %v6560
        %6562 = vmatpush1.msra.mxu0 %v6561
        %6563 = vmatprep.subr.mxu0 0.0
        %v6564 = vand.u32 %v326, 4294901760
        %v6565 = vsub.f32 %v326, %v6564
        %6566 = vmatpush1.msra.mxu0 %v6565
        %6567 = vmatprep.subr.mxu0 0.0
        %v6568 = vand.u32 %v325, 4294901760
        %v6569 = vsub.f32 %v325, %v6568
        %6570 = vmatpush1.msra.mxu0 %v6569
        %6571 = vmatprep.subr.mxu0 0.0
        %v6572 = vand.u32 %v324, 4294901760
        %v6573 = vsub.f32 %v324, %v6572
        %6574 = vmatpush1.msra.mxu0 %v6573
        %6575 = vmatprep.subr.mxu0 0.0
        %v6576 = vand.u32 %v323, 4294901760
        %v6577 = vsub.f32 %v323, %v6576
        %6578 = vmatpush1.msra.mxu0 %v6577
        %6579 = vmatprep.subr.mxu0 0.0
        %v6580 = vand.u32 %v322, 4294901760
        %v6581 = vsub.f32 %v322, %v6580
        %6582 = vmatpush1.msra.mxu0 %v6581
        %6583 = vmatprep.subr.mxu0 0.0
        %v6584 = vand.u32 %v353, 4294901760
        %v6585 = vsub.f32 %v353, %v6584
        %6586 = vmatpush2.msra.mxu0 %v6585
        %6587 = vmatprep.subr.mxu0 0.0
        %v6588 = vand.u32 %v352, 4294901760
        %v6589 = vsub.f32 %v352, %v6588
        %6590 = vmatpush2.msra.mxu0 %v6589
        %6591 = vmatprep.subr.mxu0 0.0
        %v6592 = vand.u32 %v351, 4294901760
        %v6593 = vsub.f32 %v351, %v6592
        %6594 = vmatpush2.msra.mxu0 %v6593
        %6595 = vmatprep.subr.mxu0 0.0
        %v6596 = vand.u32 %v350, 4294901760
        %v6597 = vsub.f32 %v350, %v6596
        %6598 = vmatpush2.msra.mxu0 %v6597
        %6599 = vmatprep.subr.mxu0 0.0
        %v6600 = vand.u32 %v349, 4294901760
        %v6601 = vsub.f32 %v349, %v6600
        %6602 = vmatpush2.msra.mxu0 %v6601
        %6603 = vmatprep.subr.mxu0 0.0
        %v6604 = vand.u32 %v348, 4294901760
        %v6605 = vsub.f32 %v348, %v6604
        %6606 = vmatpush2.msra.mxu0 %v6605
        %6607 = vmatprep.subr.mxu0 0.0
        %v6608 = vand.u32 %v347, 4294901760
        %v6609 = vsub.f32 %v347, %v6608
        %6610 = vmatpush2.msra.mxu0 %v6609
        %6611 = vmatprep.subr.mxu0 0.0
        %v6612 = vand.u32 %v346, 4294901760
        %v6613 = vsub.f32 %v346, %v6612
        %6614 = vmatpush2.msra.mxu0 %v6613
        %6615 = vmatprep.subr.mxu0 0.0
        %v6616 = vand.u32 %v345, 4294901760
        %v6617 = vsub.f32 %v345, %v6616
        %6618 = vmatpush2.msra.mxu0 %v6617
        %6619 = vmatprep.subr.mxu0 0.0
        %v6620 = vand.u32 %v344, 4294901760
        %v6621 = vsub.f32 %v344, %v6620
        %6622 = vmatpush2.msra.mxu0 %v6621
        %6623 = vmatprep.subr.mxu0 0.0
        %v6624 = vand.u32 %v343, 4294901760
        %v6625 = vsub.f32 %v343, %v6624
        %6626 = vmatpush2.msra.mxu0 %v6625
        %6627 = vmatprep.subr.mxu0 0.0
        %v6628 = vand.u32 %v342, 4294901760
        %v6629 = vsub.f32 %v342, %v6628
        %6630 = vmatpush2.msra.mxu0 %v6629
        %6631 = vmatprep.subr.mxu0 0.0
        %v6632 = vand.u32 %v341, 4294901760
        %v6633 = vsub.f32 %v341, %v6632
        %6634 = vmatpush2.msra.mxu0 %v6633
        %6635 = vmatprep.subr.mxu0 0.0
        %v6636 = vand.u32 %v340, 4294901760
        %v6637 = vsub.f32 %v340, %v6636
        %6638 = vmatpush2.msra.mxu0 %v6637
        %6639 = vmatprep.subr.mxu0 0.0
        %v6640 = vand.u32 %v339, 4294901760
        %v6641 = vsub.f32 %v339, %v6640
        %6642 = vmatpush2.msra.mxu0 %v6641
        %6643 = vmatprep.subr.mxu0 0.0
        %v6644 = vand.u32 %v338, 4294901760
        %v6645 = vsub.f32 %v338, %v6644
        %6646 = vmatpush2.msra.mxu0 %v6645
        %v6647 = vand.u32 %v6148, 4294901760
        %v6648 = vsub.f32 %v6148, %v6647
        %6649 = vmatprep.mubr.f32.mxu0 %v6648
        %v6650 = vand.u32 %v6146, 4294901760
        %v6651 = vsub.f32 %v6146, %v6650
        %6652 = vmatmul.mubr.f32.gmra.mxu0 %v6651
        %v6653 = vpop.f32.mrf.mxu0
        %v6654 = vadd.f32 %v6509, %v6653
        %v6655 = vpop.f32.mrf.mxu0
        %v6656 = vand.u32 %v6152, 4294901760
        %v6657 = vsub.f32 %v6152, %v6656
        %6658 = vmatprep.mubr.f32.mxu0 %v6657
        %v6659 = vand.u32 %v6150, 4294901760
        %v6660 = vsub.f32 %v6150, %v6659
        %6661 = vmatmul.mubr.f32.gmra.mxu0 %v6660
        %v6662 = vpop.f32.mrf.mxu0
        %v6663 = vadd.f32 %v6516, %v6662
        %v6664 = vpop.f32.mrf.mxu0
        %6665 = vdwg.mxu0
        %6666 = vmatprep.subr.mxu0 0.0
        %v6667 = vand.u32 %v337, 4294901760
        %6668 = vmatpush1.msra.mxu0 %v6667
        %6669 = vmatprep.subr.mxu0 0.0
        %v6670 = vand.u32 %v336, 4294901760
        %6671 = vmatpush1.msra.mxu0 %v6670
        %6672 = vmatprep.subr.mxu0 0.0
        %v6673 = vand.u32 %v335, 4294901760
        %6674 = vmatpush1.msra.mxu0 %v6673
        %6675 = vmatprep.subr.mxu0 0.0
        %v6676 = vand.u32 %v334, 4294901760
        %6677 = vmatpush1.msra.mxu0 %v6676
        %6678 = vmatprep.subr.mxu0 0.0
        %v6679 = vand.u32 %v333, 4294901760
        %6680 = vmatpush1.msra.mxu0 %v6679
        %6681 = vmatprep.subr.mxu0 0.0
        %v6682 = vand.u32 %v332, 4294901760
        %6683 = vmatpush1.msra.mxu0 %v6682
        %6684 = vmatprep.subr.mxu0 0.0
        %v6685 = vand.u32 %v331, 4294901760
        %6686 = vmatpush1.msra.mxu0 %v6685
        %6687 = vmatprep.subr.mxu0 0.0
        %v6688 = vand.u32 %v330, 4294901760
        %6689 = vmatpush1.msra.mxu0 %v6688
        %6690 = vmatprep.subr.mxu0 0.0
        %v6691 = vand.u32 %v329, 4294901760
        %6692 = vmatpush1.msra.mxu0 %v6691
        %6693 = vmatprep.subr.mxu0 0.0
        %v6694 = vand.u32 %v328, 4294901760
        %6695 = vmatpush1.msra.mxu0 %v6694
        %6696 = vmatprep.subr.mxu0 0.0
        %v6697 = vand.u32 %v327, 4294901760
        %6698 = vmatpush1.msra.mxu0 %v6697
        %6699 = vmatprep.subr.mxu0 0.0
        %v6700 = vand.u32 %v326, 4294901760
        %6701 = vmatpush1.msra.mxu0 %v6700
        %6702 = vmatprep.subr.mxu0 0.0
        %v6703 = vand.u32 %v325, 4294901760
        %6704 = vmatpush1.msra.mxu0 %v6703
        %6705 = vmatprep.subr.mxu0 0.0
        %v6706 = vand.u32 %v324, 4294901760
        %6707 = vmatpush1.msra.mxu0 %v6706
        %6708 = vmatprep.subr.mxu0 0.0
        %v6709 = vand.u32 %v323, 4294901760
        %6710 = vmatpush1.msra.mxu0 %v6709
        %6711 = vmatprep.subr.mxu0 0.0
        %v6712 = vand.u32 %v322, 4294901760
        %6713 = vmatpush1.msra.mxu0 %v6712
        %6714 = vmatprep.subr.mxu0 0.0
        %v6715 = vand.u32 %v353, 4294901760
        %6716 = vmatpush2.msra.mxu0 %v6715
        %6717 = vmatprep.subr.mxu0 0.0
        %v6718 = vand.u32 %v352, 4294901760
        %6719 = vmatpush2.msra.mxu0 %v6718
        %6720 = vmatprep.subr.mxu0 0.0
        %v6721 = vand.u32 %v351, 4294901760
        %6722 = vmatpush2.msra.mxu0 %v6721
        %6723 = vmatprep.subr.mxu0 0.0
        %v6724 = vand.u32 %v350, 4294901760
        %6725 = vmatpush2.msra.mxu0 %v6724
        %6726 = vmatprep.subr.mxu0 0.0
        %v6727 = vand.u32 %v349, 4294901760
        %6728 = vmatpush2.msra.mxu0 %v6727
        %6729 = vmatprep.subr.mxu0 0.0
        %v6730 = vand.u32 %v348, 4294901760
        %6731 = vmatpush2.msra.mxu0 %v6730
        %6732 = vmatprep.subr.mxu0 0.0
        %v6733 = vand.u32 %v347, 4294901760
        %6734 = vmatpush2.msra.mxu0 %v6733
        %6735 = vmatprep.subr.mxu0 0.0
        %v6736 = vand.u32 %v346, 4294901760
        %6737 = vmatpush2.msra.mxu0 %v6736
        %6738 = vmatprep.subr.mxu0 0.0
        %v6739 = vand.u32 %v345, 4294901760
        %6740 = vmatpush2.msra.mxu0 %v6739
        %6741 = vmatprep.subr.mxu0 0.0
        %v6742 = vand.u32 %v344, 4294901760
        %6743 = vmatpush2.msra.mxu0 %v6742
        %6744 = vmatprep.subr.mxu0 0.0
        %v6745 = vand.u32 %v343, 4294901760
        %6746 = vmatpush2.msra.mxu0 %v6745
        %6747 = vmatprep.subr.mxu0 0.0
        %v6748 = vand.u32 %v342, 4294901760
        %6749 = vmatpush2.msra.mxu0 %v6748
        %6750 = vmatprep.subr.mxu0 0.0
        %v6751 = vand.u32 %v341, 4294901760
        %6752 = vmatpush2.msra.mxu0 %v6751
        %6753 = vmatprep.subr.mxu0 0.0
        %v6754 = vand.u32 %v340, 4294901760
        %6755 = vmatpush2.msra.mxu0 %v6754
        %6756 = vmatprep.subr.mxu0 0.0
        %v6757 = vand.u32 %v339, 4294901760
        %6758 = vmatpush2.msra.mxu0 %v6757
        %6759 = vmatprep.subr.mxu0 0.0
        %v6760 = vand.u32 %v338, 4294901760
        %6761 = vmatpush2.msra.mxu0 %v6760
        %v6762 = vand.u32 %v6148, 4294901760
        %v6763 = vsub.f32 %v6148, %v6762
        %v6764 = vand.u32 %v6763, 4294901760
        %6765 = vmatprep.mubr.f32.mxu0 %v6764
        %v6766 = vand.u32 %v6146, 4294901760
        %v6767 = vsub.f32 %v6146, %v6766
        %v6768 = vand.u32 %v6767, 4294901760
        %6769 = vmatmul.mubr.f32.gmra.mxu0 %v6768
        %v6770 = vpop.f32.mrf.mxu0
        %v6771 = vadd.f32 %v6654, %v6770
        %v6772 = vpop.f32.mrf.mxu0
        %v6773 = vand.u32 %v6152, 4294901760
        %v6774 = vsub.f32 %v6152, %v6773
        %v6775 = vand.u32 %v6774, 4294901760
        %6776 = vmatprep.mubr.f32.mxu0 %v6775
        %v6777 = vand.u32 %v6150, 4294901760
        %v6778 = vsub.f32 %v6150, %v6777
        %v6779 = vand.u32 %v6778, 4294901760
        %6780 = vmatmul.mubr.f32.gmra.mxu0 %v6779
        %v6781 = vpop.f32.mrf.mxu0
        %v6782 = vadd.f32 %v6663, %v6781
        %v6783 = vpop.f32.mrf.mxu0
        %6784 = vdwg.mxu0
        %6785 = vmatprep.subr.mxu0 0.0
        %v6786 = vand.u32 %v337, 4294901760
        %v6787 = vsub.f32 %v337, %v6786
        %v6788 = vand.u32 %v6787, 4294901760
        %6789 = vmatpush1.msra.mxu0 %v6788
        %6790 = vmatprep.subr.mxu0 0.0
        %v6791 = vand.u32 %v336, 4294901760
        %v6792 = vsub.f32 %v336, %v6791
        %v6793 = vand.u32 %v6792, 4294901760
        %6794 = vmatpush1.msra.mxu0 %v6793
        %6795 = vmatprep.subr.mxu0 0.0
        %v6796 = vand.u32 %v335, 4294901760
        %v6797 = vsub.f32 %v335, %v6796
        %v6798 = vand.u32 %v6797, 4294901760
        %6799 = vmatpush1.msra.mxu0 %v6798
        %6800 = vmatprep.subr.mxu0 0.0
        %v6801 = vand.u32 %v334, 4294901760
        %v6802 = vsub.f32 %v334, %v6801
        %v6803 = vand.u32 %v6802, 4294901760
        %6804 = vmatpush1.msra.mxu0 %v6803
        %6805 = vmatprep.subr.mxu0 0.0
        %v6806 = vand.u32 %v333, 4294901760
        %v6807 = vsub.f32 %v333, %v6806
        %v6808 = vand.u32 %v6807, 4294901760
        %6809 = vmatpush1.msra.mxu0 %v6808
        %6810 = vmatprep.subr.mxu0 0.0
        %v6811 = vand.u32 %v332, 4294901760
        %v6812 = vsub.f32 %v332, %v6811
        %v6813 = vand.u32 %v6812, 4294901760
        %6814 = vmatpush1.msra.mxu0 %v6813
        %6815 = vmatprep.subr.mxu0 0.0
        %v6816 = vand.u32 %v331, 4294901760
        %v6817 = vsub.f32 %v331, %v6816
        %v6818 = vand.u32 %v6817, 4294901760
        %6819 = vmatpush1.msra.mxu0 %v6818
        %6820 = vmatprep.subr.mxu0 0.0
        %v6821 = vand.u32 %v330, 4294901760
        %v6822 = vsub.f32 %v330, %v6821
        %v6823 = vand.u32 %v6822, 4294901760
        %6824 = vmatpush1.msra.mxu0 %v6823
        %6825 = vmatprep.subr.mxu0 0.0
        %v6826 = vand.u32 %v329, 4294901760
        %v6827 = vsub.f32 %v329, %v6826
        %v6828 = vand.u32 %v6827, 4294901760
        %6829 = vmatpush1.msra.mxu0 %v6828
        %6830 = vmatprep.subr.mxu0 0.0
        %v6831 = vand.u32 %v328, 4294901760
        %v6832 = vsub.f32 %v328, %v6831
        %v6833 = vand.u32 %v6832, 4294901760
        %6834 = vmatpush1.msra.mxu0 %v6833
        %6835 = vmatprep.subr.mxu0 0.0
        %v6836 = vand.u32 %v327, 4294901760
        %v6837 = vsub.f32 %v327, %v6836
        %v6838 = vand.u32 %v6837, 4294901760
        %6839 = vmatpush1.msra.mxu0 %v6838
        %6840 = vmatprep.subr.mxu0 0.0
        %v6841 = vand.u32 %v326, 4294901760
        %v6842 = vsub.f32 %v326, %v6841
        %v6843 = vand.u32 %v6842, 4294901760
        %6844 = vmatpush1.msra.mxu0 %v6843
        %6845 = vmatprep.subr.mxu0 0.0
        %v6846 = vand.u32 %v325, 4294901760
        %v6847 = vsub.f32 %v325, %v6846
        %v6848 = vand.u32 %v6847, 4294901760
        %6849 = vmatpush1.msra.mxu0 %v6848
        %6850 = vmatprep.subr.mxu0 0.0
        %v6851 = vand.u32 %v324, 4294901760
        %v6852 = vsub.f32 %v324, %v6851
        %v6853 = vand.u32 %v6852, 4294901760
        %6854 = vmatpush1.msra.mxu0 %v6853
        %6855 = vmatprep.subr.mxu0 0.0
        %v6856 = vand.u32 %v323, 4294901760
        %v6857 = vsub.f32 %v323, %v6856
        %v6858 = vand.u32 %v6857, 4294901760
        %6859 = vmatpush1.msra.mxu0 %v6858
        %6860 = vmatprep.subr.mxu0 0.0
        %v6861 = vand.u32 %v322, 4294901760
        %v6862 = vsub.f32 %v322, %v6861
        %v6863 = vand.u32 %v6862, 4294901760
        %6864 = vmatpush1.msra.mxu0 %v6863
        %6865 = vmatprep.subr.mxu0 0.0
        %v6866 = vand.u32 %v353, 4294901760
        %v6867 = vsub.f32 %v353, %v6866
        %v6868 = vand.u32 %v6867, 4294901760
        %6869 = vmatpush2.msra.mxu0 %v6868
        %6870 = vmatprep.subr.mxu0 0.0
        %v6871 = vand.u32 %v352, 4294901760
        %v6872 = vsub.f32 %v352, %v6871
        %v6873 = vand.u32 %v6872, 4294901760
        %6874 = vmatpush2.msra.mxu0 %v6873
        %6875 = vmatprep.subr.mxu0 0.0
        %v6876 = vand.u32 %v351, 4294901760
        %v6877 = vsub.f32 %v351, %v6876
        %v6878 = vand.u32 %v6877, 4294901760
        %6879 = vmatpush2.msra.mxu0 %v6878
        %6880 = vmatprep.subr.mxu0 0.0
        %v6881 = vand.u32 %v350, 4294901760
        %v6882 = vsub.f32 %v350, %v6881
        %v6883 = vand.u32 %v6882, 4294901760
        %6884 = vmatpush2.msra.mxu0 %v6883
        %6885 = vmatprep.subr.mxu0 0.0
        %v6886 = vand.u32 %v349, 4294901760
        %v6887 = vsub.f32 %v349, %v6886
        %v6888 = vand.u32 %v6887, 4294901760
        %6889 = vmatpush2.msra.mxu0 %v6888
        %6890 = vmatprep.subr.mxu0 0.0
        %v6891 = vand.u32 %v348, 4294901760
        %v6892 = vsub.f32 %v348, %v6891
        %v6893 = vand.u32 %v6892, 4294901760
        %6894 = vmatpush2.msra.mxu0 %v6893
        %6895 = vmatprep.subr.mxu0 0.0
        %v6896 = vand.u32 %v347, 4294901760
        %v6897 = vsub.f32 %v347, %v6896
        %v6898 = vand.u32 %v6897, 4294901760
        %6899 = vmatpush2.msra.mxu0 %v6898
        %6900 = vmatprep.subr.mxu0 0.0
        %v6901 = vand.u32 %v346, 4294901760
        %v6902 = vsub.f32 %v346, %v6901
        %v6903 = vand.u32 %v6902, 4294901760
        %6904 = vmatpush2.msra.mxu0 %v6903
        %6905 = vmatprep.subr.mxu0 0.0
        %v6906 = vand.u32 %v345, 4294901760
        %v6907 = vsub.f32 %v345, %v6906
        %v6908 = vand.u32 %v6907, 4294901760
        %6909 = vmatpush2.msra.mxu0 %v6908
        %6910 = vmatprep.subr.mxu0 0.0
        %v6911 = vand.u32 %v344, 4294901760
        %v6912 = vsub.f32 %v344, %v6911
        %v6913 = vand.u32 %v6912, 4294901760
        %6914 = vmatpush2.msra.mxu0 %v6913
        %6915 = vmatprep.subr.mxu0 0.0
        %v6916 = vand.u32 %v343, 4294901760
        %v6917 = vsub.f32 %v343, %v6916
        %v6918 = vand.u32 %v6917, 4294901760
        %6919 = vmatpush2.msra.mxu0 %v6918
        %6920 = vmatprep.subr.mxu0 0.0
        %v6921 = vand.u32 %v342, 4294901760
        %v6922 = vsub.f32 %v342, %v6921
        %v6923 = vand.u32 %v6922, 4294901760
        %6924 = vmatpush2.msra.mxu0 %v6923
        %6925 = vmatprep.subr.mxu0 0.0
        %v6926 = vand.u32 %v341, 4294901760
        %v6927 = vsub.f32 %v341, %v6926
        %v6928 = vand.u32 %v6927, 4294901760
        %6929 = vmatpush2.msra.mxu0 %v6928
        %6930 = vmatprep.subr.mxu0 0.0
        %v6931 = vand.u32 %v340, 4294901760
        %v6932 = vsub.f32 %v340, %v6931
        %v6933 = vand.u32 %v6932, 4294901760
        %6934 = vmatpush2.msra.mxu0 %v6933
        %6935 = vmatprep.subr.mxu0 0.0
        %v6936 = vand.u32 %v339, 4294901760
        %v6937 = vsub.f32 %v339, %v6936
        %v6938 = vand.u32 %v6937, 4294901760
        %6939 = vmatpush2.msra.mxu0 %v6938
        %6940 = vmatprep.subr.mxu0 0.0
        %v6941 = vand.u32 %v338, 4294901760
        %v6942 = vsub.f32 %v338, %v6941
        %v6943 = vand.u32 %v6942, 4294901760
        %6944 = vmatpush2.msra.mxu0 %v6943
        %v6945 = vand.u32 %v6148, 4294901760
        %6946 = vmatprep.mubr.f32.mxu0 %v6945
        %v6947 = vand.u32 %v6146, 4294901760
        %6948 = vmatmul.mubr.f32.gmra.mxu0 %v6947
        %v6949 = vpop.f32.mrf.mxu0
        %v6950 = vadd.f32 %v6771, %v6949
        %v6951 = vpop.f32.mrf.mxu0
        %v6952 = vand.u32 %v6152, 4294901760
        %6953 = vmatprep.mubr.f32.mxu0 %v6952
        %v6954 = vand.u32 %v6150, 4294901760
        %6955 = vmatmul.mubr.f32.gmra.mxu0 %v6954
        %v6956 = vpop.f32.mrf.mxu0
        %v6957 = vadd.f32 %v6782, %v6956
        %v6958 = vpop.f32.mrf.mxu0
        %6959 = vdwg.mxu0
        %6960 = vmatprep.subr.mxu0 0.0
        %v6961 = vand.u32 %v337, 4294901760
        %6962 = vmatpush1.msra.mxu0 %v6961
        %6963 = vmatprep.subr.mxu0 0.0
        %v6964 = vand.u32 %v336, 4294901760
        %6965 = vmatpush1.msra.mxu0 %v6964
        %6966 = vmatprep.subr.mxu0 0.0
        %v6967 = vand.u32 %v335, 4294901760
        %6968 = vmatpush1.msra.mxu0 %v6967
        %6969 = vmatprep.subr.mxu0 0.0
        %v6970 = vand.u32 %v334, 4294901760
        %6971 = vmatpush1.msra.mxu0 %v6970
        %6972 = vmatprep.subr.mxu0 0.0
        %v6973 = vand.u32 %v333, 4294901760
        %6974 = vmatpush1.msra.mxu0 %v6973
        %6975 = vmatprep.subr.mxu0 0.0
        %v6976 = vand.u32 %v332, 4294901760
        %6977 = vmatpush1.msra.mxu0 %v6976
        %6978 = vmatprep.subr.mxu0 0.0
        %v6979 = vand.u32 %v331, 4294901760
        %6980 = vmatpush1.msra.mxu0 %v6979
        %6981 = vmatprep.subr.mxu0 0.0
        %v6982 = vand.u32 %v330, 4294901760
        %6983 = vmatpush1.msra.mxu0 %v6982
        %6984 = vmatprep.subr.mxu0 0.0
        %v6985 = vand.u32 %v329, 4294901760
        %6986 = vmatpush1.msra.mxu0 %v6985
        %6987 = vmatprep.subr.mxu0 0.0
        %v6988 = vand.u32 %v328, 4294901760
        %6989 = vmatpush1.msra.mxu0 %v6988
        %6990 = vmatprep.subr.mxu0 0.0
        %v6991 = vand.u32 %v327, 4294901760
        %6992 = vmatpush1.msra.mxu0 %v6991
        %6993 = vmatprep.subr.mxu0 0.0
        %v6994 = vand.u32 %v326, 4294901760
        %6995 = vmatpush1.msra.mxu0 %v6994
        %6996 = vmatprep.subr.mxu0 0.0
        %v6997 = vand.u32 %v325, 4294901760
        %6998 = vmatpush1.msra.mxu0 %v6997
        %6999 = vmatprep.subr.mxu0 0.0
        %v7000 = vand.u32 %v324, 4294901760
        %7001 = vmatpush1.msra.mxu0 %v7000
        %7002 = vmatprep.subr.mxu0 0.0
        %v7003 = vand.u32 %v323, 4294901760
        %7004 = vmatpush1.msra.mxu0 %v7003
        %7005 = vmatprep.subr.mxu0 0.0
        %v7006 = vand.u32 %v322, 4294901760
        %7007 = vmatpush1.msra.mxu0 %v7006
        %7008 = vmatprep.subr.mxu0 0.0
        %v7009 = vand.u32 %v353, 4294901760
        %7010 = vmatpush2.msra.mxu0 %v7009
        %7011 = vmatprep.subr.mxu0 0.0
        %v7012 = vand.u32 %v352, 4294901760
        %7013 = vmatpush2.msra.mxu0 %v7012
        %7014 = vmatprep.subr.mxu0 0.0
        %v7015 = vand.u32 %v351, 4294901760
        %7016 = vmatpush2.msra.mxu0 %v7015
        %7017 = vmatprep.subr.mxu0 0.0
        %v7018 = vand.u32 %v350, 4294901760
        %7019 = vmatpush2.msra.mxu0 %v7018
        %7020 = vmatprep.subr.mxu0 0.0
        %v7021 = vand.u32 %v349, 4294901760
        %7022 = vmatpush2.msra.mxu0 %v7021
        %7023 = vmatprep.subr.mxu0 0.0
        %v7024 = vand.u32 %v348, 4294901760
        %7025 = vmatpush2.msra.mxu0 %v7024
        %7026 = vmatprep.subr.mxu0 0.0
        %v7027 = vand.u32 %v347, 4294901760
        %7028 = vmatpush2.msra.mxu0 %v7027
        %7029 = vmatprep.subr.mxu0 0.0
        %v7030 = vand.u32 %v346, 4294901760
        %7031 = vmatpush2.msra.mxu0 %v7030
        %7032 = vmatprep.subr.mxu0 0.0
        %v7033 = vand.u32 %v345, 4294901760
        %7034 = vmatpush2.msra.mxu0 %v7033
        %7035 = vmatprep.subr.mxu0 0.0
        %v7036 = vand.u32 %v344, 4294901760
        %7037 = vmatpush2.msra.mxu0 %v7036
        %7038 = vmatprep.subr.mxu0 0.0
        %v7039 = vand.u32 %v343, 4294901760
        %7040 = vmatpush2.msra.mxu0 %v7039
        %7041 = vmatprep.subr.mxu0 0.0
        %v7042 = vand.u32 %v342, 4294901760
        %7043 = vmatpush2.msra.mxu0 %v7042
        %7044 = vmatprep.subr.mxu0 0.0
        %v7045 = vand.u32 %v341, 4294901760
        %7046 = vmatpush2.msra.mxu0 %v7045
        %7047 = vmatprep.subr.mxu0 0.0
        %v7048 = vand.u32 %v340, 4294901760
        %7049 = vmatpush2.msra.mxu0 %v7048
        %7050 = vmatprep.subr.mxu0 0.0
        %v7051 = vand.u32 %v339, 4294901760
        %7052 = vmatpush2.msra.mxu0 %v7051
        %7053 = vmatprep.subr.mxu0 0.0
        %v7054 = vand.u32 %v338, 4294901760
        %7055 = vmatpush2.msra.mxu0 %v7054
        %v7056 = vand.u32 %v6148, 4294901760
        %7057 = vmatprep.mubr.f32.mxu0 %v7056
        %v7058 = vand.u32 %v6146, 4294901760
        %7059 = vmatmul.mubr.f32.gmra.mxu0 %v7058
        %v7060 = vpop.f32.mrf.mxu0
        %v7061 = vadd.f32 %v6950, %v7060
        %v7062 = vpop.f32.mrf.mxu0
        %v7063 = vand.u32 %v6152, 4294901760
        %7064 = vmatprep.mubr.f32.mxu0 %v7063
        %v7065 = vand.u32 %v6150, 4294901760
        %7066 = vmatmul.mubr.f32.gmra.mxu0 %v7065
        %v7067 = vpop.f32.mrf.mxu0
        %v7068 = vadd.f32 %v6957, %v7067
        %v7069 = vpop.f32.mrf.mxu0
        %7070 = vdwg.mxu0
        %v7071 = vrcp.pop %v7061
        %v7072 = vrcp.pop %v7068
        %7075 = vrot.lane.b32.xlu0 %v7071, 1
        %v7076 = vpop.permute.xlu0 %7075
        %7077 = vrot.lane.b32.xlu0 %v7072, 1
        %v7078 = vpop.permute.xlu0 %7077
        %v7081 = vmul.f32 %v7061, %v7076
        %v7082 = vmul.f32 %v7068, %v7078
        %v7083 = vadd.f32 %v7081, 3.8146973e-13
        %v7084 = vadd.f32 %v7082, 3.8146973e-13
        %7085 = vrot.lane.b32.xlu0 %v7071, 2
        %v7086 = vpop.permute.xlu0 %7085
        %7087 = vrot.lane.b32.xlu0 %v7072, 2
        %v7088 = vpop.permute.xlu0 %7087
        %v7091 = vmul.f32 %v7061, %v7086
        %v7092 = vmul.f32 %v7068, %v7088
        %v7093 = vadd.f32 %v7091, 3.8146973e-13
        %v7094 = vadd.f32 %v7092, 3.8146973e-13
        %7095 = vrot.lane.b32.xlu0 %v7071, 3
        %v7096 = vpop.permute.xlu0 %7095
        %7097 = vrot.lane.b32.xlu0 %v7072, 3
        %v7098 = vpop.permute.xlu0 %7097
        %v7101 = vmul.f32 %v7061, %v7096
        %v7102 = vmul.f32 %v7068, %v7098
        %v7103 = vadd.f32 %v7101, 9.671111e-06
        %v7104 = vadd.f32 %v7102, 9.671111e-06
        %v7105 = vmul.f32 %v7083, %v7083
        %v7106 = vmul.f32 %v7084, %v7084
        %v7107 = vmul.f32 %v7105, 0.9999744
        %v7108 = vmul.f32 %v7106, 0.9999744
        %7111 = vrot.lane.b32.xlu0 %v7107, 2
        %v7112 = vpop.permute.xlu0 %7111
        %7113 = vrot.lane.b32.xlu0 %v7108, 2
        %v7114 = vpop.permute.xlu0 %7113
        %v7117 = vsub.f32 %v7103, %v7112
        %v7118 = vsub.f32 %v7104, %v7114
        %7119 = vrot.lane.b32.xlu0 %v7071, 4
        %v7120 = vpop.permute.xlu0 %7119
        %7121 = vrot.lane.b32.xlu0 %v7072, 4
        %v7122 = vpop.permute.xlu0 %7121
        %v7125 = vmul.f32 %v7061, %v7120
        %v7126 = vmul.f32 %v7068, %v7122
        %v7127 = vadd.f32 %v7125, 5.684342e-21
        %v7128 = vadd.f32 %v7126, 5.684342e-21
        %7131 = vrot.lane.b32.xlu0 %v7093, 127
        %v7132 = vpop.permute.xlu0 %7131
        %7133 = vrot.lane.b32.xlu0 %v7094, 127
        %v7134 = vpop.permute.xlu0 %7133
        %v7137 = vmul.f32 %v7083, %v7132
        %v7138 = vmul.f32 %v7084, %v7134
        %v7139 = vmul.f32 %v7137, 0.9999744
        %v7140 = vmul.f32 %v7138, 0.9999744
        %7143 = vrot.lane.b32.xlu0 %v7139, 3
        %v7144 = vpop.permute.xlu0 %7143
        %7145 = vrot.lane.b32.xlu0 %v7140, 3
        %v7146 = vpop.permute.xlu0 %7145
        %v7149 = vsub.f32 %v7127, %v7144
        %v7150 = vsub.f32 %v7128, %v7146
        %7151 = vrot.lane.b32.xlu0 %v7071, 5
        %v7152 = vpop.permute.xlu0 %7151
        %7153 = vrot.lane.b32.xlu0 %v7072, 5
        %v7154 = vpop.permute.xlu0 %7153
        %v7157 = vmul.f32 %v7061, %v7152
        %v7158 = vmul.f32 %v7068, %v7154
        %v7159 = vadd.f32 %v7157, 9.671111e-06
        %v7160 = vadd.f32 %v7158, 9.671111e-06
        %v7161 = vmul.f32 %v7093, %v7093
        %v7162 = vmul.f32 %v7094, %v7094
        %v7163 = vmul.f32 %v7161, 0.9999744
        %v7164 = vmul.f32 %v7162, 0.9999744
        %7167 = vrot.lane.b32.xlu0 %v7163, 3
        %v7168 = vpop.permute.xlu0 %7167
        %7169 = vrot.lane.b32.xlu0 %v7164, 3
        %v7170 = vpop.permute.xlu0 %7169
        %v7173 = vsub.f32 %v7159, %v7168
        %v7174 = vsub.f32 %v7160, %v7170
        %7176 = vset.pattern.permute.xlu0 5
        %7177 = vperm.xlu0 %7176, %v7173
        %v7178 = vpop.permute.xlu0 %7177
        %7181 = vset.pattern.permute.xlu0 5
        %7182 = vperm.xlu0 %7181, %v7174
        %v7183 = vpop.permute.xlu0 %7182
        %v7185 = vsel %vm1449, %v7178, 0.0
        %v7186 = vsel %vm1449, %v7183, 0.0
        %7188 = vset.pattern.permute.xlu0 4
        %7189 = vperm.xlu0 %7188, %v7149
        %v7190 = vpop.permute.xlu0 %7189
        %7193 = vset.pattern.permute.xlu0 4
        %7194 = vperm.xlu0 %7193, %v7150
        %v7195 = vpop.permute.xlu0 %7194
        %v7197 = vsel %vm1448, %v7190, %v7185
        %v7198 = vsel %vm1448, %v7195, %v7186
        %7200 = vset.pattern.permute.xlu0 3
        %7201 = vperm.xlu0 %7200, %v7117
        %v7202 = vpop.permute.xlu0 %7201
        %7205 = vset.pattern.permute.xlu0 3
        %7206 = vperm.xlu0 %7205, %v7118
        %v7207 = vpop.permute.xlu0 %7206
        %v7209 = vsel %vm1445, %v7202, %v7197
        %v7210 = vsel %vm1445, %v7207, %v7198
        %7211 = vset.pattern.permute.xlu0 2
        %7212 = vperm.xlu0 %7211, %v7093
        %v7213 = vpop.permute.xlu0 %7212
        %7215 = vset.pattern.permute.xlu0 2
        %7216 = vperm.xlu0 %7215, %v7094
        %v7217 = vpop.permute.xlu0 %7216
        %v7219 = vsel %vm1444, %v7213, %v7209
        %v7220 = vsel %vm1444, %v7217, %v7210
        %7222 = vset.pattern.permute.xlu0 1
        %7223 = vperm.xlu0 %7222, %v7083
        %v7224 = vpop.permute.xlu0 %7223
        %7227 = vset.pattern.permute.xlu0 1
        %7228 = vperm.xlu0 %7227, %v7084
        %v7229 = vpop.permute.xlu0 %7228
        %v7231 = vsel %vm1443, %v7224, %v7219
        %v7232 = vsel %vm1443, %v7229, %v7220
        %s7233 = sld [smem:[#allocation3 + $0x6]]
        %s7234 = smul.f32 %s7233, %s305
        %v7235 = vstv %s7234
        %v7236 = vmul.f32 %v306, %v7235
        %v7237 = vmul.f32 %v307, %v7235
        %v7238 = vmul.f32 %v308, %v7235
        %v7239 = vmul.f32 %v309, %v7235
        %s7240 = sld [smem:[#allocation3 + $0x86]]
        %s7241 = smul.f32 %s7240, %s305
        %v7242 = vstv %s7241
        %v7243 = vmul.f32 %v310, %v7242
        %v7244 = vmul.f32 %v311, %v7242
        %v7245 = vmul.f32 %v312, %v7242
        %v7246 = vmul.f32 %v313, %v7242
        %v7247 = vadd.f32 %v7236, %v7243
        %v7248 = vadd.f32 %v7237, %v7244
        %v7249 = vadd.f32 %v7238, %v7245
        %v7250 = vadd.f32 %v7239, %v7246
        %s7251 = sld [smem:[#allocation3 + $0x106]]
        %s7252 = smul.f32 %s7251, %s305
        %v7253 = vstv %s7252
        %v7254 = vmul.f32 %v314, %v7253
        %v7255 = vmul.f32 %v315, %v7253
        %v7256 = vmul.f32 %v316, %v7253
        %v7257 = vmul.f32 %v317, %v7253
        %v7258 = vadd.f32 %v7247, %v7254
        %v7259 = vadd.f32 %v7248, %v7255
        %v7260 = vadd.f32 %v7249, %v7256
        %v7261 = vadd.f32 %v7250, %v7257
        %s7262 = sld [smem:[#allocation3 + $0x186]]
        %s7263 = smul.f32 %s7262, %s305
        %v7264 = vstv %s7263
        %v7265 = vmul.f32 %v318, %v7264
        %v7266 = vmul.f32 %v319, %v7264
        %v7267 = vmul.f32 %v320, %v7264
        %v7268 = vmul.f32 %v321, %v7264
        %v7269 = vadd.f32 %v7258, %v7265
        %v7270 = vadd.f32 %v7259, %v7266
        %v7271 = vadd.f32 %v7260, %v7267
        %v7272 = vadd.f32 %v7261, %v7268
        %s7273 = sld [smem:[#allocation8 + $0x6]]
        %s7274 = smul.f32 %s7273, %s305
        %v7275 = vstv %s7274
        %v7276 = vadd.f32 %v7269, %v7275
        %v7277 = vadd.f32 %v7270, %v7275
        %v7278 = vadd.f32 %v7271, %v7275
        %v7279 = vadd.f32 %v7272, %v7275
        %v7280 = vmax.f32 %v7276, %v7277
        %7281 = vmax.xlane.f32.xlu0 %v7280
        %v7282 = vpop.xlane.xlu0 %7281
        %v7283 = vmax.f32 %v7278, %v7279
        %7284 = vmax.xlane.f32.xlu0 %v7283
        %v7285 = vpop.xlane.xlu0 %7284
        %v7286 = vsub.f32 %v7276, %v7282
        %v7287 = vsub.f32 %v7277, %v7282
        %v7288 = vsub.f32 %v7278, %v7285
        %v7289 = vsub.f32 %v7279, %v7285
        %v7290 = vmul.f32 %v7286, 1.442695
        %v7291 = vpow.pop %v7290
        %v7292 = vmul.f32 %v7287, 1.442695
        %v7293 = vpow.pop %v7292
        %v7294 = vmul.f32 %v7288, 1.442695
        %v7295 = vpow.pop %v7294
        %v7296 = vmul.f32 %v7289, 1.442695
        %v7297 = vpow.pop %v7296
        %7298 = vmatprep.subr.mxu0 0.0
        %v7299 = vand.u32 %v337, 4294901760
        %7300 = vmatpush1.msra.mxu0 %v7299
        %7301 = vmatprep.subr.mxu0 0.0
        %v7302 = vand.u32 %v336, 4294901760
        %7303 = vmatpush1.msra.mxu0 %v7302
        %7304 = vmatprep.subr.mxu0 0.0
        %v7305 = vand.u32 %v335, 4294901760
        %7306 = vmatpush1.msra.mxu0 %v7305
        %7307 = vmatprep.subr.mxu0 0.0
        %v7308 = vand.u32 %v334, 4294901760
        %7309 = vmatpush1.msra.mxu0 %v7308
        %7310 = vmatprep.subr.mxu0 0.0
        %v7311 = vand.u32 %v333, 4294901760
        %7312 = vmatpush1.msra.mxu0 %v7311
        %7313 = vmatprep.subr.mxu0 0.0
        %v7314 = vand.u32 %v332, 4294901760
        %7315 = vmatpush1.msra.mxu0 %v7314
        %7316 = vmatprep.subr.mxu0 0.0
        %v7317 = vand.u32 %v331, 4294901760
        %7318 = vmatpush1.msra.mxu0 %v7317
        %7319 = vmatprep.subr.mxu0 0.0
        %v7320 = vand.u32 %v330, 4294901760
        %7321 = vmatpush1.msra.mxu0 %v7320
        %7322 = vmatprep.subr.mxu0 0.0
        %v7323 = vand.u32 %v329, 4294901760
        %7324 = vmatpush1.msra.mxu0 %v7323
        %7325 = vmatprep.subr.mxu0 0.0
        %v7326 = vand.u32 %v328, 4294901760
        %7327 = vmatpush1.msra.mxu0 %v7326
        %7328 = vmatprep.subr.mxu0 0.0
        %v7329 = vand.u32 %v327, 4294901760
        %7330 = vmatpush1.msra.mxu0 %v7329
        %7331 = vmatprep.subr.mxu0 0.0
        %v7332 = vand.u32 %v326, 4294901760
        %7333 = vmatpush1.msra.mxu0 %v7332
        %7334 = vmatprep.subr.mxu0 0.0
        %v7335 = vand.u32 %v325, 4294901760
        %7336 = vmatpush1.msra.mxu0 %v7335
        %7337 = vmatprep.subr.mxu0 0.0
        %v7338 = vand.u32 %v324, 4294901760
        %7339 = vmatpush1.msra.mxu0 %v7338
        %7340 = vmatprep.subr.mxu0 0.0
        %v7341 = vand.u32 %v323, 4294901760
        %7342 = vmatpush1.msra.mxu0 %v7341
        %7343 = vmatprep.subr.mxu0 0.0
        %v7344 = vand.u32 %v322, 4294901760
        %7345 = vmatpush1.msra.mxu0 %v7344
        %7346 = vmatprep.subr.mxu0 0.0
        %v7347 = vand.u32 %v353, 4294901760
        %7348 = vmatpush2.msra.mxu0 %v7347
        %7349 = vmatprep.subr.mxu0 0.0
        %v7350 = vand.u32 %v352, 4294901760
        %7351 = vmatpush2.msra.mxu0 %v7350
        %7352 = vmatprep.subr.mxu0 0.0
        %v7353 = vand.u32 %v351, 4294901760
        %7354 = vmatpush2.msra.mxu0 %v7353
        %7355 = vmatprep.subr.mxu0 0.0
        %v7356 = vand.u32 %v350, 4294901760
        %7357 = vmatpush2.msra.mxu0 %v7356
        %7358 = vmatprep.subr.mxu0 0.0
        %v7359 = vand.u32 %v349, 4294901760
        %7360 = vmatpush2.msra.mxu0 %v7359
        %7361 = vmatprep.subr.mxu0 0.0
        %v7362 = vand.u32 %v348, 4294901760
        %7363 = vmatpush2.msra.mxu0 %v7362
        %7364 = vmatprep.subr.mxu0 0.0
        %v7365 = vand.u32 %v347, 4294901760
        %7366 = vmatpush2.msra.mxu0 %v7365
        %7367 = vmatprep.subr.mxu0 0.0
        %v7368 = vand.u32 %v346, 4294901760
        %7369 = vmatpush2.msra.mxu0 %v7368
        %7370 = vmatprep.subr.mxu0 0.0
        %v7371 = vand.u32 %v345, 4294901760
        %7372 = vmatpush2.msra.mxu0 %v7371
        %7373 = vmatprep.subr.mxu0 0.0
        %v7374 = vand.u32 %v344, 4294901760
        %7375 = vmatpush2.msra.mxu0 %v7374
        %7376 = vmatprep.subr.mxu0 0.0
        %v7377 = vand.u32 %v343, 4294901760
        %7378 = vmatpush2.msra.mxu0 %v7377
        %7379 = vmatprep.subr.mxu0 0.0
        %v7380 = vand.u32 %v342, 4294901760
        %7381 = vmatpush2.msra.mxu0 %v7380
        %7382 = vmatprep.subr.mxu0 0.0
        %v7383 = vand.u32 %v341, 4294901760
        %7384 = vmatpush2.msra.mxu0 %v7383
        %7385 = vmatprep.subr.mxu0 0.0
        %v7386 = vand.u32 %v340, 4294901760
        %7387 = vmatpush2.msra.mxu0 %v7386
        %7388 = vmatprep.subr.mxu0 0.0
        %v7389 = vand.u32 %v339, 4294901760
        %7390 = vmatpush2.msra.mxu0 %v7389
        %7391 = vmatprep.subr.mxu0 0.0
        %v7392 = vand.u32 %v338, 4294901760
        %7393 = vmatpush2.msra.mxu0 %v7392
        %v7394 = vand.u32 %v7293, 4294901760
        %v7395 = vsub.f32 %v7293, %v7394
        %v7396 = vand.u32 %v7395, 4294901760
        %v7397 = vsub.f32 %v7395, %v7396
        %v7398 = vand.u32 %v7397, 4294901760
        %7399 = vmatprep.mubr.f32.mxu0 %v7398
        %v7400 = vand.u32 %v7291, 4294901760
        %v7401 = vsub.f32 %v7291, %v7400
        %v7402 = vand.u32 %v7401, 4294901760
        %v7403 = vsub.f32 %v7401, %v7402
        %v7404 = vand.u32 %v7403, 4294901760
        %7405 = vmatmul.mubr.f32.gmra.mxu0 %v7404
        %v7406 = vpop.f32.mrf.mxu0
        %v7407 = vadd.f32 0.0, %v7406
        %v7408 = vpop.f32.mrf.mxu0
        %v7409 = vand.u32 %v7297, 4294901760
        %v7410 = vsub.f32 %v7297, %v7409
        %v7411 = vand.u32 %v7410, 4294901760
        %v7412 = vsub.f32 %v7410, %v7411
        %v7413 = vand.u32 %v7412, 4294901760
        %7414 = vmatprep.mubr.f32.mxu0 %v7413
        %v7415 = vand.u32 %v7295, 4294901760
        %v7416 = vsub.f32 %v7295, %v7415
        %v7417 = vand.u32 %v7416, 4294901760
        %v7418 = vsub.f32 %v7416, %v7417
        %v7419 = vand.u32 %v7418, 4294901760
        %7420 = vmatmul.mubr.f32.gmra.mxu0 %v7419
        %v7421 = vpop.f32.mrf.mxu0
        %v7422 = vadd.f32 0.0, %v7421
        %v7423 = vpop.f32.mrf.mxu0
        %7424 = vdwg.mxu0
        %7425 = vmatprep.subr.mxu0 0.0
        %v7426 = vand.u32 %v337, 4294901760
        %v7427 = vsub.f32 %v337, %v7426
        %v7428 = vand.u32 %v7427, 4294901760
        %v7429 = vsub.f32 %v7427, %v7428
        %v7430 = vand.u32 %v7429, 4294901760
        %7431 = vmatpush1.msra.mxu0 %v7430
        %7432 = vmatprep.subr.mxu0 0.0
        %v7433 = vand.u32 %v336, 4294901760
        %v7434 = vsub.f32 %v336, %v7433
        %v7435 = vand.u32 %v7434, 4294901760
        %v7436 = vsub.f32 %v7434, %v7435
        %v7437 = vand.u32 %v7436, 4294901760
        %7438 = vmatpush1.msra.mxu0 %v7437
        %7439 = vmatprep.subr.mxu0 0.0
        %v7440 = vand.u32 %v335, 4294901760
        %v7441 = vsub.f32 %v335, %v7440
        %v7442 = vand.u32 %v7441, 4294901760
        %v7443 = vsub.f32 %v7441, %v7442
        %v7444 = vand.u32 %v7443, 4294901760
        %7445 = vmatpush1.msra.mxu0 %v7444
        %7446 = vmatprep.subr.mxu0 0.0
        %v7447 = vand.u32 %v334, 4294901760
        %v7448 = vsub.f32 %v334, %v7447
        %v7449 = vand.u32 %v7448, 4294901760
        %v7450 = vsub.f32 %v7448, %v7449
        %v7451 = vand.u32 %v7450, 4294901760
        %7452 = vmatpush1.msra.mxu0 %v7451
        %7453 = vmatprep.subr.mxu0 0.0
        %v7454 = vand.u32 %v333, 4294901760
        %v7455 = vsub.f32 %v333, %v7454
        %v7456 = vand.u32 %v7455, 4294901760
        %v7457 = vsub.f32 %v7455, %v7456
        %v7458 = vand.u32 %v7457, 4294901760
        %7459 = vmatpush1.msra.mxu0 %v7458
        %7460 = vmatprep.subr.mxu0 0.0
        %v7461 = vand.u32 %v332, 4294901760
        %v7462 = vsub.f32 %v332, %v7461
        %v7463 = vand.u32 %v7462, 4294901760
        %v7464 = vsub.f32 %v7462, %v7463
        %v7465 = vand.u32 %v7464, 4294901760
        %7466 = vmatpush1.msra.mxu0 %v7465
        %7467 = vmatprep.subr.mxu0 0.0
        %v7468 = vand.u32 %v331, 4294901760
        %v7469 = vsub.f32 %v331, %v7468
        %v7470 = vand.u32 %v7469, 4294901760
        %v7471 = vsub.f32 %v7469, %v7470
        %v7472 = vand.u32 %v7471, 4294901760
        %7473 = vmatpush1.msra.mxu0 %v7472
        %7474 = vmatprep.subr.mxu0 0.0
        %v7475 = vand.u32 %v330, 4294901760
        %v7476 = vsub.f32 %v330, %v7475
        %v7477 = vand.u32 %v7476, 4294901760
        %v7478 = vsub.f32 %v7476, %v7477
        %v7479 = vand.u32 %v7478, 4294901760
        %7480 = vmatpush1.msra.mxu0 %v7479
        %7481 = vmatprep.subr.mxu0 0.0
        %v7482 = vand.u32 %v329, 4294901760
        %v7483 = vsub.f32 %v329, %v7482
        %v7484 = vand.u32 %v7483, 4294901760
        %v7485 = vsub.f32 %v7483, %v7484
        %v7486 = vand.u32 %v7485, 4294901760
        %7487 = vmatpush1.msra.mxu0 %v7486
        %7488 = vmatprep.subr.mxu0 0.0
        %v7489 = vand.u32 %v328, 4294901760
        %v7490 = vsub.f32 %v328, %v7489
        %v7491 = vand.u32 %v7490, 4294901760
        %v7492 = vsub.f32 %v7490, %v7491
        %v7493 = vand.u32 %v7492, 4294901760
        %7494 = vmatpush1.msra.mxu0 %v7493
        %7495 = vmatprep.subr.mxu0 0.0
        %v7496 = vand.u32 %v327, 4294901760
        %v7497 = vsub.f32 %v327, %v7496
        %v7498 = vand.u32 %v7497, 4294901760
        %v7499 = vsub.f32 %v7497, %v7498
        %v7500 = vand.u32 %v7499, 4294901760
        %7501 = vmatpush1.msra.mxu0 %v7500
        %7502 = vmatprep.subr.mxu0 0.0
        %v7503 = vand.u32 %v326, 4294901760
        %v7504 = vsub.f32 %v326, %v7503
        %v7505 = vand.u32 %v7504, 4294901760
        %v7506 = vsub.f32 %v7504, %v7505
        %v7507 = vand.u32 %v7506, 4294901760
        %7508 = vmatpush1.msra.mxu0 %v7507
        %7509 = vmatprep.subr.mxu0 0.0
        %v7510 = vand.u32 %v325, 4294901760
        %v7511 = vsub.f32 %v325, %v7510
        %v7512 = vand.u32 %v7511, 4294901760
        %v7513 = vsub.f32 %v7511, %v7512
        %v7514 = vand.u32 %v7513, 4294901760
        %7515 = vmatpush1.msra.mxu0 %v7514
        %7516 = vmatprep.subr.mxu0 0.0
        %v7517 = vand.u32 %v324, 4294901760
        %v7518 = vsub.f32 %v324, %v7517
        %v7519 = vand.u32 %v7518, 4294901760
        %v7520 = vsub.f32 %v7518, %v7519
        %v7521 = vand.u32 %v7520, 4294901760
        %7522 = vmatpush1.msra.mxu0 %v7521
        %7523 = vmatprep.subr.mxu0 0.0
        %v7524 = vand.u32 %v323, 4294901760
        %v7525 = vsub.f32 %v323, %v7524
        %v7526 = vand.u32 %v7525, 4294901760
        %v7527 = vsub.f32 %v7525, %v7526
        %v7528 = vand.u32 %v7527, 4294901760
        %7529 = vmatpush1.msra.mxu0 %v7528
        %7530 = vmatprep.subr.mxu0 0.0
        %v7531 = vand.u32 %v322, 4294901760
        %v7532 = vsub.f32 %v322, %v7531
        %v7533 = vand.u32 %v7532, 4294901760
        %v7534 = vsub.f32 %v7532, %v7533
        %v7535 = vand.u32 %v7534, 4294901760
        %7536 = vmatpush1.msra.mxu0 %v7535
        %7537 = vmatprep.subr.mxu0 0.0
        %v7538 = vand.u32 %v353, 4294901760
        %v7539 = vsub.f32 %v353, %v7538
        %v7540 = vand.u32 %v7539, 4294901760
        %v7541 = vsub.f32 %v7539, %v7540
        %v7542 = vand.u32 %v7541, 4294901760
        %7543 = vmatpush2.msra.mxu0 %v7542
        %7544 = vmatprep.subr.mxu0 0.0
        %v7545 = vand.u32 %v352, 4294901760
        %v7546 = vsub.f32 %v352, %v7545
        %v7547 = vand.u32 %v7546, 4294901760
        %v7548 = vsub.f32 %v7546, %v7547
        %v7549 = vand.u32 %v7548, 4294901760
        %7550 = vmatpush2.msra.mxu0 %v7549
        %7551 = vmatprep.subr.mxu0 0.0
        %v7552 = vand.u32 %v351, 4294901760
        %v7553 = vsub.f32 %v351, %v7552
        %v7554 = vand.u32 %v7553, 4294901760
        %v7555 = vsub.f32 %v7553, %v7554
        %v7556 = vand.u32 %v7555, 4294901760
        %7557 = vmatpush2.msra.mxu0 %v7556
        %7558 = vmatprep.subr.mxu0 0.0
        %v7559 = vand.u32 %v350, 4294901760
        %v7560 = vsub.f32 %v350, %v7559
        %v7561 = vand.u32 %v7560, 4294901760
        %v7562 = vsub.f32 %v7560, %v7561
        %v7563 = vand.u32 %v7562, 4294901760
        %7564 = vmatpush2.msra.mxu0 %v7563
        %7565 = vmatprep.subr.mxu0 0.0
        %v7566 = vand.u32 %v349, 4294901760
        %v7567 = vsub.f32 %v349, %v7566
        %v7568 = vand.u32 %v7567, 4294901760
        %v7569 = vsub.f32 %v7567, %v7568
        %v7570 = vand.u32 %v7569, 4294901760
        %7571 = vmatpush2.msra.mxu0 %v7570
        %7572 = vmatprep.subr.mxu0 0.0
        %v7573 = vand.u32 %v348, 4294901760
        %v7574 = vsub.f32 %v348, %v7573
        %v7575 = vand.u32 %v7574, 4294901760
        %v7576 = vsub.f32 %v7574, %v7575
        %v7577 = vand.u32 %v7576, 4294901760
        %7578 = vmatpush2.msra.mxu0 %v7577
        %7579 = vmatprep.subr.mxu0 0.0
        %v7580 = vand.u32 %v347, 4294901760
        %v7581 = vsub.f32 %v347, %v7580
        %v7582 = vand.u32 %v7581, 4294901760
        %v7583 = vsub.f32 %v7581, %v7582
        %v7584 = vand.u32 %v7583, 4294901760
        %7585 = vmatpush2.msra.mxu0 %v7584
        %7586 = vmatprep.subr.mxu0 0.0
        %v7587 = vand.u32 %v346, 4294901760
        %v7588 = vsub.f32 %v346, %v7587
        %v7589 = vand.u32 %v7588, 4294901760
        %v7590 = vsub.f32 %v7588, %v7589
        %v7591 = vand.u32 %v7590, 4294901760
        %7592 = vmatpush2.msra.mxu0 %v7591
        %7593 = vmatprep.subr.mxu0 0.0
        %v7594 = vand.u32 %v345, 4294901760
        %v7595 = vsub.f32 %v345, %v7594
        %v7596 = vand.u32 %v7595, 4294901760
        %v7597 = vsub.f32 %v7595, %v7596
        %v7598 = vand.u32 %v7597, 4294901760
        %7599 = vmatpush2.msra.mxu0 %v7598
        %7600 = vmatprep.subr.mxu0 0.0
        %v7601 = vand.u32 %v344, 4294901760
        %v7602 = vsub.f32 %v344, %v7601
        %v7603 = vand.u32 %v7602, 4294901760
        %v7604 = vsub.f32 %v7602, %v7603
        %v7605 = vand.u32 %v7604, 4294901760
        %7606 = vmatpush2.msra.mxu0 %v7605
        %7607 = vmatprep.subr.mxu0 0.0
        %v7608 = vand.u32 %v343, 4294901760
        %v7609 = vsub.f32 %v343, %v7608
        %v7610 = vand.u32 %v7609, 4294901760
        %v7611 = vsub.f32 %v7609, %v7610
        %v7612 = vand.u32 %v7611, 4294901760
        %7613 = vmatpush2.msra.mxu0 %v7612
        %7614 = vmatprep.subr.mxu0 0.0
        %v7615 = vand.u32 %v342, 4294901760
        %v7616 = vsub.f32 %v342, %v7615
        %v7617 = vand.u32 %v7616, 4294901760
        %v7618 = vsub.f32 %v7616, %v7617
        %v7619 = vand.u32 %v7618, 4294901760
        %7620 = vmatpush2.msra.mxu0 %v7619
        %7621 = vmatprep.subr.mxu0 0.0
        %v7622 = vand.u32 %v341, 4294901760
        %v7623 = vsub.f32 %v341, %v7622
        %v7624 = vand.u32 %v7623, 4294901760
        %v7625 = vsub.f32 %v7623, %v7624
        %v7626 = vand.u32 %v7625, 4294901760
        %7627 = vmatpush2.msra.mxu0 %v7626
        %7628 = vmatprep.subr.mxu0 0.0
        %v7629 = vand.u32 %v340, 4294901760
        %v7630 = vsub.f32 %v340, %v7629
        %v7631 = vand.u32 %v7630, 4294901760
        %v7632 = vsub.f32 %v7630, %v7631
        %v7633 = vand.u32 %v7632, 4294901760
        %7634 = vmatpush2.msra.mxu0 %v7633
        %7635 = vmatprep.subr.mxu0 0.0
        %v7636 = vand.u32 %v339, 4294901760
        %v7637 = vsub.f32 %v339, %v7636
        %v7638 = vand.u32 %v7637, 4294901760
        %v7639 = vsub.f32 %v7637, %v7638
        %v7640 = vand.u32 %v7639, 4294901760
        %7641 = vmatpush2.msra.mxu0 %v7640
        %7642 = vmatprep.subr.mxu0 0.0
        %v7643 = vand.u32 %v338, 4294901760
        %v7644 = vsub.f32 %v338, %v7643
        %v7645 = vand.u32 %v7644, 4294901760
        %v7646 = vsub.f32 %v7644, %v7645
        %v7647 = vand.u32 %v7646, 4294901760
        %7648 = vmatpush2.msra.mxu0 %v7647
        %v7649 = vand.u32 %v7293, 4294901760
        %7650 = vmatprep.mubr.f32.mxu0 %v7649
        %v7651 = vand.u32 %v7291, 4294901760
        %7652 = vmatmul.mubr.f32.gmra.mxu0 %v7651
        %v7653 = vpop.f32.mrf.mxu0
        %v7654 = vadd.f32 %v7407, %v7653
        %v7655 = vpop.f32.mrf.mxu0
        %v7656 = vand.u32 %v7297, 4294901760
        %7657 = vmatprep.mubr.f32.mxu0 %v7656
        %v7658 = vand.u32 %v7295, 4294901760
        %7659 = vmatmul.mubr.f32.gmra.mxu0 %v7658
        %v7660 = vpop.f32.mrf.mxu0
        %v7661 = vadd.f32 %v7422, %v7660
        %v7662 = vpop.f32.mrf.mxu0
        %7663 = vdwg.mxu0
        %7664 = vmatprep.subr.mxu0 0.0
        %v7665 = vand.u32 %v337, 4294901760
        %v7666 = vsub.f32 %v337, %v7665
        %7667 = vmatpush1.msra.mxu0 %v7666
        %7668 = vmatprep.subr.mxu0 0.0
        %v7669 = vand.u32 %v336, 4294901760
        %v7670 = vsub.f32 %v336, %v7669
        %7671 = vmatpush1.msra.mxu0 %v7670
        %7672 = vmatprep.subr.mxu0 0.0
        %v7673 = vand.u32 %v335, 4294901760
        %v7674 = vsub.f32 %v335, %v7673
        %7675 = vmatpush1.msra.mxu0 %v7674
        %7676 = vmatprep.subr.mxu0 0.0
        %v7677 = vand.u32 %v334, 4294901760
        %v7678 = vsub.f32 %v334, %v7677
        %7679 = vmatpush1.msra.mxu0 %v7678
        %7680 = vmatprep.subr.mxu0 0.0
        %v7681 = vand.u32 %v333, 4294901760
        %v7682 = vsub.f32 %v333, %v7681
        %7683 = vmatpush1.msra.mxu0 %v7682
        %7684 = vmatprep.subr.mxu0 0.0
        %v7685 = vand.u32 %v332, 4294901760
        %v7686 = vsub.f32 %v332, %v7685
        %7687 = vmatpush1.msra.mxu0 %v7686
        %7688 = vmatprep.subr.mxu0 0.0
        %v7689 = vand.u32 %v331, 4294901760
        %v7690 = vsub.f32 %v331, %v7689
        %7691 = vmatpush1.msra.mxu0 %v7690
        %7692 = vmatprep.subr.mxu0 0.0
        %v7693 = vand.u32 %v330, 4294901760
        %v7694 = vsub.f32 %v330, %v7693
        %7695 = vmatpush1.msra.mxu0 %v7694
        %7696 = vmatprep.subr.mxu0 0.0
        %v7697 = vand.u32 %v329, 4294901760
        %v7698 = vsub.f32 %v329, %v7697
        %7699 = vmatpush1.msra.mxu0 %v7698
        %7700 = vmatprep.subr.mxu0 0.0
        %v7701 = vand.u32 %v328, 4294901760
        %v7702 = vsub.f32 %v328, %v7701
        %7703 = vmatpush1.msra.mxu0 %v7702
        %7704 = vmatprep.subr.mxu0 0.0
        %v7705 = vand.u32 %v327, 4294901760
        %v7706 = vsub.f32 %v327, %v7705
        %7707 = vmatpush1.msra.mxu0 %v7706
        %7708 = vmatprep.subr.mxu0 0.0
        %v7709 = vand.u32 %v326, 4294901760
        %v7710 = vsub.f32 %v326, %v7709
        %7711 = vmatpush1.msra.mxu0 %v7710
        %7712 = vmatprep.subr.mxu0 0.0
        %v7713 = vand.u32 %v325, 4294901760
        %v7714 = vsub.f32 %v325, %v7713
        %7715 = vmatpush1.msra.mxu0 %v7714
        %7716 = vmatprep.subr.mxu0 0.0
        %v7717 = vand.u32 %v324, 4294901760
        %v7718 = vsub.f32 %v324, %v7717
        %7719 = vmatpush1.msra.mxu0 %v7718
        %7720 = vmatprep.subr.mxu0 0.0
        %v7721 = vand.u32 %v323, 4294901760
        %v7722 = vsub.f32 %v323, %v7721
        %7723 = vmatpush1.msra.mxu0 %v7722
        %7724 = vmatprep.subr.mxu0 0.0
        %v7725 = vand.u32 %v322, 4294901760
        %v7726 = vsub.f32 %v322, %v7725
        %7727 = vmatpush1.msra.mxu0 %v7726
        %7728 = vmatprep.subr.mxu0 0.0
        %v7729 = vand.u32 %v353, 4294901760
        %v7730 = vsub.f32 %v353, %v7729
        %7731 = vmatpush2.msra.mxu0 %v7730
        %7732 = vmatprep.subr.mxu0 0.0
        %v7733 = vand.u32 %v352, 4294901760
        %v7734 = vsub.f32 %v352, %v7733
        %7735 = vmatpush2.msra.mxu0 %v7734
        %7736 = vmatprep.subr.mxu0 0.0
        %v7737 = vand.u32 %v351, 4294901760
        %v7738 = vsub.f32 %v351, %v7737
        %7739 = vmatpush2.msra.mxu0 %v7738
        %7740 = vmatprep.subr.mxu0 0.0
        %v7741 = vand.u32 %v350, 4294901760
        %v7742 = vsub.f32 %v350, %v7741
        %7743 = vmatpush2.msra.mxu0 %v7742
        %7744 = vmatprep.subr.mxu0 0.0
        %v7745 = vand.u32 %v349, 4294901760
        %v7746 = vsub.f32 %v349, %v7745
        %7747 = vmatpush2.msra.mxu0 %v7746
        %7748 = vmatprep.subr.mxu0 0.0
        %v7749 = vand.u32 %v348, 4294901760
        %v7750 = vsub.f32 %v348, %v7749
        %7751 = vmatpush2.msra.mxu0 %v7750
        %7752 = vmatprep.subr.mxu0 0.0
        %v7753 = vand.u32 %v347, 4294901760
        %v7754 = vsub.f32 %v347, %v7753
        %7755 = vmatpush2.msra.mxu0 %v7754
        %7756 = vmatprep.subr.mxu0 0.0
        %v7757 = vand.u32 %v346, 4294901760
        %v7758 = vsub.f32 %v346, %v7757
        %7759 = vmatpush2.msra.mxu0 %v7758
        %7760 = vmatprep.subr.mxu0 0.0
        %v7761 = vand.u32 %v345, 4294901760
        %v7762 = vsub.f32 %v345, %v7761
        %7763 = vmatpush2.msra.mxu0 %v7762
        %7764 = vmatprep.subr.mxu0 0.0
        %v7765 = vand.u32 %v344, 4294901760
        %v7766 = vsub.f32 %v344, %v7765
        %7767 = vmatpush2.msra.mxu0 %v7766
        %7768 = vmatprep.subr.mxu0 0.0
        %v7769 = vand.u32 %v343, 4294901760
        %v7770 = vsub.f32 %v343, %v7769
        %7771 = vmatpush2.msra.mxu0 %v7770
        %7772 = vmatprep.subr.mxu0 0.0
        %v7773 = vand.u32 %v342, 4294901760
        %v7774 = vsub.f32 %v342, %v7773
        %7775 = vmatpush2.msra.mxu0 %v7774
        %7776 = vmatprep.subr.mxu0 0.0
        %v7777 = vand.u32 %v341, 4294901760
        %v7778 = vsub.f32 %v341, %v7777
        %7779 = vmatpush2.msra.mxu0 %v7778
        %7780 = vmatprep.subr.mxu0 0.0
        %v7781 = vand.u32 %v340, 4294901760
        %v7782 = vsub.f32 %v340, %v7781
        %7783 = vmatpush2.msra.mxu0 %v7782
        %7784 = vmatprep.subr.mxu0 0.0
        %v7785 = vand.u32 %v339, 4294901760
        %v7786 = vsub.f32 %v339, %v7785
        %7787 = vmatpush2.msra.mxu0 %v7786
        %7788 = vmatprep.subr.mxu0 0.0
        %v7789 = vand.u32 %v338, 4294901760
        %v7790 = vsub.f32 %v338, %v7789
        %7791 = vmatpush2.msra.mxu0 %v7790
        %v7792 = vand.u32 %v7293, 4294901760
        %v7793 = vsub.f32 %v7293, %v7792
        %7794 = vmatprep.mubr.f32.mxu0 %v7793
        %v7795 = vand.u32 %v7291, 4294901760
        %v7796 = vsub.f32 %v7291, %v7795
        %7797 = vmatmul.mubr.f32.gmra.mxu0 %v7796
        %v7798 = vpop.f32.mrf.mxu0
        %v7799 = vadd.f32 %v7654, %v7798
        %v7800 = vpop.f32.mrf.mxu0
        %v7801 = vand.u32 %v7297, 4294901760
        %v7802 = vsub.f32 %v7297, %v7801
        %7803 = vmatprep.mubr.f32.mxu0 %v7802
        %v7804 = vand.u32 %v7295, 4294901760
        %v7805 = vsub.f32 %v7295, %v7804
        %7806 = vmatmul.mubr.f32.gmra.mxu0 %v7805
        %v7807 = vpop.f32.mrf.mxu0
        %v7808 = vadd.f32 %v7661, %v7807
        %v7809 = vpop.f32.mrf.mxu0
        %7810 = vdwg.mxu0
        %7811 = vmatprep.subr.mxu0 0.0
        %v7812 = vand.u32 %v337, 4294901760
        %7813 = vmatpush1.msra.mxu0 %v7812
        %7814 = vmatprep.subr.mxu0 0.0
        %v7815 = vand.u32 %v336, 4294901760
        %7816 = vmatpush1.msra.mxu0 %v7815
        %7817 = vmatprep.subr.mxu0 0.0
        %v7818 = vand.u32 %v335, 4294901760
        %7819 = vmatpush1.msra.mxu0 %v7818
        %7820 = vmatprep.subr.mxu0 0.0
        %v7821 = vand.u32 %v334, 4294901760
        %7822 = vmatpush1.msra.mxu0 %v7821
        %7823 = vmatprep.subr.mxu0 0.0
        %v7824 = vand.u32 %v333, 4294901760
        %7825 = vmatpush1.msra.mxu0 %v7824
        %7826 = vmatprep.subr.mxu0 0.0
        %v7827 = vand.u32 %v332, 4294901760
        %7828 = vmatpush1.msra.mxu0 %v7827
        %7829 = vmatprep.subr.mxu0 0.0
        %v7830 = vand.u32 %v331, 4294901760
        %7831 = vmatpush1.msra.mxu0 %v7830
        %7832 = vmatprep.subr.mxu0 0.0
        %v7833 = vand.u32 %v330, 4294901760
        %7834 = vmatpush1.msra.mxu0 %v7833
        %7835 = vmatprep.subr.mxu0 0.0
        %v7836 = vand.u32 %v329, 4294901760
        %7837 = vmatpush1.msra.mxu0 %v7836
        %7838 = vmatprep.subr.mxu0 0.0
        %v7839 = vand.u32 %v328, 4294901760
        %7840 = vmatpush1.msra.mxu0 %v7839
        %7841 = vmatprep.subr.mxu0 0.0
        %v7842 = vand.u32 %v327, 4294901760
        %7843 = vmatpush1.msra.mxu0 %v7842
        %7844 = vmatprep.subr.mxu0 0.0
        %v7845 = vand.u32 %v326, 4294901760
        %7846 = vmatpush1.msra.mxu0 %v7845
        %7847 = vmatprep.subr.mxu0 0.0
        %v7848 = vand.u32 %v325, 4294901760
        %7849 = vmatpush1.msra.mxu0 %v7848
        %7850 = vmatprep.subr.mxu0 0.0
        %v7851 = vand.u32 %v324, 4294901760
        %7852 = vmatpush1.msra.mxu0 %v7851
        %7853 = vmatprep.subr.mxu0 0.0
        %v7854 = vand.u32 %v323, 4294901760
        %7855 = vmatpush1.msra.mxu0 %v7854
        %7856 = vmatprep.subr.mxu0 0.0
        %v7857 = vand.u32 %v322, 4294901760
        %7858 = vmatpush1.msra.mxu0 %v7857
        %7859 = vmatprep.subr.mxu0 0.0
        %v7860 = vand.u32 %v353, 4294901760
        %7861 = vmatpush2.msra.mxu0 %v7860
        %7862 = vmatprep.subr.mxu0 0.0
        %v7863 = vand.u32 %v352, 4294901760
        %7864 = vmatpush2.msra.mxu0 %v7863
        %7865 = vmatprep.subr.mxu0 0.0
        %v7866 = vand.u32 %v351, 4294901760
        %7867 = vmatpush2.msra.mxu0 %v7866
        %7868 = vmatprep.subr.mxu0 0.0
        %v7869 = vand.u32 %v350, 4294901760
        %7870 = vmatpush2.msra.mxu0 %v7869
        %7871 = vmatprep.subr.mxu0 0.0
        %v7872 = vand.u32 %v349, 4294901760
        %7873 = vmatpush2.msra.mxu0 %v7872
        %7874 = vmatprep.subr.mxu0 0.0
        %v7875 = vand.u32 %v348, 4294901760
        %7876 = vmatpush2.msra.mxu0 %v7875
        %7877 = vmatprep.subr.mxu0 0.0
        %v7878 = vand.u32 %v347, 4294901760
        %7879 = vmatpush2.msra.mxu0 %v7878
        %7880 = vmatprep.subr.mxu0 0.0
        %v7881 = vand.u32 %v346, 4294901760
        %7882 = vmatpush2.msra.mxu0 %v7881
        %7883 = vmatprep.subr.mxu0 0.0
        %v7884 = vand.u32 %v345, 4294901760
        %7885 = vmatpush2.msra.mxu0 %v7884
        %7886 = vmatprep.subr.mxu0 0.0
        %v7887 = vand.u32 %v344, 4294901760
        %7888 = vmatpush2.msra.mxu0 %v7887
        %7889 = vmatprep.subr.mxu0 0.0
        %v7890 = vand.u32 %v343, 4294901760
        %7891 = vmatpush2.msra.mxu0 %v7890
        %7892 = vmatprep.subr.mxu0 0.0
        %v7893 = vand.u32 %v342, 4294901760
        %7894 = vmatpush2.msra.mxu0 %v7893
        %7895 = vmatprep.subr.mxu0 0.0
        %v7896 = vand.u32 %v341, 4294901760
        %7897 = vmatpush2.msra.mxu0 %v7896
        %7898 = vmatprep.subr.mxu0 0.0
        %v7899 = vand.u32 %v340, 4294901760
        %7900 = vmatpush2.msra.mxu0 %v7899
        %7901 = vmatprep.subr.mxu0 0.0
        %v7902 = vand.u32 %v339, 4294901760
        %7903 = vmatpush2.msra.mxu0 %v7902
        %7904 = vmatprep.subr.mxu0 0.0
        %v7905 = vand.u32 %v338, 4294901760
        %7906 = vmatpush2.msra.mxu0 %v7905
        %v7907 = vand.u32 %v7293, 4294901760
        %v7908 = vsub.f32 %v7293, %v7907
        %v7909 = vand.u32 %v7908, 4294901760
        %7910 = vmatprep.mubr.f32.mxu0 %v7909
        %v7911 = vand.u32 %v7291, 4294901760
        %v7912 = vsub.f32 %v7291, %v7911
        %v7913 = vand.u32 %v7912, 4294901760
        %7914 = vmatmul.mubr.f32.gmra.mxu0 %v7913
        %v7915 = vpop.f32.mrf.mxu0
        %v7916 = vadd.f32 %v7799, %v7915
        %v7917 = vpop.f32.mrf.mxu0
        %v7918 = vand.u32 %v7297, 4294901760
        %v7919 = vsub.f32 %v7297, %v7918
        %v7920 = vand.u32 %v7919, 4294901760
        %7921 = vmatprep.mubr.f32.mxu0 %v7920
        %v7922 = vand.u32 %v7295, 4294901760
        %v7923 = vsub.f32 %v7295, %v7922
        %v7924 = vand.u32 %v7923, 4294901760
        %7925 = vmatmul.mubr.f32.gmra.mxu0 %v7924
        %v7926 = vpop.f32.mrf.mxu0
        %v7927 = vadd.f32 %v7808, %v7926
        %v7928 = vpop.f32.mrf.mxu0
        %7929 = vdwg.mxu0
        %7930 = vmatprep.subr.mxu0 0.0
        %v7931 = vand.u32 %v337, 4294901760
        %v7932 = vsub.f32 %v337, %v7931
        %v7933 = vand.u32 %v7932, 4294901760
        %7934 = vmatpush1.msra.mxu0 %v7933
        %7935 = vmatprep.subr.mxu0 0.0
        %v7936 = vand.u32 %v336, 4294901760
        %v7937 = vsub.f32 %v336, %v7936
        %v7938 = vand.u32 %v7937, 4294901760
        %7939 = vmatpush1.msra.mxu0 %v7938
        %7940 = vmatprep.subr.mxu0 0.0
        %v7941 = vand.u32 %v335, 4294901760
        %v7942 = vsub.f32 %v335, %v7941
        %v7943 = vand.u32 %v7942, 4294901760
        %7944 = vmatpush1.msra.mxu0 %v7943
        %7945 = vmatprep.subr.mxu0 0.0
        %v7946 = vand.u32 %v334, 4294901760
        %v7947 = vsub.f32 %v334, %v7946
        %v7948 = vand.u32 %v7947, 4294901760
        %7949 = vmatpush1.msra.mxu0 %v7948
        %7950 = vmatprep.subr.mxu0 0.0
        %v7951 = vand.u32 %v333, 4294901760
        %v7952 = vsub.f32 %v333, %v7951
        %v7953 = vand.u32 %v7952, 4294901760
        %7954 = vmatpush1.msra.mxu0 %v7953
        %7955 = vmatprep.subr.mxu0 0.0
        %v7956 = vand.u32 %v332, 4294901760
        %v7957 = vsub.f32 %v332, %v7956
        %v7958 = vand.u32 %v7957, 4294901760
        %7959 = vmatpush1.msra.mxu0 %v7958
        %7960 = vmatprep.subr.mxu0 0.0
        %v7961 = vand.u32 %v331, 4294901760
        %v7962 = vsub.f32 %v331, %v7961
        %v7963 = vand.u32 %v7962, 4294901760
        %7964 = vmatpush1.msra.mxu0 %v7963
        %7965 = vmatprep.subr.mxu0 0.0
        %v7966 = vand.u32 %v330, 4294901760
        %v7967 = vsub.f32 %v330, %v7966
        %v7968 = vand.u32 %v7967, 4294901760
        %7969 = vmatpush1.msra.mxu0 %v7968
        %7970 = vmatprep.subr.mxu0 0.0
        %v7971 = vand.u32 %v329, 4294901760
        %v7972 = vsub.f32 %v329, %v7971
        %v7973 = vand.u32 %v7972, 4294901760
        %7974 = vmatpush1.msra.mxu0 %v7973
        %7975 = vmatprep.subr.mxu0 0.0
        %v7976 = vand.u32 %v328, 4294901760
        %v7977 = vsub.f32 %v328, %v7976
        %v7978 = vand.u32 %v7977, 4294901760
        %7979 = vmatpush1.msra.mxu0 %v7978
        %7980 = vmatprep.subr.mxu0 0.0
        %v7981 = vand.u32 %v327, 4294901760
        %v7982 = vsub.f32 %v327, %v7981
        %v7983 = vand.u32 %v7982, 4294901760
        %7984 = vmatpush1.msra.mxu0 %v7983
        %7985 = vmatprep.subr.mxu0 0.0
        %v7986 = vand.u32 %v326, 4294901760
        %v7987 = vsub.f32 %v326, %v7986
        %v7988 = vand.u32 %v7987, 4294901760
        %7989 = vmatpush1.msra.mxu0 %v7988
        %7990 = vmatprep.subr.mxu0 0.0
        %v7991 = vand.u32 %v325, 4294901760
        %v7992 = vsub.f32 %v325, %v7991
        %v7993 = vand.u32 %v7992, 4294901760
        %7994 = vmatpush1.msra.mxu0 %v7993
        %7995 = vmatprep.subr.mxu0 0.0
        %v7996 = vand.u32 %v324, 4294901760
        %v7997 = vsub.f32 %v324, %v7996
        %v7998 = vand.u32 %v7997, 4294901760
        %7999 = vmatpush1.msra.mxu0 %v7998
        %8000 = vmatprep.subr.mxu0 0.0
        %v8001 = vand.u32 %v323, 4294901760
        %v8002 = vsub.f32 %v323, %v8001
        %v8003 = vand.u32 %v8002, 4294901760
        %8004 = vmatpush1.msra.mxu0 %v8003
        %8005 = vmatprep.subr.mxu0 0.0
        %v8006 = vand.u32 %v322, 4294901760
        %v8007 = vsub.f32 %v322, %v8006
        %v8008 = vand.u32 %v8007, 4294901760
        %8009 = vmatpush1.msra.mxu0 %v8008
        %8010 = vmatprep.subr.mxu0 0.0
        %v8011 = vand.u32 %v353, 4294901760
        %v8012 = vsub.f32 %v353, %v8011
        %v8013 = vand.u32 %v8012, 4294901760
        %8014 = vmatpush2.msra.mxu0 %v8013
        %8015 = vmatprep.subr.mxu0 0.0
        %v8016 = vand.u32 %v352, 4294901760
        %v8017 = vsub.f32 %v352, %v8016
        %v8018 = vand.u32 %v8017, 4294901760
        %8019 = vmatpush2.msra.mxu0 %v8018
        %8020 = vmatprep.subr.mxu0 0.0
        %v8021 = vand.u32 %v351, 4294901760
        %v8022 = vsub.f32 %v351, %v8021
        %v8023 = vand.u32 %v8022, 4294901760
        %8024 = vmatpush2.msra.mxu0 %v8023
        %8025 = vmatprep.subr.mxu0 0.0
        %v8026 = vand.u32 %v350, 4294901760
        %v8027 = vsub.f32 %v350, %v8026
        %v8028 = vand.u32 %v8027, 4294901760
        %8029 = vmatpush2.msra.mxu0 %v8028
        %8030 = vmatprep.subr.mxu0 0.0
        %v8031 = vand.u32 %v349, 4294901760
        %v8032 = vsub.f32 %v349, %v8031
        %v8033 = vand.u32 %v8032, 4294901760
        %8034 = vmatpush2.msra.mxu0 %v8033
        %8035 = vmatprep.subr.mxu0 0.0
        %v8036 = vand.u32 %v348, 4294901760
        %v8037 = vsub.f32 %v348, %v8036
        %v8038 = vand.u32 %v8037, 4294901760
        %8039 = vmatpush2.msra.mxu0 %v8038
        %8040 = vmatprep.subr.mxu0 0.0
        %v8041 = vand.u32 %v347, 4294901760
        %v8042 = vsub.f32 %v347, %v8041
        %v8043 = vand.u32 %v8042, 4294901760
        %8044 = vmatpush2.msra.mxu0 %v8043
        %8045 = vmatprep.subr.mxu0 0.0
        %v8046 = vand.u32 %v346, 4294901760
        %v8047 = vsub.f32 %v346, %v8046
        %v8048 = vand.u32 %v8047, 4294901760
        %8049 = vmatpush2.msra.mxu0 %v8048
        %8050 = vmatprep.subr.mxu0 0.0
        %v8051 = vand.u32 %v345, 4294901760
        %v8052 = vsub.f32 %v345, %v8051
        %v8053 = vand.u32 %v8052, 4294901760
        %8054 = vmatpush2.msra.mxu0 %v8053
        %8055 = vmatprep.subr.mxu0 0.0
        %v8056 = vand.u32 %v344, 4294901760
        %v8057 = vsub.f32 %v344, %v8056
        %v8058 = vand.u32 %v8057, 4294901760
        %8059 = vmatpush2.msra.mxu0 %v8058
        %8060 = vmatprep.subr.mxu0 0.0
        %v8061 = vand.u32 %v343, 4294901760
        %v8062 = vsub.f32 %v343, %v8061
        %v8063 = vand.u32 %v8062, 4294901760
        %8064 = vmatpush2.msra.mxu0 %v8063
        %8065 = vmatprep.subr.mxu0 0.0
        %v8066 = vand.u32 %v342, 4294901760
        %v8067 = vsub.f32 %v342, %v8066
        %v8068 = vand.u32 %v8067, 4294901760
        %8069 = vmatpush2.msra.mxu0 %v8068
        %8070 = vmatprep.subr.mxu0 0.0
        %v8071 = vand.u32 %v341, 4294901760
        %v8072 = vsub.f32 %v341, %v8071
        %v8073 = vand.u32 %v8072, 4294901760
        %8074 = vmatpush2.msra.mxu0 %v8073
        %8075 = vmatprep.subr.mxu0 0.0
        %v8076 = vand.u32 %v340, 4294901760
        %v8077 = vsub.f32 %v340, %v8076
        %v8078 = vand.u32 %v8077, 4294901760
        %8079 = vmatpush2.msra.mxu0 %v8078
        %8080 = vmatprep.subr.mxu0 0.0
        %v8081 = vand.u32 %v339, 4294901760
        %v8082 = vsub.f32 %v339, %v8081
        %v8083 = vand.u32 %v8082, 4294901760
        %8084 = vmatpush2.msra.mxu0 %v8083
        %8085 = vmatprep.subr.mxu0 0.0
        %v8086 = vand.u32 %v338, 4294901760
        %v8087 = vsub.f32 %v338, %v8086
        %v8088 = vand.u32 %v8087, 4294901760
        %8089 = vmatpush2.msra.mxu0 %v8088
        %v8090 = vand.u32 %v7293, 4294901760
        %8091 = vmatprep.mubr.f32.mxu0 %v8090
        %v8092 = vand.u32 %v7291, 4294901760
        %8093 = vmatmul.mubr.f32.gmra.mxu0 %v8092
        %v8094 = vpop.f32.mrf.mxu0
        %v8095 = vadd.f32 %v7916, %v8094
        %v8096 = vpop.f32.mrf.mxu0
        %v8097 = vand.u32 %v7297, 4294901760
        %8098 = vmatprep.mubr.f32.mxu0 %v8097
        %v8099 = vand.u32 %v7295, 4294901760
        %8100 = vmatmul.mubr.f32.gmra.mxu0 %v8099
        %v8101 = vpop.f32.mrf.mxu0
        %v8102 = vadd.f32 %v7927, %v8101
        %v8103 = vpop.f32.mrf.mxu0
        %8104 = vdwg.mxu0
        %8105 = vmatprep.subr.mxu0 0.0
        %v8106 = vand.u32 %v337, 4294901760
        %8107 = vmatpush1.msra.mxu0 %v8106
        %8108 = vmatprep.subr.mxu0 0.0
        %v8109 = vand.u32 %v336, 4294901760
        %8110 = vmatpush1.msra.mxu0 %v8109
        %8111 = vmatprep.subr.mxu0 0.0
        %v8112 = vand.u32 %v335, 4294901760
        %8113 = vmatpush1.msra.mxu0 %v8112
        %8114 = vmatprep.subr.mxu0 0.0
        %v8115 = vand.u32 %v334, 4294901760
        %8116 = vmatpush1.msra.mxu0 %v8115
        %8117 = vmatprep.subr.mxu0 0.0
        %v8118 = vand.u32 %v333, 4294901760
        %8119 = vmatpush1.msra.mxu0 %v8118
        %8120 = vmatprep.subr.mxu0 0.0
        %v8121 = vand.u32 %v332, 4294901760
        %8122 = vmatpush1.msra.mxu0 %v8121
        %8123 = vmatprep.subr.mxu0 0.0
        %v8124 = vand.u32 %v331, 4294901760
        %8125 = vmatpush1.msra.mxu0 %v8124
        %8126 = vmatprep.subr.mxu0 0.0
        %v8127 = vand.u32 %v330, 4294901760
        %8128 = vmatpush1.msra.mxu0 %v8127
        %8129 = vmatprep.subr.mxu0 0.0
        %v8130 = vand.u32 %v329, 4294901760
        %8131 = vmatpush1.msra.mxu0 %v8130
        %8132 = vmatprep.subr.mxu0 0.0
        %v8133 = vand.u32 %v328, 4294901760
        %8134 = vmatpush1.msra.mxu0 %v8133
        %8135 = vmatprep.subr.mxu0 0.0
        %v8136 = vand.u32 %v327, 4294901760
        %8137 = vmatpush1.msra.mxu0 %v8136
        %8138 = vmatprep.subr.mxu0 0.0
        %v8139 = vand.u32 %v326, 4294901760
        %8140 = vmatpush1.msra.mxu0 %v8139
        %8141 = vmatprep.subr.mxu0 0.0
        %v8142 = vand.u32 %v325, 4294901760
        %8143 = vmatpush1.msra.mxu0 %v8142
        %8144 = vmatprep.subr.mxu0 0.0
        %v8145 = vand.u32 %v324, 4294901760
        %8146 = vmatpush1.msra.mxu0 %v8145
        %8147 = vmatprep.subr.mxu0 0.0
        %v8148 = vand.u32 %v323, 4294901760
        %8149 = vmatpush1.msra.mxu0 %v8148
        %8150 = vmatprep.subr.mxu0 0.0
        %v8151 = vand.u32 %v322, 4294901760
        %8152 = vmatpush1.msra.mxu0 %v8151
        %8153 = vmatprep.subr.mxu0 0.0
        %v8154 = vand.u32 %v353, 4294901760
        %8155 = vmatpush2.msra.mxu0 %v8154
        %8156 = vmatprep.subr.mxu0 0.0
        %v8157 = vand.u32 %v352, 4294901760
        %8158 = vmatpush2.msra.mxu0 %v8157
        %8159 = vmatprep.subr.mxu0 0.0
        %v8160 = vand.u32 %v351, 4294901760
        %8161 = vmatpush2.msra.mxu0 %v8160
        %8162 = vmatprep.subr.mxu0 0.0
        %v8163 = vand.u32 %v350, 4294901760
        %8164 = vmatpush2.msra.mxu0 %v8163
        %8165 = vmatprep.subr.mxu0 0.0
        %v8166 = vand.u32 %v349, 4294901760
        %8167 = vmatpush2.msra.mxu0 %v8166
        %8168 = vmatprep.subr.mxu0 0.0
        %v8169 = vand.u32 %v348, 4294901760
        %8170 = vmatpush2.msra.mxu0 %v8169
        %8171 = vmatprep.subr.mxu0 0.0
        %v8172 = vand.u32 %v347, 4294901760
        %8173 = vmatpush2.msra.mxu0 %v8172
        %8174 = vmatprep.subr.mxu0 0.0
        %v8175 = vand.u32 %v346, 4294901760
        %8176 = vmatpush2.msra.mxu0 %v8175
        %8177 = vmatprep.subr.mxu0 0.0
        %v8178 = vand.u32 %v345, 4294901760
        %8179 = vmatpush2.msra.mxu0 %v8178
        %8180 = vmatprep.subr.mxu0 0.0
        %v8181 = vand.u32 %v344, 4294901760
        %8182 = vmatpush2.msra.mxu0 %v8181
        %8183 = vmatprep.subr.mxu0 0.0
        %v8184 = vand.u32 %v343, 4294901760
        %8185 = vmatpush2.msra.mxu0 %v8184
        %8186 = vmatprep.subr.mxu0 0.0
        %v8187 = vand.u32 %v342, 4294901760
        %8188 = vmatpush2.msra.mxu0 %v8187
        %8189 = vmatprep.subr.mxu0 0.0
        %v8190 = vand.u32 %v341, 4294901760
        %8191 = vmatpush2.msra.mxu0 %v8190
        %8192 = vmatprep.subr.mxu0 0.0
        %v8193 = vand.u32 %v340, 4294901760
        %8194 = vmatpush2.msra.mxu0 %v8193
        %8195 = vmatprep.subr.mxu0 0.0
        %v8196 = vand.u32 %v339, 4294901760
        %8197 = vmatpush2.msra.mxu0 %v8196
        %8198 = vmatprep.subr.mxu0 0.0
        %v8199 = vand.u32 %v338, 4294901760
        %8200 = vmatpush2.msra.mxu0 %v8199
        %v8201 = vand.u32 %v7293, 4294901760
        %8202 = vmatprep.mubr.f32.mxu0 %v8201
        %v8203 = vand.u32 %v7291, 4294901760
        %8204 = vmatmul.mubr.f32.gmra.mxu0 %v8203
        %v8205 = vpop.f32.mrf.mxu0
        %v8206 = vadd.f32 %v8095, %v8205
        %v8207 = vpop.f32.mrf.mxu0
        %v8208 = vand.u32 %v7297, 4294901760
        %8209 = vmatprep.mubr.f32.mxu0 %v8208
        %v8210 = vand.u32 %v7295, 4294901760
        %8211 = vmatmul.mubr.f32.gmra.mxu0 %v8210
        %v8212 = vpop.f32.mrf.mxu0
        %v8213 = vadd.f32 %v8102, %v8212
        %v8214 = vpop.f32.mrf.mxu0
        %8215 = vdwg.mxu0
        %v8216 = vrcp.pop %v8206
        %v8217 = vrcp.pop %v8213
        %8220 = vrot.lane.b32.xlu0 %v8216, 1
        %v8221 = vpop.permute.xlu0 %8220
        %8222 = vrot.lane.b32.xlu0 %v8217, 1
        %v8223 = vpop.permute.xlu0 %8222
        %v8226 = vmul.f32 %v8206, %v8221
        %v8227 = vmul.f32 %v8213, %v8223
        %v8228 = vadd.f32 %v8226, 3.8146973e-13
        %v8229 = vadd.f32 %v8227, 3.8146973e-13
        %8230 = vrot.lane.b32.xlu0 %v8216, 2
        %v8231 = vpop.permute.xlu0 %8230
        %8232 = vrot.lane.b32.xlu0 %v8217, 2
        %v8233 = vpop.permute.xlu0 %8232
        %v8236 = vmul.f32 %v8206, %v8231
        %v8237 = vmul.f32 %v8213, %v8233
        %v8238 = vadd.f32 %v8236, 3.8146973e-13
        %v8239 = vadd.f32 %v8237, 3.8146973e-13
        %8240 = vrot.lane.b32.xlu0 %v8216, 3
        %v8241 = vpop.permute.xlu0 %8240
        %8242 = vrot.lane.b32.xlu0 %v8217, 3
        %v8243 = vpop.permute.xlu0 %8242
        %v8246 = vmul.f32 %v8206, %v8241
        %v8247 = vmul.f32 %v8213, %v8243
        %v8248 = vadd.f32 %v8246, 9.671111e-06
        %v8249 = vadd.f32 %v8247, 9.671111e-06
        %v8250 = vmul.f32 %v8228, %v8228
        %v8251 = vmul.f32 %v8229, %v8229
        %v8252 = vmul.f32 %v8250, 0.9999744
        %v8253 = vmul.f32 %v8251, 0.9999744
        %8256 = vrot.lane.b32.xlu0 %v8252, 2
        %v8257 = vpop.permute.xlu0 %8256
        %8258 = vrot.lane.b32.xlu0 %v8253, 2
        %v8259 = vpop.permute.xlu0 %8258
        %v8262 = vsub.f32 %v8248, %v8257
        %v8263 = vsub.f32 %v8249, %v8259
        %8264 = vrot.lane.b32.xlu0 %v8216, 4
        %v8265 = vpop.permute.xlu0 %8264
        %8266 = vrot.lane.b32.xlu0 %v8217, 4
        %v8267 = vpop.permute.xlu0 %8266
        %v8270 = vmul.f32 %v8206, %v8265
        %v8271 = vmul.f32 %v8213, %v8267
        %v8272 = vadd.f32 %v8270, 5.684342e-21
        %v8273 = vadd.f32 %v8271, 5.684342e-21
        %8276 = vrot.lane.b32.xlu0 %v8238, 127
        %v8277 = vpop.permute.xlu0 %8276
        %8278 = vrot.lane.b32.xlu0 %v8239, 127
        %v8279 = vpop.permute.xlu0 %8278
        %v8282 = vmul.f32 %v8228, %v8277
        %v8283 = vmul.f32 %v8229, %v8279
        %v8284 = vmul.f32 %v8282, 0.9999744
        %v8285 = vmul.f32 %v8283, 0.9999744
        %8288 = vrot.lane.b32.xlu0 %v8284, 3
        %v8289 = vpop.permute.xlu0 %8288
        %8290 = vrot.lane.b32.xlu0 %v8285, 3
        %v8291 = vpop.permute.xlu0 %8290
        %v8294 = vsub.f32 %v8272, %v8289
        %v8295 = vsub.f32 %v8273, %v8291
        %8296 = vrot.lane.b32.xlu0 %v8216, 5
        %v8297 = vpop.permute.xlu0 %8296
        %8298 = vrot.lane.b32.xlu0 %v8217, 5
        %v8299 = vpop.permute.xlu0 %8298
        %v8302 = vmul.f32 %v8206, %v8297
        %v8303 = vmul.f32 %v8213, %v8299
        %v8304 = vadd.f32 %v8302, 9.671111e-06
        %v8305 = vadd.f32 %v8303, 9.671111e-06
        %v8306 = vmul.f32 %v8238, %v8238
        %v8307 = vmul.f32 %v8239, %v8239
        %v8308 = vmul.f32 %v8306, 0.9999744
        %v8309 = vmul.f32 %v8307, 0.9999744
        %8312 = vrot.lane.b32.xlu0 %v8308, 3
        %v8313 = vpop.permute.xlu0 %8312
        %8314 = vrot.lane.b32.xlu0 %v8309, 3
        %v8315 = vpop.permute.xlu0 %8314
        %v8318 = vsub.f32 %v8304, %v8313
        %v8319 = vsub.f32 %v8305, %v8315
        %8321 = vset.pattern.permute.xlu0 5
        %8322 = vperm.xlu0 %8321, %v8318
        %v8323 = vpop.permute.xlu0 %8322
        %8326 = vset.pattern.permute.xlu0 5
        %8327 = vperm.xlu0 %8326, %v8319
        %v8328 = vpop.permute.xlu0 %8327
        %v8330 = vsel %vm1449, %v8323, 0.0
        %v8331 = vsel %vm1449, %v8328, 0.0
        %8333 = vset.pattern.permute.xlu0 4
        %8334 = vperm.xlu0 %8333, %v8294
        %v8335 = vpop.permute.xlu0 %8334
        %8338 = vset.pattern.permute.xlu0 4
        %8339 = vperm.xlu0 %8338, %v8295
        %v8340 = vpop.permute.xlu0 %8339
        %v8342 = vsel %vm1448, %v8335, %v8330
        %v8343 = vsel %vm1448, %v8340, %v8331
        %8345 = vset.pattern.permute.xlu0 3
        %8346 = vperm.xlu0 %8345, %v8262
        %v8347 = vpop.permute.xlu0 %8346
        %8350 = vset.pattern.permute.xlu0 3
        %8351 = vperm.xlu0 %8350, %v8263
        %v8352 = vpop.permute.xlu0 %8351
        %v8354 = vsel %vm1445, %v8347, %v8342
        %v8355 = vsel %vm1445, %v8352, %v8343
        %8356 = vset.pattern.permute.xlu0 2
        %8357 = vperm.xlu0 %8356, %v8238
        %v8358 = vpop.permute.xlu0 %8357
        %8360 = vset.pattern.permute.xlu0 2
        %8361 = vperm.xlu0 %8360, %v8239
        %v8362 = vpop.permute.xlu0 %8361
        %v8364 = vsel %vm1444, %v8358, %v8354
        %v8365 = vsel %vm1444, %v8362, %v8355
        %8367 = vset.pattern.permute.xlu0 1
        %8368 = vperm.xlu0 %8367, %v8228
        %v8369 = vpop.permute.xlu0 %8368
        %8372 = vset.pattern.permute.xlu0 1
        %8373 = vperm.xlu0 %8372, %v8229
        %v8374 = vpop.permute.xlu0 %8373
        %v8376 = vsel %vm1443, %v8369, %v8364
        %v8377 = vsel %vm1443, %v8374, %v8365
        %s8378 = sld [smem:[#allocation3 + $0x7]]
        %s8379 = smul.f32 %s8378, %s305
        %v8380 = vstv %s8379
        %v8381 = vmul.f32 %v306, %v8380
        %v8382 = vmul.f32 %v307, %v8380
        %v8383 = vmul.f32 %v308, %v8380
        %v8384 = vmul.f32 %v309, %v8380
        %s8385 = sld [smem:[#allocation3 + $0x87]]
        %s8386 = smul.f32 %s8385, %s305
        %v8387 = vstv %s8386
        %v8388 = vmul.f32 %v310, %v8387
        %v8389 = vmul.f32 %v311, %v8387
        %v8390 = vmul.f32 %v312, %v8387
        %v8391 = vmul.f32 %v313, %v8387
        %v8392 = vadd.f32 %v8381, %v8388
        %v8393 = vadd.f32 %v8382, %v8389
        %v8394 = vadd.f32 %v8383, %v8390
        %v8395 = vadd.f32 %v8384, %v8391
        %s8396 = sld [smem:[#allocation3 + $0x107]]
        %s8397 = smul.f32 %s8396, %s305
        %v8398 = vstv %s8397
        %v8399 = vmul.f32 %v314, %v8398
        %v8400 = vmul.f32 %v315, %v8398
        %v8401 = vmul.f32 %v316, %v8398
        %v8402 = vmul.f32 %v317, %v8398
        %v8403 = vadd.f32 %v8392, %v8399
        %v8404 = vadd.f32 %v8393, %v8400
        %v8405 = vadd.f32 %v8394, %v8401
        %v8406 = vadd.f32 %v8395, %v8402
        %s8407 = sld [smem:[#allocation3 + $0x187]]
        %s8408 = smul.f32 %s8407, %s305
        %v8409 = vstv %s8408
        %v8410 = vmul.f32 %v318, %v8409
        %v8411 = vmul.f32 %v319, %v8409
        %v8412 = vmul.f32 %v320, %v8409
        %v8413 = vmul.f32 %v321, %v8409
        %v8414 = vadd.f32 %v8403, %v8410
        %v8415 = vadd.f32 %v8404, %v8411
        %v8416 = vadd.f32 %v8405, %v8412
        %v8417 = vadd.f32 %v8406, %v8413
        %s8418 = sld [smem:[#allocation8 + $0x7]]
        %s8419 = smul.f32 %s8418, %s305
        %v8420 = vstv %s8419
        %v8421 = vadd.f32 %v8414, %v8420
        %v8422 = vadd.f32 %v8415, %v8420
        %v8423 = vadd.f32 %v8416, %v8420
        %v8424 = vadd.f32 %v8417, %v8420
        %v8425 = vmax.f32 %v8421, %v8422
        %8426 = vmax.xlane.f32.xlu0 %v8425
        %v8427 = vpop.xlane.xlu0 %8426
        %v8428 = vmax.f32 %v8423, %v8424
        %8429 = vmax.xlane.f32.xlu0 %v8428
        %v8430 = vpop.xlane.xlu0 %8429
        %v8431 = vsub.f32 %v8421, %v8427
        %v8432 = vsub.f32 %v8422, %v8427
        %v8433 = vsub.f32 %v8423, %v8430
        %v8434 = vsub.f32 %v8424, %v8430
        %v8435 = vmul.f32 %v8431, 1.442695
        %v8436 = vpow.pop %v8435
        %v8437 = vmul.f32 %v8432, 1.442695
        %v8438 = vpow.pop %v8437
        %v8439 = vmul.f32 %v8433, 1.442695
        %v8440 = vpow.pop %v8439
        %v8441 = vmul.f32 %v8434, 1.442695
        %v8442 = vpow.pop %v8441
        %8443 = vmatprep.subr.mxu0 0.0
        %v8444 = vand.u32 %v337, 4294901760
        %8445 = vmatpush1.msra.mxu0 %v8444
        %8446 = vmatprep.subr.mxu0 0.0
        %v8447 = vand.u32 %v336, 4294901760
        %8448 = vmatpush1.msra.mxu0 %v8447
        %8449 = vmatprep.subr.mxu0 0.0
        %v8450 = vand.u32 %v335, 4294901760
        %8451 = vmatpush1.msra.mxu0 %v8450
        %8452 = vmatprep.subr.mxu0 0.0
        %v8453 = vand.u32 %v334, 4294901760
        %8454 = vmatpush1.msra.mxu0 %v8453
        %8455 = vmatprep.subr.mxu0 0.0
        %v8456 = vand.u32 %v333, 4294901760
        %8457 = vmatpush1.msra.mxu0 %v8456
        %8458 = vmatprep.subr.mxu0 0.0
        %v8459 = vand.u32 %v332, 4294901760
        %8460 = vmatpush1.msra.mxu0 %v8459
        %8461 = vmatprep.subr.mxu0 0.0
        %v8462 = vand.u32 %v331, 4294901760
        %8463 = vmatpush1.msra.mxu0 %v8462
        %8464 = vmatprep.subr.mxu0 0.0
        %v8465 = vand.u32 %v330, 4294901760
        %8466 = vmatpush1.msra.mxu0 %v8465
        %8467 = vmatprep.subr.mxu0 0.0
        %v8468 = vand.u32 %v329, 4294901760
        %8469 = vmatpush1.msra.mxu0 %v8468
        %8470 = vmatprep.subr.mxu0 0.0
        %v8471 = vand.u32 %v328, 4294901760
        %8472 = vmatpush1.msra.mxu0 %v8471
        %8473 = vmatprep.subr.mxu0 0.0
        %v8474 = vand.u32 %v327, 4294901760
        %8475 = vmatpush1.msra.mxu0 %v8474
        %8476 = vmatprep.subr.mxu0 0.0
        %v8477 = vand.u32 %v326, 4294901760
        %8478 = vmatpush1.msra.mxu0 %v8477
        %8479 = vmatprep.subr.mxu0 0.0
        %v8480 = vand.u32 %v325, 4294901760
        %8481 = vmatpush1.msra.mxu0 %v8480
        %8482 = vmatprep.subr.mxu0 0.0
        %v8483 = vand.u32 %v324, 4294901760
        %8484 = vmatpush1.msra.mxu0 %v8483
        %8485 = vmatprep.subr.mxu0 0.0
        %v8486 = vand.u32 %v323, 4294901760
        %8487 = vmatpush1.msra.mxu0 %v8486
        %8488 = vmatprep.subr.mxu0 0.0
        %v8489 = vand.u32 %v322, 4294901760
        %8490 = vmatpush1.msra.mxu0 %v8489
        %8491 = vmatprep.subr.mxu0 0.0
        %v8492 = vand.u32 %v353, 4294901760
        %8493 = vmatpush2.msra.mxu0 %v8492
        %8494 = vmatprep.subr.mxu0 0.0
        %v8495 = vand.u32 %v352, 4294901760
        %8496 = vmatpush2.msra.mxu0 %v8495
        %8497 = vmatprep.subr.mxu0 0.0
        %v8498 = vand.u32 %v351, 4294901760
        %8499 = vmatpush2.msra.mxu0 %v8498
        %8500 = vmatprep.subr.mxu0 0.0
        %v8501 = vand.u32 %v350, 4294901760
        %8502 = vmatpush2.msra.mxu0 %v8501
        %8503 = vmatprep.subr.mxu0 0.0
        %v8504 = vand.u32 %v349, 4294901760
        %8505 = vmatpush2.msra.mxu0 %v8504
        %8506 = vmatprep.subr.mxu0 0.0
        %v8507 = vand.u32 %v348, 4294901760
        %8508 = vmatpush2.msra.mxu0 %v8507
        %8509 = vmatprep.subr.mxu0 0.0
        %v8510 = vand.u32 %v347, 4294901760
        %8511 = vmatpush2.msra.mxu0 %v8510
        %8512 = vmatprep.subr.mxu0 0.0
        %v8513 = vand.u32 %v346, 4294901760
        %8514 = vmatpush2.msra.mxu0 %v8513
        %8515 = vmatprep.subr.mxu0 0.0
        %v8516 = vand.u32 %v345, 4294901760
        %8517 = vmatpush2.msra.mxu0 %v8516
        %8518 = vmatprep.subr.mxu0 0.0
        %v8519 = vand.u32 %v344, 4294901760
        %8520 = vmatpush2.msra.mxu0 %v8519
        %8521 = vmatprep.subr.mxu0 0.0
        %v8522 = vand.u32 %v343, 4294901760
        %8523 = vmatpush2.msra.mxu0 %v8522
        %8524 = vmatprep.subr.mxu0 0.0
        %v8525 = vand.u32 %v342, 4294901760
        %8526 = vmatpush2.msra.mxu0 %v8525
        %8527 = vmatprep.subr.mxu0 0.0
        %v8528 = vand.u32 %v341, 4294901760
        %8529 = vmatpush2.msra.mxu0 %v8528
        %8530 = vmatprep.subr.mxu0 0.0
        %v8531 = vand.u32 %v340, 4294901760
        %8532 = vmatpush2.msra.mxu0 %v8531
        %8533 = vmatprep.subr.mxu0 0.0
        %v8534 = vand.u32 %v339, 4294901760
        %8535 = vmatpush2.msra.mxu0 %v8534
        %8536 = vmatprep.subr.mxu0 0.0
        %v8537 = vand.u32 %v338, 4294901760
        %8538 = vmatpush2.msra.mxu0 %v8537
        %v8539 = vand.u32 %v8438, 4294901760
        %v8540 = vsub.f32 %v8438, %v8539
        %v8541 = vand.u32 %v8540, 4294901760
        %v8542 = vsub.f32 %v8540, %v8541
        %v8543 = vand.u32 %v8542, 4294901760
        %8544 = vmatprep.mubr.f32.mxu0 %v8543
        %v8545 = vand.u32 %v8436, 4294901760
        %v8546 = vsub.f32 %v8436, %v8545
        %v8547 = vand.u32 %v8546, 4294901760
        %v8548 = vsub.f32 %v8546, %v8547
        %v8549 = vand.u32 %v8548, 4294901760
        %8550 = vmatmul.mubr.f32.gmra.mxu0 %v8549
        %v8551 = vpop.f32.mrf.mxu0
        %v8552 = vadd.f32 0.0, %v8551
        %v8553 = vpop.f32.mrf.mxu0
        %v8554 = vand.u32 %v8442, 4294901760
        %v8555 = vsub.f32 %v8442, %v8554
        %v8556 = vand.u32 %v8555, 4294901760
        %v8557 = vsub.f32 %v8555, %v8556
        %v8558 = vand.u32 %v8557, 4294901760
        %8559 = vmatprep.mubr.f32.mxu0 %v8558
        %v8560 = vand.u32 %v8440, 4294901760
        %v8561 = vsub.f32 %v8440, %v8560
        %v8562 = vand.u32 %v8561, 4294901760
        %v8563 = vsub.f32 %v8561, %v8562
        %v8564 = vand.u32 %v8563, 4294901760
        %8565 = vmatmul.mubr.f32.gmra.mxu0 %v8564
        %v8566 = vpop.f32.mrf.mxu0
        %v8567 = vadd.f32 0.0, %v8566
        %v8568 = vpop.f32.mrf.mxu0
        %8569 = vdwg.mxu0
        %8570 = vmatprep.subr.mxu0 0.0
        %v8571 = vand.u32 %v337, 4294901760
        %v8572 = vsub.f32 %v337, %v8571
        %v8573 = vand.u32 %v8572, 4294901760
        %v8574 = vsub.f32 %v8572, %v8573
        %v8575 = vand.u32 %v8574, 4294901760
        %8576 = vmatpush1.msra.mxu0 %v8575
        %8577 = vmatprep.subr.mxu0 0.0
        %v8578 = vand.u32 %v336, 4294901760
        %v8579 = vsub.f32 %v336, %v8578
        %v8580 = vand.u32 %v8579, 4294901760
        %v8581 = vsub.f32 %v8579, %v8580
        %v8582 = vand.u32 %v8581, 4294901760
        %8583 = vmatpush1.msra.mxu0 %v8582
        %8584 = vmatprep.subr.mxu0 0.0
        %v8585 = vand.u32 %v335, 4294901760
        %v8586 = vsub.f32 %v335, %v8585
        %v8587 = vand.u32 %v8586, 4294901760
        %v8588 = vsub.f32 %v8586, %v8587
        %v8589 = vand.u32 %v8588, 4294901760
        %8590 = vmatpush1.msra.mxu0 %v8589
        %8591 = vmatprep.subr.mxu0 0.0
        %v8592 = vand.u32 %v334, 4294901760
        %v8593 = vsub.f32 %v334, %v8592
        %v8594 = vand.u32 %v8593, 4294901760
        %v8595 = vsub.f32 %v8593, %v8594
        %v8596 = vand.u32 %v8595, 4294901760
        %8597 = vmatpush1.msra.mxu0 %v8596
        %8598 = vmatprep.subr.mxu0 0.0
        %v8599 = vand.u32 %v333, 4294901760
        %v8600 = vsub.f32 %v333, %v8599
        %v8601 = vand.u32 %v8600, 4294901760
        %v8602 = vsub.f32 %v8600, %v8601
        %v8603 = vand.u32 %v8602, 4294901760
        %8604 = vmatpush1.msra.mxu0 %v8603
        %8605 = vmatprep.subr.mxu0 0.0
        %v8606 = vand.u32 %v332, 4294901760
        %v8607 = vsub.f32 %v332, %v8606
        %v8608 = vand.u32 %v8607, 4294901760
        %v8609 = vsub.f32 %v8607, %v8608
        %v8610 = vand.u32 %v8609, 4294901760
        %8611 = vmatpush1.msra.mxu0 %v8610
        %8612 = vmatprep.subr.mxu0 0.0
        %v8613 = vand.u32 %v331, 4294901760
        %v8614 = vsub.f32 %v331, %v8613
        %v8615 = vand.u32 %v8614, 4294901760
        %v8616 = vsub.f32 %v8614, %v8615
        %v8617 = vand.u32 %v8616, 4294901760
        %8618 = vmatpush1.msra.mxu0 %v8617
        %8619 = vmatprep.subr.mxu0 0.0
        %v8620 = vand.u32 %v330, 4294901760
        %v8621 = vsub.f32 %v330, %v8620
        %v8622 = vand.u32 %v8621, 4294901760
        %v8623 = vsub.f32 %v8621, %v8622
        %v8624 = vand.u32 %v8623, 4294901760
        %8625 = vmatpush1.msra.mxu0 %v8624
        %8626 = vmatprep.subr.mxu0 0.0
        %v8627 = vand.u32 %v329, 4294901760
        %v8628 = vsub.f32 %v329, %v8627
        %v8629 = vand.u32 %v8628, 4294901760
        %v8630 = vsub.f32 %v8628, %v8629
        %v8631 = vand.u32 %v8630, 4294901760
        %8632 = vmatpush1.msra.mxu0 %v8631
        %8633 = vmatprep.subr.mxu0 0.0
        %v8634 = vand.u32 %v328, 4294901760
        %v8635 = vsub.f32 %v328, %v8634
        %v8636 = vand.u32 %v8635, 4294901760
        %v8637 = vsub.f32 %v8635, %v8636
        %v8638 = vand.u32 %v8637, 4294901760
        %8639 = vmatpush1.msra.mxu0 %v8638
        %8640 = vmatprep.subr.mxu0 0.0
        %v8641 = vand.u32 %v327, 4294901760
        %v8642 = vsub.f32 %v327, %v8641
        %v8643 = vand.u32 %v8642, 4294901760
        %v8644 = vsub.f32 %v8642, %v8643
        %v8645 = vand.u32 %v8644, 4294901760
        %8646 = vmatpush1.msra.mxu0 %v8645
        %8647 = vmatprep.subr.mxu0 0.0
        %v8648 = vand.u32 %v326, 4294901760
        %v8649 = vsub.f32 %v326, %v8648
        %v8650 = vand.u32 %v8649, 4294901760
        %v8651 = vsub.f32 %v8649, %v8650
        %v8652 = vand.u32 %v8651, 4294901760
        %8653 = vmatpush1.msra.mxu0 %v8652
        %8654 = vmatprep.subr.mxu0 0.0
        %v8655 = vand.u32 %v325, 4294901760
        %v8656 = vsub.f32 %v325, %v8655
        %v8657 = vand.u32 %v8656, 4294901760
        %v8658 = vsub.f32 %v8656, %v8657
        %v8659 = vand.u32 %v8658, 4294901760
        %8660 = vmatpush1.msra.mxu0 %v8659
        %8661 = vmatprep.subr.mxu0 0.0
        %v8662 = vand.u32 %v324, 4294901760
        %v8663 = vsub.f32 %v324, %v8662
        %v8664 = vand.u32 %v8663, 4294901760
        %v8665 = vsub.f32 %v8663, %v8664
        %v8666 = vand.u32 %v8665, 4294901760
        %8667 = vmatpush1.msra.mxu0 %v8666
        %8668 = vmatprep.subr.mxu0 0.0
        %v8669 = vand.u32 %v323, 4294901760
        %v8670 = vsub.f32 %v323, %v8669
        %v8671 = vand.u32 %v8670, 4294901760
        %v8672 = vsub.f32 %v8670, %v8671
        %v8673 = vand.u32 %v8672, 4294901760
        %8674 = vmatpush1.msra.mxu0 %v8673
        %8675 = vmatprep.subr.mxu0 0.0
        %v8676 = vand.u32 %v322, 4294901760
        %v8677 = vsub.f32 %v322, %v8676
        %v8678 = vand.u32 %v8677, 4294901760
        %v8679 = vsub.f32 %v8677, %v8678
        %v8680 = vand.u32 %v8679, 4294901760
        %8681 = vmatpush1.msra.mxu0 %v8680
        %8682 = vmatprep.subr.mxu0 0.0
        %v8683 = vand.u32 %v353, 4294901760
        %v8684 = vsub.f32 %v353, %v8683
        %v8685 = vand.u32 %v8684, 4294901760
        %v8686 = vsub.f32 %v8684, %v8685
        %v8687 = vand.u32 %v8686, 4294901760
        %8688 = vmatpush2.msra.mxu0 %v8687
        %8689 = vmatprep.subr.mxu0 0.0
        %v8690 = vand.u32 %v352, 4294901760
        %v8691 = vsub.f32 %v352, %v8690
        %v8692 = vand.u32 %v8691, 4294901760
        %v8693 = vsub.f32 %v8691, %v8692
        %v8694 = vand.u32 %v8693, 4294901760
        %8695 = vmatpush2.msra.mxu0 %v8694
        %8696 = vmatprep.subr.mxu0 0.0
        %v8697 = vand.u32 %v351, 4294901760
        %v8698 = vsub.f32 %v351, %v8697
        %v8699 = vand.u32 %v8698, 4294901760
        %v8700 = vsub.f32 %v8698, %v8699
        %v8701 = vand.u32 %v8700, 4294901760
        %8702 = vmatpush2.msra.mxu0 %v8701
        %8703 = vmatprep.subr.mxu0 0.0
        %v8704 = vand.u32 %v350, 4294901760
        %v8705 = vsub.f32 %v350, %v8704
        %v8706 = vand.u32 %v8705, 4294901760
        %v8707 = vsub.f32 %v8705, %v8706
        %v8708 = vand.u32 %v8707, 4294901760
        %8709 = vmatpush2.msra.mxu0 %v8708
        %8710 = vmatprep.subr.mxu0 0.0
        %v8711 = vand.u32 %v349, 4294901760
        %v8712 = vsub.f32 %v349, %v8711
        %v8713 = vand.u32 %v8712, 4294901760
        %v8714 = vsub.f32 %v8712, %v8713
        %v8715 = vand.u32 %v8714, 4294901760
        %8716 = vmatpush2.msra.mxu0 %v8715
        %8717 = vmatprep.subr.mxu0 0.0
        %v8718 = vand.u32 %v348, 4294901760
        %v8719 = vsub.f32 %v348, %v8718
        %v8720 = vand.u32 %v8719, 4294901760
        %v8721 = vsub.f32 %v8719, %v8720
        %v8722 = vand.u32 %v8721, 4294901760
        %8723 = vmatpush2.msra.mxu0 %v8722
        %8724 = vmatprep.subr.mxu0 0.0
        %v8725 = vand.u32 %v347, 4294901760
        %v8726 = vsub.f32 %v347, %v8725
        %v8727 = vand.u32 %v8726, 4294901760
        %v8728 = vsub.f32 %v8726, %v8727
        %v8729 = vand.u32 %v8728, 4294901760
        %8730 = vmatpush2.msra.mxu0 %v8729
        %8731 = vmatprep.subr.mxu0 0.0
        %v8732 = vand.u32 %v346, 4294901760
        %v8733 = vsub.f32 %v346, %v8732
        %v8734 = vand.u32 %v8733, 4294901760
        %v8735 = vsub.f32 %v8733, %v8734
        %v8736 = vand.u32 %v8735, 4294901760
        %8737 = vmatpush2.msra.mxu0 %v8736
        %8738 = vmatprep.subr.mxu0 0.0
        %v8739 = vand.u32 %v345, 4294901760
        %v8740 = vsub.f32 %v345, %v8739
        %v8741 = vand.u32 %v8740, 4294901760
        %v8742 = vsub.f32 %v8740, %v8741
        %v8743 = vand.u32 %v8742, 4294901760
        %8744 = vmatpush2.msra.mxu0 %v8743
        %8745 = vmatprep.subr.mxu0 0.0
        %v8746 = vand.u32 %v344, 4294901760
        %v8747 = vsub.f32 %v344, %v8746
        %v8748 = vand.u32 %v8747, 4294901760
        %v8749 = vsub.f32 %v8747, %v8748
        %v8750 = vand.u32 %v8749, 4294901760
        %8751 = vmatpush2.msra.mxu0 %v8750
        %8752 = vmatprep.subr.mxu0 0.0
        %v8753 = vand.u32 %v343, 4294901760
        %v8754 = vsub.f32 %v343, %v8753
        %v8755 = vand.u32 %v8754, 4294901760
        %v8756 = vsub.f32 %v8754, %v8755
        %v8757 = vand.u32 %v8756, 4294901760
        %8758 = vmatpush2.msra.mxu0 %v8757
        %8759 = vmatprep.subr.mxu0 0.0
        %v8760 = vand.u32 %v342, 4294901760
        %v8761 = vsub.f32 %v342, %v8760
        %v8762 = vand.u32 %v8761, 4294901760
        %v8763 = vsub.f32 %v8761, %v8762
        %v8764 = vand.u32 %v8763, 4294901760
        %8765 = vmatpush2.msra.mxu0 %v8764
        %8766 = vmatprep.subr.mxu0 0.0
        %v8767 = vand.u32 %v341, 4294901760
        %v8768 = vsub.f32 %v341, %v8767
        %v8769 = vand.u32 %v8768, 4294901760
        %v8770 = vsub.f32 %v8768, %v8769
        %v8771 = vand.u32 %v8770, 4294901760
        %8772 = vmatpush2.msra.mxu0 %v8771
        %8773 = vmatprep.subr.mxu0 0.0
        %v8774 = vand.u32 %v340, 4294901760
        %v8775 = vsub.f32 %v340, %v8774
        %v8776 = vand.u32 %v8775, 4294901760
        %v8777 = vsub.f32 %v8775, %v8776
        %v8778 = vand.u32 %v8777, 4294901760
        %8779 = vmatpush2.msra.mxu0 %v8778
        %8780 = vmatprep.subr.mxu0 0.0
        %v8781 = vand.u32 %v339, 4294901760
        %v8782 = vsub.f32 %v339, %v8781
        %v8783 = vand.u32 %v8782, 4294901760
        %v8784 = vsub.f32 %v8782, %v8783
        %v8785 = vand.u32 %v8784, 4294901760
        %8786 = vmatpush2.msra.mxu0 %v8785
        %8787 = vmatprep.subr.mxu0 0.0
        %v8788 = vand.u32 %v338, 4294901760
        %v8789 = vsub.f32 %v338, %v8788
        %v8790 = vand.u32 %v8789, 4294901760
        %v8791 = vsub.f32 %v8789, %v8790
        %v8792 = vand.u32 %v8791, 4294901760
        %8793 = vmatpush2.msra.mxu0 %v8792
        %v8794 = vand.u32 %v8438, 4294901760
        %8795 = vmatprep.mubr.f32.mxu0 %v8794
        %v8796 = vand.u32 %v8436, 4294901760
        %8797 = vmatmul.mubr.f32.gmra.mxu0 %v8796
        %v8798 = vpop.f32.mrf.mxu0
        %v8799 = vadd.f32 %v8552, %v8798
        %v8800 = vpop.f32.mrf.mxu0
        %v8801 = vand.u32 %v8442, 4294901760
        %8802 = vmatprep.mubr.f32.mxu0 %v8801
        %v8803 = vand.u32 %v8440, 4294901760
        %8804 = vmatmul.mubr.f32.gmra.mxu0 %v8803
        %v8805 = vpop.f32.mrf.mxu0
        %v8806 = vadd.f32 %v8567, %v8805
        %v8807 = vpop.f32.mrf.mxu0
        %8808 = vdwg.mxu0
        %8809 = vmatprep.subr.mxu0 0.0
        %v8810 = vand.u32 %v337, 4294901760
        %v8811 = vsub.f32 %v337, %v8810
        %8812 = vmatpush1.msra.mxu0 %v8811
        %8813 = vmatprep.subr.mxu0 0.0
        %v8814 = vand.u32 %v336, 4294901760
        %v8815 = vsub.f32 %v336, %v8814
        %8816 = vmatpush1.msra.mxu0 %v8815
        %8817 = vmatprep.subr.mxu0 0.0
        %v8818 = vand.u32 %v335, 4294901760
        %v8819 = vsub.f32 %v335, %v8818
        %8820 = vmatpush1.msra.mxu0 %v8819
        %8821 = vmatprep.subr.mxu0 0.0
        %v8822 = vand.u32 %v334, 4294901760
        %v8823 = vsub.f32 %v334, %v8822
        %8824 = vmatpush1.msra.mxu0 %v8823
        %8825 = vmatprep.subr.mxu0 0.0
        %v8826 = vand.u32 %v333, 4294901760
        %v8827 = vsub.f32 %v333, %v8826
        %8828 = vmatpush1.msra.mxu0 %v8827
        %8829 = vmatprep.subr.mxu0 0.0
        %v8830 = vand.u32 %v332, 4294901760
        %v8831 = vsub.f32 %v332, %v8830
        %8832 = vmatpush1.msra.mxu0 %v8831
        %8833 = vmatprep.subr.mxu0 0.0
        %v8834 = vand.u32 %v331, 4294901760
        %v8835 = vsub.f32 %v331, %v8834
        %8836 = vmatpush1.msra.mxu0 %v8835
        %8837 = vmatprep.subr.mxu0 0.0
        %v8838 = vand.u32 %v330, 4294901760
        %v8839 = vsub.f32 %v330, %v8838
        %8840 = vmatpush1.msra.mxu0 %v8839
        %8841 = vmatprep.subr.mxu0 0.0
        %v8842 = vand.u32 %v329, 4294901760
        %v8843 = vsub.f32 %v329, %v8842
        %8844 = vmatpush1.msra.mxu0 %v8843
        %8845 = vmatprep.subr.mxu0 0.0
        %v8846 = vand.u32 %v328, 4294901760
        %v8847 = vsub.f32 %v328, %v8846
        %8848 = vmatpush1.msra.mxu0 %v8847
        %8849 = vmatprep.subr.mxu0 0.0
        %v8850 = vand.u32 %v327, 4294901760
        %v8851 = vsub.f32 %v327, %v8850
        %8852 = vmatpush1.msra.mxu0 %v8851
        %8853 = vmatprep.subr.mxu0 0.0
        %v8854 = vand.u32 %v326, 4294901760
        %v8855 = vsub.f32 %v326, %v8854
        %8856 = vmatpush1.msra.mxu0 %v8855
        %8857 = vmatprep.subr.mxu0 0.0
        %v8858 = vand.u32 %v325, 4294901760
        %v8859 = vsub.f32 %v325, %v8858
        %8860 = vmatpush1.msra.mxu0 %v8859
        %8861 = vmatprep.subr.mxu0 0.0
        %v8862 = vand.u32 %v324, 4294901760
        %v8863 = vsub.f32 %v324, %v8862
        %8864 = vmatpush1.msra.mxu0 %v8863
        %8865 = vmatprep.subr.mxu0 0.0
        %v8866 = vand.u32 %v323, 4294901760
        %v8867 = vsub.f32 %v323, %v8866
        %8868 = vmatpush1.msra.mxu0 %v8867
        %8869 = vmatprep.subr.mxu0 0.0
        %v8870 = vand.u32 %v322, 4294901760
        %v8871 = vsub.f32 %v322, %v8870
        %8872 = vmatpush1.msra.mxu0 %v8871
        %8873 = vmatprep.subr.mxu0 0.0
        %v8874 = vand.u32 %v353, 4294901760
        %v8875 = vsub.f32 %v353, %v8874
        %8876 = vmatpush2.msra.mxu0 %v8875
        %8877 = vmatprep.subr.mxu0 0.0
        %v8878 = vand.u32 %v352, 4294901760
        %v8879 = vsub.f32 %v352, %v8878
        %8880 = vmatpush2.msra.mxu0 %v8879
        %8881 = vmatprep.subr.mxu0 0.0
        %v8882 = vand.u32 %v351, 4294901760
        %v8883 = vsub.f32 %v351, %v8882
        %8884 = vmatpush2.msra.mxu0 %v8883
        %8885 = vmatprep.subr.mxu0 0.0
        %v8886 = vand.u32 %v350, 4294901760
        %v8887 = vsub.f32 %v350, %v8886
        %8888 = vmatpush2.msra.mxu0 %v8887
        %8889 = vmatprep.subr.mxu0 0.0
        %v8890 = vand.u32 %v349, 4294901760
        %v8891 = vsub.f32 %v349, %v8890
        %8892 = vmatpush2.msra.mxu0 %v8891
        %8893 = vmatprep.subr.mxu0 0.0
        %v8894 = vand.u32 %v348, 4294901760
        %v8895 = vsub.f32 %v348, %v8894
        %8896 = vmatpush2.msra.mxu0 %v8895
        %8897 = vmatprep.subr.mxu0 0.0
        %v8898 = vand.u32 %v347, 4294901760
        %v8899 = vsub.f32 %v347, %v8898
        %8900 = vmatpush2.msra.mxu0 %v8899
        %8901 = vmatprep.subr.mxu0 0.0
        %v8902 = vand.u32 %v346, 4294901760
        %v8903 = vsub.f32 %v346, %v8902
        %8904 = vmatpush2.msra.mxu0 %v8903
        %8905 = vmatprep.subr.mxu0 0.0
        %v8906 = vand.u32 %v345, 4294901760
        %v8907 = vsub.f32 %v345, %v8906
        %8908 = vmatpush2.msra.mxu0 %v8907
        %8909 = vmatprep.subr.mxu0 0.0
        %v8910 = vand.u32 %v344, 4294901760
        %v8911 = vsub.f32 %v344, %v8910
        %8912 = vmatpush2.msra.mxu0 %v8911
        %8913 = vmatprep.subr.mxu0 0.0
        %v8914 = vand.u32 %v343, 4294901760
        %v8915 = vsub.f32 %v343, %v8914
        %8916 = vmatpush2.msra.mxu0 %v8915
        %8917 = vmatprep.subr.mxu0 0.0
        %v8918 = vand.u32 %v342, 4294901760
        %v8919 = vsub.f32 %v342, %v8918
        %8920 = vmatpush2.msra.mxu0 %v8919
        %8921 = vmatprep.subr.mxu0 0.0
        %v8922 = vand.u32 %v341, 4294901760
        %v8923 = vsub.f32 %v341, %v8922
        %8924 = vmatpush2.msra.mxu0 %v8923
        %8925 = vmatprep.subr.mxu0 0.0
        %v8926 = vand.u32 %v340, 4294901760
        %v8927 = vsub.f32 %v340, %v8926
        %8928 = vmatpush2.msra.mxu0 %v8927
        %8929 = vmatprep.subr.mxu0 0.0
        %v8930 = vand.u32 %v339, 4294901760
        %v8931 = vsub.f32 %v339, %v8930
        %8932 = vmatpush2.msra.mxu0 %v8931
        %8933 = vmatprep.subr.mxu0 0.0
        %v8934 = vand.u32 %v338, 4294901760
        %v8935 = vsub.f32 %v338, %v8934
        %8936 = vmatpush2.msra.mxu0 %v8935
        %v8937 = vand.u32 %v8438, 4294901760
        %v8938 = vsub.f32 %v8438, %v8937
        %8939 = vmatprep.mubr.f32.mxu0 %v8938
        %v8940 = vand.u32 %v8436, 4294901760
        %v8941 = vsub.f32 %v8436, %v8940
        %8942 = vmatmul.mubr.f32.gmra.mxu0 %v8941
        %v8943 = vpop.f32.mrf.mxu0
        %v8944 = vadd.f32 %v8799, %v8943
        %v8945 = vpop.f32.mrf.mxu0
        %v8946 = vand.u32 %v8442, 4294901760
        %v8947 = vsub.f32 %v8442, %v8946
        %8948 = vmatprep.mubr.f32.mxu0 %v8947
        %v8949 = vand.u32 %v8440, 4294901760
        %v8950 = vsub.f32 %v8440, %v8949
        %8951 = vmatmul.mubr.f32.gmra.mxu0 %v8950
        %v8952 = vpop.f32.mrf.mxu0
        %v8953 = vadd.f32 %v8806, %v8952
        %v8954 = vpop.f32.mrf.mxu0
        %8955 = vdwg.mxu0
        %8956 = vmatprep.subr.mxu0 0.0
        %v8957 = vand.u32 %v337, 4294901760
        %8958 = vmatpush1.msra.mxu0 %v8957
        %8959 = vmatprep.subr.mxu0 0.0
        %v8960 = vand.u32 %v336, 4294901760
        %8961 = vmatpush1.msra.mxu0 %v8960
        %8962 = vmatprep.subr.mxu0 0.0
        %v8963 = vand.u32 %v335, 4294901760
        %8964 = vmatpush1.msra.mxu0 %v8963
        %8965 = vmatprep.subr.mxu0 0.0
        %v8966 = vand.u32 %v334, 4294901760
        %8967 = vmatpush1.msra.mxu0 %v8966
        %8968 = vmatprep.subr.mxu0 0.0
        %v8969 = vand.u32 %v333, 4294901760
        %8970 = vmatpush1.msra.mxu0 %v8969
        %8971 = vmatprep.subr.mxu0 0.0
        %v8972 = vand.u32 %v332, 4294901760
        %8973 = vmatpush1.msra.mxu0 %v8972
        %8974 = vmatprep.subr.mxu0 0.0
        %v8975 = vand.u32 %v331, 4294901760
        %8976 = vmatpush1.msra.mxu0 %v8975
        %8977 = vmatprep.subr.mxu0 0.0
        %v8978 = vand.u32 %v330, 4294901760
        %8979 = vmatpush1.msra.mxu0 %v8978
        %8980 = vmatprep.subr.mxu0 0.0
        %v8981 = vand.u32 %v329, 4294901760
        %8982 = vmatpush1.msra.mxu0 %v8981
        %8983 = vmatprep.subr.mxu0 0.0
        %v8984 = vand.u32 %v328, 4294901760
        %8985 = vmatpush1.msra.mxu0 %v8984
        %8986 = vmatprep.subr.mxu0 0.0
        %v8987 = vand.u32 %v327, 4294901760
        %8988 = vmatpush1.msra.mxu0 %v8987
        %8989 = vmatprep.subr.mxu0 0.0
        %v8990 = vand.u32 %v326, 4294901760
        %8991 = vmatpush1.msra.mxu0 %v8990
        %8992 = vmatprep.subr.mxu0 0.0
        %v8993 = vand.u32 %v325, 4294901760
        %8994 = vmatpush1.msra.mxu0 %v8993
        %8995 = vmatprep.subr.mxu0 0.0
        %v8996 = vand.u32 %v324, 4294901760
        %8997 = vmatpush1.msra.mxu0 %v8996
        %8998 = vmatprep.subr.mxu0 0.0
        %v8999 = vand.u32 %v323, 4294901760
        %9000 = vmatpush1.msra.mxu0 %v8999
        %9001 = vmatprep.subr.mxu0 0.0
        %v9002 = vand.u32 %v322, 4294901760
        %9003 = vmatpush1.msra.mxu0 %v9002
        %9004 = vmatprep.subr.mxu0 0.0
        %v9005 = vand.u32 %v353, 4294901760
        %9006 = vmatpush2.msra.mxu0 %v9005
        %9007 = vmatprep.subr.mxu0 0.0
        %v9008 = vand.u32 %v352, 4294901760
        %9009 = vmatpush2.msra.mxu0 %v9008
        %9010 = vmatprep.subr.mxu0 0.0
        %v9011 = vand.u32 %v351, 4294901760
        %9012 = vmatpush2.msra.mxu0 %v9011
        %9013 = vmatprep.subr.mxu0 0.0
        %v9014 = vand.u32 %v350, 4294901760
        %9015 = vmatpush2.msra.mxu0 %v9014
        %9016 = vmatprep.subr.mxu0 0.0
        %v9017 = vand.u32 %v349, 4294901760
        %9018 = vmatpush2.msra.mxu0 %v9017
        %9019 = vmatprep.subr.mxu0 0.0
        %v9020 = vand.u32 %v348, 4294901760
        %9021 = vmatpush2.msra.mxu0 %v9020
        %9022 = vmatprep.subr.mxu0 0.0
        %v9023 = vand.u32 %v347, 4294901760
        %9024 = vmatpush2.msra.mxu0 %v9023
        %9025 = vmatprep.subr.mxu0 0.0
        %v9026 = vand.u32 %v346, 4294901760
        %9027 = vmatpush2.msra.mxu0 %v9026
        %9028 = vmatprep.subr.mxu0 0.0
        %v9029 = vand.u32 %v345, 4294901760
        %9030 = vmatpush2.msra.mxu0 %v9029
        %9031 = vmatprep.subr.mxu0 0.0
        %v9032 = vand.u32 %v344, 4294901760
        %9033 = vmatpush2.msra.mxu0 %v9032
        %9034 = vmatprep.subr.mxu0 0.0
        %v9035 = vand.u32 %v343, 4294901760
        %9036 = vmatpush2.msra.mxu0 %v9035
        %9037 = vmatprep.subr.mxu0 0.0
        %v9038 = vand.u32 %v342, 4294901760
        %9039 = vmatpush2.msra.mxu0 %v9038
        %9040 = vmatprep.subr.mxu0 0.0
        %v9041 = vand.u32 %v341, 4294901760
        %9042 = vmatpush2.msra.mxu0 %v9041
        %9043 = vmatprep.subr.mxu0 0.0
        %v9044 = vand.u32 %v340, 4294901760
        %9045 = vmatpush2.msra.mxu0 %v9044
        %9046 = vmatprep.subr.mxu0 0.0
        %v9047 = vand.u32 %v339, 4294901760
        %9048 = vmatpush2.msra.mxu0 %v9047
        %9049 = vmatprep.subr.mxu0 0.0
        %v9050 = vand.u32 %v338, 4294901760
        %9051 = vmatpush2.msra.mxu0 %v9050
        %v9052 = vand.u32 %v8438, 4294901760
        %v9053 = vsub.f32 %v8438, %v9052
        %v9054 = vand.u32 %v9053, 4294901760
        %9055 = vmatprep.mubr.f32.mxu0 %v9054
        %v9056 = vand.u32 %v8436, 4294901760
        %v9057 = vsub.f32 %v8436, %v9056
        %v9058 = vand.u32 %v9057, 4294901760
        %9059 = vmatmul.mubr.f32.gmra.mxu0 %v9058
        %v9060 = vpop.f32.mrf.mxu0
        %v9061 = vadd.f32 %v8944, %v9060
        %v9062 = vpop.f32.mrf.mxu0
        %v9063 = vand.u32 %v8442, 4294901760
        %v9064 = vsub.f32 %v8442, %v9063
        %v9065 = vand.u32 %v9064, 4294901760
        %9066 = vmatprep.mubr.f32.mxu0 %v9065
        %v9067 = vand.u32 %v8440, 4294901760
        %v9068 = vsub.f32 %v8440, %v9067
        %v9069 = vand.u32 %v9068, 4294901760
        %9070 = vmatmul.mubr.f32.gmra.mxu0 %v9069
        %v9071 = vpop.f32.mrf.mxu0
        %v9072 = vadd.f32 %v8953, %v9071
        %v9073 = vpop.f32.mrf.mxu0
        %9074 = vdwg.mxu0
        %9075 = vmatprep.subr.mxu0 0.0
        %v9076 = vand.u32 %v337, 4294901760
        %v9077 = vsub.f32 %v337, %v9076
        %v9078 = vand.u32 %v9077, 4294901760
        %9079 = vmatpush1.msra.mxu0 %v9078
        %9080 = vmatprep.subr.mxu0 0.0
        %v9081 = vand.u32 %v336, 4294901760
        %v9082 = vsub.f32 %v336, %v9081
        %v9083 = vand.u32 %v9082, 4294901760
        %9084 = vmatpush1.msra.mxu0 %v9083
        %9085 = vmatprep.subr.mxu0 0.0
        %v9086 = vand.u32 %v335, 4294901760
        %v9087 = vsub.f32 %v335, %v9086
        %v9088 = vand.u32 %v9087, 4294901760
        %9089 = vmatpush1.msra.mxu0 %v9088
        %9090 = vmatprep.subr.mxu0 0.0
        %v9091 = vand.u32 %v334, 4294901760
        %v9092 = vsub.f32 %v334, %v9091
        %v9093 = vand.u32 %v9092, 4294901760
        %9094 = vmatpush1.msra.mxu0 %v9093
        %9095 = vmatprep.subr.mxu0 0.0
        %v9096 = vand.u32 %v333, 4294901760
        %v9097 = vsub.f32 %v333, %v9096
        %v9098 = vand.u32 %v9097, 4294901760
        %9099 = vmatpush1.msra.mxu0 %v9098
        %9100 = vmatprep.subr.mxu0 0.0
        %v9101 = vand.u32 %v332, 4294901760
        %v9102 = vsub.f32 %v332, %v9101
        %v9103 = vand.u32 %v9102, 4294901760
        %9104 = vmatpush1.msra.mxu0 %v9103
        %9105 = vmatprep.subr.mxu0 0.0
        %v9106 = vand.u32 %v331, 4294901760
        %v9107 = vsub.f32 %v331, %v9106
        %v9108 = vand.u32 %v9107, 4294901760
        %9109 = vmatpush1.msra.mxu0 %v9108
        %9110 = vmatprep.subr.mxu0 0.0
        %v9111 = vand.u32 %v330, 4294901760
        %v9112 = vsub.f32 %v330, %v9111
        %v9113 = vand.u32 %v9112, 4294901760
        %9114 = vmatpush1.msra.mxu0 %v9113
        %9115 = vmatprep.subr.mxu0 0.0
        %v9116 = vand.u32 %v329, 4294901760
        %v9117 = vsub.f32 %v329, %v9116
        %v9118 = vand.u32 %v9117, 4294901760
        %9119 = vmatpush1.msra.mxu0 %v9118
        %9120 = vmatprep.subr.mxu0 0.0
        %v9121 = vand.u32 %v328, 4294901760
        %v9122 = vsub.f32 %v328, %v9121
        %v9123 = vand.u32 %v9122, 4294901760
        %9124 = vmatpush1.msra.mxu0 %v9123
        %9125 = vmatprep.subr.mxu0 0.0
        %v9126 = vand.u32 %v327, 4294901760
        %v9127 = vsub.f32 %v327, %v9126
        %v9128 = vand.u32 %v9127, 4294901760
        %9129 = vmatpush1.msra.mxu0 %v9128
        %9130 = vmatprep.subr.mxu0 0.0
        %v9131 = vand.u32 %v326, 4294901760
        %v9132 = vsub.f32 %v326, %v9131
        %v9133 = vand.u32 %v9132, 4294901760
        %9134 = vmatpush1.msra.mxu0 %v9133
        %9135 = vmatprep.subr.mxu0 0.0
        %v9136 = vand.u32 %v325, 4294901760
        %v9137 = vsub.f32 %v325, %v9136
        %v9138 = vand.u32 %v9137, 4294901760
        %9139 = vmatpush1.msra.mxu0 %v9138
        %9140 = vmatprep.subr.mxu0 0.0
        %v9141 = vand.u32 %v324, 4294901760
        %v9142 = vsub.f32 %v324, %v9141
        %v9143 = vand.u32 %v9142, 4294901760
        %9144 = vmatpush1.msra.mxu0 %v9143
        %9145 = vmatprep.subr.mxu0 0.0
        %v9146 = vand.u32 %v323, 4294901760
        %v9147 = vsub.f32 %v323, %v9146
        %v9148 = vand.u32 %v9147, 4294901760
        %9149 = vmatpush1.msra.mxu0 %v9148
        %9150 = vmatprep.subr.mxu0 0.0
        %v9151 = vand.u32 %v322, 4294901760
        %v9152 = vsub.f32 %v322, %v9151
        %v9153 = vand.u32 %v9152, 4294901760
        %9154 = vmatpush1.msra.mxu0 %v9153
        %9155 = vmatprep.subr.mxu0 0.0
        %v9156 = vand.u32 %v353, 4294901760
        %v9157 = vsub.f32 %v353, %v9156
        %v9158 = vand.u32 %v9157, 4294901760
        %9159 = vmatpush2.msra.mxu0 %v9158
        %9160 = vmatprep.subr.mxu0 0.0
        %v9161 = vand.u32 %v352, 4294901760
        %v9162 = vsub.f32 %v352, %v9161
        %v9163 = vand.u32 %v9162, 4294901760
        %9164 = vmatpush2.msra.mxu0 %v9163
        %9165 = vmatprep.subr.mxu0 0.0
        %v9166 = vand.u32 %v351, 4294901760
        %v9167 = vsub.f32 %v351, %v9166
        %v9168 = vand.u32 %v9167, 4294901760
        %9169 = vmatpush2.msra.mxu0 %v9168
        %9170 = vmatprep.subr.mxu0 0.0
        %v9171 = vand.u32 %v350, 4294901760
        %v9172 = vsub.f32 %v350, %v9171
        %v9173 = vand.u32 %v9172, 4294901760
        %9174 = vmatpush2.msra.mxu0 %v9173
        %9175 = vmatprep.subr.mxu0 0.0
        %v9176 = vand.u32 %v349, 4294901760
        %v9177 = vsub.f32 %v349, %v9176
        %v9178 = vand.u32 %v9177, 4294901760
        %9179 = vmatpush2.msra.mxu0 %v9178
        %9180 = vmatprep.subr.mxu0 0.0
        %v9181 = vand.u32 %v348, 4294901760
        %v9182 = vsub.f32 %v348, %v9181
        %v9183 = vand.u32 %v9182, 4294901760
        %9184 = vmatpush2.msra.mxu0 %v9183
        %9185 = vmatprep.subr.mxu0 0.0
        %v9186 = vand.u32 %v347, 4294901760
        %v9187 = vsub.f32 %v347, %v9186
        %v9188 = vand.u32 %v9187, 4294901760
        %9189 = vmatpush2.msra.mxu0 %v9188
        %9190 = vmatprep.subr.mxu0 0.0
        %v9191 = vand.u32 %v346, 4294901760
        %v9192 = vsub.f32 %v346, %v9191
        %v9193 = vand.u32 %v9192, 4294901760
        %9194 = vmatpush2.msra.mxu0 %v9193
        %9195 = vmatprep.subr.mxu0 0.0
        %v9196 = vand.u32 %v345, 4294901760
        %v9197 = vsub.f32 %v345, %v9196
        %v9198 = vand.u32 %v9197, 4294901760
        %9199 = vmatpush2.msra.mxu0 %v9198
        %9200 = vmatprep.subr.mxu0 0.0
        %v9201 = vand.u32 %v344, 4294901760
        %v9202 = vsub.f32 %v344, %v9201
        %v9203 = vand.u32 %v9202, 4294901760
        %9204 = vmatpush2.msra.mxu0 %v9203
        %9205 = vmatprep.subr.mxu0 0.0
        %v9206 = vand.u32 %v343, 4294901760
        %v9207 = vsub.f32 %v343, %v9206
        %v9208 = vand.u32 %v9207, 4294901760
        %9209 = vmatpush2.msra.mxu0 %v9208
        %9210 = vmatprep.subr.mxu0 0.0
        %v9211 = vand.u32 %v342, 4294901760
        %v9212 = vsub.f32 %v342, %v9211
        %v9213 = vand.u32 %v9212, 4294901760
        %9214 = vmatpush2.msra.mxu0 %v9213
        %9215 = vmatprep.subr.mxu0 0.0
        %v9216 = vand.u32 %v341, 4294901760
        %v9217 = vsub.f32 %v341, %v9216
        %v9218 = vand.u32 %v9217, 4294901760
        %9219 = vmatpush2.msra.mxu0 %v9218
        %9220 = vmatprep.subr.mxu0 0.0
        %v9221 = vand.u32 %v340, 4294901760
        %v9222 = vsub.f32 %v340, %v9221
        %v9223 = vand.u32 %v9222, 4294901760
        %9224 = vmatpush2.msra.mxu0 %v9223
        %9225 = vmatprep.subr.mxu0 0.0
        %v9226 = vand.u32 %v339, 4294901760
        %v9227 = vsub.f32 %v339, %v9226
        %v9228 = vand.u32 %v9227, 4294901760
        %9229 = vmatpush2.msra.mxu0 %v9228
        %9230 = vmatprep.subr.mxu0 0.0
        %v9231 = vand.u32 %v338, 4294901760
        %v9232 = vsub.f32 %v338, %v9231
        %v9233 = vand.u32 %v9232, 4294901760
        %9234 = vmatpush2.msra.mxu0 %v9233
        %v9235 = vand.u32 %v8438, 4294901760
        %9236 = vmatprep.mubr.f32.mxu0 %v9235
        %v9237 = vand.u32 %v8436, 4294901760
        %9238 = vmatmul.mubr.f32.gmra.mxu0 %v9237
        %v9239 = vpop.f32.mrf.mxu0
        %v9240 = vadd.f32 %v9061, %v9239
        %v9241 = vpop.f32.mrf.mxu0
        %v9242 = vand.u32 %v8442, 4294901760
        %9243 = vmatprep.mubr.f32.mxu0 %v9242
        %v9244 = vand.u32 %v8440, 4294901760
        %9245 = vmatmul.mubr.f32.gmra.mxu0 %v9244
        %v9246 = vpop.f32.mrf.mxu0
        %v9247 = vadd.f32 %v9072, %v9246
        %v9248 = vpop.f32.mrf.mxu0
        %9249 = vdwg.mxu0
        %9250 = vmatprep.subr.mxu0 0.0
        %v9251 = vand.u32 %v337, 4294901760
        %9252 = vmatpush1.msra.mxu0 %v9251
        %9253 = vmatprep.subr.mxu0 0.0
        %v9254 = vand.u32 %v336, 4294901760
        %9255 = vmatpush1.msra.mxu0 %v9254
        %9256 = vmatprep.subr.mxu0 0.0
        %v9257 = vand.u32 %v335, 4294901760
        %9258 = vmatpush1.msra.mxu0 %v9257
        %9259 = vmatprep.subr.mxu0 0.0
        %v9260 = vand.u32 %v334, 4294901760
        %9261 = vmatpush1.msra.mxu0 %v9260
        %9262 = vmatprep.subr.mxu0 0.0
        %v9263 = vand.u32 %v333, 4294901760
        %9264 = vmatpush1.msra.mxu0 %v9263
        %9265 = vmatprep.subr.mxu0 0.0
        %v9266 = vand.u32 %v332, 4294901760
        %9267 = vmatpush1.msra.mxu0 %v9266
        %9268 = vmatprep.subr.mxu0 0.0
        %v9269 = vand.u32 %v331, 4294901760
        %9270 = vmatpush1.msra.mxu0 %v9269
        %9271 = vmatprep.subr.mxu0 0.0
        %v9272 = vand.u32 %v330, 4294901760
        %9273 = vmatpush1.msra.mxu0 %v9272
        %9274 = vmatprep.subr.mxu0 0.0
        %v9275 = vand.u32 %v329, 4294901760
        %9276 = vmatpush1.msra.mxu0 %v9275
        %9277 = vmatprep.subr.mxu0 0.0
        %v9278 = vand.u32 %v328, 4294901760
        %9279 = vmatpush1.msra.mxu0 %v9278
        %9280 = vmatprep.subr.mxu0 0.0
        %v9281 = vand.u32 %v327, 4294901760
        %9282 = vmatpush1.msra.mxu0 %v9281
        %9283 = vmatprep.subr.mxu0 0.0
        %v9284 = vand.u32 %v326, 4294901760
        %9285 = vmatpush1.msra.mxu0 %v9284
        %9286 = vmatprep.subr.mxu0 0.0
        %v9287 = vand.u32 %v325, 4294901760
        %9288 = vmatpush1.msra.mxu0 %v9287
        %9289 = vmatprep.subr.mxu0 0.0
        %v9290 = vand.u32 %v324, 4294901760
        %9291 = vmatpush1.msra.mxu0 %v9290
        %9292 = vmatprep.subr.mxu0 0.0
        %v9293 = vand.u32 %v323, 4294901760
        %9294 = vmatpush1.msra.mxu0 %v9293
        %9295 = vmatprep.subr.mxu0 0.0
        %v9296 = vand.u32 %v322, 4294901760
        %9297 = vmatpush1.msra.mxu0 %v9296
        %9298 = vmatprep.subr.mxu0 0.0
        %v9299 = vand.u32 %v353, 4294901760
        %9300 = vmatpush2.msra.mxu0 %v9299
        %9301 = vmatprep.subr.mxu0 0.0
        %v9302 = vand.u32 %v352, 4294901760
        %9303 = vmatpush2.msra.mxu0 %v9302
        %9304 = vmatprep.subr.mxu0 0.0
        %v9305 = vand.u32 %v351, 4294901760
        %9306 = vmatpush2.msra.mxu0 %v9305
        %9307 = vmatprep.subr.mxu0 0.0
        %v9308 = vand.u32 %v350, 4294901760
        %9309 = vmatpush2.msra.mxu0 %v9308
        %9310 = vmatprep.subr.mxu0 0.0
        %v9311 = vand.u32 %v349, 4294901760
        %9312 = vmatpush2.msra.mxu0 %v9311
        %9313 = vmatprep.subr.mxu0 0.0
        %v9314 = vand.u32 %v348, 4294901760
        %9315 = vmatpush2.msra.mxu0 %v9314
        %9316 = vmatprep.subr.mxu0 0.0
        %v9317 = vand.u32 %v347, 4294901760
        %9318 = vmatpush2.msra.mxu0 %v9317
        %9319 = vmatprep.subr.mxu0 0.0
        %v9320 = vand.u32 %v346, 4294901760
        %9321 = vmatpush2.msra.mxu0 %v9320
        %9322 = vmatprep.subr.mxu0 0.0
        %v9323 = vand.u32 %v345, 4294901760
        %9324 = vmatpush2.msra.mxu0 %v9323
        %9325 = vmatprep.subr.mxu0 0.0
        %v9326 = vand.u32 %v344, 4294901760
        %9327 = vmatpush2.msra.mxu0 %v9326
        %9328 = vmatprep.subr.mxu0 0.0
        %v9329 = vand.u32 %v343, 4294901760
        %9330 = vmatpush2.msra.mxu0 %v9329
        %9331 = vmatprep.subr.mxu0 0.0
        %v9332 = vand.u32 %v342, 4294901760
        %9333 = vmatpush2.msra.mxu0 %v9332
        %9334 = vmatprep.subr.mxu0 0.0
        %v9335 = vand.u32 %v341, 4294901760
        %9336 = vmatpush2.msra.mxu0 %v9335
        %9337 = vmatprep.subr.mxu0 0.0
        %v9338 = vand.u32 %v340, 4294901760
        %9339 = vmatpush2.msra.mxu0 %v9338
        %9340 = vmatprep.subr.mxu0 0.0
        %v9341 = vand.u32 %v339, 4294901760
        %9342 = vmatpush2.msra.mxu0 %v9341
        %9343 = vmatprep.subr.mxu0 0.0
        %v9344 = vand.u32 %v338, 4294901760
        %9345 = vmatpush2.msra.mxu0 %v9344
        %v9346 = vand.u32 %v8438, 4294901760
        %9347 = vmatprep.mubr.f32.mxu0 %v9346
        %v9348 = vand.u32 %v8436, 4294901760
        %9349 = vmatmul.mubr.f32.gmra.mxu0 %v9348
        %v9350 = vpop.f32.mrf.mxu0
        %v9351 = vadd.f32 %v9240, %v9350
        %v9352 = vpop.f32.mrf.mxu0
        %v9353 = vand.u32 %v8442, 4294901760
        %9354 = vmatprep.mubr.f32.mxu0 %v9353
        %v9355 = vand.u32 %v8440, 4294901760
        %9356 = vmatmul.mubr.f32.gmra.mxu0 %v9355
        %v9357 = vpop.f32.mrf.mxu0
        %v9358 = vadd.f32 %v9247, %v9357
        %v9359 = vpop.f32.mrf.mxu0
        %9360 = vdwg.mxu0
        %v9361 = vrcp.pop %v9351
        %v9362 = vrcp.pop %v9358
        %9365 = vrot.lane.b32.xlu0 %v9361, 1
        %v9366 = vpop.permute.xlu0 %9365
        %9367 = vrot.lane.b32.xlu0 %v9362, 1
        %v9368 = vpop.permute.xlu0 %9367
        %v9371 = vmul.f32 %v9351, %v9366
        %v9372 = vmul.f32 %v9358, %v9368
        %v9373 = vadd.f32 %v9371, 3.8146973e-13
        %v9374 = vadd.f32 %v9372, 3.8146973e-13
        %9375 = vrot.lane.b32.xlu0 %v9361, 2
        %v9376 = vpop.permute.xlu0 %9375
        %9377 = vrot.lane.b32.xlu0 %v9362, 2
        %v9378 = vpop.permute.xlu0 %9377
        %v9381 = vmul.f32 %v9351, %v9376
        %v9382 = vmul.f32 %v9358, %v9378
        %v9383 = vadd.f32 %v9381, 3.8146973e-13
        %v9384 = vadd.f32 %v9382, 3.8146973e-13
        %9385 = vrot.lane.b32.xlu0 %v9361, 3
        %v9386 = vpop.permute.xlu0 %9385
        %9387 = vrot.lane.b32.xlu0 %v9362, 3
        %v9388 = vpop.permute.xlu0 %9387
        %v9391 = vmul.f32 %v9351, %v9386
        %v9392 = vmul.f32 %v9358, %v9388
        %v9393 = vadd.f32 %v9391, 9.671111e-06
        %v9394 = vadd.f32 %v9392, 9.671111e-06
        %v9395 = vmul.f32 %v9373, %v9373
        %v9396 = vmul.f32 %v9374, %v9374
        %v9397 = vmul.f32 %v9395, 0.9999744
        %v9398 = vmul.f32 %v9396, 0.9999744
        %9401 = vrot.lane.b32.xlu0 %v9397, 2
        %v9402 = vpop.permute.xlu0 %9401
        %9403 = vrot.lane.b32.xlu0 %v9398, 2
        %v9404 = vpop.permute.xlu0 %9403
        %v9407 = vsub.f32 %v9393, %v9402
        %v9408 = vsub.f32 %v9394, %v9404
        %9409 = vrot.lane.b32.xlu0 %v9361, 4
        %v9410 = vpop.permute.xlu0 %9409
        %9411 = vrot.lane.b32.xlu0 %v9362, 4
        %v9412 = vpop.permute.xlu0 %9411
        %v9415 = vmul.f32 %v9351, %v9410
        %v9416 = vmul.f32 %v9358, %v9412
        %v9417 = vadd.f32 %v9415, 5.684342e-21
        %v9418 = vadd.f32 %v9416, 5.684342e-21
        %9421 = vrot.lane.b32.xlu0 %v9383, 127
        %v9422 = vpop.permute.xlu0 %9421
        %9423 = vrot.lane.b32.xlu0 %v9384, 127
        %v9424 = vpop.permute.xlu0 %9423
        %v9427 = vmul.f32 %v9373, %v9422
        %v9428 = vmul.f32 %v9374, %v9424
        %v9429 = vmul.f32 %v9427, 0.9999744
        %v9430 = vmul.f32 %v9428, 0.9999744
        %9433 = vrot.lane.b32.xlu0 %v9429, 3
        %v9434 = vpop.permute.xlu0 %9433
        %9435 = vrot.lane.b32.xlu0 %v9430, 3
        %v9436 = vpop.permute.xlu0 %9435
        %v9439 = vsub.f32 %v9417, %v9434
        %v9440 = vsub.f32 %v9418, %v9436
        %9441 = vrot.lane.b32.xlu0 %v9361, 5
        %v9442 = vpop.permute.xlu0 %9441
        %9443 = vrot.lane.b32.xlu0 %v9362, 5
        %v9444 = vpop.permute.xlu0 %9443
        %v9447 = vmul.f32 %v9351, %v9442
        %v9448 = vmul.f32 %v9358, %v9444
        %v9449 = vadd.f32 %v9447, 9.671111e-06
        %v9450 = vadd.f32 %v9448, 9.671111e-06
        %v9451 = vmul.f32 %v9383, %v9383
        %v9452 = vmul.f32 %v9384, %v9384
        %v9453 = vmul.f32 %v9451, 0.9999744
        %v9454 = vmul.f32 %v9452, 0.9999744
        %9457 = vrot.lane.b32.xlu0 %v9453, 3
        %v9458 = vpop.permute.xlu0 %9457
        %9459 = vrot.lane.b32.xlu0 %v9454, 3
        %v9460 = vpop.permute.xlu0 %9459
        %v9463 = vsub.f32 %v9449, %v9458
        %v9464 = vsub.f32 %v9450, %v9460
        %9466 = vset.pattern.permute.xlu0 5
        %9467 = vperm.xlu0 %9466, %v9463
        %v9468 = vpop.permute.xlu0 %9467
        %9471 = vset.pattern.permute.xlu0 5
        %9472 = vperm.xlu0 %9471, %v9464
        %v9473 = vpop.permute.xlu0 %9472
        %v9475 = vsel %vm1449, %v9468, 0.0
        %v9476 = vsel %vm1449, %v9473, 0.0
        %9478 = vset.pattern.permute.xlu0 4
        %9479 = vperm.xlu0 %9478, %v9439
        %v9480 = vpop.permute.xlu0 %9479
        %9483 = vset.pattern.permute.xlu0 4
        %9484 = vperm.xlu0 %9483, %v9440
        %v9485 = vpop.permute.xlu0 %9484
        %v9487 = vsel %vm1448, %v9480, %v9475
        %v9488 = vsel %vm1448, %v9485, %v9476
        %9490 = vset.pattern.permute.xlu0 3
        %9491 = vperm.xlu0 %9490, %v9407
        %v9492 = vpop.permute.xlu0 %9491
        %9495 = vset.pattern.permute.xlu0 3
        %9496 = vperm.xlu0 %9495, %v9408
        %v9497 = vpop.permute.xlu0 %9496
        %v9499 = vsel %vm1445, %v9492, %v9487
        %v9500 = vsel %vm1445, %v9497, %v9488
        %9501 = vset.pattern.permute.xlu0 2
        %9502 = vperm.xlu0 %9501, %v9383
        %v9503 = vpop.permute.xlu0 %9502
        %9505 = vset.pattern.permute.xlu0 2
        %9506 = vperm.xlu0 %9505, %v9384
        %v9507 = vpop.permute.xlu0 %9506
        %v9509 = vsel %vm1444, %v9503, %v9499
        %v9510 = vsel %vm1444, %v9507, %v9500
        %9512 = vset.pattern.permute.xlu0 1
        %9513 = vperm.xlu0 %9512, %v9373
        %v9514 = vpop.permute.xlu0 %9513
        %9517 = vset.pattern.permute.xlu0 1
        %9518 = vperm.xlu0 %9517, %v9374
        %v9519 = vpop.permute.xlu0 %9518
        %v9521 = vsel %vm1443, %v9514, %v9509
        %v9522 = vsel %vm1443, %v9519, %v9510
        %9525 = vrot.lane.b32.xlu0 %v2651, 8
        %v9526 = vpop.permute.xlu0 %9525
        %9527 = vrot.lane.b32.xlu0 %v2652, 8
        %v9528 = vpop.permute.xlu0 %9527
        %9533 = vrot.lane.b32.xlu0 %v3796, 16
        %v9534 = vpop.permute.xlu0 %9533
        %9535 = vrot.lane.b32.xlu0 %v3797, 16
        %v9536 = vpop.permute.xlu0 %9535
        %9541 = vrot.lane.b32.xlu0 %v4941, 24
        %v9542 = vpop.permute.xlu0 %9541
        %9543 = vrot.lane.b32.xlu0 %v4942, 24
        %v9544 = vpop.permute.xlu0 %9543
        %9549 = vrot.lane.b32.xlu0 %v6086, 32
        %v9550 = vpop.permute.xlu0 %9549
        %9551 = vrot.lane.b32.xlu0 %v6087, 32
        %v9552 = vpop.permute.xlu0 %9551
        %9557 = vrot.lane.b32.xlu0 %v7231, 40
        %v9558 = vpop.permute.xlu0 %9557
        %9559 = vrot.lane.b32.xlu0 %v7232, 40
        %v9560 = vpop.permute.xlu0 %9559
        %9565 = vrot.lane.b32.xlu0 %v8376, 48
        %v9566 = vpop.permute.xlu0 %9565
        %9567 = vrot.lane.b32.xlu0 %v8377, 48
        %v9568 = vpop.permute.xlu0 %9567
        %9573 = vrot.lane.b32.xlu0 %v9521, 56
        %v9574 = vpop.permute.xlu0 %9573
        %9575 = vrot.lane.b32.xlu0 %v9522, 56
        %v9576 = vpop.permute.xlu0 %9575
        %vm9579 = vcmask 64512
        %v9580 = vsel %vm9579, %v1506, %v9526
        %v9581 = vsel %vm9579, %v1507, %v9528
        %vm9582 = vcmask 130048
        %v9583 = vsel %vm9582, %v9580, %v9534
        %v9584 = vsel %vm9582, %v9581, %v9536
        %vm9585 = vcmask 195584
        %v9586 = vsel %vm9585, %v9583, %v9542
        %v9587 = vsel %vm9585, %v9584, %v9544
        %vm9588 = vcmask 261120
        %v9589 = vsel %vm9588, %v9586, %v9550
        %v9590 = vsel %vm9588, %v9587, %v9552
        %vm9591 = vcmask 326656
        %v9592 = vsel %vm9591, %v9589, %v9558
        %v9593 = vsel %vm9591, %v9590, %v9560
        %vm9594 = vcmask 392192
        %v9595 = vsel %vm9594, %v9592, %v9566
        %v9596 = vsel %vm9594, %v9593, %v9568
        %vm9597 = vcmask 457728
        %v9598 = vsel %vm9597, %v9595, %v9574
        %v9599 = vsel %vm9597, %v9596, %v9576
        %vm9600 = vcmask 523264
        %v9601 = vsel %vm9600, %v9598, 0.0
        %v9602 = vsel %vm9600, %v9599, 0.0
        %9603 = vst [vmem:[%s302] sm:$0xff] %v9601
        %9604 = vst [vmem:[%s302 + $0x8] sm:$0xff] %v9602
        %s9605 = sand.u32 %s160, 1
        %s9606 = scalar_lea.sflag [#allocation5], %s9605
        %s9607 = sand.u32 %s160, 1
        %s9608 = smul.addr %s9607, 16
        %s9609 = scalar_lea.vmem [#allocation12], %s9608
        // Predicated region
        $region57: #{tpu_custom_call.1} parent=39 // pred_check
          %p9610 = pneg %p170
        $region58: #{tpu_custom_call.1} parent=39 // pred_check_branch
          %9612 = sbr.rel (%p9610) target = $region60
        $region59: #{tpu_custom_call.1} parent=39 // pred_region
          %s9613 = smul.u32 2, %s31
          %s9615 = ssub.s32 256, 256
          %9616 = vsyncadd %s9606, %s9615
          %s9617 = smul.addr %s30, 2
          %s9618 = sadd.s32 %s9613, %s9617
          %s9619 = smul.addr %s9618, 128
          %s9620 = scalar_lea.hbm %s5, %s9619
          %s9621 = sshll.u32 %s9609, 4
          %s9622 = int_to_ptr.vmem [resolvable:$true] %s9621
          %9627 = dma.vmem_to_hbm [thread:$0]  %s9622, 256, %s9620, %s9606, 128, 128, 8
        $region60: #{tpu_custom_call.1} parent=39 // pred_fallthru
          _
      $region40: #{tpu_custom_call.1} parent=5 // pred_fallthru
        _
      %p9628 = scmp.le.s32.totalorder 2, %s21
      // Predicated region
      $region61: #{tpu_custom_call.1} parent=5 // pred_check
        %p9629 = pneg %p9628
      $region62: #{tpu_custom_call.1} parent=5 // pred_check_branch
        %9631 = sbr.rel (%p9629) target = $region64
      $region63: #{tpu_custom_call.1} parent=5 // pred_region
        %s9632 = ssub.s32 %s21, 2
        // Predicated region
        $region65: #{tpu_custom_call.1} parent=63 // pred_check
          %p9633 = pneg %p176
        $region66: #{tpu_custom_call.1} parent=63 // pred_check_branch
          %9635 = sbr.rel (%p9633) target = $region68
        $region67: #{tpu_custom_call.1} parent=63 // pred_region
          %s9636 = sand.u32 %s161, 1
          %s9637 = scalar_lea.sflag [#allocation5], %s9636
          %s9638 = sand.u32 %s161, 1
          %s9639 = smul.addr %s9638, 16
          %s9640 = scalar_lea.vmem [#allocation12], %s9639
          %9641 = dma.done %s9637, 256
        $region68: #{tpu_custom_call.1} parent=63 // pred_fallthru
          _
      $region64: #{tpu_custom_call.1} parent=5 // pred_fallthru
        _
    $region6: #{tpu_custom_call.1} parent=1 // loop_footer
      %s25 = sadd.s32 1, %s21
    $region7: #{tpu_custom_call.1} parent=1 // loop_footer_branch
      %20 = sbr.rel target = $region3
    $region8: #{tpu_custom_call.1} parent=1 // loop_exit
      _
    %9642 = vsyncpa [#allocation4], 1
    %s9643 = scalar_lea.sflag [#allocation4], 1
    %9644 = vsyncpa %s9643, 1
    %9645 = vsyncpa [#allocation11], 1
    %s9646 = scalar_lea.sflag [#allocation11], 1
    %9647 = vsyncpa %s9646, 1
    %9648 = vsyncpa [#allocation5], 1
    %s9649 = scalar_lea.sflag [#allocation5], 1
    %9650 = vsyncpa %s9649, 1
    %9651 = vsyncpa [#allocation6], 1
    %s9652 = scalar_lea.sflag [#allocation6], 1
    %9653 = vsyncpa %s9652, 1
    %9654 = vsyncpa [#allocation7], 1
    %s9655 = scalar_lea.sflag [#allocation7], 1
    %9656 = vsyncpa %s9655, 1

</llo_original>
